<compile_context>
chip_gen: v7x
topology: tpu7x:2x2x1
jax: 0.10.0
libtpu: 0.0.40
codegen_flags: <defaults>
</compile_context>

<pallas_src>
import numpy as np
import jax
import jax.numpy as jnp
from jax import lax
from jax.experimental import pallas as pl
from jax.experimental.pallas import tpu as pltpu

# ---------------- Config (mirrors the PyTorch Config) ----------------
SEQ_LEN = 5
INPUT_DIM = 32             # embed_dim
HIDDEN = 64                # hidden_dim
NUM_LAYERS = 3
FEAT = 2 * HIDDEN          # 128  (bi-LSTM output width / padded input width)
GATES = 4 * HIDDEN         # 256  per direction (PyTorch gate order i,f,g,o)
FGATES = 2 * GATES         # 512  fused: gate g, dir d at cols [g*128 + d*64, ...+64)
G2 = 2 * HIDDEN            # 128  one fused gate group

CAT_SIZES = {"wind_dir": 8, "wind_force": 4, "uv": 5}
HEAD_NAMES = ["min_temp", "max_temp", "humidity", "air_quality",
              "wind_dir", "wind_force", "uv"]
HEAD_OUT = [1, 1, 1, 1, 8, 4, 5]
NUM_HEADS = 7
H1_PAD = 256               # 7*32 = 224  -> padded to 256
H2_PAD = 128               # 7*16 = 112  -> padded to 128
OUT_PAD = 128              # head k occupies output cols [16k, 16k + out_k)
OUT_STRIDE = 16

_INV_SQRT2 = 0.7071067811865476


def _gelu(x):
    # exact GELU (PyTorch nn.GELU default, approximate='none')
    return 0.5 * x * (1.0 + lax.erf(x * _INV_SQRT2))


def _sigmoid(x):
    # sigmoid(x) == 0.5*(1 + tanh(x/2)): one EUP push per vreg instead of the
    # exp + reciprocal pair jax.nn.sigmoid may lower to (EUP has one slot).
    return 0.5 * jnp.tanh(0.5 * x) + 0.5


# ---------------- Pallas kernel ----------------
def weather_kernel(x_ref,                       # (T, Bt, INPUT_DIM)     bf16
                   w_ref,                       # (L, 3, FEAT, FGATES)   bf16  [wa|wb|whh]
                   b_ref,                       # (L, 1, FGATES)         f32
                   wh1_ref, b1_ref,             # (2, FEAT, H1) bf16, (1, H1) f32
                   w2_ref, b2_ref,              # (H1, H2) bf16, (1, H2) f32
                   w3_ref, b3_ref,              # (H2, OUT) bf16, (1, OUT) f32
                   out_ref,                     # (Bt, OUT_PAD)          f32
                   seq_ref,                     # scratch (T, Bt, FEAT)   bf16
                   pa_ref):                     # scratch (T, Bt, FGATES) f32
    T = x_ref.shape[0]
    Bt = x_ref.shape[1]

    # Stage the layer-0 input: zero-pad the native 32-wide embedding to the
    # 128-wide bf16 seq slab once, entirely in VMEM (x arrives from HBM at
    # its native width -> 8x less wrapper-side HBM staging traffic).
    seq_ref[...] = jnp.zeros_like(seq_ref)
    seq_ref[:, :, :INPUT_DIM] = x_ref[...]

    for layer in range(NUM_LAYERS):
        xin = seq_ref[...]                         # (T, Bt, FEAT) bf16
        xin2 = xin.reshape(T * Bt, FEAT)

        wa = w_ref[layer, 0]                       # (FEAT, FGATES) bf16
        wb = w_ref[layer, 1]
        whh = w_ref[layer, 2]

        # Hoisted input projection for ALL timesteps & BOTH directions; the
        # time-reversed backward projection is folded in here (pipelineable
        # region) so nothing but h @ W_hh stays on the serial critical path.
        pa = (jnp.dot(xin2, wa, preferred_element_type=jnp.float32)
              + b_ref[layer]).reshape(T, Bt, FGATES)
        pb = jnp.dot(xin2, wb,
                     preferred_element_type=jnp.float32).reshape(T, Bt, FGATES)
        for s in range(T):                         # T is a tiny static constant
            pa_ref[s] = pa[s] + pb[T - 1 - s]

        # Fused fwd/bwd recurrence: fwd consumes time s, bwd consumes T-1-s.
        h = jnp.zeros((Bt, FEAT), jnp.float32)
        c = jnp.zeros((Bt, FEAT), jnp.float32)
        for s in range(T):                         # fully unrolled, static indices
            gates = pa_ref[s] + jnp.dot(h.astype(jnp.bfloat16), whh,
                                        preferred_element_type=jnp.float32)
            i = _sigmoid(gates[:, 0 * G2:1 * G2])
            f = _sigmoid(gates[:, 1 * G2:2 * G2])
            g = jnp.tanh(gates[:, 2 * G2:3 * G2])
            o = _sigmoid(gates[:, 3 * G2:4 * G2])
            c = f * c + i * g
            h = o * jnp.tanh(c)
            # stored in "fused step" order: seq[s] = [h_fwd(t=s) | h_bwd(t=T-1-s)]
            seq_ref[s] = h.astype(jnp.bfloat16)

    # LSTM output at t = T-1: fwd half lives in seq[T-1], bwd half in seq[0].
    # wh1[0]/wh1[1] have the complementary row halves zeroed -> no lane shuffle.
    hA = seq_ref[T - 1]                            # bf16 already
    hB = seq_ref[0]
    h1 = _gelu(jnp.dot(hA, wh1_ref[0], preferred_element_type=jnp.float32)
               + jnp.dot(hB, wh1_ref[1], preferred_element_type=jnp.float32)
               + b1_ref[...])
    h2 = _gelu(jnp.dot(h1.astype(jnp.bfloat16), w2_ref[...],
                       preferred_element_type=jnp.float32) + b2_ref[...])
    out_ref[...] = (jnp.dot(h2.astype(jnp.bfloat16), w3_ref[...],
                            preferred_element_type=jnp.float32) + b3_ref[...])


# ---------------- parameter construction & packing ----------------
def _scatter_gate_cols(w_t, side):
    """(rows, 4*HIDDEN) gate-major [i|f|g|o] -> (rows, FGATES) fused layout:
    gate g of direction `side` occupies cols [g*128 + side*64, g*128 + side*64 + 64)."""
    rows = w_t.shape[0]
    out = np.zeros((rows, FGATES), np.float32)
    for g in range(4):
        out[:, g * G2 + side * HIDDEN: g * G2 + (side + 1) * HIDDEN] = \
            w_t[:, g * HIDDEN:(g + 1) * HIDDEN]
    return out


def _pack_params(raw_lstm, raw_heads):
    wa = np.zeros((NUM_LAYERS, FEAT, FGATES), np.float32)
    wb = np.zeros((NUM_LAYERS, FEAT, FGATES), np.float32)
    wh = np.zeros((NUM_LAYERS, FEAT, FGATES), np.float32)
    bb = np.zeros((NUM_LAYERS, 1, FGATES), np.float32)
    for l in range(NUM_LAYERS):
        in_dim = INPUT_DIM if l == 0 else FEAT
        f_in = _scatter_gate_cols(raw_lstm[(l, 0)]["w_ih"].T, 0)   # (in_dim, 512)
        b_in = _scatter_gate_cols(raw_lstm[(l, 1)]["w_ih"].T, 1)
        if l == 0:
            # layer-0 input is the real x sequence (zero-padded 32 -> 128)
            wa[l, :in_dim] = f_in
            wb[l, :in_dim] = b_in
        else:
            # layer l>0 input arrives permuted: seq[s] = [h_fwd(s) | h_bwd(T-1-s)]
            # gates(s) = seq[s] @ wa + seq[T-1-s] @ wb reproduces the exact
            # bidirectional input projection.
            wa[l, :HIDDEN] = f_in[:HIDDEN]
            wa[l, HIDDEN:] = b_in[HIDDEN:]
            wb[l, :HIDDEN] = b_in[:HIDDEN]
            wb[l, HIDDEN:] = f_in[HIDDEN:]
        wh[l, :HIDDEN] = _scatter_gate_cols(raw_lstm[(l, 0)]["w_hh"].T, 0)
        wh[l, HIDDEN:] = _scatter_gate_cols(raw_lstm[(l, 1)]["w_hh"].T, 1)
        bsum_f = raw_lstm[(l, 0)]["b_ih"] + raw_lstm[(l, 0)]["b_hh"]
        bsum_b = raw_lstm[(l, 1)]["b_ih"] + raw_lstm[(l, 1)]["b_hh"]
        bb[l, 0] = (_scatter_gate_cols(bsum_f[None, :], 0)[0]
                    + _scatter_gate_cols(bsum_b[None, :], 1)[0])
    # one contiguous LSTM weight tensor -> one startup DMA, one BlockSpec
    w_lstm = np.stack([wa, wb, wh], axis=1)        # (L, 3, FEAT, FGATES)

    # fused heads: W1 concatenated along N; W2/W3 block-diagonal; lane-dense out
    w1 = np.zeros((FEAT, H1_PAD), np.float32)
    b1 = np.zeros((1, H1_PAD), np.float32)
    w2 = np.zeros((H1_PAD, H2_PAD), np.float32)
    b2 = np.zeros((1, H2_PAD), np.float32)
    w3 = np.zeros((H2_PAD, OUT_PAD), np.float32)
    b3 = np.zeros((1, OUT_PAD), np.float32)
    for k in range(NUM_HEADS):
        hd = raw_heads[k]
        w1[:, 32 * k:32 * (k + 1)] = hd["w1"].T
        b1[0, 32 * k:32 * (k + 1)] = hd["b1"]
        w2[32 * k:32 * (k + 1), 16 * k:16 * (k + 1)] = hd["w2"].T
        b2[0, 16 * k:16 * (k + 1)] = hd["b2"]
        w3[16 * k:16 * (k + 1), 16 * k:16 * k + HEAD_OUT[k]] = hd["w3"].T
        b3[0, 16 * k:16 * k + HEAD_OUT[k]] = hd["b3"]
    # split W1 by input half so feats = [h_fwd(T-1) | h_bwd(T-1)] is consumed
    # as seq[T-1] @ wh1[0] + seq[0] @ wh1[1] (no lane shuffle needed).
    w1a = w1.copy(); w1a[HIDDEN:] = 0.0
    w1b = w1.copy(); w1b[:HIDDEN] = 0.0
    wh1 = np.stack([w1a, w1b], axis=0)             # (2, FEAT, H1_PAD)

    tobf = lambda a: jnp.asarray(a, jnp.bfloat16)
    tof = lambda a: jnp.asarray(a, jnp.float32)
    return {"w_lstm": tobf(w_lstm), "b": tof(bb),
            "wh1": tobf(wh1), "b1": tof(b1),
            "w2": tobf(w2), "b2": tof(b2), "w3": tobf(w3), "b3": tof(b3)}


def init_params(key):
    keys = iter(jax.random.split(key, 128))
    u = lambda k, shape, bound: np.asarray(
        jax.random.uniform(k, shape, jnp.float32, -bound, bound))

    raw_lstm = {}
    k_lstm = 1.0 / np.sqrt(HIDDEN)
    for l in range(NUM_LAYERS):
        in_dim = INPUT_DIM if l == 0 else FEAT
        for d in range(2):
            raw_lstm[(l, d)] = {
                "w_ih": u(next(keys), (GATES, in_dim), k_lstm),
                "w_hh": u(next(keys), (GATES, HIDDEN), k_lstm),
                "b_ih": u(next(keys), (GATES,), k_lstm),
                "b_hh": u(next(keys), (GATES,), k_lstm),
            }

    raw_heads = []
    for k in range(NUM_HEADS):
        head = {}
        for fan_in, fan_out, tag in ((FEAT, 32, "1"), (32, 16, "2"),
                                     (16, HEAD_OUT[k], "3")):
            bound = 1.0 / np.sqrt(fan_in)
            head["w" + tag] = u(next(keys), (fan_out, fan_in), bound)
            head["b" + tag] = u(next(keys), (fan_out,), bound)
        raw_heads.append(head)

    return {"packed": _pack_params(raw_lstm, raw_heads),
            "raw": {"lstm": raw_lstm, "heads": raw_heads}}


# ---------------- wrapper ----------------
def _round_up(n, m):
    return ((n + m - 1) // m) * m


def _num_tensorcores():
    try:
        kind = jax.devices()[0].device_kind.lower()
    except Exception:
        return 1
    return 2 if ("v7" in kind or "7x" in kind) else 1


@jax.jit
def weather_forward_packed(x, packed):
    """x: (B, T, INPUT_DIM) -> (B, OUT_PAD) lane-dense packed head outputs."""
    B = x.shape[0]
    # bf16-friendly batch tiles (multiples of 16 sublanes); cap 256 fills the
    # 256-wide v6e/v7x MXU.  On v7x (2 TensorCores) halve the tile when it
    # keeps >=2 grid tiles so the "parallel" batch axis shards over both cores.
    b_ceil = _round_up(max(B, 1), 16)
    b_tile = min(256, b_ceil)
    if _num_tensorcores() >= 2 and 32 <= b_ceil <= 512:
        b_tile = min(b_tile, _round_up(b_ceil // 2, 16))
    b_pad = _round_up(B, b_tile)
    n_tiles = b_pad // b_tile

    # time-major, native 32-wide, bf16 -> ~8x less HBM staging than padded f32
    x_t = jnp.transpose(x, (1, 0, 2)).astype(jnp.bfloat16)      # (T, B, 32)
    if b_pad != B:
        x_t = jnp.pad(x_t, ((0, 0), (0, b_pad - B), (0, 0)))

    # advisory cost estimate (helps XLA overlap this small custom call)
    mm_flops = NUM_LAYERS * (2 * 2 * SEQ_LEN * b_pad * FEAT * FGATES     # in-proj
                             + 2 * SEQ_LEN * b_pad * FEAT * FGATES)      # recurrence
    mm_flops += 2 * b_pad * (2 * FEAT * H1_PAD + H1_PAD * H2_PAD
                             + H2_PAD * OUT_PAD)                          # heads
    transc = NUM_LAYERS * SEQ_LEN * b_pad * 5 * FEAT + b_pad * (H1_PAD + H2_PAD)
    w_bytes = sum(packed[k].size * 2 for k in ("w_lstm", "wh1", "w2", "w3"))
    bias_bytes = sum(packed[k].size * 4 for k in ("b", "b1", "b2", "b3"))
    bytes_accessed = x_t.size * 2 + w_bytes + bias_bytes + b_pad * OUT_PAD * 4

    const2 = lambda i: (0, 0)
    const3 = lambda i: (0, 0, 0)
    const4 = lambda i: (0, 0, 0, 0)
    out = pl.pallas_call(
        weather_kernel,
        out_shape=jax.ShapeDtypeStruct((b_pad, OUT_PAD), jnp.float32),
        grid=(n_tiles,),
        in_specs=[
            pl.BlockSpec((SEQ_LEN, b_tile, INPUT_DIM), lambda i: (0, i, 0)),
            pl.BlockSpec((NUM_LAYERS, 3, FEAT, FGATES), const4),
            pl.BlockSpec((NUM_LAYERS, 1, FGATES), const3),
            pl.BlockSpec((2, FEAT, H1_PAD), const3),
            pl.BlockSpec((1, H1_PAD), const2),
            pl.BlockSpec((H1_PAD, H2_PAD), const2),
            pl.BlockSpec((1, H2_PAD), const2),
            pl.BlockSpec((H2_PAD, OUT_PAD), const2),
            pl.BlockSpec((1, OUT_PAD), const2),
        ],
        out_specs=pl.BlockSpec((b_tile, OUT_PAD), lambda i: (i, 0)),
        scratch_shapes=[
            pltpu.VMEM((SEQ_LEN, b_tile, FEAT), jnp.bfloat16),    # seq (bf16)
            pltpu.VMEM((SEQ_LEN, b_tile, FGATES), jnp.float32),   # folded in-proj
        ],
        compiler_params=pltpu.CompilerParams(
            dimension_semantics=("parallel",),
            vmem_limit_bytes=40 * 1024 * 1024),
        cost_estimate=pl.CostEstimate(flops=mm_flops, transcendentals=transc,
                                      bytes_accessed=bytes_accessed),
    )(x_t, packed["w_lstm"], packed["b"], packed["wh1"], packed["b1"],
      packed["w2"], packed["b2"], packed["w3"], packed["b3"])
    return out[:B]


def weather_forward(x, packed):
    out = weather_forward_packed(x, packed)          # (B, OUT_PAD)
    res = {}
    for k, name in enumerate(HEAD_NAMES):
        col = OUT_STRIDE * k
        y = out[:, col:col + HEAD_OUT[k]]
        if HEAD_OUT[k] == 1:
            y = jnp.squeeze(y, axis=-1)              # matches torch .squeeze()
        res[name] = y
    return res


# ---------------- pure-JAX reference (PyTorch semantics) ----------------
def reference_forward(x, raw):
    """Matmul operands rounded to bf16 (matching the kernel's MXU precision);
    accumulation and elementwise math in f32."""
    bf = lambda a: jnp.asarray(a, jnp.float32).astype(jnp.bfloat16).astype(jnp.float32)
    mm = lambda a, b: jnp.dot(bf(a), bf(b), precision=jax.lax.Precision.HIGHEST)
    B, T = x.shape[0], SEQ_LEN
    inp = [x[:, t, :].astype(jnp.float32) for t in range(T)]
    for l in range(NUM_LAYERS):
        outs = [[None] * T, [None] * T]
        for d in range(2):
            p = raw["lstm"][(l, d)]
            w_ih_t, w_hh_t = p["w_ih"].T, p["w_hh"].T
            bias = jnp.asarray(p["b_ih"] + p["b_hh"])[None, :]
            h = jnp.zeros((B, HIDDEN), jnp.float32)
            c = jnp.zeros((B, HIDDEN), jnp.float32)
            order = range(T) if d == 0 else range(T - 1, -1, -1)
            for t in order:
                g = mm(inp[t], w_ih_t) + mm(h, w_hh_t) + bias
                i = jax.nn.sigmoid(g[:, :HIDDEN])
                f = jax.nn.sigmoid(g[:, HIDDEN:2 * HIDDEN])
                gg = jnp.tanh(g[:, 2 * HIDDEN:3 * HIDDEN])
                o = jax.nn.sigmoid(g[:, 3 * HIDDEN:])
                c = f * c + i * gg
                h = o * jnp.tanh(c)
                outs[d][t] = h
        inp = [jnp.concatenate([outs[0][t], outs[1][t]], axis=-1)
               for t in range(T)]
    feats = inp[-1]
    res = {}
    for k, name in enumerate(HEAD_NAMES):
        hd = raw["heads"][k]
        h1 = _gelu(mm(feats, hd["w1"].T) + jnp.asarray(hd["b1"])[None, :])
        h2 = _gelu(mm(h1, hd["w2"].T) + jnp.asarray(hd["b2"])[None, :])
        y = mm(h2, hd["w3"].T) + jnp.asarray(hd["b3"])[None, :]
        if HEAD_OUT[k] == 1:
            y = jnp.squeeze(y, axis=-1)
        res[name] = y
    return res


if __name__ == "__main__":
    batch = 8
    key_x, key_p = jax.random.split(jax.random.PRNGKey(0))
    x = jax.random.normal(key_x, (batch, SEQ_LEN, INPUT_DIM), jnp.float32)
    params = init_params(key_p)

    out = weather_forward(x, params["packed"])
    jax.block_until_ready(out["min_temp"])

    ref = reference_forward(x, params["raw"])
    for name in HEAD_NAMES:
        np.testing.assert_allclose(np.asarray(out[name]), np.asarray(ref[name]),
                                   atol=1e-2, rtol=1e-2)

    assert out["min_temp"].shape == (batch,)
    assert out["max_temp"].shape == (batch,)
    assert out["humidity"].shape == (batch,)
    assert out["air_quality"].shape == (batch,)
    assert out["wind_dir"].shape == (batch, CAT_SIZES["wind_dir"])
    assert out["wind_force"].shape == (batch, CAT_SIZES["wind_force"])
    assert out["uv"].shape == (batch, CAT_SIZES["uv"])
    print("KERNEL_OK")
</pallas_src>

<mosaic_0001>
module attributes {stable_mosaic.version = 11 : i64} {
  func.func @weather_kernel(%arg0: i32, %arg1: memref<5x16x32xbf16, #tpu.memory_space<vmem>>, %arg2: memref<3x3x128x512xbf16, #tpu.memory_space<vmem>>, %arg3: memref<3x1x512xf32, #tpu.memory_space<vmem>>, %arg4: memref<2x128x256xbf16, #tpu.memory_space<vmem>>, %arg5: memref<1x256xf32, #tpu.memory_space<vmem>>, %arg6: memref<256x128xbf16, #tpu.memory_space<vmem>>, %arg7: memref<1x128xf32, #tpu.memory_space<vmem>>, %arg8: memref<128x128xbf16, #tpu.memory_space<vmem>>, %arg9: memref<1x128xf32, #tpu.memory_space<vmem>>, %arg10: memref<16x128xf32, #tpu.memory_space<vmem>>, %arg11: memref<5x16x128xbf16, #tpu.memory_space<vmem>>, %arg12: memref<5x16x512xf32, #tpu.memory_space<vmem>>) attributes {dimension_semantics = [#tpu.dimension_semantics<parallel>], iteration_bounds = array<i64: 1>, scalar_prefetch = 0 : i64, scratch_operands = 2 : i64, tpu.core_type = #tpu.core_type<tc>, window_params = [{transform_indices = @transform_0, window_bounds = array<i64: 5, 16, 32>}, {pipeline_mode = #tpu.pipeline_mode<synchronous>, transform_indices = @transform_1, window_bounds = array<i64: 3, 3, 128, 512>}, {pipeline_mode = #tpu.pipeline_mode<synchronous>, transform_indices = @transform_2, window_bounds = array<i64: 3, 1, 512>}, {pipeline_mode = #tpu.pipeline_mode<synchronous>, transform_indices = @transform_3, window_bounds = array<i64: 2, 128, 256>}, {pipeline_mode = #tpu.pipeline_mode<synchronous>, transform_indices = @transform_4, window_bounds = array<i64: 1, 256>}, {pipeline_mode = #tpu.pipeline_mode<synchronous>, transform_indices = @transform_5, window_bounds = array<i64: 256, 128>}, {pipeline_mode = #tpu.pipeline_mode<synchronous>, transform_indices = @transform_6, window_bounds = array<i64: 1, 128>}, {pipeline_mode = #tpu.pipeline_mode<synchronous>, transform_indices = @transform_7, window_bounds = array<i64: 128, 128>}, {pipeline_mode = #tpu.pipeline_mode<synchronous>, transform_indices = @transform_8, window_bounds = array<i64: 1, 128>}, {transform_indices = @transform_9, window_bounds = array<i64: 16, 128>}]} {
    %cst = arith.constant 0.000000e+00 : bf16
    %0 = vector.broadcast %cst : bf16 to vector<5x16x128xbf16>
    %c0 = arith.constant 0 : index
    %c0_0 = arith.constant 0 : index
    %c0_1 = arith.constant 0 : index
    %1 = vector.load %arg11[%c0, %c0_0, %c0_1] : memref<5x16x128xbf16, #tpu.memory_space<vmem>>, vector<5x16x128xbf16>
    tpu.vector_store %arg11[%c0, %c0_0, %c0_1], %0 {strides = array<i32>} : memref<5x16x128xbf16, #tpu.memory_space<vmem>>, vector<5x16x128xbf16>,
    %c0_2 = arith.constant 0 : index
    %c0_3 = arith.constant 0 : index
    %c0_4 = arith.constant 0 : index
    %2 = vector.load %arg1[%c0_2, %c0_3, %c0_4] : memref<5x16x32xbf16, #tpu.memory_space<vmem>>, vector<5x16x32xbf16>
    %c0_5 = arith.constant 0 : index
    %c0_6 = arith.constant 0 : index
    %c0_7 = arith.constant 0 : index
    %3 = vector.load %arg11[%c0_5, %c0_6, %c0_7] : memref<5x16x128xbf16, #tpu.memory_space<vmem>>, vector<5x16x32xbf16>
    tpu.vector_store %arg11[%c0_5, %c0_6, %c0_7], %2 {strides = array<i32>} : memref<5x16x128xbf16, #tpu.memory_space<vmem>>, vector<5x16x32xbf16>,
    %c0_8 = arith.constant 0 : index
    %c0_9 = arith.constant 0 : index
    %c0_10 = arith.constant 0 : index
    %4 = vector.load %arg11[%c0_8, %c0_9, %c0_10] : memref<5x16x128xbf16, #tpu.memory_space<vmem>>, vector<5x16x128xbf16>
    %5 = vector.shape_cast %4 : vector<5x16x128xbf16> to vector<80x128xbf16>
    %c0_11 = arith.constant 0 : index
    %c0_12 = arith.constant 0 : index
    %c0_13 = arith.constant 0 : index
    %c0_14 = arith.constant 0 : index
    %6 = vector.load %arg2[%c0_11, %c0_12, %c0_13, %c0_14] : memref<3x3x128x512xbf16, #tpu.memory_space<vmem>>, vector<1x1x128x512xbf16>
    %7 = vector.shape_cast %6 : vector<1x1x128x512xbf16> to vector<128x512xbf16>
    %c0_15 = arith.constant 0 : index
    %c1 = arith.constant 1 : index
    %c0_16 = arith.constant 0 : index
    %c0_17 = arith.constant 0 : index
    %8 = vector.load %arg2[%c0_15, %c1, %c0_16, %c0_17] : memref<3x3x128x512xbf16, #tpu.memory_space<vmem>>, vector<1x1x128x512xbf16>
    %9 = vector.shape_cast %8 : vector<1x1x128x512xbf16> to vector<128x512xbf16>
    %c0_18 = arith.constant 0 : index
    %c2 = arith.constant 2 : index
    %c0_19 = arith.constant 0 : index
    %c0_20 = arith.constant 0 : index
    %10 = vector.load %arg2[%c0_18, %c2, %c0_19, %c0_20] : memref<3x3x128x512xbf16, #tpu.memory_space<vmem>>, vector<1x1x128x512xbf16>
    %11 = vector.shape_cast %10 : vector<1x1x128x512xbf16> to vector<128x512xbf16>
    %cst_21 = arith.constant dense<0.000000e+00> : vector<80x512xf32>
    %12 = tpu.matmul %5, %7, %cst_21 {dimension_numbers = #tpu.dot_dimension_numbers<[1], [0], [0], [1], [0, 0, 1, 1], [], []>} : vector<80x128xbf16>, vector<128x512xbf16>, vector<80x512xf32> -> vector<80x512xf32>
    %c0_22 = arith.constant 0 : index
    %c0_23 = arith.constant 0 : index
    %c0_24 = arith.constant 0 : index
    %13 = vector.load %arg3[%c0_22, %c0_23, %c0_24] : memref<3x1x512xf32, #tpu.memory_space<vmem>>, vector<1x1x512xf32>
    %14 = vector.shape_cast %13 : vector<1x1x512xf32> to vector<1x512xf32>
    %15 = vector.broadcast %14 : vector<1x512xf32> to vector<80x512xf32>
    %16 = arith.addf %12, %15 : vector<80x512xf32>
    %17 = vector.shape_cast %16 : vector<80x512xf32> to vector<5x16x512xf32>
    %cst_25 = arith.constant dense<0.000000e+00> : vector<80x512xf32>
    %18 = tpu.matmul %5, %9, %cst_25 {dimension_numbers = #tpu.dot_dimension_numbers<[1], [0], [0], [1], [0, 0, 1, 1], [], []>} : vector<80x128xbf16>, vector<128x512xbf16>, vector<80x512xf32> -> vector<80x512xf32>
    %19 = vector.shape_cast %18 : vector<80x512xf32> to vector<5x16x512xf32>
    %20 = vector.extract_strided_slice %17 {offsets = [0, 0, 0], sizes = [1, 16, 512], strides = [1, 1, 1]} : vector<5x16x512xf32> to vector<1x16x512xf32>
    %21 = vector.shape_cast %20 : vector<1x16x512xf32> to vector<16x512xf32>
    %22 = vector.extract_strided_slice %19 {offsets = [4, 0, 0], sizes = [1, 16, 512], strides = [1, 1, 1]} : vector<5x16x512xf32> to vector<1x16x512xf32>
    %23 = vector.shape_cast %22 : vector<1x16x512xf32> to vector<16x512xf32>
    %24 = arith.addf %21, %23 : vector<16x512xf32>
    %c0_26 = arith.constant 0 : index
    %c0_27 = arith.constant 0 : index
    %c0_28 = arith.constant 0 : index
    %25 = vector.load %arg12[%c0_26, %c0_27, %c0_28] : memref<5x16x512xf32, #tpu.memory_space<vmem>>, vector<1x16x512xf32>
    %26 = vector.shape_cast %25 : vector<1x16x512xf32> to vector<16x512xf32>
    %27 = vector.shape_cast %24 : vector<16x512xf32> to vector<1x16x512xf32>
    tpu.vector_store %arg12[%c0_26, %c0_27, %c0_28], %27 {strides = array<i32>} : memref<5x16x512xf32, #tpu.memory_space<vmem>>, vector<1x16x512xf32>,
    %28 = vector.extract_strided_slice %17 {offsets = [1, 0, 0], sizes = [1, 16, 512], strides = [1, 1, 1]} : vector<5x16x512xf32> to vector<1x16x512xf32>
    %29 = vector.shape_cast %28 : vector<1x16x512xf32> to vector<16x512xf32>
    %30 = vector.extract_strided_slice %19 {offsets = [3, 0, 0], sizes = [1, 16, 512], strides = [1, 1, 1]} : vector<5x16x512xf32> to vector<1x16x512xf32>
    %31 = vector.shape_cast %30 : vector<1x16x512xf32> to vector<16x512xf32>
    %32 = arith.addf %29, %31 : vector<16x512xf32>
    %c1_29 = arith.constant 1 : index
    %c0_30 = arith.constant 0 : index
    %c0_31 = arith.constant 0 : index
    %33 = vector.load %arg12[%c1_29, %c0_30, %c0_31] : memref<5x16x512xf32, #tpu.memory_space<vmem>>, vector<1x16x512xf32>
    %34 = vector.shape_cast %33 : vector<1x16x512xf32> to vector<16x512xf32>
    %35 = vector.shape_cast %32 : vector<16x512xf32> to vector<1x16x512xf32>
    tpu.vector_store %arg12[%c1_29, %c0_30, %c0_31], %35 {strides = array<i32>} : memref<5x16x512xf32, #tpu.memory_space<vmem>>, vector<1x16x512xf32>,
    %36 = vector.extract_strided_slice %17 {offsets = [2, 0, 0], sizes = [1, 16, 512], strides = [1, 1, 1]} : vector<5x16x512xf32> to vector<1x16x512xf32>
    %37 = vector.shape_cast %36 : vector<1x16x512xf32> to vector<16x512xf32>
    %38 = vector.extract_strided_slice %19 {offsets = [2, 0, 0], sizes = [1, 16, 512], strides = [1, 1, 1]} : vector<5x16x512xf32> to vector<1x16x512xf32>
    %39 = vector.shape_cast %38 : vector<1x16x512xf32> to vector<16x512xf32>
    %40 = arith.addf %37, %39 : vector<16x512xf32>
    %c2_32 = arith.constant 2 : index
    %c0_33 = arith.constant 0 : index
    %c0_34 = arith.constant 0 : index
    %41 = vector.load %arg12[%c2_32, %c0_33, %c0_34] : memref<5x16x512xf32, #tpu.memory_space<vmem>>, vector<1x16x512xf32>
    %42 = vector.shape_cast %41 : vector<1x16x512xf32> to vector<16x512xf32>
    %43 = vector.shape_cast %40 : vector<16x512xf32> to vector<1x16x512xf32>
    tpu.vector_store %arg12[%c2_32, %c0_33, %c0_34], %43 {strides = array<i32>} : memref<5x16x512xf32, #tpu.memory_space<vmem>>, vector<1x16x512xf32>,
    %44 = vector.extract_strided_slice %17 {offsets = [3, 0, 0], sizes = [1, 16, 512], strides = [1, 1, 1]} : vector<5x16x512xf32> to vector<1x16x512xf32>
    %45 = vector.shape_cast %44 : vector<1x16x512xf32> to vector<16x512xf32>
    %46 = vector.extract_strided_slice %19 {offsets = [1, 0, 0], sizes = [1, 16, 512], strides = [1, 1, 1]} : vector<5x16x512xf32> to vector<1x16x512xf32>
    %47 = vector.shape_cast %46 : vector<1x16x512xf32> to vector<16x512xf32>
    %48 = arith.addf %45, %47 : vector<16x512xf32>
    %c3 = arith.constant 3 : index
    %c0_35 = arith.constant 0 : index
    %c0_36 = arith.constant 0 : index
    %49 = vector.load %arg12[%c3, %c0_35, %c0_36] : memref<5x16x512xf32, #tpu.memory_space<vmem>>, vector<1x16x512xf32>
    %50 = vector.shape_cast %49 : vector<1x16x512xf32> to vector<16x512xf32>
    %51 = vector.shape_cast %48 : vector<16x512xf32> to vector<1x16x512xf32>
    tpu.vector_store %arg12[%c3, %c0_35, %c0_36], %51 {strides = array<i32>} : memref<5x16x512xf32, #tpu.memory_space<vmem>>, vector<1x16x512xf32>,
    %52 = vector.extract_strided_slice %17 {offsets = [4, 0, 0], sizes = [1, 16, 512], strides = [1, 1, 1]} : vector<5x16x512xf32> to vector<1x16x512xf32>
    %53 = vector.shape_cast %52 : vector<1x16x512xf32> to vector<16x512xf32>
    %54 = vector.extract_strided_slice %19 {offsets = [0, 0, 0], sizes = [1, 16, 512], strides = [1, 1, 1]} : vector<5x16x512xf32> to vector<1x16x512xf32>
    %55 = vector.shape_cast %54 : vector<1x16x512xf32> to vector<16x512xf32>
    %56 = arith.addf %53, %55 : vector<16x512xf32>
    %c4 = arith.constant 4 : index
    %c0_37 = arith.constant 0 : index
    %c0_38 = arith.constant 0 : index
    %57 = vector.load %arg12[%c4, %c0_37, %c0_38] : memref<5x16x512xf32, #tpu.memory_space<vmem>>, vector<1x16x512xf32>
    %58 = vector.shape_cast %57 : vector<1x16x512xf32> to vector<16x512xf32>
    %59 = vector.shape_cast %56 : vector<16x512xf32> to vector<1x16x512xf32>
    tpu.vector_store %arg12[%c4, %c0_37, %c0_38], %59 {strides = array<i32>} : memref<5x16x512xf32, #tpu.memory_space<vmem>>, vector<1x16x512xf32>,
    %cst_39 = arith.constant 0.000000e+00 : f32
    %60 = vector.broadcast %cst_39 : f32 to vector<16x128xf32>
    %cst_40 = arith.constant 0.000000e+00 : f32
    %61 = vector.broadcast %cst_40 : f32 to vector<16x128xf32>
    %c0_41 = arith.constant 0 : index
    %c0_42 = arith.constant 0 : index
    %c0_43 = arith.constant 0 : index
    %62 = vector.load %arg12[%c0_41, %c0_42, %c0_43] : memref<5x16x512xf32, #tpu.memory_space<vmem>>, vector<1x16x512xf32>
    %63 = vector.shape_cast %62 : vector<1x16x512xf32> to vector<16x512xf32>
    %64 = arith.truncf %60 : vector<16x128xf32> to vector<16x128xbf16>
    %cst_44 = arith.constant dense<0.000000e+00> : vector<16x512xf32>
    %65 = tpu.matmul %64, %11, %cst_44 {dimension_numbers = #tpu.dot_dimension_numbers<[1], [0], [0], [1], [0, 0, 1, 1], [], []>} : vector<16x128xbf16>, vector<128x512xbf16>, vector<16x512xf32> -> vector<16x512xf32>
    %66 = arith.addf %63, %65 : vector<16x512xf32>
    %67 = vector.extract_strided_slice %66 {offsets = [0, 0], sizes = [16, 128], strides = [1, 1]} : vector<16x512xf32> to vector<16x128xf32>
    %cst_45 = arith.constant 5.000000e-01 : f32
    %68 = vector.broadcast %cst_45 : f32 to vector<16x128xf32>
    %69 = arith.mulf %68, %67 : vector<16x128xf32>
    %70 = math.tanh %69 : vector<16x128xf32>
    %cst_46 = arith.constant 5.000000e-01 : f32
    %71 = vector.broadcast %cst_46 : f32 to vector<16x128xf32>
    %72 = arith.mulf %71, %70 : vector<16x128xf32>
    %cst_47 = arith.constant 5.000000e-01 : f32
    %73 = vector.broadcast %cst_47 : f32 to vector<16x128xf32>
    %74 = arith.addf %72, %73 : vector<16x128xf32>
    %75 = vector.extract_strided_slice %66 {offsets = [0, 128], sizes = [16, 128], strides = [1, 1]} : vector<16x512xf32> to vector<16x128xf32>
    %cst_48 = arith.constant 5.000000e-01 : f32
    %76 = vector.broadcast %cst_48 : f32 to vector<16x128xf32>
    %77 = arith.mulf %76, %75 : vector<16x128xf32>
    %78 = math.tanh %77 : vector<16x128xf32>
    %cst_49 = arith.constant 5.000000e-01 : f32
    %79 = vector.broadcast %cst_49 : f32 to vector<16x128xf32>
    %80 = arith.mulf %79, %78 : vector<16x128xf32>
    %cst_50 = arith.constant 5.000000e-01 : f32
    %81 = vector.broadcast %cst_50 : f32 to vector<16x128xf32>
    %82 = arith.addf %80, %81 : vector<16x128xf32>
    %83 = vector.extract_strided_slice %66 {offsets = [0, 256], sizes = [16, 128], strides = [1, 1]} : vector<16x512xf32> to vector<16x128xf32>
    %84 = math.tanh %83 : vector<16x128xf32>
    %85 = vector.extract_strided_slice %66 {offsets = [0, 384], sizes = [16, 128], strides = [1, 1]} : vector<16x512xf32> to vector<16x128xf32>
    %cst_51 = arith.constant 5.000000e-01 : f32
    %86 = vector.broadcast %cst_51 : f32 to vector<16x128xf32>
    %87 = arith.mulf %86, %85 : vector<16x128xf32>
    %88 = math.tanh %87 : vector<16x128xf32>
    %cst_52 = arith.constant 5.000000e-01 : f32
    %89 = vector.broadcast %cst_52 : f32 to vector<16x128xf32>
    %90 = arith.mulf %89, %88 : vector<16x128xf32>
    %cst_53 = arith.constant 5.000000e-01 : f32
    %91 = vector.broadcast %cst_53 : f32 to vector<16x128xf32>
    %92 = arith.addf %90, %91 : vector<16x128xf32>
    %93 = arith.mulf %82, %61 : vector<16x128xf32>
    %94 = arith.mulf %74, %84 : vector<16x128xf32>
    %95 = arith.addf %93, %94 : vector<16x128xf32>
    %96 = math.tanh %95 : vector<16x128xf32>
    %97 = arith.mulf %92, %96 : vector<16x128xf32>
    %98 = arith.truncf %97 : vector<16x128xf32> to vector<16x128xbf16>
    %c0_54 = arith.constant 0 : index
    %c0_55 = arith.constant 0 : index
    %c0_56 = arith.constant 0 : index
    %99 = vector.load %arg11[%c0_54, %c0_55, %c0_56] : memref<5x16x128xbf16, #tpu.memory_space<vmem>>, vector<1x16x128xbf16>
    %100 = vector.shape_cast %99 : vector<1x16x128xbf16> to vector<16x128xbf16>
    %101 = vector.shape_cast %98 : vector<16x128xbf16> to vector<1x16x128xbf16>
    tpu.vector_store %arg11[%c0_54, %c0_55, %c0_56], %101 {strides = array<i32>} : memref<5x16x128xbf16, #tpu.memory_space<vmem>>, vector<1x16x128xbf16>,
    %c1_57 = arith.constant 1 : index
    %c0_58 = arith.constant 0 : index
    %c0_59 = arith.constant 0 : index
    %102 = vector.load %arg12[%c1_57, %c0_58, %c0_59] : memref<5x16x512xf32, #tpu.memory_space<vmem>>, vector<1x16x512xf32>
    %103 = vector.shape_cast %102 : vector<1x16x512xf32> to vector<16x512xf32>
    %104 = arith.truncf %97 : vector<16x128xf32> to vector<16x128xbf16>
    %cst_60 = arith.constant dense<0.000000e+00> : vector<16x512xf32>
    %105 = tpu.matmul %104, %11, %cst_60 {dimension_numbers = #tpu.dot_dimension_numbers<[1], [0], [0], [1], [0, 0, 1, 1], [], []>} : vector<16x128xbf16>, vector<128x512xbf16>, vector<16x512xf32> -> vector<16x512xf32>
    %106 = arith.addf %103, %105 : vector<16x512xf32>
    %107 = vector.extract_strided_slice %106 {offsets = [0, 0], sizes = [16, 128], strides = [1, 1]} : vector<16x512xf32> to vector<16x128xf32>
    %cst_61 = arith.constant 5.000000e-01 : f32
    %108 = vector.broadcast %cst_61 : f32 to vector<16x128xf32>
    %109 = arith.mulf %108, %107 : vector<16x128xf32>
    %110 = math.tanh %109 : vector<16x128xf32>
    %cst_62 = arith.constant 5.000000e-01 : f32
    %111 = vector.broadcast %cst_62 : f32 to vector<16x128xf32>
    %112 = arith.mulf %111, %110 : vector<16x128xf32>
    %cst_63 = arith.constant 5.000000e-01 : f32
    %113 = vector.broadcast %cst_63 : f32 to vector<16x128xf32>
    %114 = arith.addf %112, %113 : vector<16x128xf32>
    %115 = vector.extract_strided_slice %106 {offsets = [0, 128], sizes = [16, 128], strides = [1, 1]} : vector<16x512xf32> to vector<16x128xf32>
    %cst_64 = arith.constant 5.000000e-01 : f32
    %116 = vector.broadcast %cst_64 : f32 to vector<16x128xf32>
    %117 = arith.mulf %116, %115 : vector<16x128xf32>
    %118 = math.tanh %117 : vector<16x128xf32>
    %cst_65 = arith.constant 5.000000e-01 : f32
    %119 = vector.broadcast %cst_65 : f32 to vector<16x128xf32>
    %120 = arith.mulf %119, %118 : vector<16x128xf32>
    %cst_66 = arith.constant 5.000000e-01 : f32
    %121 = vector.broadcast %cst_66 : f32 to vector<16x128xf32>
    %122 = arith.addf %120, %121 : vector<16x128xf32>
    %123 = vector.extract_strided_slice %106 {offsets = [0, 256], sizes = [16, 128], strides = [1, 1]} : vector<16x512xf32> to vector<16x128xf32>
    %124 = math.tanh %123 : vector<16x128xf32>
    %125 = vector.extract_strided_slice %106 {offsets = [0, 384], sizes = [16, 128], strides = [1, 1]} : vector<16x512xf32> to vector<16x128xf32>
    %cst_67 = arith.constant 5.000000e-01 : f32
    %126 = vector.broadcast %cst_67 : f32 to vector<16x128xf32>
    %127 = arith.mulf %126, %125 : vector<16x128xf32>
    %128 = math.tanh %127 : vector<16x128xf32>
    %cst_68 = arith.constant 5.000000e-01 : f32
    %129 = vector.broadcast %cst_68 : f32 to vector<16x128xf32>
    %130 = arith.mulf %129, %128 : vector<16x128xf32>
    %cst_69 = arith.constant 5.000000e-01 : f32
    %131 = vector.broadcast %cst_69 : f32 to vector<16x128xf32>
    %132 = arith.addf %130, %131 : vector<16x128xf32>
    %133 = arith.mulf %122, %95 : vector<16x128xf32>
    %134 = arith.mulf %114, %124 : vector<16x128xf32>
    %135 = arith.addf %133, %134 : vector<16x128xf32>
    %136 = math.tanh %135 : vector<16x128xf32>
    %137 = arith.mulf %132, %136 : vector<16x128xf32>
    %138 = arith.truncf %137 : vector<16x128xf32> to vector<16x128xbf16>
    %c1_70 = arith.constant 1 : index
    %c0_71 = arith.constant 0 : index
    %c0_72 = arith.constant 0 : index
    %139 = vector.load %arg11[%c1_70, %c0_71, %c0_72] : memref<5x16x128xbf16, #tpu.memory_space<vmem>>, vector<1x16x128xbf16>
    %140 = vector.shape_cast %139 : vector<1x16x128xbf16> to vector<16x128xbf16>
    %141 = vector.shape_cast %138 : vector<16x128xbf16> to vector<1x16x128xbf16>
    tpu.vector_store %arg11[%c1_70, %c0_71, %c0_72], %141 {strides = array<i32>} : memref<5x16x128xbf16, #tpu.memory_space<vmem>>, vector<1x16x128xbf16>,
    %c2_73 = arith.constant 2 : index
    %c0_74 = arith.constant 0 : index
    %c0_75 = arith.constant 0 : index
    %142 = vector.load %arg12[%c2_73, %c0_74, %c0_75] : memref<5x16x512xf32, #tpu.memory_space<vmem>>, vector<1x16x512xf32>
    %143 = vector.shape_cast %142 : vector<1x16x512xf32> to vector<16x512xf32>
    %144 = arith.truncf %137 : vector<16x128xf32> to vector<16x128xbf16>
    %cst_76 = arith.constant dense<0.000000e+00> : vector<16x512xf32>
    %145 = tpu.matmul %144, %11, %cst_76 {dimension_numbers = #tpu.dot_dimension_numbers<[1], [0], [0], [1], [0, 0, 1, 1], [], []>} : vector<16x128xbf16>, vector<128x512xbf16>, vector<16x512xf32> -> vector<16x512xf32>
    %146 = arith.addf %143, %145 : vector<16x512xf32>
    %147 = vector.extract_strided_slice %146 {offsets = [0, 0], sizes = [16, 128], strides = [1, 1]} : vector<16x512xf32> to vector<16x128xf32>
    %cst_77 = arith.constant 5.000000e-01 : f32
    %148 = vector.broadcast %cst_77 : f32 to vector<16x128xf32>
    %149 = arith.mulf %148, %147 : vector<16x128xf32>
    %150 = math.tanh %149 : vector<16x128xf32>
    %cst_78 = arith.constant 5.000000e-01 : f32
    %151 = vector.broadcast %cst_78 : f32 to vector<16x128xf32>
    %152 = arith.mulf %151, %150 : vector<16x128xf32>
    %cst_79 = arith.constant 5.000000e-01 : f32
    %153 = vector.broadcast %cst_79 : f32 to vector<16x128xf32>
    %154 = arith.addf %152, %153 : vector<16x128xf32>
    %155 = vector.extract_strided_slice %146 {offsets = [0, 128], sizes = [16, 128], strides = [1, 1]} : vector<16x512xf32> to vector<16x128xf32>
    %cst_80 = arith.constant 5.000000e-01 : f32
    %156 = vector.broadcast %cst_80 : f32 to vector<16x128xf32>
    %157 = arith.mulf %156, %155 : vector<16x128xf32>
    %158 = math.tanh %157 : vector<16x128xf32>
    %cst_81 = arith.constant 5.000000e-01 : f32
    %159 = vector.broadcast %cst_81 : f32 to vector<16x128xf32>
    %160 = arith.mulf %159, %158 : vector<16x128xf32>
    %cst_82 = arith.constant 5.000000e-01 : f32
    %161 = vector.broadcast %cst_82 : f32 to vector<16x128xf32>
    %162 = arith.addf %160, %161 : vector<16x128xf32>
    %163 = vector.extract_strided_slice %146 {offsets = [0, 256], sizes = [16, 128], strides = [1, 1]} : vector<16x512xf32> to vector<16x128xf32>
    %164 = math.tanh %163 : vector<16x128xf32>
    %165 = vector.extract_strided_slice %146 {offsets = [0, 384], sizes = [16, 128], strides = [1, 1]} : vector<16x512xf32> to vector<16x128xf32>
    %cst_83 = arith.constant 5.000000e-01 : f32
    %166 = vector.broadcast %cst_83 : f32 to vector<16x128xf32>
    %167 = arith.mulf %166, %165 : vector<16x128xf32>
    %168 = math.tanh %167 : vector<16x128xf32>
    %cst_84 = arith.constant 5.000000e-01 : f32
    %169 = vector.broadcast %cst_84 : f32 to vector<16x128xf32>
    %170 = arith.mulf %169, %168 : vector<16x128xf32>
    %cst_85 = arith.constant 5.000000e-01 : f32
    %171 = vector.broadcast %cst_85 : f32 to vector<16x128xf32>
    %172 = arith.addf %170, %171 : vector<16x128xf32>
    %173 = arith.mulf %162, %135 : vector<16x128xf32>
    %174 = arith.mulf %154, %164 : vector<16x128xf32>
    %175 = arith.addf %173, %174 : vector<16x128xf32>
    %176 = math.tanh %175 : vector<16x128xf32>
    %177 = arith.mulf %172, %176 : vector<16x128xf32>
    %178 = arith.truncf %177 : vector<16x128xf32> to vector<16x128xbf16>
    %c2_86 = arith.constant 2 : index
    %c0_87 = arith.constant 0 : index
    %c0_88 = arith.constant 0 : index
    %179 = vector.load %arg11[%c2_86, %c0_87, %c0_88] : memref<5x16x128xbf16, #tpu.memory_space<vmem>>, vector<1x16x128xbf16>
    %180 = vector.shape_cast %179 : vector<1x16x128xbf16> to vector<16x128xbf16>
    %181 = vector.shape_cast %178 : vector<16x128xbf16> to vector<1x16x128xbf16>
    tpu.vector_store %arg11[%c2_86, %c0_87, %c0_88], %181 {strides = array<i32>} : memref<5x16x128xbf16, #tpu.memory_space<vmem>>, vector<1x16x128xbf16>,
    %c3_89 = arith.constant 3 : index
    %c0_90 = arith.constant 0 : index
    %c0_91 = arith.constant 0 : index
    %182 = vector.load %arg12[%c3_89, %c0_90, %c0_91] : memref<5x16x512xf32, #tpu.memory_space<vmem>>, vector<1x16x512xf32>
    %183 = vector.shape_cast %182 : vector<1x16x512xf32> to vector<16x512xf32>
    %184 = arith.truncf %177 : vector<16x128xf32> to vector<16x128xbf16>
    %cst_92 = arith.constant dense<0.000000e+00> : vector<16x512xf32>
    %185 = tpu.matmul %184, %11, %cst_92 {dimension_numbers = #tpu.dot_dimension_numbers<[1], [0], [0], [1], [0, 0, 1, 1], [], []>} : vector<16x128xbf16>, vector<128x512xbf16>, vector<16x512xf32> -> vector<16x512xf32>
    %186 = arith.addf %183, %185 : vector<16x512xf32>
    %187 = vector.extract_strided_slice %186 {offsets = [0, 0], sizes = [16, 128], strides = [1, 1]} : vector<16x512xf32> to vector<16x128xf32>
    %cst_93 = arith.constant 5.000000e-01 : f32
    %188 = vector.broadcast %cst_93 : f32 to vector<16x128xf32>
    %189 = arith.mulf %188, %187 : vector<16x128xf32>
    %190 = math.tanh %189 : vector<16x128xf32>
    %cst_94 = arith.constant 5.000000e-01 : f32
    %191 = vector.broadcast %cst_94 : f32 to vector<16x128xf32>
    %192 = arith.mulf %191, %190 : vector<16x128xf32>
    %cst_95 = arith.constant 5.000000e-01 : f32
    %193 = vector.broadcast %cst_95 : f32 to vector<16x128xf32>
    %194 = arith.addf %192, %193 : vector<16x128xf32>
    %195 = vector.extract_strided_slice %186 {offsets = [0, 128], sizes = [16, 128], strides = [1, 1]} : vector<16x512xf32> to vector<16x128xf32>
    %cst_96 = arith.constant 5.000000e-01 : f32
    %196 = vector.broadcast %cst_96 : f32 to vector<16x128xf32>
    %197 = arith.mulf %196, %195 : vector<16x128xf32>
    %198 = math.tanh %197 : vector<16x128xf32>
    %cst_97 = arith.constant 5.000000e-01 : f32
    %199 = vector.broadcast %cst_97 : f32 to vector<16x128xf32>
    %200 = arith.mulf %199, %198 : vector<16x128xf32>
    %cst_98 = arith.constant 5.000000e-01 : f32
    %201 = vector.broadcast %cst_98 : f32 to vector<16x128xf32>
    %202 = arith.addf %200, %201 : vector<16x128xf32>
    %203 = vector.extract_strided_slice %186 {offsets = [0, 256], sizes = [16, 128], strides = [1, 1]} : vector<16x512xf32> to vector<16x128xf32>
    %204 = math.tanh %203 : vector<16x128xf32>
    %205 = vector.extract_strided_slice %186 {offsets = [0, 384], sizes = [16, 128], strides = [1, 1]} : vector<16x512xf32> to vector<16x128xf32>
    %cst_99 = arith.constant 5.000000e-01 : f32
    %206 = vector.broadcast %cst_99 : f32 to vector<16x128xf32>
    %207 = arith.mulf %206, %205 : vector<16x128xf32>
    %208 = math.tanh %207 : vector<16x128xf32>
    %cst_100 = arith.constant 5.000000e-01 : f32
    %209 = vector.broadcast %cst_100 : f32 to vector<16x128xf32>
    %210 = arith.mulf %209, %208 : vector<16x128xf32>
    %cst_101 = arith.constant 5.000000e-01 : f32
    %211 = vector.broadcast %cst_101 : f32 to vector<16x128xf32>
    %212 = arith.addf %210, %211 : vector<16x128xf32>
    %213 = arith.mulf %202, %175 : vector<16x128xf32>
    %214 = arith.mulf %194, %204 : vector<16x128xf32>
    %215 = arith.addf %213, %214 : vector<16x128xf32>
    %216 = math.tanh %215 : vector<16x128xf32>
    %217 = arith.mulf %212, %216 : vector<16x128xf32>
    %218 = arith.truncf %217 : vector<16x128xf32> to vector<16x128xbf16>
    %c3_102 = arith.constant 3 : index
    %c0_103 = arith.constant 0 : index
    %c0_104 = arith.constant 0 : index
    %219 = vector.load %arg11[%c3_102, %c0_103, %c0_104] : memref<5x16x128xbf16, #tpu.memory_space<vmem>>, vector<1x16x128xbf16>
    %220 = vector.shape_cast %219 : vector<1x16x128xbf16> to vector<16x128xbf16>
    %221 = vector.shape_cast %218 : vector<16x128xbf16> to vector<1x16x128xbf16>
    tpu.vector_store %arg11[%c3_102, %c0_103, %c0_104], %221 {strides = array<i32>} : memref<5x16x128xbf16, #tpu.memory_space<vmem>>, vector<1x16x128xbf16>,
    %c4_105 = arith.constant 4 : index
    %c0_106 = arith.constant 0 : index
    %c0_107 = arith.constant 0 : index
    %222 = vector.load %arg12[%c4_105, %c0_106, %c0_107] : memref<5x16x512xf32, #tpu.memory_space<vmem>>, vector<1x16x512xf32>
    %223 = vector.shape_cast %222 : vector<1x16x512xf32> to vector<16x512xf32>
    %224 = arith.truncf %217 : vector<16x128xf32> to vector<16x128xbf16>
    %cst_108 = arith.constant dense<0.000000e+00> : vector<16x512xf32>
    %225 = tpu.matmul %224, %11, %cst_108 {dimension_numbers = #tpu.dot_dimension_numbers<[1], [0], [0], [1], [0, 0, 1, 1], [], []>} : vector<16x128xbf16>, vector<128x512xbf16>, vector<16x512xf32> -> vector<16x512xf32>
    %226 = arith.addf %223, %225 : vector<16x512xf32>
    %227 = vector.extract_strided_slice %226 {offsets = [0, 0], sizes = [16, 128], strides = [1, 1]} : vector<16x512xf32> to vector<16x128xf32>
    %cst_109 = arith.constant 5.000000e-01 : f32
    %228 = vector.broadcast %cst_109 : f32 to vector<16x128xf32>
    %229 = arith.mulf %228, %227 : vector<16x128xf32>
    %230 = math.tanh %229 : vector<16x128xf32>
    %cst_110 = arith.constant 5.000000e-01 : f32
    %231 = vector.broadcast %cst_110 : f32 to vector<16x128xf32>
    %232 = arith.mulf %231, %230 : vector<16x128xf32>
    %cst_111 = arith.constant 5.000000e-01 : f32
    %233 = vector.broadcast %cst_111 : f32 to vector<16x128xf32>
    %234 = arith.addf %232, %233 : vector<16x128xf32>
    %235 = vector.extract_strided_slice %226 {offsets = [0, 128], sizes = [16, 128], strides = [1, 1]} : vector<16x512xf32> to vector<16x128xf32>
    %cst_112 = arith.constant 5.000000e-01 : f32
    %236 = vector.broadcast %cst_112 : f32 to vector<16x128xf32>
    %237 = arith.mulf %236, %235 : vector<16x128xf32>
    %238 = math.tanh %237 : vector<16x128xf32>
    %cst_113 = arith.constant 5.000000e-01 : f32
    %239 = vector.broadcast %cst_113 : f32 to vector<16x128xf32>
    %240 = arith.mulf %239, %238 : vector<16x128xf32>
    %cst_114 = arith.constant 5.000000e-01 : f32
    %241 = vector.broadcast %cst_114 : f32 to vector<16x128xf32>
    %242 = arith.addf %240, %241 : vector<16x128xf32>
    %243 = vector.extract_strided_slice %226 {offsets = [0, 256], sizes = [16, 128], strides = [1, 1]} : vector<16x512xf32> to vector<16x128xf32>
    %244 = math.tanh %243 : vector<16x128xf32>
    %245 = vector.extract_strided_slice %226 {offsets = [0, 384], sizes = [16, 128], strides = [1, 1]} : vector<16x512xf32> to vector<16x128xf32>
    %cst_115 = arith.constant 5.000000e-01 : f32
    %246 = vector.broadcast %cst_115 : f32 to vector<16x128xf32>
    %247 = arith.mulf %246, %245 : vector<16x128xf32>
    %248 = math.tanh %247 : vector<16x128xf32>
    %cst_116 = arith.constant 5.000000e-01 : f32
    %249 = vector.broadcast %cst_116 : f32 to vector<16x128xf32>
    %250 = arith.mulf %249, %248 : vector<16x128xf32>
    %cst_117 = arith.constant 5.000000e-01 : f32
    %251 = vector.broadcast %cst_117 : f32 to vector<16x128xf32>
    %252 = arith.addf %250, %251 : vector<16x128xf32>
    %253 = arith.mulf %242, %215 : vector<16x128xf32>
    %254 = arith.mulf %234, %244 : vector<16x128xf32>
    %255 = arith.addf %253, %254 : vector<16x128xf32>
    %256 = math.tanh %255 : vector<16x128xf32>
    %257 = arith.mulf %252, %256 : vector<16x128xf32>
    %258 = arith.truncf %257 : vector<16x128xf32> to vector<16x128xbf16>
    %c4_118 = arith.constant 4 : index
    %c0_119 = arith.constant 0 : index
    %c0_120 = arith.constant 0 : index
    %259 = vector.load %arg11[%c4_118, %c0_119, %c0_120] : memref<5x16x128xbf16, #tpu.memory_space<vmem>>, vector<1x16x128xbf16>
    %260 = vector.shape_cast %259 : vector<1x16x128xbf16> to vector<16x128xbf16>
    %261 = vector.shape_cast %258 : vector<16x128xbf16> to vector<1x16x128xbf16>
    tpu.vector_store %arg11[%c4_118, %c0_119, %c0_120], %261 {strides = array<i32>} : memref<5x16x128xbf16, #tpu.memory_space<vmem>>, vector<1x16x128xbf16>,
    %c0_121 = arith.constant 0 : index
    %c0_122 = arith.constant 0 : index
    %c0_123 = arith.constant 0 : index
    %262 = vector.load %arg11[%c0_121, %c0_122, %c0_123] : memref<5x16x128xbf16, #tpu.memory_space<vmem>>, vector<5x16x128xbf16>
    %263 = vector.shape_cast %262 : vector<5x16x128xbf16> to vector<80x128xbf16>
    %c1_124 = arith.constant 1 : index
    %c0_125 = arith.constant 0 : index
    %c0_126 = arith.constant 0 : index
    %c0_127 = arith.constant 0 : index
    %264 = vector.load %arg2[%c1_124, %c0_125, %c0_126, %c0_127] : memref<3x3x128x512xbf16, #tpu.memory_space<vmem>>, vector<1x1x128x512xbf16>
    %265 = vector.shape_cast %264 : vector<1x1x128x512xbf16> to vector<128x512xbf16>
    %c1_128 = arith.constant 1 : index
    %c1_129 = arith.constant 1 : index
    %c0_130 = arith.constant 0 : index
    %c0_131 = arith.constant 0 : index
    %266 = vector.load %arg2[%c1_128, %c1_129, %c0_130, %c0_131] : memref<3x3x128x512xbf16, #tpu.memory_space<vmem>>, vector<1x1x128x512xbf16>
    %267 = vector.shape_cast %266 : vector<1x1x128x512xbf16> to vector<128x512xbf16>
    %c1_132 = arith.constant 1 : index
    %c2_133 = arith.constant 2 : index
    %c0_134 = arith.constant 0 : index
    %c0_135 = arith.constant 0 : index
    %268 = vector.load %arg2[%c1_132, %c2_133, %c0_134, %c0_135] : memref<3x3x128x512xbf16, #tpu.memory_space<vmem>>, vector<1x1x128x512xbf16>
    %269 = vector.shape_cast %268 : vector<1x1x128x512xbf16> to vector<128x512xbf16>
    %cst_136 = arith.constant dense<0.000000e+00> : vector<80x512xf32>
    %270 = tpu.matmul %263, %265, %cst_136 {dimension_numbers = #tpu.dot_dimension_numbers<[1], [0], [0], [1], [0, 0, 1, 1], [], []>} : vector<80x128xbf16>, vector<128x512xbf16>, vector<80x512xf32> -> vector<80x512xf32>
    %c1_137 = arith.constant 1 : index
    %c0_138 = arith.constant 0 : index
    %c0_139 = arith.constant 0 : index
    %271 = vector.load %arg3[%c1_137, %c0_138, %c0_139] : memref<3x1x512xf32, #tpu.memory_space<vmem>>, vector<1x1x512xf32>
    %272 = vector.shape_cast %271 : vector<1x1x512xf32> to vector<1x512xf32>
    %273 = vector.broadcast %272 : vector<1x512xf32> to vector<80x512xf32>
    %274 = arith.addf %270, %273 : vector<80x512xf32>
    %275 = vector.shape_cast %274 : vector<80x512xf32> to vector<5x16x512xf32>
    %cst_140 = arith.constant dense<0.000000e+00> : vector<80x512xf32>
    %276 = tpu.matmul %263, %267, %cst_140 {dimension_numbers = #tpu.dot_dimension_numbers<[1], [0], [0], [1], [0, 0, 1, 1], [], []>} : vector<80x128xbf16>, vector<128x512xbf16>, vector<80x512xf32> -> vector<80x512xf32>
    %277 = vector.shape_cast %276 : vector<80x512xf32> to vector<5x16x512xf32>
    %278 = vector.extract_strided_slice %275 {offsets = [0, 0, 0], sizes = [1, 16, 512], strides = [1, 1, 1]} : vector<5x16x512xf32> to vector<1x16x512xf32>
    %279 = vector.shape_cast %278 : vector<1x16x512xf32> to vector<16x512xf32>
    %280 = vector.extract_strided_slice %277 {offsets = [4, 0, 0], sizes = [1, 16, 512], strides = [1, 1, 1]} : vector<5x16x512xf32> to vector<1x16x512xf32>
    %281 = vector.shape_cast %280 : vector<1x16x512xf32> to vector<16x512xf32>
    %282 = arith.addf %279, %281 : vector<16x512xf32>
    %c0_141 = arith.constant 0 : index
    %c0_142 = arith.constant 0 : index
    %c0_143 = arith.constant 0 : index
    %283 = vector.load %arg12[%c0_141, %c0_142, %c0_143] : memref<5x16x512xf32, #tpu.memory_space<vmem>>, vector<1x16x512xf32>
    %284 = vector.shape_cast %283 : vector<1x16x512xf32> to vector<16x512xf32>
    %285 = vector.shape_cast %282 : vector<16x512xf32> to vector<1x16x512xf32>
    tpu.vector_store %arg12[%c0_141, %c0_142, %c0_143], %285 {strides = array<i32>} : memref<5x16x512xf32, #tpu.memory_space<vmem>>, vector<1x16x512xf32>,
    %286 = vector.extract_strided_slice %275 {offsets = [1, 0, 0], sizes = [1, 16, 512], strides = [1, 1, 1]} : vector<5x16x512xf32> to vector<1x16x512xf32>
    %287 = vector.shape_cast %286 : vector<1x16x512xf32> to vector<16x512xf32>
    %288 = vector.extract_strided_slice %277 {offsets = [3, 0, 0], sizes = [1, 16, 512], strides = [1, 1, 1]} : vector<5x16x512xf32> to vector<1x16x512xf32>
    %289 = vector.shape_cast %288 : vector<1x16x512xf32> to vector<16x512xf32>
    %290 = arith.addf %287, %289 : vector<16x512xf32>
    %c1_144 = arith.constant 1 : index
    %c0_145 = arith.constant 0 : index
    %c0_146 = arith.constant 0 : index
    %291 = vector.load %arg12[%c1_144, %c0_145, %c0_146] : memref<5x16x512xf32, #tpu.memory_space<vmem>>, vector<1x16x512xf32>
    %292 = vector.shape_cast %291 : vector<1x16x512xf32> to vector<16x512xf32>
    %293 = vector.shape_cast %290 : vector<16x512xf32> to vector<1x16x512xf32>
    tpu.vector_store %arg12[%c1_144, %c0_145, %c0_146], %293 {strides = array<i32>} : memref<5x16x512xf32, #tpu.memory_space<vmem>>, vector<1x16x512xf32>,
    %294 = vector.extract_strided_slice %275 {offsets = [2, 0, 0], sizes = [1, 16, 512], strides = [1, 1, 1]} : vector<5x16x512xf32> to vector<1x16x512xf32>
    %295 = vector.shape_cast %294 : vector<1x16x512xf32> to vector<16x512xf32>
    %296 = vector.extract_strided_slice %277 {offsets = [2, 0, 0], sizes = [1, 16, 512], strides = [1, 1, 1]} : vector<5x16x512xf32> to vector<1x16x512xf32>
    %297 = vector.shape_cast %296 : vector<1x16x512xf32> to vector<16x512xf32>
    %298 = arith.addf %295, %297 : vector<16x512xf32>
    %c2_147 = arith.constant 2 : index
    %c0_148 = arith.constant 0 : index
    %c0_149 = arith.constant 0 : index
    %299 = vector.load %arg12[%c2_147, %c0_148, %c0_149] : memref<5x16x512xf32, #tpu.memory_space<vmem>>, vector<1x16x512xf32>
    %300 = vector.shape_cast %299 : vector<1x16x512xf32> to vector<16x512xf32>
    %301 = vector.shape_cast %298 : vector<16x512xf32> to vector<1x16x512xf32>
    tpu.vector_store %arg12[%c2_147, %c0_148, %c0_149], %301 {strides = array<i32>} : memref<5x16x512xf32, #tpu.memory_space<vmem>>, vector<1x16x512xf32>,
    %302 = vector.extract_strided_slice %275 {offsets = [3, 0, 0], sizes = [1, 16, 512], strides = [1, 1, 1]} : vector<5x16x512xf32> to vector<1x16x512xf32>
    %303 = vector.shape_cast %302 : vector<1x16x512xf32> to vector<16x512xf32>
    %304 = vector.extract_strided_slice %277 {offsets = [1, 0, 0], sizes = [1, 16, 512], strides = [1, 1, 1]} : vector<5x16x512xf32> to vector<1x16x512xf32>
    %305 = vector.shape_cast %304 : vector<1x16x512xf32> to vector<16x512xf32>
    %306 = arith.addf %303, %305 : vector<16x512xf32>
    %c3_150 = arith.constant 3 : index
    %c0_151 = arith.constant 0 : index
    %c0_152 = arith.constant 0 : index
    %307 = vector.load %arg12[%c3_150, %c0_151, %c0_152] : memref<5x16x512xf32, #tpu.memory_space<vmem>>, vector<1x16x512xf32>
    %308 = vector.shape_cast %307 : vector<1x16x512xf32> to vector<16x512xf32>
    %309 = vector.shape_cast %306 : vector<16x512xf32> to vector<1x16x512xf32>
    tpu.vector_store %arg12[%c3_150, %c0_151, %c0_152], %309 {strides = array<i32>} : memref<5x16x512xf32, #tpu.memory_space<vmem>>, vector<1x16x512xf32>,
    %310 = vector.extract_strided_slice %275 {offsets = [4, 0, 0], sizes = [1, 16, 512], strides = [1, 1, 1]} : vector<5x16x512xf32> to vector<1x16x512xf32>
    %311 = vector.shape_cast %310 : vector<1x16x512xf32> to vector<16x512xf32>
    %312 = vector.extract_strided_slice %277 {offsets = [0, 0, 0], sizes = [1, 16, 512], strides = [1, 1, 1]} : vector<5x16x512xf32> to vector<1x16x512xf32>
    %313 = vector.shape_cast %312 : vector<1x16x512xf32> to vector<16x512xf32>
    %314 = arith.addf %311, %313 : vector<16x512xf32>
    %c4_153 = arith.constant 4 : index
    %c0_154 = arith.constant 0 : index
    %c0_155 = arith.constant 0 : index
    %315 = vector.load %arg12[%c4_153, %c0_154, %c0_155] : memref<5x16x512xf32, #tpu.memory_space<vmem>>, vector<1x16x512xf32>
    %316 = vector.shape_cast %315 : vector<1x16x512xf32> to vector<16x512xf32>
    %317 = vector.shape_cast %314 : vector<16x512xf32> to vector<1x16x512xf32>
    tpu.vector_store %arg12[%c4_153, %c0_154, %c0_155], %317 {strides = array<i32>} : memref<5x16x512xf32, #tpu.memory_space<vmem>>, vector<1x16x512xf32>,
    %cst_156 = arith.constant 0.000000e+00 : f32
    %318 = vector.broadcast %cst_156 : f32 to vector<16x128xf32>
    %cst_157 = arith.constant 0.000000e+00 : f32
    %319 = vector.broadcast %cst_157 : f32 to vector<16x128xf32>
    %c0_158 = arith.constant 0 : index
    %c0_159 = arith.constant 0 : index
    %c0_160 = arith.constant 0 : index
    %320 = vector.load %arg12[%c0_158, %c0_159, %c0_160] : memref<5x16x512xf32, #tpu.memory_space<vmem>>, vector<1x16x512xf32>
    %321 = vector.shape_cast %320 : vector<1x16x512xf32> to vector<16x512xf32>
    %322 = arith.truncf %318 : vector<16x128xf32> to vector<16x128xbf16>
    %cst_161 = arith.constant dense<0.000000e+00> : vector<16x512xf32>
    %323 = tpu.matmul %322, %269, %cst_161 {dimension_numbers = #tpu.dot_dimension_numbers<[1], [0], [0], [1], [0, 0, 1, 1], [], []>} : vector<16x128xbf16>, vector<128x512xbf16>, vector<16x512xf32> -> vector<16x512xf32>
    %324 = arith.addf %321, %323 : vector<16x512xf32>
    %325 = vector.extract_strided_slice %324 {offsets = [0, 0], sizes = [16, 128], strides = [1, 1]} : vector<16x512xf32> to vector<16x128xf32>
    %cst_162 = arith.constant 5.000000e-01 : f32
    %326 = vector.broadcast %cst_162 : f32 to vector<16x128xf32>
    %327 = arith.mulf %326, %325 : vector<16x128xf32>
    %328 = math.tanh %327 : vector<16x128xf32>
    %cst_163 = arith.constant 5.000000e-01 : f32
    %329 = vector.broadcast %cst_163 : f32 to vector<16x128xf32>
    %330 = arith.mulf %329, %328 : vector<16x128xf32>
    %cst_164 = arith.constant 5.000000e-01 : f32
    %331 = vector.broadcast %cst_164 : f32 to vector<16x128xf32>
    %332 = arith.addf %330, %331 : vector<16x128xf32>
    %333 = vector.extract_strided_slice %324 {offsets = [0, 128], sizes = [16, 128], strides = [1, 1]} : vector<16x512xf32> to vector<16x128xf32>
    %cst_165 = arith.constant 5.000000e-01 : f32
    %334 = vector.broadcast %cst_165 : f32 to vector<16x128xf32>
    %335 = arith.mulf %334, %333 : vector<16x128xf32>
    %336 = math.tanh %335 : vector<16x128xf32>
    %cst_166 = arith.constant 5.000000e-01 : f32
    %337 = vector.broadcast %cst_166 : f32 to vector<16x128xf32>
    %338 = arith.mulf %337, %336 : vector<16x128xf32>
    %cst_167 = arith.constant 5.000000e-01 : f32
    %339 = vector.broadcast %cst_167 : f32 to vector<16x128xf32>
    %340 = arith.addf %338, %339 : vector<16x128xf32>
    %341 = vector.extract_strided_slice %324 {offsets = [0, 256], sizes = [16, 128], strides = [1, 1]} : vector<16x512xf32> to vector<16x128xf32>
    %342 = math.tanh %341 : vector<16x128xf32>
    %343 = vector.extract_strided_slice %324 {offsets = [0, 384], sizes = [16, 128], strides = [1, 1]} : vector<16x512xf32> to vector<16x128xf32>
    %cst_168 = arith.constant 5.000000e-01 : f32
    %344 = vector.broadcast %cst_168 : f32 to vector<16x128xf32>
    %345 = arith.mulf %344, %343 : vector<16x128xf32>
    %346 = math.tanh %345 : vector<16x128xf32>
    %cst_169 = arith.constant 5.000000e-01 : f32
    %347 = vector.broadcast %cst_169 : f32 to vector<16x128xf32>
    %348 = arith.mulf %347, %346 : vector<16x128xf32>
    %cst_170 = arith.constant 5.000000e-01 : f32
    %349 = vector.broadcast %cst_170 : f32 to vector<16x128xf32>
    %350 = arith.addf %348, %349 : vector<16x128xf32>
    %351 = arith.mulf %340, %319 : vector<16x128xf32>
    %352 = arith.mulf %332, %342 : vector<16x128xf32>
    %353 = arith.addf %351, %352 : vector<16x128xf32>
    %354 = math.tanh %353 : vector<16x128xf32>
    %355 = arith.mulf %350, %354 : vector<16x128xf32>
    %356 = arith.truncf %355 : vector<16x128xf32> to vector<16x128xbf16>
    %c0_171 = arith.constant 0 : index
    %c0_172 = arith.constant 0 : index
    %c0_173 = arith.constant 0 : index
    %357 = vector.load %arg11[%c0_171, %c0_172, %c0_173] : memref<5x16x128xbf16, #tpu.memory_space<vmem>>, vector<1x16x128xbf16>
    %358 = vector.shape_cast %357 : vector<1x16x128xbf16> to vector<16x128xbf16>
    %359 = vector.shape_cast %356 : vector<16x128xbf16> to vector<1x16x128xbf16>
    tpu.vector_store %arg11[%c0_171, %c0_172, %c0_173], %359 {strides = array<i32>} : memref<5x16x128xbf16, #tpu.memory_space<vmem>>, vector<1x16x128xbf16>,
    %c1_174 = arith.constant 1 : index
    %c0_175 = arith.constant 0 : index
    %c0_176 = arith.constant 0 : index
    %360 = vector.load %arg12[%c1_174, %c0_175, %c0_176] : memref<5x16x512xf32, #tpu.memory_space<vmem>>, vector<1x16x512xf32>
    %361 = vector.shape_cast %360 : vector<1x16x512xf32> to vector<16x512xf32>
    %362 = arith.truncf %355 : vector<16x128xf32> to vector<16x128xbf16>
    %cst_177 = arith.constant dense<0.000000e+00> : vector<16x512xf32>
    %363 = tpu.matmul %362, %269, %cst_177 {dimension_numbers = #tpu.dot_dimension_numbers<[1], [0], [0], [1], [0, 0, 1, 1], [], []>} : vector<16x128xbf16>, vector<128x512xbf16>, vector<16x512xf32> -> vector<16x512xf32>
    %364 = arith.addf %361, %363 : vector<16x512xf32>
    %365 = vector.extract_strided_slice %364 {offsets = [0, 0], sizes = [16, 128], strides = [1, 1]} : vector<16x512xf32> to vector<16x128xf32>
    %cst_178 = arith.constant 5.000000e-01 : f32
    %366 = vector.broadcast %cst_178 : f32 to vector<16x128xf32>
    %367 = arith.mulf %366, %365 : vector<16x128xf32>
    %368 = math.tanh %367 : vector<16x128xf32>
    %cst_179 = arith.constant 5.000000e-01 : f32
    %369 = vector.broadcast %cst_179 : f32 to vector<16x128xf32>
    %370 = arith.mulf %369, %368 : vector<16x128xf32>
    %cst_180 = arith.constant 5.000000e-01 : f32
    %371 = vector.broadcast %cst_180 : f32 to vector<16x128xf32>
    %372 = arith.addf %370, %371 : vector<16x128xf32>
    %373 = vector.extract_strided_slice %364 {offsets = [0, 128], sizes = [16, 128], strides = [1, 1]} : vector<16x512xf32> to vector<16x128xf32>
    %cst_181 = arith.constant 5.000000e-01 : f32
    %374 = vector.broadcast %cst_181 : f32 to vector<16x128xf32>
    %375 = arith.mulf %374, %373 : vector<16x128xf32>
    %376 = math.tanh %375 : vector<16x128xf32>
    %cst_182 = arith.constant 5.000000e-01 : f32
    %377 = vector.broadcast %cst_182 : f32 to vector<16x128xf32>
    %378 = arith.mulf %377, %376 : vector<16x128xf32>
    %cst_183 = arith.constant 5.000000e-01 : f32
    %379 = vector.broadcast %cst_183 : f32 to vector<16x128xf32>
    %380 = arith.addf %378, %379 : vector<16x128xf32>
    %381 = vector.extract_strided_slice %364 {offsets = [0, 256], sizes = [16, 128], strides = [1, 1]} : vector<16x512xf32> to vector<16x128xf32>
    %382 = math.tanh %381 : vector<16x128xf32>
    %383 = vector.extract_strided_slice %364 {offsets = [0, 384], sizes = [16, 128], strides = [1, 1]} : vector<16x512xf32> to vector<16x128xf32>
    %cst_184 = arith.constant 5.000000e-01 : f32
    %384 = vector.broadcast %cst_184 : f32 to vector<16x128xf32>
    %385 = arith.mulf %384, %383 : vector<16x128xf32>
    %386 = math.tanh %385 : vector<16x128xf32>
    %cst_185 = arith.constant 5.000000e-01 : f32
    %387 = vector.broadcast %cst_185 : f32 to vector<16x128xf32>
    %388 = arith.mulf %387, %386 : vector<16x128xf32>
    %cst_186 = arith.constant 5.000000e-01 : f32
    %389 = vector.broadcast %cst_186 : f32 to vector<16x128xf32>
    %390 = arith.addf %388, %389 : vector<16x128xf32>
    %391 = arith.mulf %380, %353 : vector<16x128xf32>
    %392 = arith.mulf %372, %382 : vector<16x128xf32>
    %393 = arith.addf %391, %392 : vector<16x128xf32>
    %394 = math.tanh %393 : vector<16x128xf32>
    %395 = arith.mulf %390, %394 : vector<16x128xf32>
    %396 = arith.truncf %395 : vector<16x128xf32> to vector<16x128xbf16>
    %c1_187 = arith.constant 1 : index
    %c0_188 = arith.constant 0 : index
    %c0_189 = arith.constant 0 : index
    %397 = vector.load %arg11[%c1_187, %c0_188, %c0_189] : memref<5x16x128xbf16, #tpu.memory_space<vmem>>, vector<1x16x128xbf16>
    %398 = vector.shape_cast %397 : vector<1x16x128xbf16> to vector<16x128xbf16>
    %399 = vector.shape_cast %396 : vector<16x128xbf16> to vector<1x16x128xbf16>
    tpu.vector_store %arg11[%c1_187, %c0_188, %c0_189], %399 {strides = array<i32>} : memref<5x16x128xbf16, #tpu.memory_space<vmem>>, vector<1x16x128xbf16>,
    %c2_190 = arith.constant 2 : index
    %c0_191 = arith.constant 0 : index
    %c0_192 = arith.constant 0 : index
    %400 = vector.load %arg12[%c2_190, %c0_191, %c0_192] : memref<5x16x512xf32, #tpu.memory_space<vmem>>, vector<1x16x512xf32>
    %401 = vector.shape_cast %400 : vector<1x16x512xf32> to vector<16x512xf32>
    %402 = arith.truncf %395 : vector<16x128xf32> to vector<16x128xbf16>
    %cst_193 = arith.constant dense<0.000000e+00> : vector<16x512xf32>
    %403 = tpu.matmul %402, %269, %cst_193 {dimension_numbers = #tpu.dot_dimension_numbers<[1], [0], [0], [1], [0, 0, 1, 1], [], []>} : vector<16x128xbf16>, vector<128x512xbf16>, vector<16x512xf32> -> vector<16x512xf32>
    %404 = arith.addf %401, %403 : vector<16x512xf32>
    %405 = vector.extract_strided_slice %404 {offsets = [0, 0], sizes = [16, 128], strides = [1, 1]} : vector<16x512xf32> to vector<16x128xf32>
    %cst_194 = arith.constant 5.000000e-01 : f32
    %406 = vector.broadcast %cst_194 : f32 to vector<16x128xf32>
    %407 = arith.mulf %406, %405 : vector<16x128xf32>
    %408 = math.tanh %407 : vector<16x128xf32>
    %cst_195 = arith.constant 5.000000e-01 : f32
    %409 = vector.broadcast %cst_195 : f32 to vector<16x128xf32>
    %410 = arith.mulf %409, %408 : vector<16x128xf32>
    %cst_196 = arith.constant 5.000000e-01 : f32
    %411 = vector.broadcast %cst_196 : f32 to vector<16x128xf32>
    %412 = arith.addf %410, %411 : vector<16x128xf32>
    %413 = vector.extract_strided_slice %404 {offsets = [0, 128], sizes = [16, 128], strides = [1, 1]} : vector<16x512xf32> to vector<16x128xf32>
    %cst_197 = arith.constant 5.000000e-01 : f32
    %414 = vector.broadcast %cst_197 : f32 to vector<16x128xf32>
    %415 = arith.mulf %414, %413 : vector<16x128xf32>
    %416 = math.tanh %415 : vector<16x128xf32>
    %cst_198 = arith.constant 5.000000e-01 : f32
    %417 = vector.broadcast %cst_198 : f32 to vector<16x128xf32>
    %418 = arith.mulf %417, %416 : vector<16x128xf32>
    %cst_199 = arith.constant 5.000000e-01 : f32
    %419 = vector.broadcast %cst_199 : f32 to vector<16x128xf32>
    %420 = arith.addf %418, %419 : vector<16x128xf32>
    %421 = vector.extract_strided_slice %404 {offsets = [0, 256], sizes = [16, 128], strides = [1, 1]} : vector<16x512xf32> to vector<16x128xf32>
    %422 = math.tanh %421 : vector<16x128xf32>
    %423 = vector.extract_strided_slice %404 {offsets = [0, 384], sizes = [16, 128], strides = [1, 1]} : vector<16x512xf32> to vector<16x128xf32>
    %cst_200 = arith.constant 5.000000e-01 : f32
    %424 = vector.broadcast %cst_200 : f32 to vector<16x128xf32>
    %425 = arith.mulf %424, %423 : vector<16x128xf32>
    %426 = math.tanh %425 : vector<16x128xf32>
    %cst_201 = arith.constant 5.000000e-01 : f32
    %427 = vector.broadcast %cst_201 : f32 to vector<16x128xf32>
    %428 = arith.mulf %427, %426 : vector<16x128xf32>
    %cst_202 = arith.constant 5.000000e-01 : f32
    %429 = vector.broadcast %cst_202 : f32 to vector<16x128xf32>
    %430 = arith.addf %428, %429 : vector<16x128xf32>
    %431 = arith.mulf %420, %393 : vector<16x128xf32>
    %432 = arith.mulf %412, %422 : vector<16x128xf32>
    %433 = arith.addf %431, %432 : vector<16x128xf32>
    %434 = math.tanh %433 : vector<16x128xf32>
    %435 = arith.mulf %430, %434 : vector<16x128xf32>
    %436 = arith.truncf %435 : vector<16x128xf32> to vector<16x128xbf16>
    %c2_203 = arith.constant 2 : index
    %c0_204 = arith.constant 0 : index
    %c0_205 = arith.constant 0 : index
    %437 = vector.load %arg11[%c2_203, %c0_204, %c0_205] : memref<5x16x128xbf16, #tpu.memory_space<vmem>>, vector<1x16x128xbf16>
    %438 = vector.shape_cast %437 : vector<1x16x128xbf16> to vector<16x128xbf16>
    %439 = vector.shape_cast %436 : vector<16x128xbf16> to vector<1x16x128xbf16>
    tpu.vector_store %arg11[%c2_203, %c0_204, %c0_205], %439 {strides = array<i32>} : memref<5x16x128xbf16, #tpu.memory_space<vmem>>, vector<1x16x128xbf16>,
    %c3_206 = arith.constant 3 : index
    %c0_207 = arith.constant 0 : index
    %c0_208 = arith.constant 0 : index
    %440 = vector.load %arg12[%c3_206, %c0_207, %c0_208] : memref<5x16x512xf32, #tpu.memory_space<vmem>>, vector<1x16x512xf32>
    %441 = vector.shape_cast %440 : vector<1x16x512xf32> to vector<16x512xf32>
    %442 = arith.truncf %435 : vector<16x128xf32> to vector<16x128xbf16>
    %cst_209 = arith.constant dense<0.000000e+00> : vector<16x512xf32>
    %443 = tpu.matmul %442, %269, %cst_209 {dimension_numbers = #tpu.dot_dimension_numbers<[1], [0], [0], [1], [0, 0, 1, 1], [], []>} : vector<16x128xbf16>, vector<128x512xbf16>, vector<16x512xf32> -> vector<16x512xf32>
    %444 = arith.addf %441, %443 : vector<16x512xf32>
    %445 = vector.extract_strided_slice %444 {offsets = [0, 0], sizes = [16, 128], strides = [1, 1]} : vector<16x512xf32> to vector<16x128xf32>
    %cst_210 = arith.constant 5.000000e-01 : f32
    %446 = vector.broadcast %cst_210 : f32 to vector<16x128xf32>
    %447 = arith.mulf %446, %445 : vector<16x128xf32>
    %448 = math.tanh %447 : vector<16x128xf32>
    %cst_211 = arith.constant 5.000000e-01 : f32
    %449 = vector.broadcast %cst_211 : f32 to vector<16x128xf32>
    %450 = arith.mulf %449, %448 : vector<16x128xf32>
    %cst_212 = arith.constant 5.000000e-01 : f32
    %451 = vector.broadcast %cst_212 : f32 to vector<16x128xf32>
    %452 = arith.addf %450, %451 : vector<16x128xf32>
    %453 = vector.extract_strided_slice %444 {offsets = [0, 128], sizes = [16, 128], strides = [1, 1]} : vector<16x512xf32> to vector<16x128xf32>
    %cst_213 = arith.constant 5.000000e-01 : f32
    %454 = vector.broadcast %cst_213 : f32 to vector<16x128xf32>
    %455 = arith.mulf %454, %453 : vector<16x128xf32>
    %456 = math.tanh %455 : vector<16x128xf32>
    %cst_214 = arith.constant 5.000000e-01 : f32
    %457 = vector.broadcast %cst_214 : f32 to vector<16x128xf32>
    %458 = arith.mulf %457, %456 : vector<16x128xf32>
    %cst_215 = arith.constant 5.000000e-01 : f32
    %459 = vector.broadcast %cst_215 : f32 to vector<16x128xf32>
    %460 = arith.addf %458, %459 : vector<16x128xf32>
    %461 = vector.extract_strided_slice %444 {offsets = [0, 256], sizes = [16, 128], strides = [1, 1]} : vector<16x512xf32> to vector<16x128xf32>
    %462 = math.tanh %461 : vector<16x128xf32>
    %463 = vector.extract_strided_slice %444 {offsets = [0, 384], sizes = [16, 128], strides = [1, 1]} : vector<16x512xf32> to vector<16x128xf32>
    %cst_216 = arith.constant 5.000000e-01 : f32
    %464 = vector.broadcast %cst_216 : f32 to vector<16x128xf32>
    %465 = arith.mulf %464, %463 : vector<16x128xf32>
    %466 = math.tanh %465 : vector<16x128xf32>
    %cst_217 = arith.constant 5.000000e-01 : f32
    %467 = vector.broadcast %cst_217 : f32 to vector<16x128xf32>
    %468 = arith.mulf %467, %466 : vector<16x128xf32>
    %cst_218 = arith.constant 5.000000e-01 : f32
    %469 = vector.broadcast %cst_218 : f32 to vector<16x128xf32>
    %470 = arith.addf %468, %469 : vector<16x128xf32>
    %471 = arith.mulf %460, %433 : vector<16x128xf32>
    %472 = arith.mulf %452, %462 : vector<16x128xf32>
    %473 = arith.addf %471, %472 : vector<16x128xf32>
    %474 = math.tanh %473 : vector<16x128xf32>
    %475 = arith.mulf %470, %474 : vector<16x128xf32>
    %476 = arith.truncf %475 : vector<16x128xf32> to vector<16x128xbf16>
    %c3_219 = arith.constant 3 : index
    %c0_220 = arith.constant 0 : index
    %c0_221 = arith.constant 0 : index
    %477 = vector.load %arg11[%c3_219, %c0_220, %c0_221] : memref<5x16x128xbf16, #tpu.memory_space<vmem>>, vector<1x16x128xbf16>
    %478 = vector.shape_cast %477 : vector<1x16x128xbf16> to vector<16x128xbf16>
    %479 = vector.shape_cast %476 : vector<16x128xbf16> to vector<1x16x128xbf16>
    tpu.vector_store %arg11[%c3_219, %c0_220, %c0_221], %479 {strides = array<i32>} : memref<5x16x128xbf16, #tpu.memory_space<vmem>>, vector<1x16x128xbf16>,
    %c4_222 = arith.constant 4 : index
    %c0_223 = arith.constant 0 : index
    %c0_224 = arith.constant 0 : index
    %480 = vector.load %arg12[%c4_222, %c0_223, %c0_224] : memref<5x16x512xf32, #tpu.memory_space<vmem>>, vector<1x16x512xf32>
    %481 = vector.shape_cast %480 : vector<1x16x512xf32> to vector<16x512xf32>
    %482 = arith.truncf %475 : vector<16x128xf32> to vector<16x128xbf16>
    %cst_225 = arith.constant dense<0.000000e+00> : vector<16x512xf32>
    %483 = tpu.matmul %482, %269, %cst_225 {dimension_numbers = #tpu.dot_dimension_numbers<[1], [0], [0], [1], [0, 0, 1, 1], [], []>} : vector<16x128xbf16>, vector<128x512xbf16>, vector<16x512xf32> -> vector<16x512xf32>
    %484 = arith.addf %481, %483 : vector<16x512xf32>
    %485 = vector.extract_strided_slice %484 {offsets = [0, 0], sizes = [16, 128], strides = [1, 1]} : vector<16x512xf32> to vector<16x128xf32>
    %cst_226 = arith.constant 5.000000e-01 : f32
    %486 = vector.broadcast %cst_226 : f32 to vector<16x128xf32>
    %487 = arith.mulf %486, %485 : vector<16x128xf32>
    %488 = math.tanh %487 : vector<16x128xf32>
    %cst_227 = arith.constant 5.000000e-01 : f32
    %489 = vector.broadcast %cst_227 : f32 to vector<16x128xf32>
    %490 = arith.mulf %489, %488 : vector<16x128xf32>
    %cst_228 = arith.constant 5.000000e-01 : f32
    %491 = vector.broadcast %cst_228 : f32 to vector<16x128xf32>
    %492 = arith.addf %490, %491 : vector<16x128xf32>
    %493 = vector.extract_strided_slice %484 {offsets = [0, 128], sizes = [16, 128], strides = [1, 1]} : vector<16x512xf32> to vector<16x128xf32>
    %cst_229 = arith.constant 5.000000e-01 : f32
    %494 = vector.broadcast %cst_229 : f32 to vector<16x128xf32>
    %495 = arith.mulf %494, %493 : vector<16x128xf32>
    %496 = math.tanh %495 : vector<16x128xf32>
    %cst_230 = arith.constant 5.000000e-01 : f32
    %497 = vector.broadcast %cst_230 : f32 to vector<16x128xf32>
    %498 = arith.mulf %497, %496 : vector<16x128xf32>
    %cst_231 = arith.constant 5.000000e-01 : f32
    %499 = vector.broadcast %cst_231 : f32 to vector<16x128xf32>
    %500 = arith.addf %498, %499 : vector<16x128xf32>
    %501 = vector.extract_strided_slice %484 {offsets = [0, 256], sizes = [16, 128], strides = [1, 1]} : vector<16x512xf32> to vector<16x128xf32>
    %502 = math.tanh %501 : vector<16x128xf32>
    %503 = vector.extract_strided_slice %484 {offsets = [0, 384], sizes = [16, 128], strides = [1, 1]} : vector<16x512xf32> to vector<16x128xf32>
    %cst_232 = arith.constant 5.000000e-01 : f32
    %504 = vector.broadcast %cst_232 : f32 to vector<16x128xf32>
    %505 = arith.mulf %504, %503 : vector<16x128xf32>
    %506 = math.tanh %505 : vector<16x128xf32>
    %cst_233 = arith.constant 5.000000e-01 : f32
    %507 = vector.broadcast %cst_233 : f32 to vector<16x128xf32>
    %508 = arith.mulf %507, %506 : vector<16x128xf32>
    %cst_234 = arith.constant 5.000000e-01 : f32
    %509 = vector.broadcast %cst_234 : f32 to vector<16x128xf32>
    %510 = arith.addf %508, %509 : vector<16x128xf32>
    %511 = arith.mulf %500, %473 : vector<16x128xf32>
    %512 = arith.mulf %492, %502 : vector<16x128xf32>
    %513 = arith.addf %511, %512 : vector<16x128xf32>
    %514 = math.tanh %513 : vector<16x128xf32>
    %515 = arith.mulf %510, %514 : vector<16x128xf32>
    %516 = arith.truncf %515 : vector<16x128xf32> to vector<16x128xbf16>
    %c4_235 = arith.constant 4 : index
    %c0_236 = arith.constant 0 : index
    %c0_237 = arith.constant 0 : index
    %517 = vector.load %arg11[%c4_235, %c0_236, %c0_237] : memref<5x16x128xbf16, #tpu.memory_space<vmem>>, vector<1x16x128xbf16>
    %518 = vector.shape_cast %517 : vector<1x16x128xbf16> to vector<16x128xbf16>
    %519 = vector.shape_cast %516 : vector<16x128xbf16> to vector<1x16x128xbf16>
    tpu.vector_store %arg11[%c4_235, %c0_236, %c0_237], %519 {strides = array<i32>} : memref<5x16x128xbf16, #tpu.memory_space<vmem>>, vector<1x16x128xbf16>,
    %c0_238 = arith.constant 0 : index
    %c0_239 = arith.constant 0 : index
    %c0_240 = arith.constant 0 : index
    %520 = vector.load %arg11[%c0_238, %c0_239, %c0_240] : memref<5x16x128xbf16, #tpu.memory_space<vmem>>, vector<5x16x128xbf16>
    %521 = vector.shape_cast %520 : vector<5x16x128xbf16> to vector<80x128xbf16>
    %c2_241 = arith.constant 2 : index
    %c0_242 = arith.constant 0 : index
    %c0_243 = arith.constant 0 : index
    %c0_244 = arith.constant 0 : index
    %522 = vector.load %arg2[%c2_241, %c0_242, %c0_243, %c0_244] : memref<3x3x128x512xbf16, #tpu.memory_space<vmem>>, vector<1x1x128x512xbf16>
    %523 = vector.shape_cast %522 : vector<1x1x128x512xbf16> to vector<128x512xbf16>
    %c2_245 = arith.constant 2 : index
    %c1_246 = arith.constant 1 : index
    %c0_247 = arith.constant 0 : index
    %c0_248 = arith.constant 0 : index
    %524 = vector.load %arg2[%c2_245, %c1_246, %c0_247, %c0_248] : memref<3x3x128x512xbf16, #tpu.memory_space<vmem>>, vector<1x1x128x512xbf16>
    %525 = vector.shape_cast %524 : vector<1x1x128x512xbf16> to vector<128x512xbf16>
    %c2_249 = arith.constant 2 : index
    %c2_250 = arith.constant 2 : index
    %c0_251 = arith.constant 0 : index
    %c0_252 = arith.constant 0 : index
    %526 = vector.load %arg2[%c2_249, %c2_250, %c0_251, %c0_252] : memref<3x3x128x512xbf16, #tpu.memory_space<vmem>>, vector<1x1x128x512xbf16>
    %527 = vector.shape_cast %526 : vector<1x1x128x512xbf16> to vector<128x512xbf16>
    %cst_253 = arith.constant dense<0.000000e+00> : vector<80x512xf32>
    %528 = tpu.matmul %521, %523, %cst_253 {dimension_numbers = #tpu.dot_dimension_numbers<[1], [0], [0], [1], [0, 0, 1, 1], [], []>} : vector<80x128xbf16>, vector<128x512xbf16>, vector<80x512xf32> -> vector<80x512xf32>
    %c2_254 = arith.constant 2 : index
    %c0_255 = arith.constant 0 : index
    %c0_256 = arith.constant 0 : index
    %529 = vector.load %arg3[%c2_254, %c0_255, %c0_256] : memref<3x1x512xf32, #tpu.memory_space<vmem>>, vector<1x1x512xf32>
    %530 = vector.shape_cast %529 : vector<1x1x512xf32> to vector<1x512xf32>
    %531 = vector.broadcast %530 : vector<1x512xf32> to vector<80x512xf32>
    %532 = arith.addf %528, %531 : vector<80x512xf32>
    %533 = vector.shape_cast %532 : vector<80x512xf32> to vector<5x16x512xf32>
    %cst_257 = arith.constant dense<0.000000e+00> : vector<80x512xf32>
    %534 = tpu.matmul %521, %525, %cst_257 {dimension_numbers = #tpu.dot_dimension_numbers<[1], [0], [0], [1], [0, 0, 1, 1], [], []>} : vector<80x128xbf16>, vector<128x512xbf16>, vector<80x512xf32> -> vector<80x512xf32>
    %535 = vector.shape_cast %534 : vector<80x512xf32> to vector<5x16x512xf32>
    %536 = vector.extract_strided_slice %533 {offsets = [0, 0, 0], sizes = [1, 16, 512], strides = [1, 1, 1]} : vector<5x16x512xf32> to vector<1x16x512xf32>
    %537 = vector.shape_cast %536 : vector<1x16x512xf32> to vector<16x512xf32>
    %538 = vector.extract_strided_slice %535 {offsets = [4, 0, 0], sizes = [1, 16, 512], strides = [1, 1, 1]} : vector<5x16x512xf32> to vector<1x16x512xf32>
    %539 = vector.shape_cast %538 : vector<1x16x512xf32> to vector<16x512xf32>
    %540 = arith.addf %537, %539 : vector<16x512xf32>
    %c0_258 = arith.constant 0 : index
    %c0_259 = arith.constant 0 : index
    %c0_260 = arith.constant 0 : index
    %541 = vector.load %arg12[%c0_258, %c0_259, %c0_260] : memref<5x16x512xf32, #tpu.memory_space<vmem>>, vector<1x16x512xf32>
    %542 = vector.shape_cast %541 : vector<1x16x512xf32> to vector<16x512xf32>
    %543 = vector.shape_cast %540 : vector<16x512xf32> to vector<1x16x512xf32>
    tpu.vector_store %arg12[%c0_258, %c0_259, %c0_260], %543 {strides = array<i32>} : memref<5x16x512xf32, #tpu.memory_space<vmem>>, vector<1x16x512xf32>,
    %544 = vector.extract_strided_slice %533 {offsets = [1, 0, 0], sizes = [1, 16, 512], strides = [1, 1, 1]} : vector<5x16x512xf32> to vector<1x16x512xf32>
    %545 = vector.shape_cast %544 : vector<1x16x512xf32> to vector<16x512xf32>
    %546 = vector.extract_strided_slice %535 {offsets = [3, 0, 0], sizes = [1, 16, 512], strides = [1, 1, 1]} : vector<5x16x512xf32> to vector<1x16x512xf32>
    %547 = vector.shape_cast %546 : vector<1x16x512xf32> to vector<16x512xf32>
    %548 = arith.addf %545, %547 : vector<16x512xf32>
    %c1_261 = arith.constant 1 : index
    %c0_262 = arith.constant 0 : index
    %c0_263 = arith.constant 0 : index
    %549 = vector.load %arg12[%c1_261, %c0_262, %c0_263] : memref<5x16x512xf32, #tpu.memory_space<vmem>>, vector<1x16x512xf32>
    %550 = vector.shape_cast %549 : vector<1x16x512xf32> to vector<16x512xf32>
    %551 = vector.shape_cast %548 : vector<16x512xf32> to vector<1x16x512xf32>
    tpu.vector_store %arg12[%c1_261, %c0_262, %c0_263], %551 {strides = array<i32>} : memref<5x16x512xf32, #tpu.memory_space<vmem>>, vector<1x16x512xf32>,
    %552 = vector.extract_strided_slice %533 {offsets = [2, 0, 0], sizes = [1, 16, 512], strides = [1, 1, 1]} : vector<5x16x512xf32> to vector<1x16x512xf32>
    %553 = vector.shape_cast %552 : vector<1x16x512xf32> to vector<16x512xf32>
    %554 = vector.extract_strided_slice %535 {offsets = [2, 0, 0], sizes = [1, 16, 512], strides = [1, 1, 1]} : vector<5x16x512xf32> to vector<1x16x512xf32>
    %555 = vector.shape_cast %554 : vector<1x16x512xf32> to vector<16x512xf32>
    %556 = arith.addf %553, %555 : vector<16x512xf32>
    %c2_264 = arith.constant 2 : index
    %c0_265 = arith.constant 0 : index
    %c0_266 = arith.constant 0 : index
    %557 = vector.load %arg12[%c2_264, %c0_265, %c0_266] : memref<5x16x512xf32, #tpu.memory_space<vmem>>, vector<1x16x512xf32>
    %558 = vector.shape_cast %557 : vector<1x16x512xf32> to vector<16x512xf32>
    %559 = vector.shape_cast %556 : vector<16x512xf32> to vector<1x16x512xf32>
    tpu.vector_store %arg12[%c2_264, %c0_265, %c0_266], %559 {strides = array<i32>} : memref<5x16x512xf32, #tpu.memory_space<vmem>>, vector<1x16x512xf32>,
    %560 = vector.extract_strided_slice %533 {offsets = [3, 0, 0], sizes = [1, 16, 512], strides = [1, 1, 1]} : vector<5x16x512xf32> to vector<1x16x512xf32>
    %561 = vector.shape_cast %560 : vector<1x16x512xf32> to vector<16x512xf32>
    %562 = vector.extract_strided_slice %535 {offsets = [1, 0, 0], sizes = [1, 16, 512], strides = [1, 1, 1]} : vector<5x16x512xf32> to vector<1x16x512xf32>
    %563 = vector.shape_cast %562 : vector<1x16x512xf32> to vector<16x512xf32>
    %564 = arith.addf %561, %563 : vector<16x512xf32>
    %c3_267 = arith.constant 3 : index
    %c0_268 = arith.constant 0 : index
    %c0_269 = arith.constant 0 : index
    %565 = vector.load %arg12[%c3_267, %c0_268, %c0_269] : memref<5x16x512xf32, #tpu.memory_space<vmem>>, vector<1x16x512xf32>
    %566 = vector.shape_cast %565 : vector<1x16x512xf32> to vector<16x512xf32>
    %567 = vector.shape_cast %564 : vector<16x512xf32> to vector<1x16x512xf32>
    tpu.vector_store %arg12[%c3_267, %c0_268, %c0_269], %567 {strides = array<i32>} : memref<5x16x512xf32, #tpu.memory_space<vmem>>, vector<1x16x512xf32>,
    %568 = vector.extract_strided_slice %533 {offsets = [4, 0, 0], sizes = [1, 16, 512], strides = [1, 1, 1]} : vector<5x16x512xf32> to vector<1x16x512xf32>
    %569 = vector.shape_cast %568 : vector<1x16x512xf32> to vector<16x512xf32>
    %570 = vector.extract_strided_slice %535 {offsets = [0, 0, 0], sizes = [1, 16, 512], strides = [1, 1, 1]} : vector<5x16x512xf32> to vector<1x16x512xf32>
    %571 = vector.shape_cast %570 : vector<1x16x512xf32> to vector<16x512xf32>
    %572 = arith.addf %569, %571 : vector<16x512xf32>
    %c4_270 = arith.constant 4 : index
    %c0_271 = arith.constant 0 : index
    %c0_272 = arith.constant 0 : index
    %573 = vector.load %arg12[%c4_270, %c0_271, %c0_272] : memref<5x16x512xf32, #tpu.memory_space<vmem>>, vector<1x16x512xf32>
    %574 = vector.shape_cast %573 : vector<1x16x512xf32> to vector<16x512xf32>
    %575 = vector.shape_cast %572 : vector<16x512xf32> to vector<1x16x512xf32>
    tpu.vector_store %arg12[%c4_270, %c0_271, %c0_272], %575 {strides = array<i32>} : memref<5x16x512xf32, #tpu.memory_space<vmem>>, vector<1x16x512xf32>,
    %cst_273 = arith.constant 0.000000e+00 : f32
    %576 = vector.broadcast %cst_273 : f32 to vector<16x128xf32>
    %cst_274 = arith.constant 0.000000e+00 : f32
    %577 = vector.broadcast %cst_274 : f32 to vector<16x128xf32>
    %c0_275 = arith.constant 0 : index
    %c0_276 = arith.constant 0 : index
    %c0_277 = arith.constant 0 : index
    %578 = vector.load %arg12[%c0_275, %c0_276, %c0_277] : memref<5x16x512xf32, #tpu.memory_space<vmem>>, vector<1x16x512xf32>
    %579 = vector.shape_cast %578 : vector<1x16x512xf32> to vector<16x512xf32>
    %580 = arith.truncf %576 : vector<16x128xf32> to vector<16x128xbf16>
    %cst_278 = arith.constant dense<0.000000e+00> : vector<16x512xf32>
    %581 = tpu.matmul %580, %527, %cst_278 {dimension_numbers = #tpu.dot_dimension_numbers<[1], [0], [0], [1], [0, 0, 1, 1], [], []>} : vector<16x128xbf16>, vector<128x512xbf16>, vector<16x512xf32> -> vector<16x512xf32>
    %582 = arith.addf %579, %581 : vector<16x512xf32>
    %583 = vector.extract_strided_slice %582 {offsets = [0, 0], sizes = [16, 128], strides = [1, 1]} : vector<16x512xf32> to vector<16x128xf32>
    %cst_279 = arith.constant 5.000000e-01 : f32
    %584 = vector.broadcast %cst_279 : f32 to vector<16x128xf32>
    %585 = arith.mulf %584, %583 : vector<16x128xf32>
    %586 = math.tanh %585 : vector<16x128xf32>
    %cst_280 = arith.constant 5.000000e-01 : f32
    %587 = vector.broadcast %cst_280 : f32 to vector<16x128xf32>
    %588 = arith.mulf %587, %586 : vector<16x128xf32>
    %cst_281 = arith.constant 5.000000e-01 : f32
    %589 = vector.broadcast %cst_281 : f32 to vector<16x128xf32>
    %590 = arith.addf %588, %589 : vector<16x128xf32>
    %591 = vector.extract_strided_slice %582 {offsets = [0, 128], sizes = [16, 128], strides = [1, 1]} : vector<16x512xf32> to vector<16x128xf32>
    %cst_282 = arith.constant 5.000000e-01 : f32
    %592 = vector.broadcast %cst_282 : f32 to vector<16x128xf32>
    %593 = arith.mulf %592, %591 : vector<16x128xf32>
    %594 = math.tanh %593 : vector<16x128xf32>
    %cst_283 = arith.constant 5.000000e-01 : f32
    %595 = vector.broadcast %cst_283 : f32 to vector<16x128xf32>
    %596 = arith.mulf %595, %594 : vector<16x128xf32>
    %cst_284 = arith.constant 5.000000e-01 : f32
    %597 = vector.broadcast %cst_284 : f32 to vector<16x128xf32>
    %598 = arith.addf %596, %597 : vector<16x128xf32>
    %599 = vector.extract_strided_slice %582 {offsets = [0, 256], sizes = [16, 128], strides = [1, 1]} : vector<16x512xf32> to vector<16x128xf32>
    %600 = math.tanh %599 : vector<16x128xf32>
    %601 = vector.extract_strided_slice %582 {offsets = [0, 384], sizes = [16, 128], strides = [1, 1]} : vector<16x512xf32> to vector<16x128xf32>
    %cst_285 = arith.constant 5.000000e-01 : f32
    %602 = vector.broadcast %cst_285 : f32 to vector<16x128xf32>
    %603 = arith.mulf %602, %601 : vector<16x128xf32>
    %604 = math.tanh %603 : vector<16x128xf32>
    %cst_286 = arith.constant 5.000000e-01 : f32
    %605 = vector.broadcast %cst_286 : f32 to vector<16x128xf32>
    %606 = arith.mulf %605, %604 : vector<16x128xf32>
    %cst_287 = arith.constant 5.000000e-01 : f32
    %607 = vector.broadcast %cst_287 : f32 to vector<16x128xf32>
    %608 = arith.addf %606, %607 : vector<16x128xf32>
    %609 = arith.mulf %598, %577 : vector<16x128xf32>
    %610 = arith.mulf %590, %600 : vector<16x128xf32>
    %611 = arith.addf %609, %610 : vector<16x128xf32>
    %612 = math.tanh %611 : vector<16x128xf32>
    %613 = arith.mulf %608, %612 : vector<16x128xf32>
    %614 = arith.truncf %613 : vector<16x128xf32> to vector<16x128xbf16>
    %c0_288 = arith.constant 0 : index
    %c0_289 = arith.constant 0 : index
    %c0_290 = arith.constant 0 : index
    %615 = vector.load %arg11[%c0_288, %c0_289, %c0_290] : memref<5x16x128xbf16, #tpu.memory_space<vmem>>, vector<1x16x128xbf16>
    %616 = vector.shape_cast %615 : vector<1x16x128xbf16> to vector<16x128xbf16>
    %617 = vector.shape_cast %614 : vector<16x128xbf16> to vector<1x16x128xbf16>
    tpu.vector_store %arg11[%c0_288, %c0_289, %c0_290], %617 {strides = array<i32>} : memref<5x16x128xbf16, #tpu.memory_space<vmem>>, vector<1x16x128xbf16>,
    %c1_291 = arith.constant 1 : index
    %c0_292 = arith.constant 0 : index
    %c0_293 = arith.constant 0 : index
    %618 = vector.load %arg12[%c1_291, %c0_292, %c0_293] : memref<5x16x512xf32, #tpu.memory_space<vmem>>, vector<1x16x512xf32>
    %619 = vector.shape_cast %618 : vector<1x16x512xf32> to vector<16x512xf32>
    %620 = arith.truncf %613 : vector<16x128xf32> to vector<16x128xbf16>
    %cst_294 = arith.constant dense<0.000000e+00> : vector<16x512xf32>
    %621 = tpu.matmul %620, %527, %cst_294 {dimension_numbers = #tpu.dot_dimension_numbers<[1], [0], [0], [1], [0, 0, 1, 1], [], []>} : vector<16x128xbf16>, vector<128x512xbf16>, vector<16x512xf32> -> vector<16x512xf32>
    %622 = arith.addf %619, %621 : vector<16x512xf32>
    %623 = vector.extract_strided_slice %622 {offsets = [0, 0], sizes = [16, 128], strides = [1, 1]} : vector<16x512xf32> to vector<16x128xf32>
    %cst_295 = arith.constant 5.000000e-01 : f32
    %624 = vector.broadcast %cst_295 : f32 to vector<16x128xf32>
    %625 = arith.mulf %624, %623 : vector<16x128xf32>
    %626 = math.tanh %625 : vector<16x128xf32>
    %cst_296 = arith.constant 5.000000e-01 : f32
    %627 = vector.broadcast %cst_296 : f32 to vector<16x128xf32>
    %628 = arith.mulf %627, %626 : vector<16x128xf32>
    %cst_297 = arith.constant 5.000000e-01 : f32
    %629 = vector.broadcast %cst_297 : f32 to vector<16x128xf32>
    %630 = arith.addf %628, %629 : vector<16x128xf32>
    %631 = vector.extract_strided_slice %622 {offsets = [0, 128], sizes = [16, 128], strides = [1, 1]} : vector<16x512xf32> to vector<16x128xf32>
    %cst_298 = arith.constant 5.000000e-01 : f32
    %632 = vector.broadcast %cst_298 : f32 to vector<16x128xf32>
    %633 = arith.mulf %632, %631 : vector<16x128xf32>
    %634 = math.tanh %633 : vector<16x128xf32>
    %cst_299 = arith.constant 5.000000e-01 : f32
    %635 = vector.broadcast %cst_299 : f32 to vector<16x128xf32>
    %636 = arith.mulf %635, %634 : vector<16x128xf32>
    %cst_300 = arith.constant 5.000000e-01 : f32
    %637 = vector.broadcast %cst_300 : f32 to vector<16x128xf32>
    %638 = arith.addf %636, %637 : vector<16x128xf32>
    %639 = vector.extract_strided_slice %622 {offsets = [0, 256], sizes = [16, 128], strides = [1, 1]} : vector<16x512xf32> to vector<16x128xf32>
    %640 = math.tanh %639 : vector<16x128xf32>
    %641 = vector.extract_strided_slice %622 {offsets = [0, 384], sizes = [16, 128], strides = [1, 1]} : vector<16x512xf32> to vector<16x128xf32>
    %cst_301 = arith.constant 5.000000e-01 : f32
    %642 = vector.broadcast %cst_301 : f32 to vector<16x128xf32>
    %643 = arith.mulf %642, %641 : vector<16x128xf32>
    %644 = math.tanh %643 : vector<16x128xf32>
    %cst_302 = arith.constant 5.000000e-01 : f32
    %645 = vector.broadcast %cst_302 : f32 to vector<16x128xf32>
    %646 = arith.mulf %645, %644 : vector<16x128xf32>
    %cst_303 = arith.constant 5.000000e-01 : f32
    %647 = vector.broadcast %cst_303 : f32 to vector<16x128xf32>
    %648 = arith.addf %646, %647 : vector<16x128xf32>
    %649 = arith.mulf %638, %611 : vector<16x128xf32>
    %650 = arith.mulf %630, %640 : vector<16x128xf32>
    %651 = arith.addf %649, %650 : vector<16x128xf32>
    %652 = math.tanh %651 : vector<16x128xf32>
    %653 = arith.mulf %648, %652 : vector<16x128xf32>
    %654 = arith.truncf %653 : vector<16x128xf32> to vector<16x128xbf16>
    %c1_304 = arith.constant 1 : index
    %c0_305 = arith.constant 0 : index
    %c0_306 = arith.constant 0 : index
    %655 = vector.load %arg11[%c1_304, %c0_305, %c0_306] : memref<5x16x128xbf16, #tpu.memory_space<vmem>>, vector<1x16x128xbf16>
    %656 = vector.shape_cast %655 : vector<1x16x128xbf16> to vector<16x128xbf16>
    %657 = vector.shape_cast %654 : vector<16x128xbf16> to vector<1x16x128xbf16>
    tpu.vector_store %arg11[%c1_304, %c0_305, %c0_306], %657 {strides = array<i32>} : memref<5x16x128xbf16, #tpu.memory_space<vmem>>, vector<1x16x128xbf16>,
    %c2_307 = arith.constant 2 : index
    %c0_308 = arith.constant 0 : index
    %c0_309 = arith.constant 0 : index
    %658 = vector.load %arg12[%c2_307, %c0_308, %c0_309] : memref<5x16x512xf32, #tpu.memory_space<vmem>>, vector<1x16x512xf32>
    %659 = vector.shape_cast %658 : vector<1x16x512xf32> to vector<16x512xf32>
    %660 = arith.truncf %653 : vector<16x128xf32> to vector<16x128xbf16>
    %cst_310 = arith.constant dense<0.000000e+00> : vector<16x512xf32>
    %661 = tpu.matmul %660, %527, %cst_310 {dimension_numbers = #tpu.dot_dimension_numbers<[1], [0], [0], [1], [0, 0, 1, 1], [], []>} : vector<16x128xbf16>, vector<128x512xbf16>, vector<16x512xf32> -> vector<16x512xf32>
    %662 = arith.addf %659, %661 : vector<16x512xf32>
    %663 = vector.extract_strided_slice %662 {offsets = [0, 0], sizes = [16, 128], strides = [1, 1]} : vector<16x512xf32> to vector<16x128xf32>
    %cst_311 = arith.constant 5.000000e-01 : f32
    %664 = vector.broadcast %cst_311 : f32 to vector<16x128xf32>
    %665 = arith.mulf %664, %663 : vector<16x128xf32>
    %666 = math.tanh %665 : vector<16x128xf32>
    %cst_312 = arith.constant 5.000000e-01 : f32
    %667 = vector.broadcast %cst_312 : f32 to vector<16x128xf32>
    %668 = arith.mulf %667, %666 : vector<16x128xf32>
    %cst_313 = arith.constant 5.000000e-01 : f32
    %669 = vector.broadcast %cst_313 : f32 to vector<16x128xf32>
    %670 = arith.addf %668, %669 : vector<16x128xf32>
    %671 = vector.extract_strided_slice %662 {offsets = [0, 128], sizes = [16, 128], strides = [1, 1]} : vector<16x512xf32> to vector<16x128xf32>
    %cst_314 = arith.constant 5.000000e-01 : f32
    %672 = vector.broadcast %cst_314 : f32 to vector<16x128xf32>
    %673 = arith.mulf %672, %671 : vector<16x128xf32>
    %674 = math.tanh %673 : vector<16x128xf32>
    %cst_315 = arith.constant 5.000000e-01 : f32
    %675 = vector.broadcast %cst_315 : f32 to vector<16x128xf32>
    %676 = arith.mulf %675, %674 : vector<16x128xf32>
    %cst_316 = arith.constant 5.000000e-01 : f32
    %677 = vector.broadcast %cst_316 : f32 to vector<16x128xf32>
    %678 = arith.addf %676, %677 : vector<16x128xf32>
    %679 = vector.extract_strided_slice %662 {offsets = [0, 256], sizes = [16, 128], strides = [1, 1]} : vector<16x512xf32> to vector<16x128xf32>
    %680 = math.tanh %679 : vector<16x128xf32>
    %681 = vector.extract_strided_slice %662 {offsets = [0, 384], sizes = [16, 128], strides = [1, 1]} : vector<16x512xf32> to vector<16x128xf32>
    %cst_317 = arith.constant 5.000000e-01 : f32
    %682 = vector.broadcast %cst_317 : f32 to vector<16x128xf32>
    %683 = arith.mulf %682, %681 : vector<16x128xf32>
    %684 = math.tanh %683 : vector<16x128xf32>
    %cst_318 = arith.constant 5.000000e-01 : f32
    %685 = vector.broadcast %cst_318 : f32 to vector<16x128xf32>
    %686 = arith.mulf %685, %684 : vector<16x128xf32>
    %cst_319 = arith.constant 5.000000e-01 : f32
    %687 = vector.broadcast %cst_319 : f32 to vector<16x128xf32>
    %688 = arith.addf %686, %687 : vector<16x128xf32>
    %689 = arith.mulf %678, %651 : vector<16x128xf32>
    %690 = arith.mulf %670, %680 : vector<16x128xf32>
    %691 = arith.addf %689, %690 : vector<16x128xf32>
    %692 = math.tanh %691 : vector<16x128xf32>
    %693 = arith.mulf %688, %692 : vector<16x128xf32>
    %694 = arith.truncf %693 : vector<16x128xf32> to vector<16x128xbf16>
    %c2_320 = arith.constant 2 : index
    %c0_321 = arith.constant 0 : index
    %c0_322 = arith.constant 0 : index
    %695 = vector.load %arg11[%c2_320, %c0_321, %c0_322] : memref<5x16x128xbf16, #tpu.memory_space<vmem>>, vector<1x16x128xbf16>
    %696 = vector.shape_cast %695 : vector<1x16x128xbf16> to vector<16x128xbf16>
    %697 = vector.shape_cast %694 : vector<16x128xbf16> to vector<1x16x128xbf16>
    tpu.vector_store %arg11[%c2_320, %c0_321, %c0_322], %697 {strides = array<i32>} : memref<5x16x128xbf16, #tpu.memory_space<vmem>>, vector<1x16x128xbf16>,
    %c3_323 = arith.constant 3 : index
    %c0_324 = arith.constant 0 : index
    %c0_325 = arith.constant 0 : index
    %698 = vector.load %arg12[%c3_323, %c0_324, %c0_325] : memref<5x16x512xf32, #tpu.memory_space<vmem>>, vector<1x16x512xf32>
    %699 = vector.shape_cast %698 : vector<1x16x512xf32> to vector<16x512xf32>
    %700 = arith.truncf %693 : vector<16x128xf32> to vector<16x128xbf16>
    %cst_326 = arith.constant dense<0.000000e+00> : vector<16x512xf32>
    %701 = tpu.matmul %700, %527, %cst_326 {dimension_numbers = #tpu.dot_dimension_numbers<[1], [0], [0], [1], [0, 0, 1, 1], [], []>} : vector<16x128xbf16>, vector<128x512xbf16>, vector<16x512xf32> -> vector<16x512xf32>
    %702 = arith.addf %699, %701 : vector<16x512xf32>
    %703 = vector.extract_strided_slice %702 {offsets = [0, 0], sizes = [16, 128], strides = [1, 1]} : vector<16x512xf32> to vector<16x128xf32>
    %cst_327 = arith.constant 5.000000e-01 : f32
    %704 = vector.broadcast %cst_327 : f32 to vector<16x128xf32>
    %705 = arith.mulf %704, %703 : vector<16x128xf32>
    %706 = math.tanh %705 : vector<16x128xf32>
    %cst_328 = arith.constant 5.000000e-01 : f32
    %707 = vector.broadcast %cst_328 : f32 to vector<16x128xf32>
    %708 = arith.mulf %707, %706 : vector<16x128xf32>
    %cst_329 = arith.constant 5.000000e-01 : f32
    %709 = vector.broadcast %cst_329 : f32 to vector<16x128xf32>
    %710 = arith.addf %708, %709 : vector<16x128xf32>
    %711 = vector.extract_strided_slice %702 {offsets = [0, 128], sizes = [16, 128], strides = [1, 1]} : vector<16x512xf32> to vector<16x128xf32>
    %cst_330 = arith.constant 5.000000e-01 : f32
    %712 = vector.broadcast %cst_330 : f32 to vector<16x128xf32>
    %713 = arith.mulf %712, %711 : vector<16x128xf32>
    %714 = math.tanh %713 : vector<16x128xf32>
    %cst_331 = arith.constant 5.000000e-01 : f32
    %715 = vector.broadcast %cst_331 : f32 to vector<16x128xf32>
    %716 = arith.mulf %715, %714 : vector<16x128xf32>
    %cst_332 = arith.constant 5.000000e-01 : f32
    %717 = vector.broadcast %cst_332 : f32 to vector<16x128xf32>
    %718 = arith.addf %716, %717 : vector<16x128xf32>
    %719 = vector.extract_strided_slice %702 {offsets = [0, 256], sizes = [16, 128], strides = [1, 1]} : vector<16x512xf32> to vector<16x128xf32>
    %720 = math.tanh %719 : vector<16x128xf32>
    %721 = vector.extract_strided_slice %702 {offsets = [0, 384], sizes = [16, 128], strides = [1, 1]} : vector<16x512xf32> to vector<16x128xf32>
    %cst_333 = arith.constant 5.000000e-01 : f32
    %722 = vector.broadcast %cst_333 : f32 to vector<16x128xf32>
    %723 = arith.mulf %722, %721 : vector<16x128xf32>
    %724 = math.tanh %723 : vector<16x128xf32>
    %cst_334 = arith.constant 5.000000e-01 : f32
    %725 = vector.broadcast %cst_334 : f32 to vector<16x128xf32>
    %726 = arith.mulf %725, %724 : vector<16x128xf32>
    %cst_335 = arith.constant 5.000000e-01 : f32
    %727 = vector.broadcast %cst_335 : f32 to vector<16x128xf32>
    %728 = arith.addf %726, %727 : vector<16x128xf32>
    %729 = arith.mulf %718, %691 : vector<16x128xf32>
    %730 = arith.mulf %710, %720 : vector<16x128xf32>
    %731 = arith.addf %729, %730 : vector<16x128xf32>
    %732 = math.tanh %731 : vector<16x128xf32>
    %733 = arith.mulf %728, %732 : vector<16x128xf32>
    %734 = arith.truncf %733 : vector<16x128xf32> to vector<16x128xbf16>
    %c3_336 = arith.constant 3 : index
    %c0_337 = arith.constant 0 : index
    %c0_338 = arith.constant 0 : index
    %735 = vector.load %arg11[%c3_336, %c0_337, %c0_338] : memref<5x16x128xbf16, #tpu.memory_space<vmem>>, vector<1x16x128xbf16>
    %736 = vector.shape_cast %735 : vector<1x16x128xbf16> to vector<16x128xbf16>
    %737 = vector.shape_cast %734 : vector<16x128xbf16> to vector<1x16x128xbf16>
    tpu.vector_store %arg11[%c3_336, %c0_337, %c0_338], %737 {strides = array<i32>} : memref<5x16x128xbf16, #tpu.memory_space<vmem>>, vector<1x16x128xbf16>,
    %c4_339 = arith.constant 4 : index
    %c0_340 = arith.constant 0 : index
    %c0_341 = arith.constant 0 : index
    %738 = vector.load %arg12[%c4_339, %c0_340, %c0_341] : memref<5x16x512xf32, #tpu.memory_space<vmem>>, vector<1x16x512xf32>
    %739 = vector.shape_cast %738 : vector<1x16x512xf32> to vector<16x512xf32>
    %740 = arith.truncf %733 : vector<16x128xf32> to vector<16x128xbf16>
    %cst_342 = arith.constant dense<0.000000e+00> : vector<16x512xf32>
    %741 = tpu.matmul %740, %527, %cst_342 {dimension_numbers = #tpu.dot_dimension_numbers<[1], [0], [0], [1], [0, 0, 1, 1], [], []>} : vector<16x128xbf16>, vector<128x512xbf16>, vector<16x512xf32> -> vector<16x512xf32>
    %742 = arith.addf %739, %741 : vector<16x512xf32>
    %743 = vector.extract_strided_slice %742 {offsets = [0, 0], sizes = [16, 128], strides = [1, 1]} : vector<16x512xf32> to vector<16x128xf32>
    %cst_343 = arith.constant 5.000000e-01 : f32
    %744 = vector.broadcast %cst_343 : f32 to vector<16x128xf32>
    %745 = arith.mulf %744, %743 : vector<16x128xf32>
    %746 = math.tanh %745 : vector<16x128xf32>
    %cst_344 = arith.constant 5.000000e-01 : f32
    %747 = vector.broadcast %cst_344 : f32 to vector<16x128xf32>
    %748 = arith.mulf %747, %746 : vector<16x128xf32>
    %cst_345 = arith.constant 5.000000e-01 : f32
    %749 = vector.broadcast %cst_345 : f32 to vector<16x128xf32>
    %750 = arith.addf %748, %749 : vector<16x128xf32>
    %751 = vector.extract_strided_slice %742 {offsets = [0, 128], sizes = [16, 128], strides = [1, 1]} : vector<16x512xf32> to vector<16x128xf32>
    %cst_346 = arith.constant 5.000000e-01 : f32
    %752 = vector.broadcast %cst_346 : f32 to vector<16x128xf32>
    %753 = arith.mulf %752, %751 : vector<16x128xf32>
    %754 = math.tanh %753 : vector<16x128xf32>
    %cst_347 = arith.constant 5.000000e-01 : f32
    %755 = vector.broadcast %cst_347 : f32 to vector<16x128xf32>
    %756 = arith.mulf %755, %754 : vector<16x128xf32>
    %cst_348 = arith.constant 5.000000e-01 : f32
    %757 = vector.broadcast %cst_348 : f32 to vector<16x128xf32>
    %758 = arith.addf %756, %757 : vector<16x128xf32>
    %759 = vector.extract_strided_slice %742 {offsets = [0, 256], sizes = [16, 128], strides = [1, 1]} : vector<16x512xf32> to vector<16x128xf32>
    %760 = math.tanh %759 : vector<16x128xf32>
    %761 = vector.extract_strided_slice %742 {offsets = [0, 384], sizes = [16, 128], strides = [1, 1]} : vector<16x512xf32> to vector<16x128xf32>
    %cst_349 = arith.constant 5.000000e-01 : f32
    %762 = vector.broadcast %cst_349 : f32 to vector<16x128xf32>
    %763 = arith.mulf %762, %761 : vector<16x128xf32>
    %764 = math.tanh %763 : vector<16x128xf32>
    %cst_350 = arith.constant 5.000000e-01 : f32
    %765 = vector.broadcast %cst_350 : f32 to vector<16x128xf32>
    %766 = arith.mulf %765, %764 : vector<16x128xf32>
    %cst_351 = arith.constant 5.000000e-01 : f32
    %767 = vector.broadcast %cst_351 : f32 to vector<16x128xf32>
    %768 = arith.addf %766, %767 : vector<16x128xf32>
    %769 = arith.mulf %758, %731 : vector<16x128xf32>
    %770 = arith.mulf %750, %760 : vector<16x128xf32>
    %771 = arith.addf %769, %770 : vector<16x128xf32>
    %772 = math.tanh %771 : vector<16x128xf32>
    %773 = arith.mulf %768, %772 : vector<16x128xf32>
    %774 = arith.truncf %773 : vector<16x128xf32> to vector<16x128xbf16>
    %c4_352 = arith.constant 4 : index
    %c0_353 = arith.constant 0 : index
    %c0_354 = arith.constant 0 : index
    %775 = vector.load %arg11[%c4_352, %c0_353, %c0_354] : memref<5x16x128xbf16, #tpu.memory_space<vmem>>, vector<1x16x128xbf16>
    %776 = vector.shape_cast %775 : vector<1x16x128xbf16> to vector<16x128xbf16>
    %777 = vector.shape_cast %774 : vector<16x128xbf16> to vector<1x16x128xbf16>
    tpu.vector_store %arg11[%c4_352, %c0_353, %c0_354], %777 {strides = array<i32>} : memref<5x16x128xbf16, #tpu.memory_space<vmem>>, vector<1x16x128xbf16>,
    %c4_355 = arith.constant 4 : index
    %c0_356 = arith.constant 0 : index
    %c0_357 = arith.constant 0 : index
    %778 = vector.load %arg11[%c4_355, %c0_356, %c0_357] : memref<5x16x128xbf16, #tpu.memory_space<vmem>>, vector<1x16x128xbf16>
    %779 = vector.shape_cast %778 : vector<1x16x128xbf16> to vector<16x128xbf16>
    %c0_358 = arith.constant 0 : index
    %c0_359 = arith.constant 0 : index
    %c0_360 = arith.constant 0 : index
    %780 = vector.load %arg11[%c0_358, %c0_359, %c0_360] : memref<5x16x128xbf16, #tpu.memory_space<vmem>>, vector<1x16x128xbf16>
    %781 = vector.shape_cast %780 : vector<1x16x128xbf16> to vector<16x128xbf16>
    %c0_361 = arith.constant 0 : index
    %c0_362 = arith.constant 0 : index
    %c0_363 = arith.constant 0 : index
    %782 = vector.load %arg4[%c0_361, %c0_362, %c0_363] : memref<2x128x256xbf16, #tpu.memory_space<vmem>>, vector<1x128x256xbf16>
    %783 = vector.shape_cast %782 : vector<1x128x256xbf16> to vector<128x256xbf16>
    %cst_364 = arith.constant dense<0.000000e+00> : vector<16x256xf32>
    %784 = tpu.matmul %779, %783, %cst_364 {dimension_numbers = #tpu.dot_dimension_numbers<[1], [0], [0], [1], [0, 0, 1, 1], [], []>} : vector<16x128xbf16>, vector<128x256xbf16>, vector<16x256xf32> -> vector<16x256xf32>
    %c1_365 = arith.constant 1 : index
    %c0_366 = arith.constant 0 : index
    %c0_367 = arith.constant 0 : index
    %785 = vector.load %arg4[%c1_365, %c0_366, %c0_367] : memref<2x128x256xbf16, #tpu.memory_space<vmem>>, vector<1x128x256xbf16>
    %786 = vector.shape_cast %785 : vector<1x128x256xbf16> to vector<128x256xbf16>
    %cst_368 = arith.constant dense<0.000000e+00> : vector<16x256xf32>
    %787 = tpu.matmul %781, %786, %cst_368 {dimension_numbers = #tpu.dot_dimension_numbers<[1], [0], [0], [1], [0, 0, 1, 1], [], []>} : vector<16x128xbf16>, vector<128x256xbf16>, vector<16x256xf32> -> vector<16x256xf32>
    %788 = arith.addf %784, %787 : vector<16x256xf32>
    %c0_369 = arith.constant 0 : index
    %c0_370 = arith.constant 0 : index
    %789 = vector.load %arg5[%c0_369, %c0_370] : memref<1x256xf32, #tpu.memory_space<vmem>>, vector<1x256xf32>
    %790 = vector.broadcast %789 : vector<1x256xf32> to vector<16x256xf32>
    %791 = arith.addf %788, %790 : vector<16x256xf32>
    %cst_371 = arith.constant 5.000000e-01 : f32
    %792 = vector.broadcast %cst_371 : f32 to vector<16x256xf32>
    %793 = arith.mulf %792, %791 : vector<16x256xf32>
    %cst_372 = arith.constant 0.707106769 : f32
    %794 = vector.broadcast %cst_372 : f32 to vector<16x256xf32>
    %795 = arith.mulf %791, %794 : vector<16x256xf32>
    %796 = math.erf %795 : vector<16x256xf32>
    %cst_373 = arith.constant 1.000000e+00 : f32
    %797 = vector.broadcast %cst_373 : f32 to vector<16x256xf32>
    %798 = arith.addf %797, %796 : vector<16x256xf32>
    %799 = arith.mulf %793, %798 : vector<16x256xf32>
    %800 = arith.truncf %799 : vector<16x256xf32> to vector<16x256xbf16>
    %c0_374 = arith.constant 0 : index
    %c0_375 = arith.constant 0 : index
    %801 = vector.load %arg6[%c0_374, %c0_375] : memref<256x128xbf16, #tpu.memory_space<vmem>>, vector<256x128xbf16>
    %cst_376 = arith.constant dense<0.000000e+00> : vector<16x128xf32>
    %802 = tpu.matmul %800, %801, %cst_376 {dimension_numbers = #tpu.dot_dimension_numbers<[1], [0], [0], [1], [0, 0, 1, 1], [], []>} : vector<16x256xbf16>, vector<256x128xbf16>, vector<16x128xf32> -> vector<16x128xf32>
    %c0_377 = arith.constant 0 : index
    %c0_378 = arith.constant 0 : index
    %803 = vector.load %arg7[%c0_377, %c0_378] : memref<1x128xf32, #tpu.memory_space<vmem>>, vector<1x128xf32>
    %804 = vector.broadcast %803 : vector<1x128xf32> to vector<16x128xf32>
    %805 = arith.addf %802, %804 : vector<16x128xf32>
    %cst_379 = arith.constant 5.000000e-01 : f32
    %806 = vector.broadcast %cst_379 : f32 to vector<16x128xf32>
    %807 = arith.mulf %806, %805 : vector<16x128xf32>
    %cst_380 = arith.constant 0.707106769 : f32
    %808 = vector.broadcast %cst_380 : f32 to vector<16x128xf32>
    %809 = arith.mulf %805, %808 : vector<16x128xf32>
    %810 = math.erf %809 : vector<16x128xf32>
    %cst_381 = arith.constant 1.000000e+00 : f32
    %811 = vector.broadcast %cst_381 : f32 to vector<16x128xf32>
    %812 = arith.addf %811, %810 : vector<16x128xf32>
    %813 = arith.mulf %807, %812 : vector<16x128xf32>
    %814 = arith.truncf %813 : vector<16x128xf32> to vector<16x128xbf16>
    %c0_382 = arith.constant 0 : index
    %c0_383 = arith.constant 0 : index
    %815 = vector.load %arg8[%c0_382, %c0_383] : memref<128x128xbf16, #tpu.memory_space<vmem>>, vector<128x128xbf16>
    %cst_384 = arith.constant dense<0.000000e+00> : vector<16x128xf32>
    %816 = tpu.matmul %814, %815, %cst_384 {dimension_numbers = #tpu.dot_dimension_numbers<[1], [0], [0], [1], [0, 0, 1, 1], [], []>} : vector<16x128xbf16>, vector<128x128xbf16>, vector<16x128xf32> -> vector<16x128xf32>
    %c0_385 = arith.constant 0 : index
    %c0_386 = arith.constant 0 : index
    %817 = vector.load %arg9[%c0_385, %c0_386] : memref<1x128xf32, #tpu.memory_space<vmem>>, vector<1x128xf32>
    %818 = vector.broadcast %817 : vector<1x128xf32> to vector<16x128xf32>
    %819 = arith.addf %816, %818 : vector<16x128xf32>
    %c0_387 = arith.constant 0 : index
    %c0_388 = arith.constant 0 : index
    %820 = vector.load %arg10[%c0_387, %c0_388] : memref<16x128xf32, #tpu.memory_space<vmem>>, vector<16x128xf32>
    tpu.vector_store %arg10[%c0_387, %c0_388], %819 {strides = array<i32>} : memref<16x128xf32, #tpu.memory_space<vmem>>, vector<16x128xf32>,
    return
  }
  func.func @transform_0(%arg0: i32) -> (i32, i32, i32) {
    %c0_i32 = arith.constant 0 : i32
    %c0_i32_0 = arith.constant 0 : i32
    %c0_i32_1 = arith.constant 0 : i32
    return %c0_i32, %arg0, %c0_i32_0 : i32, i32, i32
  }
  func.func @transform_1(%arg0: i32) -> (i32, i32, i32, i32) {
    %c0_i32 = arith.constant 0 : i32
    %c0_i32_0 = arith.constant 0 : i32
    %c0_i32_1 = arith.constant 0 : i32
    %c0_i32_2 = arith.constant 0 : i32
    %c0_i32_3 = arith.constant 0 : i32
    return %c0_i32, %c0_i32_0, %c0_i32_1, %c0_i32_2 : i32, i32, i32, i32
  }
  func.func @transform_2(%arg0: i32) -> (i32, i32, i32) {
    %c0_i32 = arith.constant 0 : i32
    %c0_i32_0 = arith.constant 0 : i32
    %c0_i32_1 = arith.constant 0 : i32
    %c0_i32_2 = arith.constant 0 : i32
    return %c0_i32, %c0_i32_0, %c0_i32_1 : i32, i32, i32
  }
  func.func @transform_3(%arg0: i32) -> (i32, i32, i32) {
    %c0_i32 = arith.constant 0 : i32
    %c0_i32_0 = arith.constant 0 : i32
    %c0_i32_1 = arith.constant 0 : i32
    %c0_i32_2 = arith.constant 0 : i32
    return %c0_i32, %c0_i32_0, %c0_i32_1 : i32, i32, i32
  }
  func.func @transform_4(%arg0: i32) -> (i32, i32) {
    %c0_i32 = arith.constant 0 : i32
    %c0_i32_0 = arith.constant 0 : i32
    %c0_i32_1 = arith.constant 0 : i32
    return %c0_i32, %c0_i32_0 : i32, i32
  }
  func.func @transform_5(%arg0: i32) -> (i32, i32) {
    %c0_i32 = arith.constant 0 : i32
    %c0_i32_0 = arith.constant 0 : i32
    %c0_i32_1 = arith.constant 0 : i32
    return %c0_i32, %c0_i32_0 : i32, i32
  }
  func.func @transform_6(%arg0: i32) -> (i32, i32) {
    %c0_i32 = arith.constant 0 : i32
    %c0_i32_0 = arith.constant 0 : i32
    %c0_i32_1 = arith.constant 0 : i32
    return %c0_i32, %c0_i32_0 : i32, i32
  }
  func.func @transform_7(%arg0: i32) -> (i32, i32) {
    %c0_i32 = arith.constant 0 : i32
    %c0_i32_0 = arith.constant 0 : i32
    %c0_i32_1 = arith.constant 0 : i32
    return %c0_i32, %c0_i32_0 : i32, i32
  }
  func.func @transform_8(%arg0: i32) -> (i32, i32) {
    %c0_i32 = arith.constant 0 : i32
    %c0_i32_0 = arith.constant 0 : i32
    %c0_i32_1 = arith.constant 0 : i32
    return %c0_i32, %c0_i32_0 : i32, i32
  }
  func.func @transform_9(%arg0: i32) -> (i32, i32) {
    %c0_i32 = arith.constant 0 : i32
    %c0_i32_0 = arith.constant 0 : i32
    return %arg0, %c0_i32 : i32, i32
  }
}

</mosaic_0001>

<llo_original>
// kernel: weather_forward_packed.1
$region0: #{weather_forward_packed.1}
  #allocation0 [shape = 'u32[]', space=smem, size = 0x4, offset = 0x4, fixed_abs, tag = 'smem constant byte address 0x4 - core index']
  #allocation1 [shape = 'u32[144,128]{1,0:T(1,128)}', space=vmem, size = 0x12000, scoped, tag = 'internal scratch']
  #allocation2 [shape = 'bf16[5,16,128]{2,1,0:T(16,128)(2,1)}', space=vmem, size = 0x5000, scoped, tag = 'scratch operand']
  #allocation3 [shape = 'f32[5,16,512]{2,1,0:T(8,128)}', space=vmem, size = 0x28000, scoped, tag = 'scratch operand']
  %s0 = inlined_call_operand.vmem [shape: bf16[5,16,32], index: 0, kind: input, shape index: {}]
  %s1 = inlined_call_operand.hbm [shape: bf16[3,3,128,512], index: 1, kind: input, shape index: {}]
  %s2 = inlined_call_operand.hbm [shape: f32[3,1,512], index: 2, kind: input, shape index: {}]
  %s3 = inlined_call_operand.hbm [shape: bf16[2,128,256], index: 3, kind: input, shape index: {}]
  %s4 = inlined_call_operand.hbm [shape: f32[1,256], index: 4, kind: input, shape index: {}]
  %s5 = inlined_call_operand.hbm [shape: bf16[256,128], index: 5, kind: input, shape index: {}]
  %s6 = inlined_call_operand.hbm [shape: f32[1,128], index: 6, kind: input, shape index: {}]
  %s7 = inlined_call_operand.hbm [shape: bf16[128,128], index: 7, kind: input, shape index: {}]
  %s8 = inlined_call_operand.hbm [shape: f32[1,128], index: 8, kind: input, shape index: {}]
  %s9 = inlined_call_operand.vmem [shape: f32[16,128], index: 9, kind: output, shape index: {}]
  %s10 = sld [smem:[#allocation0]]
  $region78: #{weather_forward_packed.1} parent=0
    _
  %s12 = ssub.s32 1, %s10
  %s13 = scalar_select 0, %s12, %s10
  $region1: #{weather_forward_packed.1} parent=0
    #allocation4 [shape = 'u8[1179648]{0}', space=vmem, size = 0x120000, scoped, tag = 'input window, operand 1, single buffered']
    #allocation5 [shape = 's32[1]{0}', space=sflag, size = 0x4, scoped, tag = 'scoped memory for weather_forward_packed.1']
    #allocation6 [shape = 'u8[6144]{0}', space=vmem, size = 0x1800, scoped, tag = 'input window, operand 2, single buffered']
    #allocation7 [shape = 's32[1]{0}', space=sflag, size = 0x4, scoped, tag = 'scoped memory for weather_forward_packed.1']
    #allocation8 [shape = 'u8[131072]{0}', space=vmem, size = 0x20000, scoped, tag = 'input window, operand 3, single buffered']
    #allocation9 [shape = 'u8[1024]{0}', space=vmem, size = 0x400, scoped, tag = 'input window, operand 4, single buffered']
    #allocation10 [shape = 's32[1]{0}', space=sflag, size = 0x4, scoped, tag = 'scoped memory for weather_forward_packed.1']
    #allocation11 [shape = 'u8[65536]{0}', space=vmem, size = 0x10000, scoped, tag = 'input window, operand 5, single buffered']
    #allocation12 [shape = 'u8[512]{0}', space=vmem, size = 0x400, scoped, tag = 'input window, operand 6, single buffered']
    #allocation13 [shape = 's32[1]{0}', space=sflag, size = 0x4, scoped, tag = 'scoped memory for weather_forward_packed.1']
    #allocation14 [shape = 'u8[32768]{0}', space=vmem, size = 0x8000, scoped, tag = 'input window, operand 7, single buffered']
    #allocation15 [shape = 'u8[512]{0}', space=vmem, size = 0x400, scoped, tag = 'input window, operand 8, single buffered']
    #allocation16 [shape = 's32[1]{0}', space=sflag, size = 0x4, scoped, tag = 'scoped memory for weather_forward_packed.1']
    %14 = vsyncpa [#allocation5], 0
    %15 = vsyncpa [#allocation7], 0
    %16 = vsyncpa [#allocation10], 0
    %17 = vsyncpa [#allocation13], 0
    %18 = vsyncpa [#allocation16], 0
    // Predicated region
    $region2: #{weather_forward_packed.1} parent=1 // pred_check
      _
    $region3: #{weather_forward_packed.1} parent=1 // pred_check_branch
      %20 = sbr.rel (0) target = $region5
    $region4: #{weather_forward_packed.1} parent=1 // pred_region
      _
    $region5: #{weather_forward_packed.1} parent=1 // pred_fallthru
      _
    // Predicated region
    $region6: #{weather_forward_packed.1} parent=1 // pred_check
      _
    $region7: #{weather_forward_packed.1} parent=1 // pred_check_branch
      %22 = sbr.rel (0) target = $region9
    $region8: #{weather_forward_packed.1} parent=1 // pred_region
      %s24 = ssub.s32 36864, 36864
      %25 = vsyncadd [#allocation5], %s24
      %s26 = sshll.u32 [#allocation4], 4
      %s27 = int_to_ptr.vmem [resolvable:$true] %s26
      %32 = dma.hbm_to_vmem [thread:$0]  %s1, 36864, %s27, [#allocation5], 256, 256, 16
    $region9: #{weather_forward_packed.1} parent=1 // pred_fallthru
      _
    // Predicated region
    $region10: #{weather_forward_packed.1} parent=1 // pred_check
      _
    $region11: #{weather_forward_packed.1} parent=1 // pred_check_branch
      %34 = sbr.rel (0) target = $region13
    $region12: #{weather_forward_packed.1} parent=1 // pred_region
      %s36 = ssub.s32 192, 192
      %37 = vsyncadd [#allocation7], %s36
      %s38 = sshll.u32 [#allocation6], 4
      %s39 = int_to_ptr.vmem [resolvable:$true] %s38
      %44 = dma.hbm_to_vmem [thread:$0]  %s2, 192, %s39, [#allocation7], 64, 64, 4
    $region13: #{weather_forward_packed.1} parent=1 // pred_fallthru
      _
    // Predicated region
    $region14: #{weather_forward_packed.1} parent=1 // pred_check
      _
    $region15: #{weather_forward_packed.1} parent=1 // pred_check_branch
      %46 = sbr.rel (0) target = $region17
    $region16: #{weather_forward_packed.1} parent=1 // pred_region
      %s48 = ssub.s32 4096, 4096
      %49 = vsyncadd [#allocation7], %s48
      %s50 = sshll.u32 [#allocation8], 4
      %s51 = int_to_ptr.vmem [resolvable:$true] %s50
      %56 = dma.hbm_to_vmem [thread:$0]  %s3, 4096, %s51, [#allocation7], 128, 128, 8
    $region17: #{weather_forward_packed.1} parent=1 // pred_fallthru
      _
    // Predicated region
    $region18: #{weather_forward_packed.1} parent=1 // pred_check
      _
    $region19: #{weather_forward_packed.1} parent=1 // pred_check_branch
      %58 = sbr.rel (0) target = $region21
    $region20: #{weather_forward_packed.1} parent=1 // pred_region
      %s60 = ssub.s32 32, 32
      %61 = vsyncadd [#allocation10], %s60
      %s63 = sshll.u32 [#allocation9], 4
      %s64 = int_to_ptr.vmem [resolvable:$true] %s63
      %66 = dma.hbm_to_vmem [thread:$0]  %s4, 32, %s64, [#allocation10]
    $region21: #{weather_forward_packed.1} parent=1 // pred_fallthru
      _
    // Predicated region
    $region22: #{weather_forward_packed.1} parent=1 // pred_check
      _
    $region23: #{weather_forward_packed.1} parent=1 // pred_check_branch
      %68 = sbr.rel (0) target = $region25
    $region24: #{weather_forward_packed.1} parent=1 // pred_region
      %s70 = ssub.s32 2048, 2048
      %71 = vsyncadd [#allocation10], %s70
      %s72 = sshll.u32 [#allocation11], 4
      %s73 = int_to_ptr.vmem [resolvable:$true] %s72
      %78 = dma.hbm_to_vmem [thread:$0]  %s5, 2048, %s73, [#allocation10], 64, 64, 4
    $region25: #{weather_forward_packed.1} parent=1 // pred_fallthru
      _
    // Predicated region
    $region26: #{weather_forward_packed.1} parent=1 // pred_check
      _
    $region27: #{weather_forward_packed.1} parent=1 // pred_check_branch
      %80 = sbr.rel (0) target = $region29
    $region28: #{weather_forward_packed.1} parent=1 // pred_region
      %s82 = ssub.s32 16, 16
      %83 = vsyncadd [#allocation13], %s82
      %s85 = sshll.u32 [#allocation12], 4
      %s86 = int_to_ptr.vmem [resolvable:$true] %s85
      %88 = dma.hbm_to_vmem [thread:$0]  %s6, 16, %s86, [#allocation13]
    $region29: #{weather_forward_packed.1} parent=1 // pred_fallthru
      _
    // Predicated region
    $region30: #{weather_forward_packed.1} parent=1 // pred_check
      _
    $region31: #{weather_forward_packed.1} parent=1 // pred_check_branch
      %90 = sbr.rel (0) target = $region33
    $region32: #{weather_forward_packed.1} parent=1 // pred_region
      %s92 = ssub.s32 1024, 1024
      %93 = vsyncadd [#allocation13], %s92
      %s94 = sshll.u32 [#allocation14], 4
      %s95 = int_to_ptr.vmem [resolvable:$true] %s94
      %100 = dma.hbm_to_vmem [thread:$0]  %s7, 1024, %s95, [#allocation13], 64, 64, 4
    $region33: #{weather_forward_packed.1} parent=1 // pred_fallthru
      _
    // Predicated region
    $region34: #{weather_forward_packed.1} parent=1 // pred_check
      _
    $region35: #{weather_forward_packed.1} parent=1 // pred_check_branch
      %102 = sbr.rel (0) target = $region37
    $region36: #{weather_forward_packed.1} parent=1 // pred_region
      %s104 = ssub.s32 16, 16
      %105 = vsyncadd [#allocation16], %s104
      %s107 = sshll.u32 [#allocation15], 4
      %s108 = int_to_ptr.vmem [resolvable:$true] %s107
      %110 = dma.hbm_to_vmem [thread:$0]  %s8, 16, %s108, [#allocation16]
    $region37: #{weather_forward_packed.1} parent=1 // pred_fallthru
      _
    // Predicated region
    $region38: #{weather_forward_packed.1} parent=1 // pred_check
      _
    $region39: #{weather_forward_packed.1} parent=1 // pred_check_branch
      %112 = sbr.rel (0) target = $region41
    $region40: #{weather_forward_packed.1} parent=1 // pred_region
      %113 = dma.done [#allocation5], 36864
    $region41: #{weather_forward_packed.1} parent=1 // pred_fallthru
      _
    // Predicated region
    $region42: #{weather_forward_packed.1} parent=1 // pred_check
      _
    $region43: #{weather_forward_packed.1} parent=1 // pred_check_branch
      %115 = sbr.rel (0) target = $region45
    $region44: #{weather_forward_packed.1} parent=1 // pred_region
      %116 = dma.done [#allocation7], 192
    $region45: #{weather_forward_packed.1} parent=1 // pred_fallthru
      _
    // Predicated region
    $region46: #{weather_forward_packed.1} parent=1 // pred_check
      _
    $region47: #{weather_forward_packed.1} parent=1 // pred_check_branch
      %118 = sbr.rel (0) target = $region49
    $region48: #{weather_forward_packed.1} parent=1 // pred_region
      %119 = dma.done [#allocation7], 4096
    $region49: #{weather_forward_packed.1} parent=1 // pred_fallthru
      _
    // Predicated region
    $region50: #{weather_forward_packed.1} parent=1 // pred_check
      _
    $region51: #{weather_forward_packed.1} parent=1 // pred_check_branch
      %121 = sbr.rel (0) target = $region53
    $region52: #{weather_forward_packed.1} parent=1 // pred_region
      %122 = dma.done [#allocation10], 32
    $region53: #{weather_forward_packed.1} parent=1 // pred_fallthru
      _
    // Predicated region
    $region54: #{weather_forward_packed.1} parent=1 // pred_check
      _
    $region55: #{weather_forward_packed.1} parent=1 // pred_check_branch
      %124 = sbr.rel (0) target = $region57
    $region56: #{weather_forward_packed.1} parent=1 // pred_region
      %125 = dma.done [#allocation10], 2048
    $region57: #{weather_forward_packed.1} parent=1 // pred_fallthru
      _
    // Predicated region
    $region58: #{weather_forward_packed.1} parent=1 // pred_check
      _
    $region59: #{weather_forward_packed.1} parent=1 // pred_check_branch
      %127 = sbr.rel (0) target = $region61
    $region60: #{weather_forward_packed.1} parent=1 // pred_region
      %128 = dma.done [#allocation13], 16
    $region61: #{weather_forward_packed.1} parent=1 // pred_fallthru
      _
    // Predicated region
    $region62: #{weather_forward_packed.1} parent=1 // pred_check
      _
    $region63: #{weather_forward_packed.1} parent=1 // pred_check_branch
      %130 = sbr.rel (0) target = $region65
    $region64: #{weather_forward_packed.1} parent=1 // pred_region
      %131 = dma.done [#allocation13], 1024
    $region65: #{weather_forward_packed.1} parent=1 // pred_fallthru
      _
    // Predicated region
    $region66: #{weather_forward_packed.1} parent=1 // pred_check
      _
    $region67: #{weather_forward_packed.1} parent=1 // pred_check_branch
      %133 = sbr.rel (0) target = $region69
    $region68: #{weather_forward_packed.1} parent=1 // pred_region
      %134 = dma.done [#allocation16], 16
    $region69: #{weather_forward_packed.1} parent=1 // pred_fallthru
      _
    %136 = vst [vmem:[#allocation2] sm:$0xff] 0
    %137 = vst [vmem:[#allocation2 + $0x8] sm:$0xff] 0
    %138 = vst [vmem:[#allocation2 + $0x10] sm:$0xff] 0
    %139 = vst [vmem:[#allocation2 + $0x18] sm:$0xff] 0
    %140 = vst [vmem:[#allocation2 + $0x20] sm:$0xff] 0
    %v141 = vld [vmem:[%s0] sm:$0xf]
    %v142 = vld [vmem:[%s0 + $0x4] sm:$0xf]
    %v143 = vld [vmem:[%s0 + $0x8] sm:$0xf]
    %v144 = vld [vmem:[%s0 + $0xc] sm:$0xf]
    %v145 = vld [vmem:[%s0 + $0x10] sm:$0xf]
    %v146 = vld [vmem:[%s0 + $0x14] sm:$0xf]
    %v147 = vld [vmem:[%s0 + $0x18] sm:$0xf]
    %v148 = vld [vmem:[%s0 + $0x1c] sm:$0xf]
    %v149 = vld [vmem:[%s0 + $0x20] sm:$0xf]
    %v150 = vld [vmem:[%s0 + $0x24] sm:$0xf]
    %v161 = vunpack.c.l.b16 %v141
    %v162 = vunpack.c.l.b16 %v142
    %v163 = vunpack.c.l.b16 %v143
    %v164 = vunpack.c.l.b16 %v144
    %v165 = vunpack.c.l.b16 %v145
    %v166 = vunpack.c.l.b16 %v146
    %v167 = vunpack.c.l.b16 %v147
    %v168 = vunpack.c.l.b16 %v148
    %v169 = vunpack.c.l.b16 %v149
    %v170 = vunpack.c.l.b16 %v150
    %v171 = vpack.c.b16 %v162, %v161
    %v172 = vpack.c.b16 %v164, %v163
    %v173 = vpack.c.b16 %v166, %v165
    %v174 = vpack.c.b16 %v168, %v167
    %v175 = vpack.c.b16 %v170, %v169
    %vm181 = vcmask 261120
    %182 = vst.msk [vmem:[#allocation2] sm:$0xff] %vm181, %v171
    %183 = vst.msk [vmem:[#allocation2 + $0x8] sm:$0xff] %vm181, %v172
    %184 = vst.msk [vmem:[#allocation2 + $0x10] sm:$0xff] %vm181, %v173
    %185 = vst.msk [vmem:[#allocation2 + $0x18] sm:$0xff] %vm181, %v174
    %186 = vst.msk [vmem:[#allocation2 + $0x20] sm:$0xff] %vm181, %v175
    %v187 = vld [vmem:[#allocation2] sm:$0xff]
    %v188 = vld [vmem:[#allocation2 + $0x8] sm:$0xff]
    %v189 = vld [vmem:[#allocation2 + $0x10] sm:$0xff]
    %v190 = vld [vmem:[#allocation2 + $0x18] sm:$0xff]
    %v191 = vld [vmem:[#allocation2 + $0x20] sm:$0xff]
    %v192 = vld [vmem:[#allocation4] sm:$0xff]
    %v193 = vld [vmem:[#allocation4 + $0x8] sm:$0xff]
    %v194 = vld [vmem:[#allocation4 + $0x10] sm:$0xff]
    %v195 = vld [vmem:[#allocation4 + $0x18] sm:$0xff]
    %v196 = vld [vmem:[#allocation4 + $0x20] sm:$0xff]
    %v197 = vld [vmem:[#allocation4 + $0x28] sm:$0xff]
    %v198 = vld [vmem:[#allocation4 + $0x30] sm:$0xff]
    %v199 = vld [vmem:[#allocation4 + $0x38] sm:$0xff]
    %v200 = vld [vmem:[#allocation4 + $0x40] sm:$0xff]
    %v201 = vld [vmem:[#allocation4 + $0x48] sm:$0xff]
    %v202 = vld [vmem:[#allocation4 + $0x50] sm:$0xff]
    %v203 = vld [vmem:[#allocation4 + $0x58] sm:$0xff]
    %v204 = vld [vmem:[#allocation4 + $0x60] sm:$0xff]
    %v205 = vld [vmem:[#allocation4 + $0x68] sm:$0xff]
    %v206 = vld [vmem:[#allocation4 + $0x70] sm:$0xff]
    %v207 = vld [vmem:[#allocation4 + $0x78] sm:$0xff]
    %v208 = vld [vmem:[#allocation4 + $0x80] sm:$0xff]
    %v209 = vld [vmem:[#allocation4 + $0x88] sm:$0xff]
    %v210 = vld [vmem:[#allocation4 + $0x90] sm:$0xff]
    %v211 = vld [vmem:[#allocation4 + $0x98] sm:$0xff]
    %v212 = vld [vmem:[#allocation4 + $0xa0] sm:$0xff]
    %v213 = vld [vmem:[#allocation4 + $0xa8] sm:$0xff]
    %v214 = vld [vmem:[#allocation4 + $0xb0] sm:$0xff]
    %v215 = vld [vmem:[#allocation4 + $0xb8] sm:$0xff]
    %v216 = vld [vmem:[#allocation4 + $0xc0] sm:$0xff]
    %v217 = vld [vmem:[#allocation4 + $0xc8] sm:$0xff]
    %v218 = vld [vmem:[#allocation4 + $0xd0] sm:$0xff]
    %v219 = vld [vmem:[#allocation4 + $0xd8] sm:$0xff]
    %v220 = vld [vmem:[#allocation4 + $0xe0] sm:$0xff]
    %v221 = vld [vmem:[#allocation4 + $0xe8] sm:$0xff]
    %v222 = vld [vmem:[#allocation4 + $0xf0] sm:$0xff]
    %v223 = vld [vmem:[#allocation4 + $0xf8] sm:$0xff]
    %s224 = scalar_lea.vmem [#allocation4], 256
    %v225 = vld [vmem:[%s224] sm:$0xff]
    %v226 = vld [vmem:[%s224 + $0x8] sm:$0xff]
    %v227 = vld [vmem:[%s224 + $0x10] sm:$0xff]
    %v228 = vld [vmem:[%s224 + $0x18] sm:$0xff]
    %v229 = vld [vmem:[%s224 + $0x20] sm:$0xff]
    %v230 = vld [vmem:[%s224 + $0x28] sm:$0xff]
    %v231 = vld [vmem:[%s224 + $0x30] sm:$0xff]
    %v232 = vld [vmem:[%s224 + $0x38] sm:$0xff]
    %v233 = vld [vmem:[%s224 + $0x40] sm:$0xff]
    %v234 = vld [vmem:[%s224 + $0x48] sm:$0xff]
    %v235 = vld [vmem:[%s224 + $0x50] sm:$0xff]
    %v236 = vld [vmem:[%s224 + $0x58] sm:$0xff]
    %v237 = vld [vmem:[%s224 + $0x60] sm:$0xff]
    %v238 = vld [vmem:[%s224 + $0x68] sm:$0xff]
    %v239 = vld [vmem:[%s224 + $0x70] sm:$0xff]
    %v240 = vld [vmem:[%s224 + $0x78] sm:$0xff]
    %v241 = vld [vmem:[%s224 + $0x80] sm:$0xff]
    %v242 = vld [vmem:[%s224 + $0x88] sm:$0xff]
    %v243 = vld [vmem:[%s224 + $0x90] sm:$0xff]
    %v244 = vld [vmem:[%s224 + $0x98] sm:$0xff]
    %v245 = vld [vmem:[%s224 + $0xa0] sm:$0xff]
    %v246 = vld [vmem:[%s224 + $0xa8] sm:$0xff]
    %v247 = vld [vmem:[%s224 + $0xb0] sm:$0xff]
    %v248 = vld [vmem:[%s224 + $0xb8] sm:$0xff]
    %v249 = vld [vmem:[%s224 + $0xc0] sm:$0xff]
    %v250 = vld [vmem:[%s224 + $0xc8] sm:$0xff]
    %v251 = vld [vmem:[%s224 + $0xd0] sm:$0xff]
    %v252 = vld [vmem:[%s224 + $0xd8] sm:$0xff]
    %v253 = vld [vmem:[%s224 + $0xe0] sm:$0xff]
    %v254 = vld [vmem:[%s224 + $0xe8] sm:$0xff]
    %v255 = vld [vmem:[%s224 + $0xf0] sm:$0xff]
    %v256 = vld [vmem:[%s224 + $0xf8] sm:$0xff]
    %s257 = scalar_lea.vmem [#allocation4], 512
    %v258 = vld [vmem:[%s257] sm:$0xff]
    %v259 = vld [vmem:[%s257 + $0x8] sm:$0xff]
    %v260 = vld [vmem:[%s257 + $0x10] sm:$0xff]
    %v261 = vld [vmem:[%s257 + $0x18] sm:$0xff]
    %v262 = vld [vmem:[%s257 + $0x20] sm:$0xff]
    %v263 = vld [vmem:[%s257 + $0x28] sm:$0xff]
    %v264 = vld [vmem:[%s257 + $0x30] sm:$0xff]
    %v265 = vld [vmem:[%s257 + $0x38] sm:$0xff]
    %v266 = vld [vmem:[%s257 + $0x40] sm:$0xff]
    %v267 = vld [vmem:[%s257 + $0x48] sm:$0xff]
    %v268 = vld [vmem:[%s257 + $0x50] sm:$0xff]
    %v269 = vld [vmem:[%s257 + $0x58] sm:$0xff]
    %v270 = vld [vmem:[%s257 + $0x60] sm:$0xff]
    %v271 = vld [vmem:[%s257 + $0x68] sm:$0xff]
    %v272 = vld [vmem:[%s257 + $0x70] sm:$0xff]
    %v273 = vld [vmem:[%s257 + $0x78] sm:$0xff]
    %v274 = vld [vmem:[%s257 + $0x80] sm:$0xff]
    %v275 = vld [vmem:[%s257 + $0x88] sm:$0xff]
    %v276 = vld [vmem:[%s257 + $0x90] sm:$0xff]
    %v277 = vld [vmem:[%s257 + $0x98] sm:$0xff]
    %v278 = vld [vmem:[%s257 + $0xa0] sm:$0xff]
    %v279 = vld [vmem:[%s257 + $0xa8] sm:$0xff]
    %v280 = vld [vmem:[%s257 + $0xb0] sm:$0xff]
    %v281 = vld [vmem:[%s257 + $0xb8] sm:$0xff]
    %v282 = vld [vmem:[%s257 + $0xc0] sm:$0xff]
    %v283 = vld [vmem:[%s257 + $0xc8] sm:$0xff]
    %v284 = vld [vmem:[%s257 + $0xd0] sm:$0xff]
    %v285 = vld [vmem:[%s257 + $0xd8] sm:$0xff]
    %v286 = vld [vmem:[%s257 + $0xe0] sm:$0xff]
    %v287 = vld [vmem:[%s257 + $0xe8] sm:$0xff]
    %v288 = vld [vmem:[%s257 + $0xf0] sm:$0xff]
    %v289 = vld [vmem:[%s257 + $0xf8] sm:$0xff]
    %v290 = vld [vmem:[#allocation6] sm:$0xf]
    %v292 = vlaneseq
    %v293 = vshrl.u32 %v292, 7
    %v294 = vsub.s32 0, %v293
    %v295 = vrot.slane %v290, %v294
    %v296 = vlaneseq
    %v297 = vshrl.u32 %v296, 7
    %v298 = vsub.s32 1, %v297
    %v299 = vrot.slane %v290, %v298
    %v300 = vlaneseq
    %v301 = vshrl.u32 %v300, 7
    %v302 = vsub.s32 2, %v301
    %v303 = vrot.slane %v290, %v302
    %v304 = vlaneseq
    %v305 = vshrl.u32 %v304, 7
    %v306 = vsub.s32 3, %v305
    %v307 = vrot.slane %v290, %v306
    %v344 = vunpack.c.l.b16 %v192
    %v345 = vunpack.c.h.b16 %v192
    %v346 = vunpack.c.l.b16 %v193
    %v347 = vunpack.c.h.b16 %v193
    %v348 = vunpack.c.l.b16 %v194
    %v349 = vunpack.c.h.b16 %v194
    %v350 = vunpack.c.l.b16 %v195
    %v351 = vunpack.c.h.b16 %v195
    %v352 = vunpack.c.l.b16 %v196
    %v353 = vunpack.c.h.b16 %v196
    %v354 = vunpack.c.l.b16 %v197
    %v355 = vunpack.c.h.b16 %v197
    %v356 = vunpack.c.l.b16 %v198
    %v357 = vunpack.c.h.b16 %v198
    %v358 = vunpack.c.l.b16 %v199
    %v359 = vunpack.c.h.b16 %v199
    %v360 = vunpack.c.l.b16 %v200
    %v361 = vunpack.c.h.b16 %v200
    %v362 = vunpack.c.l.b16 %v201
    %v363 = vunpack.c.h.b16 %v201
    %v364 = vunpack.c.l.b16 %v202
    %v365 = vunpack.c.h.b16 %v202
    %v366 = vunpack.c.l.b16 %v203
    %v367 = vunpack.c.h.b16 %v203
    %v368 = vunpack.c.l.b16 %v204
    %v369 = vunpack.c.h.b16 %v204
    %v370 = vunpack.c.l.b16 %v205
    %v371 = vunpack.c.h.b16 %v205
    %v372 = vunpack.c.l.b16 %v206
    %v373 = vunpack.c.h.b16 %v206
    %v374 = vunpack.c.l.b16 %v207
    %v375 = vunpack.c.h.b16 %v207
    %v376 = vunpack.c.l.b16 %v208
    %v377 = vunpack.c.h.b16 %v208
    %v378 = vunpack.c.l.b16 %v209
    %v379 = vunpack.c.h.b16 %v209
    %v380 = vunpack.c.l.b16 %v210
    %v381 = vunpack.c.h.b16 %v210
    %v382 = vunpack.c.l.b16 %v211
    %v383 = vunpack.c.h.b16 %v211
    %v384 = vunpack.c.l.b16 %v212
    %v385 = vunpack.c.h.b16 %v212
    %v386 = vunpack.c.l.b16 %v213
    %v387 = vunpack.c.h.b16 %v213
    %v388 = vunpack.c.l.b16 %v214
    %v389 = vunpack.c.h.b16 %v214
    %v390 = vunpack.c.l.b16 %v215
    %v391 = vunpack.c.h.b16 %v215
    %v392 = vunpack.c.l.b16 %v216
    %v393 = vunpack.c.h.b16 %v216
    %v394 = vunpack.c.l.b16 %v217
    %v395 = vunpack.c.h.b16 %v217
    %v396 = vunpack.c.l.b16 %v218
    %v397 = vunpack.c.h.b16 %v218
    %v398 = vunpack.c.l.b16 %v219
    %v399 = vunpack.c.h.b16 %v219
    %v400 = vunpack.c.l.b16 %v220
    %v401 = vunpack.c.h.b16 %v220
    %v402 = vunpack.c.l.b16 %v221
    %v403 = vunpack.c.h.b16 %v221
    %v404 = vunpack.c.l.b16 %v222
    %v405 = vunpack.c.h.b16 %v222
    %v406 = vunpack.c.l.b16 %v223
    %v407 = vunpack.c.h.b16 %v223
    %v408 = vpack.c.b16 %v348, %v344
    %v409 = vpack.c.b16 %v349, %v345
    %v410 = vpack.c.b16 %v350, %v346
    %v411 = vpack.c.b16 %v351, %v347
    %v412 = vpack.c.b16 %v356, %v352
    %v413 = vpack.c.b16 %v357, %v353
    %v414 = vpack.c.b16 %v358, %v354
    %v415 = vpack.c.b16 %v359, %v355
    %v416 = vpack.c.b16 %v364, %v360
    %v417 = vpack.c.b16 %v365, %v361
    %v418 = vpack.c.b16 %v366, %v362
    %v419 = vpack.c.b16 %v367, %v363
    %v420 = vpack.c.b16 %v372, %v368
    %v421 = vpack.c.b16 %v373, %v369
    %v422 = vpack.c.b16 %v374, %v370
    %v423 = vpack.c.b16 %v375, %v371
    %v424 = vpack.c.b16 %v380, %v376
    %v425 = vpack.c.b16 %v381, %v377
    %v426 = vpack.c.b16 %v382, %v378
    %v427 = vpack.c.b16 %v383, %v379
    %v428 = vpack.c.b16 %v388, %v384
    %v429 = vpack.c.b16 %v389, %v385
    %v430 = vpack.c.b16 %v390, %v386
    %v431 = vpack.c.b16 %v391, %v387
    %v432 = vpack.c.b16 %v396, %v392
    %v433 = vpack.c.b16 %v397, %v393
    %v434 = vpack.c.b16 %v398, %v394
    %v435 = vpack.c.b16 %v399, %v395
    %v436 = vpack.c.b16 %v404, %v400
    %v437 = vpack.c.b16 %v405, %v401
    %v438 = vpack.c.b16 %v406, %v402
    %v439 = vpack.c.b16 %v407, %v403
    %472 = vmatprep.subr.bf16.mxu0 %v409
    %473 = vmatpush1.bf16.msra.mxu0 %v408
    %474 = vmatprep.subr.bf16.mxu0 %v413
    %475 = vmatpush1.bf16.msra.mxu0 %v412
    %476 = vmatprep.subr.bf16.mxu0 %v417
    %477 = vmatpush1.bf16.msra.mxu0 %v416
    %478 = vmatprep.subr.bf16.mxu0 %v421
    %479 = vmatpush1.bf16.msra.mxu0 %v420
    %480 = vmatprep.subr.bf16.mxu0 %v425
    %481 = vmatpush1.bf16.msra.mxu0 %v424
    %482 = vmatprep.subr.bf16.mxu0 %v429
    %483 = vmatpush1.bf16.msra.mxu0 %v428
    %484 = vmatprep.subr.bf16.mxu0 %v433
    %485 = vmatpush1.bf16.msra.mxu0 %v432
    %486 = vmatprep.subr.bf16.mxu0 %v437
    %487 = vmatpush1.bf16.msra.mxu0 %v436
    %488 = vmatprep.subr.bf16.mxu0 0
    %489 = vmatpush1.bf16.msra.mxu0 0
    %490 = vmatprep.subr.bf16.mxu0 0
    %491 = vmatpush1.bf16.msra.mxu0 0
    %492 = vmatprep.subr.bf16.mxu0 0
    %493 = vmatpush1.bf16.msra.mxu0 0
    %494 = vmatprep.subr.bf16.mxu0 0
    %495 = vmatpush1.bf16.msra.mxu0 0
    %496 = vmatprep.subr.bf16.mxu0 0
    %497 = vmatpush1.bf16.msra.mxu0 0
    %498 = vmatprep.subr.bf16.mxu0 0
    %499 = vmatpush1.bf16.msra.mxu0 0
    %500 = vmatprep.subr.bf16.mxu0 0
    %501 = vmatpush1.bf16.msra.mxu0 0
    %502 = vmatprep.subr.bf16.mxu0 0
    %503 = vmatpush1.bf16.msra.mxu0 0
    %504 = vmatprep.mubr.bf16.mxu0 0
    %505 = vmatmul.mubr.bf16.gmra.mrb[0].mxu0 %v187
    %v506 = vpop.f32.mrb[0].mxu0
    %v507 = vadd.f32 %v295, %v506
    %v508 = vpop.f32.mrb[0].mxu0
    %v509 = vadd.f32 %v299, %v508
    %v510 = vpop.f32.mrb[0].mxu0
    %v511 = vadd.f32 %v295, %v510
    %v512 = vpop.f32.mrb[0].mxu0
    %v513 = vadd.f32 %v299, %v512
    %514 = vmatprep.mubr.bf16.mxu0 0
    %515 = vmatmul.mubr.bf16.gmra.mrb[0].mxu0 %v188
    %v516 = vpop.f32.mrb[0].mxu0
    %v517 = vadd.f32 %v295, %v516
    %v518 = vpop.f32.mrb[0].mxu0
    %v519 = vadd.f32 %v299, %v518
    %v520 = vpop.f32.mrb[0].mxu0
    %v521 = vadd.f32 %v295, %v520
    %v522 = vpop.f32.mrb[0].mxu0
    %v523 = vadd.f32 %v299, %v522
    %524 = vmatprep.mubr.bf16.mxu0 0
    %525 = vmatmul.mubr.bf16.gmra.mrb[0].mxu0 %v189
    %v526 = vpop.f32.mrb[0].mxu0
    %v527 = vadd.f32 %v295, %v526
    %v528 = vpop.f32.mrb[0].mxu0
    %v529 = vadd.f32 %v299, %v528
    %v530 = vpop.f32.mrb[0].mxu0
    %v531 = vadd.f32 %v295, %v530
    %v532 = vpop.f32.mrb[0].mxu0
    %v533 = vadd.f32 %v299, %v532
    %534 = vmatprep.mubr.bf16.mxu0 0
    %535 = vmatmul.mubr.bf16.gmra.mrb[0].mxu0 %v190
    %v536 = vpop.f32.mrb[0].mxu0
    %v537 = vadd.f32 %v295, %v536
    %v538 = vpop.f32.mrb[0].mxu0
    %v539 = vadd.f32 %v299, %v538
    %v540 = vpop.f32.mrb[0].mxu0
    %v541 = vadd.f32 %v295, %v540
    %v542 = vpop.f32.mrb[0].mxu0
    %v543 = vadd.f32 %v299, %v542
    %544 = vmatprep.mubr.bf16.mxu0 0
    %545 = vmatmul.mubr.bf16.gmra.mrb[0].mxu0 %v191
    %v546 = vpop.f32.mrb[0].mxu0
    %v547 = vadd.f32 %v295, %v546
    %v548 = vpop.f32.mrb[0].mxu0
    %v549 = vadd.f32 %v299, %v548
    %v550 = vpop.f32.mrb[0].mxu0
    %v551 = vadd.f32 %v295, %v550
    %v552 = vpop.f32.mrb[0].mxu0
    %v553 = vadd.f32 %v299, %v552
    %554 = vdwg.mxu0
    %555 = vmatprep.subr.bf16.mxu0 %v411
    %556 = vmatpush1.bf16.msra.mxu0 %v410
    %557 = vmatprep.subr.bf16.mxu0 %v415
    %558 = vmatpush1.bf16.msra.mxu0 %v414
    %559 = vmatprep.subr.bf16.mxu0 %v419
    %560 = vmatpush1.bf16.msra.mxu0 %v418
    %561 = vmatprep.subr.bf16.mxu0 %v423
    %562 = vmatpush1.bf16.msra.mxu0 %v422
    %563 = vmatprep.subr.bf16.mxu0 %v427
    %564 = vmatpush1.bf16.msra.mxu0 %v426
    %565 = vmatprep.subr.bf16.mxu0 %v431
    %566 = vmatpush1.bf16.msra.mxu0 %v430
    %567 = vmatprep.subr.bf16.mxu0 %v435
    %568 = vmatpush1.bf16.msra.mxu0 %v434
    %569 = vmatprep.subr.bf16.mxu0 %v439
    %570 = vmatpush1.bf16.msra.mxu0 %v438
    %571 = vmatprep.subr.bf16.mxu0 0
    %572 = vmatpush1.bf16.msra.mxu0 0
    %573 = vmatprep.subr.bf16.mxu0 0
    %574 = vmatpush1.bf16.msra.mxu0 0
    %575 = vmatprep.subr.bf16.mxu0 0
    %576 = vmatpush1.bf16.msra.mxu0 0
    %577 = vmatprep.subr.bf16.mxu0 0
    %578 = vmatpush1.bf16.msra.mxu0 0
    %579 = vmatprep.subr.bf16.mxu0 0
    %580 = vmatpush1.bf16.msra.mxu0 0
    %581 = vmatprep.subr.bf16.mxu0 0
    %582 = vmatpush1.bf16.msra.mxu0 0
    %583 = vmatprep.subr.bf16.mxu0 0
    %584 = vmatpush1.bf16.msra.mxu0 0
    %585 = vmatprep.subr.bf16.mxu0 0
    %586 = vmatpush1.bf16.msra.mxu0 0
    %587 = vmatprep.mubr.bf16.mxu0 0
    %588 = vmatmul.mubr.bf16.gmra.mrb[0].mxu0 %v187
    %v589 = vpop.f32.mrb[0].mxu0
    %v590 = vadd.f32 %v303, %v589
    %v591 = vpop.f32.mrb[0].mxu0
    %v592 = vadd.f32 %v307, %v591
    %v593 = vpop.f32.mrb[0].mxu0
    %v594 = vadd.f32 %v303, %v593
    %v595 = vpop.f32.mrb[0].mxu0
    %v596 = vadd.f32 %v307, %v595
    %597 = vmatprep.mubr.bf16.mxu0 0
    %598 = vmatmul.mubr.bf16.gmra.mrb[0].mxu0 %v188
    %v599 = vpop.f32.mrb[0].mxu0
    %v600 = vadd.f32 %v303, %v599
    %v601 = vpop.f32.mrb[0].mxu0
    %v602 = vadd.f32 %v307, %v601
    %v603 = vpop.f32.mrb[0].mxu0
    %v604 = vadd.f32 %v303, %v603
    %v605 = vpop.f32.mrb[0].mxu0
    %v606 = vadd.f32 %v307, %v605
    %607 = vmatprep.mubr.bf16.mxu0 0
    %608 = vmatmul.mubr.bf16.gmra.mrb[0].mxu0 %v189
    %v609 = vpop.f32.mrb[0].mxu0
    %v610 = vadd.f32 %v303, %v609
    %v611 = vpop.f32.mrb[0].mxu0
    %v612 = vadd.f32 %v307, %v611
    %v613 = vpop.f32.mrb[0].mxu0
    %v614 = vadd.f32 %v303, %v613
    %v615 = vpop.f32.mrb[0].mxu0
    %v616 = vadd.f32 %v307, %v615
    %617 = vmatprep.mubr.bf16.mxu0 0
    %618 = vmatmul.mubr.bf16.gmra.mrb[0].mxu0 %v190
    %v619 = vpop.f32.mrb[0].mxu0
    %v620 = vadd.f32 %v303, %v619
    %v621 = vpop.f32.mrb[0].mxu0
    %v622 = vadd.f32 %v307, %v621
    %v623 = vpop.f32.mrb[0].mxu0
    %v624 = vadd.f32 %v303, %v623
    %v625 = vpop.f32.mrb[0].mxu0
    %v626 = vadd.f32 %v307, %v625
    %627 = vmatprep.mubr.bf16.mxu0 0
    %628 = vmatmul.mubr.bf16.gmra.mrb[0].mxu0 %v191
    %v629 = vpop.f32.mrb[0].mxu0
    %v630 = vadd.f32 %v303, %v629
    %v631 = vpop.f32.mrb[0].mxu0
    %v632 = vadd.f32 %v307, %v631
    %v633 = vpop.f32.mrb[0].mxu0
    %v634 = vadd.f32 %v303, %v633
    %v635 = vpop.f32.mrb[0].mxu0
    %v636 = vadd.f32 %v307, %v635
    %637 = vdwg.mxu0
    %v670 = vunpack.c.l.b16 %v225
    %v671 = vunpack.c.h.b16 %v225
    %v672 = vunpack.c.l.b16 %v226
    %v673 = vunpack.c.h.b16 %v226
    %v674 = vunpack.c.l.b16 %v227
    %v675 = vunpack.c.h.b16 %v227
    %v676 = vunpack.c.l.b16 %v228
    %v677 = vunpack.c.h.b16 %v228
    %v678 = vunpack.c.l.b16 %v229
    %v679 = vunpack.c.h.b16 %v229
    %v680 = vunpack.c.l.b16 %v230
    %v681 = vunpack.c.h.b16 %v230
    %v682 = vunpack.c.l.b16 %v231
    %v683 = vunpack.c.h.b16 %v231
    %v684 = vunpack.c.l.b16 %v232
    %v685 = vunpack.c.h.b16 %v232
    %v686 = vunpack.c.l.b16 %v233
    %v687 = vunpack.c.h.b16 %v233
    %v688 = vunpack.c.l.b16 %v234
    %v689 = vunpack.c.h.b16 %v234
    %v690 = vunpack.c.l.b16 %v235
    %v691 = vunpack.c.h.b16 %v235
    %v692 = vunpack.c.l.b16 %v236
    %v693 = vunpack.c.h.b16 %v236
    %v694 = vunpack.c.l.b16 %v237
    %v695 = vunpack.c.h.b16 %v237
    %v696 = vunpack.c.l.b16 %v238
    %v697 = vunpack.c.h.b16 %v238
    %v698 = vunpack.c.l.b16 %v239
    %v699 = vunpack.c.h.b16 %v239
    %v700 = vunpack.c.l.b16 %v240
    %v701 = vunpack.c.h.b16 %v240
    %v702 = vunpack.c.l.b16 %v241
    %v703 = vunpack.c.h.b16 %v241
    %v704 = vunpack.c.l.b16 %v242
    %v705 = vunpack.c.h.b16 %v242
    %v706 = vunpack.c.l.b16 %v243
    %v707 = vunpack.c.h.b16 %v243
    %v708 = vunpack.c.l.b16 %v244
    %v709 = vunpack.c.h.b16 %v244
    %v710 = vunpack.c.l.b16 %v245
    %v711 = vunpack.c.h.b16 %v245
    %v712 = vunpack.c.l.b16 %v246
    %v713 = vunpack.c.h.b16 %v246
    %v714 = vunpack.c.l.b16 %v247
    %v715 = vunpack.c.h.b16 %v247
    %v716 = vunpack.c.l.b16 %v248
    %v717 = vunpack.c.h.b16 %v248
    %v718 = vunpack.c.l.b16 %v249
    %v719 = vunpack.c.h.b16 %v249
    %v720 = vunpack.c.l.b16 %v250
    %v721 = vunpack.c.h.b16 %v250
    %v722 = vunpack.c.l.b16 %v251
    %v723 = vunpack.c.h.b16 %v251
    %v724 = vunpack.c.l.b16 %v252
    %v725 = vunpack.c.h.b16 %v252
    %v726 = vunpack.c.l.b16 %v253
    %v727 = vunpack.c.h.b16 %v253
    %v728 = vunpack.c.l.b16 %v254
    %v729 = vunpack.c.h.b16 %v254
    %v730 = vunpack.c.l.b16 %v255
    %v731 = vunpack.c.h.b16 %v255
    %v732 = vunpack.c.l.b16 %v256
    %v733 = vunpack.c.h.b16 %v256
    %v734 = vpack.c.b16 %v674, %v670
    %v735 = vpack.c.b16 %v675, %v671
    %v736 = vpack.c.b16 %v676, %v672
    %v737 = vpack.c.b16 %v677, %v673
    %v738 = vpack.c.b16 %v682, %v678
    %v739 = vpack.c.b16 %v683, %v679
    %v740 = vpack.c.b16 %v684, %v680
    %v741 = vpack.c.b16 %v685, %v681
    %v742 = vpack.c.b16 %v690, %v686
    %v743 = vpack.c.b16 %v691, %v687
    %v744 = vpack.c.b16 %v692, %v688
    %v745 = vpack.c.b16 %v693, %v689
    %v746 = vpack.c.b16 %v698, %v694
    %v747 = vpack.c.b16 %v699, %v695
    %v748 = vpack.c.b16 %v700, %v696
    %v749 = vpack.c.b16 %v701, %v697
    %v750 = vpack.c.b16 %v706, %v702
    %v751 = vpack.c.b16 %v707, %v703
    %v752 = vpack.c.b16 %v708, %v704
    %v753 = vpack.c.b16 %v709, %v705
    %v754 = vpack.c.b16 %v714, %v710
    %v755 = vpack.c.b16 %v715, %v711
    %v756 = vpack.c.b16 %v716, %v712
    %v757 = vpack.c.b16 %v717, %v713
    %v758 = vpack.c.b16 %v722, %v718
    %v759 = vpack.c.b16 %v723, %v719
    %v760 = vpack.c.b16 %v724, %v720
    %v761 = vpack.c.b16 %v725, %v721
    %v762 = vpack.c.b16 %v730, %v726
    %v763 = vpack.c.b16 %v731, %v727
    %v764 = vpack.c.b16 %v732, %v728
    %v765 = vpack.c.b16 %v733, %v729
    %798 = vmatprep.subr.bf16.mxu0 %v735
    %799 = vmatpush1.bf16.msra.mxu0 %v734
    %800 = vmatprep.subr.bf16.mxu0 %v739
    %801 = vmatpush1.bf16.msra.mxu0 %v738
    %802 = vmatprep.subr.bf16.mxu0 %v743
    %803 = vmatpush1.bf16.msra.mxu0 %v742
    %804 = vmatprep.subr.bf16.mxu0 %v747
    %805 = vmatpush1.bf16.msra.mxu0 %v746
    %806 = vmatprep.subr.bf16.mxu0 %v751
    %807 = vmatpush1.bf16.msra.mxu0 %v750
    %808 = vmatprep.subr.bf16.mxu0 %v755
    %809 = vmatpush1.bf16.msra.mxu0 %v754
    %810 = vmatprep.subr.bf16.mxu0 %v759
    %811 = vmatpush1.bf16.msra.mxu0 %v758
    %812 = vmatprep.subr.bf16.mxu0 %v763
    %813 = vmatpush1.bf16.msra.mxu0 %v762
    %814 = vmatprep.subr.bf16.mxu0 0
    %815 = vmatpush1.bf16.msra.mxu0 0
    %816 = vmatprep.subr.bf16.mxu0 0
    %817 = vmatpush1.bf16.msra.mxu0 0
    %818 = vmatprep.subr.bf16.mxu0 0
    %819 = vmatpush1.bf16.msra.mxu0 0
    %820 = vmatprep.subr.bf16.mxu0 0
    %821 = vmatpush1.bf16.msra.mxu0 0
    %822 = vmatprep.subr.bf16.mxu0 0
    %823 = vmatpush1.bf16.msra.mxu0 0
    %824 = vmatprep.subr.bf16.mxu0 0
    %825 = vmatpush1.bf16.msra.mxu0 0
    %826 = vmatprep.subr.bf16.mxu0 0
    %827 = vmatpush1.bf16.msra.mxu0 0
    %828 = vmatprep.subr.bf16.mxu0 0
    %829 = vmatpush1.bf16.msra.mxu0 0
    %830 = vmatprep.mubr.bf16.mxu0 0
    %831 = vmatmul.mubr.bf16.gmra.mrb[0].mxu0 %v187
    %v832 = vpop.f32.mrb[0].mxu0
    %v833 = vadd.f32 0.0, %v832
    %v834 = vpop.f32.mrb[0].mxu0
    %v835 = vadd.f32 0.0, %v834
    %v836 = vpop.f32.mrb[0].mxu0
    %v837 = vadd.f32 0.0, %v836
    %v838 = vpop.f32.mrb[0].mxu0
    %v839 = vadd.f32 0.0, %v838
    %840 = vmatprep.mubr.bf16.mxu0 0
    %841 = vmatmul.mubr.bf16.gmra.mrb[0].mxu0 %v188
    %v842 = vpop.f32.mrb[0].mxu0
    %v843 = vadd.f32 0.0, %v842
    %v844 = vpop.f32.mrb[0].mxu0
    %v845 = vadd.f32 0.0, %v844
    %v846 = vpop.f32.mrb[0].mxu0
    %v847 = vadd.f32 0.0, %v846
    %v848 = vpop.f32.mrb[0].mxu0
    %v849 = vadd.f32 0.0, %v848
    %850 = vmatprep.mubr.bf16.mxu0 0
    %851 = vmatmul.mubr.bf16.gmra.mrb[0].mxu0 %v189
    %v852 = vpop.f32.mrb[0].mxu0
    %v853 = vadd.f32 0.0, %v852
    %v854 = vpop.f32.mrb[0].mxu0
    %v855 = vadd.f32 0.0, %v854
    %v856 = vpop.f32.mrb[0].mxu0
    %v857 = vadd.f32 0.0, %v856
    %v858 = vpop.f32.mrb[0].mxu0
    %v859 = vadd.f32 0.0, %v858
    %860 = vmatprep.mubr.bf16.mxu0 0
    %861 = vmatmul.mubr.bf16.gmra.mrb[0].mxu0 %v190
    %v862 = vpop.f32.mrb[0].mxu0
    %v863 = vadd.f32 0.0, %v862
    %v864 = vpop.f32.mrb[0].mxu0
    %v865 = vadd.f32 0.0, %v864
    %v866 = vpop.f32.mrb[0].mxu0
    %v867 = vadd.f32 0.0, %v866
    %v868 = vpop.f32.mrb[0].mxu0
    %v869 = vadd.f32 0.0, %v868
    %870 = vmatprep.mubr.bf16.mxu0 0
    %871 = vmatmul.mubr.bf16.gmra.mrb[0].mxu0 %v191
    %v872 = vpop.f32.mrb[0].mxu0
    %v873 = vadd.f32 0.0, %v872
    %v874 = vpop.f32.mrb[0].mxu0
    %v875 = vadd.f32 0.0, %v874
    %v876 = vpop.f32.mrb[0].mxu0
    %v877 = vadd.f32 0.0, %v876
    %v878 = vpop.f32.mrb[0].mxu0
    %v879 = vadd.f32 0.0, %v878
    %880 = vdwg.mxu0
    %881 = vmatprep.subr.bf16.mxu0 %v737
    %882 = vmatpush1.bf16.msra.mxu0 %v736
    %883 = vmatprep.subr.bf16.mxu0 %v741
    %884 = vmatpush1.bf16.msra.mxu0 %v740
    %885 = vmatprep.subr.bf16.mxu0 %v745
    %886 = vmatpush1.bf16.msra.mxu0 %v744
    %887 = vmatprep.subr.bf16.mxu0 %v749
    %888 = vmatpush1.bf16.msra.mxu0 %v748
    %889 = vmatprep.subr.bf16.mxu0 %v753
    %890 = vmatpush1.bf16.msra.mxu0 %v752
    %891 = vmatprep.subr.bf16.mxu0 %v757
    %892 = vmatpush1.bf16.msra.mxu0 %v756
    %893 = vmatprep.subr.bf16.mxu0 %v761
    %894 = vmatpush1.bf16.msra.mxu0 %v760
    %895 = vmatprep.subr.bf16.mxu0 %v765
    %896 = vmatpush1.bf16.msra.mxu0 %v764
    %897 = vmatprep.subr.bf16.mxu0 0
    %898 = vmatpush1.bf16.msra.mxu0 0
    %899 = vmatprep.subr.bf16.mxu0 0
    %900 = vmatpush1.bf16.msra.mxu0 0
    %901 = vmatprep.subr.bf16.mxu0 0
    %902 = vmatpush1.bf16.msra.mxu0 0
    %903 = vmatprep.subr.bf16.mxu0 0
    %904 = vmatpush1.bf16.msra.mxu0 0
    %905 = vmatprep.subr.bf16.mxu0 0
    %906 = vmatpush1.bf16.msra.mxu0 0
    %907 = vmatprep.subr.bf16.mxu0 0
    %908 = vmatpush1.bf16.msra.mxu0 0
    %909 = vmatprep.subr.bf16.mxu0 0
    %910 = vmatpush1.bf16.msra.mxu0 0
    %911 = vmatprep.subr.bf16.mxu0 0
    %912 = vmatpush1.bf16.msra.mxu0 0
    %913 = vmatprep.mubr.bf16.mxu0 0
    %914 = vmatmul.mubr.bf16.gmra.mrb[0].mxu0 %v187
    %v915 = vpop.f32.mrb[0].mxu0
    %v916 = vadd.f32 0.0, %v915
    %v917 = vpop.f32.mrb[0].mxu0
    %v918 = vadd.f32 0.0, %v917
    %v919 = vpop.f32.mrb[0].mxu0
    %v920 = vadd.f32 0.0, %v919
    %v921 = vpop.f32.mrb[0].mxu0
    %v922 = vadd.f32 0.0, %v921
    %923 = vmatprep.mubr.bf16.mxu0 0
    %924 = vmatmul.mubr.bf16.gmra.mrb[0].mxu0 %v188
    %v925 = vpop.f32.mrb[0].mxu0
    %v926 = vadd.f32 0.0, %v925
    %v927 = vpop.f32.mrb[0].mxu0
    %v928 = vadd.f32 0.0, %v927
    %v929 = vpop.f32.mrb[0].mxu0
    %v930 = vadd.f32 0.0, %v929
    %v931 = vpop.f32.mrb[0].mxu0
    %v932 = vadd.f32 0.0, %v931
    %933 = vmatprep.mubr.bf16.mxu0 0
    %934 = vmatmul.mubr.bf16.gmra.mrb[0].mxu0 %v189
    %v935 = vpop.f32.mrb[0].mxu0
    %v936 = vadd.f32 0.0, %v935
    %v937 = vpop.f32.mrb[0].mxu0
    %v938 = vadd.f32 0.0, %v937
    %v939 = vpop.f32.mrb[0].mxu0
    %v940 = vadd.f32 0.0, %v939
    %v941 = vpop.f32.mrb[0].mxu0
    %v942 = vadd.f32 0.0, %v941
    %943 = vmatprep.mubr.bf16.mxu0 0
    %944 = vmatmul.mubr.bf16.gmra.mrb[0].mxu0 %v190
    %v945 = vpop.f32.mrb[0].mxu0
    %v946 = vadd.f32 0.0, %v945
    %v947 = vpop.f32.mrb[0].mxu0
    %v948 = vadd.f32 0.0, %v947
    %v949 = vpop.f32.mrb[0].mxu0
    %v950 = vadd.f32 0.0, %v949
    %v951 = vpop.f32.mrb[0].mxu0
    %v952 = vadd.f32 0.0, %v951
    %953 = vmatprep.mubr.bf16.mxu0 0
    %954 = vmatmul.mubr.bf16.gmra.mrb[0].mxu0 %v191
    %v955 = vpop.f32.mrb[0].mxu0
    %v956 = vadd.f32 0.0, %v955
    %v957 = vpop.f32.mrb[0].mxu0
    %v958 = vadd.f32 0.0, %v957
    %v959 = vpop.f32.mrb[0].mxu0
    %v960 = vadd.f32 0.0, %v959
    %v961 = vpop.f32.mrb[0].mxu0
    %v962 = vadd.f32 0.0, %v961
    %963 = vdwg.mxu0
    %v964 = vadd.f32 %v507, %v873
    %v965 = vadd.f32 %v509, %v875
    %v966 = vadd.f32 %v590, %v956
    %v967 = vadd.f32 %v592, %v958
    %v968 = vadd.f32 %v511, %v877
    %v969 = vadd.f32 %v513, %v879
    %v970 = vadd.f32 %v594, %v960
    %v971 = vadd.f32 %v596, %v962
    %972 = vst [vmem:[#allocation3] sm:$0xff] %v964
    %973 = vst [vmem:[#allocation3 + $0x8] sm:$0xff] %v965
    %974 = vst [vmem:[#allocation3 + $0x10] sm:$0xff] %v966
    %975 = vst [vmem:[#allocation3 + $0x18] sm:$0xff] %v967
    %976 = vst [vmem:[#allocation3 + $0x20] sm:$0xff] %v968
    %977 = vst [vmem:[#allocation3 + $0x28] sm:$0xff] %v969
    %978 = vst [vmem:[#allocation3 + $0x30] sm:$0xff] %v970
    %979 = vst [vmem:[#allocation3 + $0x38] sm:$0xff] %v971
    %v980 = vadd.f32 %v517, %v863
    %v981 = vadd.f32 %v519, %v865
    %v982 = vadd.f32 %v600, %v946
    %v983 = vadd.f32 %v602, %v948
    %v984 = vadd.f32 %v521, %v867
    %v985 = vadd.f32 %v523, %v869
    %v986 = vadd.f32 %v604, %v950
    %v987 = vadd.f32 %v606, %v952
    %s988 = scalar_lea.vmem [#allocation3], 64
    %989 = vst [vmem:[%s988] sm:$0xff] %v980
    %990 = vst [vmem:[%s988 + $0x8] sm:$0xff] %v981
    %991 = vst [vmem:[%s988 + $0x10] sm:$0xff] %v982
    %992 = vst [vmem:[%s988 + $0x18] sm:$0xff] %v983
    %993 = vst [vmem:[%s988 + $0x20] sm:$0xff] %v984
    %994 = vst [vmem:[%s988 + $0x28] sm:$0xff] %v985
    %995 = vst [vmem:[%s988 + $0x30] sm:$0xff] %v986
    %996 = vst [vmem:[%s988 + $0x38] sm:$0xff] %v987
    %v997 = vadd.f32 %v527, %v853
    %v998 = vadd.f32 %v529, %v855
    %v999 = vadd.f32 %v610, %v936
    %v1000 = vadd.f32 %v612, %v938
    %v1001 = vadd.f32 %v531, %v857
    %v1002 = vadd.f32 %v533, %v859
    %v1003 = vadd.f32 %v614, %v940
    %v1004 = vadd.f32 %v616, %v942
    %s1005 = scalar_lea.vmem [#allocation3], 128
    %1006 = vst [vmem:[%s1005] sm:$0xff] %v997
    %1007 = vst [vmem:[%s1005 + $0x8] sm:$0xff] %v998
    %1008 = vst [vmem:[%s1005 + $0x10] sm:$0xff] %v999
    %1009 = vst [vmem:[%s1005 + $0x18] sm:$0xff] %v1000
    %1010 = vst [vmem:[%s1005 + $0x20] sm:$0xff] %v1001
    %1011 = vst [vmem:[%s1005 + $0x28] sm:$0xff] %v1002
    %1012 = vst [vmem:[%s1005 + $0x30] sm:$0xff] %v1003
    %1013 = vst [vmem:[%s1005 + $0x38] sm:$0xff] %v1004
    %v1014 = vadd.f32 %v537, %v843
    %v1015 = vadd.f32 %v539, %v845
    %v1016 = vadd.f32 %v620, %v926
    %v1017 = vadd.f32 %v622, %v928
    %v1018 = vadd.f32 %v541, %v847
    %v1019 = vadd.f32 %v543, %v849
    %v1020 = vadd.f32 %v624, %v930
    %v1021 = vadd.f32 %v626, %v932
    %s1022 = scalar_lea.vmem [#allocation3], 192
    %1023 = vst [vmem:[%s1022] sm:$0xff] %v1014
    %1024 = vst [vmem:[%s1022 + $0x8] sm:$0xff] %v1015
    %1025 = vst [vmem:[%s1022 + $0x10] sm:$0xff] %v1016
    %1026 = vst [vmem:[%s1022 + $0x18] sm:$0xff] %v1017
    %1027 = vst [vmem:[%s1022 + $0x20] sm:$0xff] %v1018
    %1028 = vst [vmem:[%s1022 + $0x28] sm:$0xff] %v1019
    %1029 = vst [vmem:[%s1022 + $0x30] sm:$0xff] %v1020
    %1030 = vst [vmem:[%s1022 + $0x38] sm:$0xff] %v1021
    %v1031 = vadd.f32 %v547, %v833
    %v1032 = vadd.f32 %v549, %v835
    %v1033 = vadd.f32 %v630, %v916
    %v1034 = vadd.f32 %v632, %v918
    %v1035 = vadd.f32 %v551, %v837
    %v1036 = vadd.f32 %v553, %v839
    %v1037 = vadd.f32 %v634, %v920
    %v1038 = vadd.f32 %v636, %v922
    %s1039 = scalar_lea.vmem [#allocation3], 256
    %1040 = vst [vmem:[%s1039] sm:$0xff] %v1031
    %1041 = vst [vmem:[%s1039 + $0x8] sm:$0xff] %v1032
    %1042 = vst [vmem:[%s1039 + $0x10] sm:$0xff] %v1033
    %1043 = vst [vmem:[%s1039 + $0x18] sm:$0xff] %v1034
    %1044 = vst [vmem:[%s1039 + $0x20] sm:$0xff] %v1035
    %1045 = vst [vmem:[%s1039 + $0x28] sm:$0xff] %v1036
    %1046 = vst [vmem:[%s1039 + $0x30] sm:$0xff] %v1037
    %1047 = vst [vmem:[%s1039 + $0x38] sm:$0xff] %v1038
    %v1048 = vld [vmem:[#allocation3] sm:$0xff]
    %v1049 = vld [vmem:[#allocation3 + $0x8] sm:$0xff]
    %v1050 = vld [vmem:[#allocation3 + $0x10] sm:$0xff]
    %v1051 = vld [vmem:[#allocation3 + $0x18] sm:$0xff]
    %v1052 = vld [vmem:[#allocation3 + $0x20] sm:$0xff]
    %v1053 = vld [vmem:[#allocation3 + $0x28] sm:$0xff]
    %v1054 = vld [vmem:[#allocation3 + $0x30] sm:$0xff]
    %v1055 = vld [vmem:[#allocation3 + $0x38] sm:$0xff]
    %v1088 = vunpack.c.l.b16 %v258
    %v1089 = vunpack.c.h.b16 %v258
    %v1090 = vunpack.c.l.b16 %v259
    %v1091 = vunpack.c.h.b16 %v259
    %v1092 = vunpack.c.l.b16 %v260
    %v1093 = vunpack.c.h.b16 %v260
    %v1094 = vunpack.c.l.b16 %v261
    %v1095 = vunpack.c.h.b16 %v261
    %v1096 = vunpack.c.l.b16 %v262
    %v1097 = vunpack.c.h.b16 %v262
    %v1098 = vunpack.c.l.b16 %v263
    %v1099 = vunpack.c.h.b16 %v263
    %v1100 = vunpack.c.l.b16 %v264
    %v1101 = vunpack.c.h.b16 %v264
    %v1102 = vunpack.c.l.b16 %v265
    %v1103 = vunpack.c.h.b16 %v265
    %v1104 = vunpack.c.l.b16 %v266
    %v1105 = vunpack.c.h.b16 %v266
    %v1106 = vunpack.c.l.b16 %v267
    %v1107 = vunpack.c.h.b16 %v267
    %v1108 = vunpack.c.l.b16 %v268
    %v1109 = vunpack.c.h.b16 %v268
    %v1110 = vunpack.c.l.b16 %v269
    %v1111 = vunpack.c.h.b16 %v269
    %v1112 = vunpack.c.l.b16 %v270
    %v1113 = vunpack.c.h.b16 %v270
    %v1114 = vunpack.c.l.b16 %v271
    %v1115 = vunpack.c.h.b16 %v271
    %v1116 = vunpack.c.l.b16 %v272
    %v1117 = vunpack.c.h.b16 %v272
    %v1118 = vunpack.c.l.b16 %v273
    %v1119 = vunpack.c.h.b16 %v273
    %v1120 = vunpack.c.l.b16 %v274
    %v1121 = vunpack.c.h.b16 %v274
    %v1122 = vunpack.c.l.b16 %v275
    %v1123 = vunpack.c.h.b16 %v275
    %v1124 = vunpack.c.l.b16 %v276
    %v1125 = vunpack.c.h.b16 %v276
    %v1126 = vunpack.c.l.b16 %v277
    %v1127 = vunpack.c.h.b16 %v277
    %v1128 = vunpack.c.l.b16 %v278
    %v1129 = vunpack.c.h.b16 %v278
    %v1130 = vunpack.c.l.b16 %v279
    %v1131 = vunpack.c.h.b16 %v279
    %v1132 = vunpack.c.l.b16 %v280
    %v1133 = vunpack.c.h.b16 %v280
    %v1134 = vunpack.c.l.b16 %v281
    %v1135 = vunpack.c.h.b16 %v281
    %v1136 = vunpack.c.l.b16 %v282
    %v1137 = vunpack.c.h.b16 %v282
    %v1138 = vunpack.c.l.b16 %v283
    %v1139 = vunpack.c.h.b16 %v283
    %v1140 = vunpack.c.l.b16 %v284
    %v1141 = vunpack.c.h.b16 %v284
    %v1142 = vunpack.c.l.b16 %v285
    %v1143 = vunpack.c.h.b16 %v285
    %v1144 = vunpack.c.l.b16 %v286
    %v1145 = vunpack.c.h.b16 %v286
    %v1146 = vunpack.c.l.b16 %v287
    %v1147 = vunpack.c.h.b16 %v287
    %v1148 = vunpack.c.l.b16 %v288
    %v1149 = vunpack.c.h.b16 %v288
    %v1150 = vunpack.c.l.b16 %v289
    %v1151 = vunpack.c.h.b16 %v289
    %v1152 = vpack.c.b16 %v1092, %v1088
    %v1153 = vpack.c.b16 %v1093, %v1089
    %v1154 = vpack.c.b16 %v1094, %v1090
    %v1155 = vpack.c.b16 %v1095, %v1091
    %v1156 = vpack.c.b16 %v1100, %v1096
    %v1157 = vpack.c.b16 %v1101, %v1097
    %v1158 = vpack.c.b16 %v1102, %v1098
    %v1159 = vpack.c.b16 %v1103, %v1099
    %v1160 = vpack.c.b16 %v1108, %v1104
    %v1161 = vpack.c.b16 %v1109, %v1105
    %v1162 = vpack.c.b16 %v1110, %v1106
    %v1163 = vpack.c.b16 %v1111, %v1107
    %v1164 = vpack.c.b16 %v1116, %v1112
    %v1165 = vpack.c.b16 %v1117, %v1113
    %v1166 = vpack.c.b16 %v1118, %v1114
    %v1167 = vpack.c.b16 %v1119, %v1115
    %v1168 = vpack.c.b16 %v1124, %v1120
    %v1169 = vpack.c.b16 %v1125, %v1121
    %v1170 = vpack.c.b16 %v1126, %v1122
    %v1171 = vpack.c.b16 %v1127, %v1123
    %v1172 = vpack.c.b16 %v1132, %v1128
    %v1173 = vpack.c.b16 %v1133, %v1129
    %v1174 = vpack.c.b16 %v1134, %v1130
    %v1175 = vpack.c.b16 %v1135, %v1131
    %v1176 = vpack.c.b16 %v1140, %v1136
    %v1177 = vpack.c.b16 %v1141, %v1137
    %v1178 = vpack.c.b16 %v1142, %v1138
    %v1179 = vpack.c.b16 %v1143, %v1139
    %v1180 = vpack.c.b16 %v1148, %v1144
    %v1181 = vpack.c.b16 %v1149, %v1145
    %v1182 = vpack.c.b16 %v1150, %v1146
    %v1183 = vpack.c.b16 %v1151, %v1147
    %1216 = vmatprep.subr.bf16.mxu0 %v1153
    %1217 = vmatpush1.bf16.msra.mxu0 %v1152
    %1218 = vmatprep.subr.bf16.mxu0 %v1157
    %1219 = vmatpush1.bf16.msra.mxu0 %v1156
    %1220 = vmatprep.subr.bf16.mxu0 %v1161
    %1221 = vmatpush1.bf16.msra.mxu0 %v1160
    %1222 = vmatprep.subr.bf16.mxu0 %v1165
    %1223 = vmatpush1.bf16.msra.mxu0 %v1164
    %1224 = vmatprep.subr.bf16.mxu0 %v1169
    %1225 = vmatpush1.bf16.msra.mxu0 %v1168
    %1226 = vmatprep.subr.bf16.mxu0 %v1173
    %1227 = vmatpush1.bf16.msra.mxu0 %v1172
    %1228 = vmatprep.subr.bf16.mxu0 %v1177
    %1229 = vmatpush1.bf16.msra.mxu0 %v1176
    %1230 = vmatprep.subr.bf16.mxu0 %v1181
    %1231 = vmatpush1.bf16.msra.mxu0 %v1180
    %1232 = vmatprep.subr.bf16.mxu0 0
    %1233 = vmatpush1.bf16.msra.mxu0 0
    %1234 = vmatprep.subr.bf16.mxu0 0
    %1235 = vmatpush1.bf16.msra.mxu0 0
    %1236 = vmatprep.subr.bf16.mxu0 0
    %1237 = vmatpush1.bf16.msra.mxu0 0
    %1238 = vmatprep.subr.bf16.mxu0 0
    %1239 = vmatpush1.bf16.msra.mxu0 0
    %1240 = vmatprep.subr.bf16.mxu0 0
    %1241 = vmatpush1.bf16.msra.mxu0 0
    %1242 = vmatprep.subr.bf16.mxu0 0
    %1243 = vmatpush1.bf16.msra.mxu0 0
    %1244 = vmatprep.subr.bf16.mxu0 0
    %1245 = vmatpush1.bf16.msra.mxu0 0
    %1246 = vmatprep.subr.bf16.mxu0 0
    %1247 = vmatpush1.bf16.msra.mxu0 0
    %1248 = vmatprep.mubr.bf16.mxu0 0
    %1249 = vmatmul.mubr.bf16.gmra.mrb[0].mxu0 0
    %v1250 = vpop.f32.mrb[0].mxu0
    %v1251 = vadd.f32 0.0, %v1250
    %v1252 = vpop.f32.mrb[0].mxu0
    %v1253 = vadd.f32 0.0, %v1252
    %v1254 = vpop.f32.mrb[0].mxu0
    %v1255 = vadd.f32 0.0, %v1254
    %v1256 = vpop.f32.mrb[0].mxu0
    %v1257 = vadd.f32 0.0, %v1256
    %1258 = vdwg.mxu0
    %1259 = vmatprep.subr.bf16.mxu0 %v1155
    %1260 = vmatpush1.bf16.msra.mxu0 %v1154
    %1261 = vmatprep.subr.bf16.mxu0 %v1159
    %1262 = vmatpush1.bf16.msra.mxu0 %v1158
    %1263 = vmatprep.subr.bf16.mxu0 %v1163
    %1264 = vmatpush1.bf16.msra.mxu0 %v1162
    %1265 = vmatprep.subr.bf16.mxu0 %v1167
    %1266 = vmatpush1.bf16.msra.mxu0 %v1166
    %1267 = vmatprep.subr.bf16.mxu0 %v1171
    %1268 = vmatpush1.bf16.msra.mxu0 %v1170
    %1269 = vmatprep.subr.bf16.mxu0 %v1175
    %1270 = vmatpush1.bf16.msra.mxu0 %v1174
    %1271 = vmatprep.subr.bf16.mxu0 %v1179
    %1272 = vmatpush1.bf16.msra.mxu0 %v1178
    %1273 = vmatprep.subr.bf16.mxu0 %v1183
    %1274 = vmatpush1.bf16.msra.mxu0 %v1182
    %1275 = vmatprep.subr.bf16.mxu0 0
    %1276 = vmatpush1.bf16.msra.mxu0 0
    %1277 = vmatprep.subr.bf16.mxu0 0
    %1278 = vmatpush1.bf16.msra.mxu0 0
    %1279 = vmatprep.subr.bf16.mxu0 0
    %1280 = vmatpush1.bf16.msra.mxu0 0
    %1281 = vmatprep.subr.bf16.mxu0 0
    %1282 = vmatpush1.bf16.msra.mxu0 0
    %1283 = vmatprep.subr.bf16.mxu0 0
    %1284 = vmatpush1.bf16.msra.mxu0 0
    %1285 = vmatprep.subr.bf16.mxu0 0
    %1286 = vmatpush1.bf16.msra.mxu0 0
    %1287 = vmatprep.subr.bf16.mxu0 0
    %1288 = vmatpush1.bf16.msra.mxu0 0
    %1289 = vmatprep.subr.bf16.mxu0 0
    %1290 = vmatpush1.bf16.msra.mxu0 0
    %1291 = vmatprep.mubr.bf16.mxu0 0
    %1292 = vmatmul.mubr.bf16.gmra.mrb[0].mxu0 0
    %v1293 = vpop.f32.mrb[0].mxu0
    %v1294 = vadd.f32 0.0, %v1293
    %v1295 = vpop.f32.mrb[0].mxu0
    %v1296 = vadd.f32 0.0, %v1295
    %v1297 = vpop.f32.mrb[0].mxu0
    %v1298 = vadd.f32 0.0, %v1297
    %v1299 = vpop.f32.mrb[0].mxu0
    %v1300 = vadd.f32 0.0, %v1299
    %1301 = vdwg.mxu0
    %v1302 = vadd.f32 %v1048, %v1251
    %v1303 = vadd.f32 %v1049, %v1253
    %v1304 = vadd.f32 %v1050, %v1294
    %v1305 = vadd.f32 %v1051, %v1296
    %v1306 = vadd.f32 %v1052, %v1255
    %v1307 = vadd.f32 %v1053, %v1257
    %v1308 = vadd.f32 %v1054, %v1298
    %v1309 = vadd.f32 %v1055, %v1300
    %v1310 = vmul.f32 %v1302, 0.5
    %v1311 = vmul.f32 %v1306, 0.5
    %v1312 = vtanh.pop %v1310
    %v1313 = vtanh.pop %v1311
    %v1314 = vmul.f32 %v1312, 0.5
    %v1315 = vmul.f32 %v1313, 0.5
    %v1316 = vadd.f32 %v1314, 0.5
    %v1317 = vadd.f32 %v1315, 0.5
    %v1318 = vmul.f32 %v1303, 0.5
    %v1319 = vmul.f32 %v1307, 0.5
    %v1320 = vtanh.pop %v1318
    %v1321 = vtanh.pop %v1319
    %v1322 = vmul.f32 %v1320, 0.5
    %v1323 = vmul.f32 %v1321, 0.5
    %v1324 = vadd.f32 %v1322, 0.5
    %v1325 = vadd.f32 %v1323, 0.5
    %v1326 = vtanh.pop %v1304
    %v1327 = vtanh.pop %v1308
    %v1328 = vmul.f32 %v1305, 0.5
    %v1329 = vmul.f32 %v1309, 0.5
    %v1330 = vtanh.pop %v1328
    %v1331 = vtanh.pop %v1329
    %v1332 = vmul.f32 %v1330, 0.5
    %v1333 = vmul.f32 %v1331, 0.5
    %v1334 = vadd.f32 %v1332, 0.5
    %v1335 = vadd.f32 %v1333, 0.5
    %v1336 = vmul.f32 %v1324, 0.0
    %v1337 = vmul.f32 %v1325, 0.0
    %v1338 = vmul.f32 %v1316, %v1326
    %v1339 = vmul.f32 %v1317, %v1327
    %v1340 = vadd.f32 %v1336, %v1338
    %v1341 = vadd.f32 %v1337, %v1339
    %v1342 = vtanh.pop %v1340
    %v1343 = vtanh.pop %v1341
    %v1344 = vmul.f32 %v1334, %v1342
    %v1345 = vmul.f32 %v1335, %v1343
    %v1346 = vpack.c.bf16 %v1345, %v1344
    %1347 = vst [vmem:[#allocation2] sm:$0xff] %v1346
    %v1348 = vld [vmem:[%s988] sm:$0xff]
    %v1349 = vld [vmem:[%s988 + $0x8] sm:$0xff]
    %v1350 = vld [vmem:[%s988 + $0x10] sm:$0xff]
    %v1351 = vld [vmem:[%s988 + $0x18] sm:$0xff]
    %v1352 = vld [vmem:[%s988 + $0x20] sm:$0xff]
    %v1353 = vld [vmem:[%s988 + $0x28] sm:$0xff]
    %v1354 = vld [vmem:[%s988 + $0x30] sm:$0xff]
    %v1355 = vld [vmem:[%s988 + $0x38] sm:$0xff]
    %1356 = vmatprep.subr.bf16.mxu0 %v1153
    %1357 = vmatpush1.bf16.msra.mxu0 %v1152
    %1358 = vmatprep.subr.bf16.mxu0 %v1157
    %1359 = vmatpush1.bf16.msra.mxu0 %v1156
    %1360 = vmatprep.subr.bf16.mxu0 %v1161
    %1361 = vmatpush1.bf16.msra.mxu0 %v1160
    %1362 = vmatprep.subr.bf16.mxu0 %v1165
    %1363 = vmatpush1.bf16.msra.mxu0 %v1164
    %1364 = vmatprep.subr.bf16.mxu0 %v1169
    %1365 = vmatpush1.bf16.msra.mxu0 %v1168
    %1366 = vmatprep.subr.bf16.mxu0 %v1173
    %1367 = vmatpush1.bf16.msra.mxu0 %v1172
    %1368 = vmatprep.subr.bf16.mxu0 %v1177
    %1369 = vmatpush1.bf16.msra.mxu0 %v1176
    %1370 = vmatprep.subr.bf16.mxu0 %v1181
    %1371 = vmatpush1.bf16.msra.mxu0 %v1180
    %1372 = vmatprep.subr.bf16.mxu0 0
    %1373 = vmatpush1.bf16.msra.mxu0 0
    %1374 = vmatprep.subr.bf16.mxu0 0
    %1375 = vmatpush1.bf16.msra.mxu0 0
    %1376 = vmatprep.subr.bf16.mxu0 0
    %1377 = vmatpush1.bf16.msra.mxu0 0
    %1378 = vmatprep.subr.bf16.mxu0 0
    %1379 = vmatpush1.bf16.msra.mxu0 0
    %1380 = vmatprep.subr.bf16.mxu0 0
    %1381 = vmatpush1.bf16.msra.mxu0 0
    %1382 = vmatprep.subr.bf16.mxu0 0
    %1383 = vmatpush1.bf16.msra.mxu0 0
    %1384 = vmatprep.subr.bf16.mxu0 0
    %1385 = vmatpush1.bf16.msra.mxu0 0
    %1386 = vmatprep.subr.bf16.mxu0 0
    %1387 = vmatpush1.bf16.msra.mxu0 0
    %1388 = vmatprep.mubr.bf16.mxu0 0
    %1389 = vmatmul.mubr.bf16.gmra.mrb[0].mxu0 %v1346
    %v1390 = vpop.f32.mrb[0].mxu0
    %v1391 = vadd.f32 0.0, %v1390
    %v1392 = vpop.f32.mrb[0].mxu0
    %v1393 = vadd.f32 0.0, %v1392
    %v1394 = vpop.f32.mrb[0].mxu0
    %v1395 = vadd.f32 0.0, %v1394
    %v1396 = vpop.f32.mrb[0].mxu0
    %v1397 = vadd.f32 0.0, %v1396
    %1398 = vdwg.mxu0
    %1399 = vmatprep.subr.bf16.mxu0 %v1155
    %1400 = vmatpush1.bf16.msra.mxu0 %v1154
    %1401 = vmatprep.subr.bf16.mxu0 %v1159
    %1402 = vmatpush1.bf16.msra.mxu0 %v1158
    %1403 = vmatprep.subr.bf16.mxu0 %v1163
    %1404 = vmatpush1.bf16.msra.mxu0 %v1162
    %1405 = vmatprep.subr.bf16.mxu0 %v1167
    %1406 = vmatpush1.bf16.msra.mxu0 %v1166
    %1407 = vmatprep.subr.bf16.mxu0 %v1171
    %1408 = vmatpush1.bf16.msra.mxu0 %v1170
    %1409 = vmatprep.subr.bf16.mxu0 %v1175
    %1410 = vmatpush1.bf16.msra.mxu0 %v1174
    %1411 = vmatprep.subr.bf16.mxu0 %v1179
    %1412 = vmatpush1.bf16.msra.mxu0 %v1178
    %1413 = vmatprep.subr.bf16.mxu0 %v1183
    %1414 = vmatpush1.bf16.msra.mxu0 %v1182
    %1415 = vmatprep.subr.bf16.mxu0 0
    %1416 = vmatpush1.bf16.msra.mxu0 0
    %1417 = vmatprep.subr.bf16.mxu0 0
    %1418 = vmatpush1.bf16.msra.mxu0 0
    %1419 = vmatprep.subr.bf16.mxu0 0
    %1420 = vmatpush1.bf16.msra.mxu0 0
    %1421 = vmatprep.subr.bf16.mxu0 0
    %1422 = vmatpush1.bf16.msra.mxu0 0
    %1423 = vmatprep.subr.bf16.mxu0 0
    %1424 = vmatpush1.bf16.msra.mxu0 0
    %1425 = vmatprep.subr.bf16.mxu0 0
    %1426 = vmatpush1.bf16.msra.mxu0 0
    %1427 = vmatprep.subr.bf16.mxu0 0
    %1428 = vmatpush1.bf16.msra.mxu0 0
    %1429 = vmatprep.subr.bf16.mxu0 0
    %1430 = vmatpush1.bf16.msra.mxu0 0
    %1431 = vmatprep.mubr.bf16.mxu0 0
    %1432 = vmatmul.mubr.bf16.gmra.mrb[0].mxu0 %v1346
    %v1433 = vpop.f32.mrb[0].mxu0
    %v1434 = vadd.f32 0.0, %v1433
    %v1435 = vpop.f32.mrb[0].mxu0
    %v1436 = vadd.f32 0.0, %v1435
    %v1437 = vpop.f32.mrb[0].mxu0
    %v1438 = vadd.f32 0.0, %v1437
    %v1439 = vpop.f32.mrb[0].mxu0
    %v1440 = vadd.f32 0.0, %v1439
    %1441 = vdwg.mxu0
    %v1442 = vadd.f32 %v1348, %v1391
    %v1443 = vadd.f32 %v1349, %v1393
    %v1444 = vadd.f32 %v1350, %v1434
    %v1445 = vadd.f32 %v1351, %v1436
    %v1446 = vadd.f32 %v1352, %v1395
    %v1447 = vadd.f32 %v1353, %v1397
    %v1448 = vadd.f32 %v1354, %v1438
    %v1449 = vadd.f32 %v1355, %v1440
    %v1450 = vmul.f32 %v1442, 0.5
    %v1451 = vmul.f32 %v1446, 0.5
    %v1452 = vtanh.pop %v1450
    %v1453 = vtanh.pop %v1451
    %v1454 = vmul.f32 %v1452, 0.5
    %v1455 = vmul.f32 %v1453, 0.5
    %v1456 = vadd.f32 %v1454, 0.5
    %v1457 = vadd.f32 %v1455, 0.5
    %v1458 = vmul.f32 %v1443, 0.5
    %v1459 = vmul.f32 %v1447, 0.5
    %v1460 = vtanh.pop %v1458
    %v1461 = vtanh.pop %v1459
    %v1462 = vmul.f32 %v1460, 0.5
    %v1463 = vmul.f32 %v1461, 0.5
    %v1464 = vadd.f32 %v1462, 0.5
    %v1465 = vadd.f32 %v1463, 0.5
    %v1466 = vtanh.pop %v1444
    %v1467 = vtanh.pop %v1448
    %v1468 = vmul.f32 %v1445, 0.5
    %v1469 = vmul.f32 %v1449, 0.5
    %v1470 = vtanh.pop %v1468
    %v1471 = vtanh.pop %v1469
    %v1472 = vmul.f32 %v1470, 0.5
    %v1473 = vmul.f32 %v1471, 0.5
    %v1474 = vadd.f32 %v1472, 0.5
    %v1475 = vadd.f32 %v1473, 0.5
    %v1476 = vmul.f32 %v1464, %v1340
    %v1477 = vmul.f32 %v1465, %v1341
    %v1478 = vmul.f32 %v1456, %v1466
    %v1479 = vmul.f32 %v1457, %v1467
    %v1480 = vadd.f32 %v1476, %v1478
    %v1481 = vadd.f32 %v1477, %v1479
    %v1482 = vtanh.pop %v1480
    %v1483 = vtanh.pop %v1481
    %v1484 = vmul.f32 %v1474, %v1482
    %v1485 = vmul.f32 %v1475, %v1483
    %v1486 = vpack.c.bf16 %v1485, %v1484
    %s1487 = scalar_lea.vmem [#allocation2], 8
    %1488 = vst [vmem:[%s1487] sm:$0xff] %v1486
    %v1489 = vld [vmem:[%s1005] sm:$0xff]
    %v1490 = vld [vmem:[%s1005 + $0x8] sm:$0xff]
    %v1491 = vld [vmem:[%s1005 + $0x10] sm:$0xff]
    %v1492 = vld [vmem:[%s1005 + $0x18] sm:$0xff]
    %v1493 = vld [vmem:[%s1005 + $0x20] sm:$0xff]
    %v1494 = vld [vmem:[%s1005 + $0x28] sm:$0xff]
    %v1495 = vld [vmem:[%s1005 + $0x30] sm:$0xff]
    %v1496 = vld [vmem:[%s1005 + $0x38] sm:$0xff]
    %1497 = vmatprep.subr.bf16.mxu0 %v1153
    %1498 = vmatpush1.bf16.msra.mxu0 %v1152
    %1499 = vmatprep.subr.bf16.mxu0 %v1157
    %1500 = vmatpush1.bf16.msra.mxu0 %v1156
    %1501 = vmatprep.subr.bf16.mxu0 %v1161
    %1502 = vmatpush1.bf16.msra.mxu0 %v1160
    %1503 = vmatprep.subr.bf16.mxu0 %v1165
    %1504 = vmatpush1.bf16.msra.mxu0 %v1164
    %1505 = vmatprep.subr.bf16.mxu0 %v1169
    %1506 = vmatpush1.bf16.msra.mxu0 %v1168
    %1507 = vmatprep.subr.bf16.mxu0 %v1173
    %1508 = vmatpush1.bf16.msra.mxu0 %v1172
    %1509 = vmatprep.subr.bf16.mxu0 %v1177
    %1510 = vmatpush1.bf16.msra.mxu0 %v1176
    %1511 = vmatprep.subr.bf16.mxu0 %v1181
    %1512 = vmatpush1.bf16.msra.mxu0 %v1180
    %1513 = vmatprep.subr.bf16.mxu0 0
    %1514 = vmatpush1.bf16.msra.mxu0 0
    %1515 = vmatprep.subr.bf16.mxu0 0
    %1516 = vmatpush1.bf16.msra.mxu0 0
    %1517 = vmatprep.subr.bf16.mxu0 0
    %1518 = vmatpush1.bf16.msra.mxu0 0
    %1519 = vmatprep.subr.bf16.mxu0 0
    %1520 = vmatpush1.bf16.msra.mxu0 0
    %1521 = vmatprep.subr.bf16.mxu0 0
    %1522 = vmatpush1.bf16.msra.mxu0 0
    %1523 = vmatprep.subr.bf16.mxu0 0
    %1524 = vmatpush1.bf16.msra.mxu0 0
    %1525 = vmatprep.subr.bf16.mxu0 0
    %1526 = vmatpush1.bf16.msra.mxu0 0
    %1527 = vmatprep.subr.bf16.mxu0 0
    %1528 = vmatpush1.bf16.msra.mxu0 0
    %1529 = vmatprep.mubr.bf16.mxu0 0
    %1530 = vmatmul.mubr.bf16.gmra.mrb[0].mxu0 %v1486
    %v1531 = vpop.f32.mrb[0].mxu0
    %v1532 = vadd.f32 0.0, %v1531
    %v1533 = vpop.f32.mrb[0].mxu0
    %v1534 = vadd.f32 0.0, %v1533
    %v1535 = vpop.f32.mrb[0].mxu0
    %v1536 = vadd.f32 0.0, %v1535
    %v1537 = vpop.f32.mrb[0].mxu0
    %v1538 = vadd.f32 0.0, %v1537
    %1539 = vdwg.mxu0
    %1540 = vmatprep.subr.bf16.mxu0 %v1155
    %1541 = vmatpush1.bf16.msra.mxu0 %v1154
    %1542 = vmatprep.subr.bf16.mxu0 %v1159
    %1543 = vmatpush1.bf16.msra.mxu0 %v1158
    %1544 = vmatprep.subr.bf16.mxu0 %v1163
    %1545 = vmatpush1.bf16.msra.mxu0 %v1162
    %1546 = vmatprep.subr.bf16.mxu0 %v1167
    %1547 = vmatpush1.bf16.msra.mxu0 %v1166
    %1548 = vmatprep.subr.bf16.mxu0 %v1171
    %1549 = vmatpush1.bf16.msra.mxu0 %v1170
    %1550 = vmatprep.subr.bf16.mxu0 %v1175
    %1551 = vmatpush1.bf16.msra.mxu0 %v1174
    %1552 = vmatprep.subr.bf16.mxu0 %v1179
    %1553 = vmatpush1.bf16.msra.mxu0 %v1178
    %1554 = vmatprep.subr.bf16.mxu0 %v1183
    %1555 = vmatpush1.bf16.msra.mxu0 %v1182
    %1556 = vmatprep.subr.bf16.mxu0 0
    %1557 = vmatpush1.bf16.msra.mxu0 0
    %1558 = vmatprep.subr.bf16.mxu0 0
    %1559 = vmatpush1.bf16.msra.mxu0 0
    %1560 = vmatprep.subr.bf16.mxu0 0
    %1561 = vmatpush1.bf16.msra.mxu0 0
    %1562 = vmatprep.subr.bf16.mxu0 0
    %1563 = vmatpush1.bf16.msra.mxu0 0
    %1564 = vmatprep.subr.bf16.mxu0 0
    %1565 = vmatpush1.bf16.msra.mxu0 0
    %1566 = vmatprep.subr.bf16.mxu0 0
    %1567 = vmatpush1.bf16.msra.mxu0 0
    %1568 = vmatprep.subr.bf16.mxu0 0
    %1569 = vmatpush1.bf16.msra.mxu0 0
    %1570 = vmatprep.subr.bf16.mxu0 0
    %1571 = vmatpush1.bf16.msra.mxu0 0
    %1572 = vmatprep.mubr.bf16.mxu0 0
    %1573 = vmatmul.mubr.bf16.gmra.mrb[0].mxu0 %v1486
    %v1574 = vpop.f32.mrb[0].mxu0
    %v1575 = vadd.f32 0.0, %v1574
    %v1576 = vpop.f32.mrb[0].mxu0
    %v1577 = vadd.f32 0.0, %v1576
    %v1578 = vpop.f32.mrb[0].mxu0
    %v1579 = vadd.f32 0.0, %v1578
    %v1580 = vpop.f32.mrb[0].mxu0
    %v1581 = vadd.f32 0.0, %v1580
    %1582 = vdwg.mxu0
    %v1583 = vadd.f32 %v1489, %v1532
    %v1584 = vadd.f32 %v1490, %v1534
    %v1585 = vadd.f32 %v1491, %v1575
    %v1586 = vadd.f32 %v1492, %v1577
    %v1587 = vadd.f32 %v1493, %v1536
    %v1588 = vadd.f32 %v1494, %v1538
    %v1589 = vadd.f32 %v1495, %v1579
    %v1590 = vadd.f32 %v1496, %v1581
    %v1591 = vmul.f32 %v1583, 0.5
    %v1592 = vmul.f32 %v1587, 0.5
    %v1593 = vtanh.pop %v1591
    %v1594 = vtanh.pop %v1592
    %v1595 = vmul.f32 %v1593, 0.5
    %v1596 = vmul.f32 %v1594, 0.5
    %v1597 = vadd.f32 %v1595, 0.5
    %v1598 = vadd.f32 %v1596, 0.5
    %v1599 = vmul.f32 %v1584, 0.5
    %v1600 = vmul.f32 %v1588, 0.5
    %v1601 = vtanh.pop %v1599
    %v1602 = vtanh.pop %v1600
    %v1603 = vmul.f32 %v1601, 0.5
    %v1604 = vmul.f32 %v1602, 0.5
    %v1605 = vadd.f32 %v1603, 0.5
    %v1606 = vadd.f32 %v1604, 0.5
    %v1607 = vtanh.pop %v1585
    %v1608 = vtanh.pop %v1589
    %v1609 = vmul.f32 %v1586, 0.5
    %v1610 = vmul.f32 %v1590, 0.5
    %v1611 = vtanh.pop %v1609
    %v1612 = vtanh.pop %v1610
    %v1613 = vmul.f32 %v1611, 0.5
    %v1614 = vmul.f32 %v1612, 0.5
    %v1615 = vadd.f32 %v1613, 0.5
    %v1616 = vadd.f32 %v1614, 0.5
    %v1617 = vmul.f32 %v1605, %v1480
    %v1618 = vmul.f32 %v1606, %v1481
    %v1619 = vmul.f32 %v1597, %v1607
    %v1620 = vmul.f32 %v1598, %v1608
    %v1621 = vadd.f32 %v1617, %v1619
    %v1622 = vadd.f32 %v1618, %v1620
    %v1623 = vtanh.pop %v1621
    %v1624 = vtanh.pop %v1622
    %v1625 = vmul.f32 %v1615, %v1623
    %v1626 = vmul.f32 %v1616, %v1624
    %v1627 = vpack.c.bf16 %v1626, %v1625
    %s1628 = scalar_lea.vmem [#allocation2], 16
    %1629 = vst [vmem:[%s1628] sm:$0xff] %v1627
    %v1630 = vld [vmem:[%s1022] sm:$0xff]
    %v1631 = vld [vmem:[%s1022 + $0x8] sm:$0xff]
    %v1632 = vld [vmem:[%s1022 + $0x10] sm:$0xff]
    %v1633 = vld [vmem:[%s1022 + $0x18] sm:$0xff]
    %v1634 = vld [vmem:[%s1022 + $0x20] sm:$0xff]
    %v1635 = vld [vmem:[%s1022 + $0x28] sm:$0xff]
    %v1636 = vld [vmem:[%s1022 + $0x30] sm:$0xff]
    %v1637 = vld [vmem:[%s1022 + $0x38] sm:$0xff]
    %1638 = vmatprep.subr.bf16.mxu0 %v1153
    %1639 = vmatpush1.bf16.msra.mxu0 %v1152
    %1640 = vmatprep.subr.bf16.mxu0 %v1157
    %1641 = vmatpush1.bf16.msra.mxu0 %v1156
    %1642 = vmatprep.subr.bf16.mxu0 %v1161
    %1643 = vmatpush1.bf16.msra.mxu0 %v1160
    %1644 = vmatprep.subr.bf16.mxu0 %v1165
    %1645 = vmatpush1.bf16.msra.mxu0 %v1164
    %1646 = vmatprep.subr.bf16.mxu0 %v1169
    %1647 = vmatpush1.bf16.msra.mxu0 %v1168
    %1648 = vmatprep.subr.bf16.mxu0 %v1173
    %1649 = vmatpush1.bf16.msra.mxu0 %v1172
    %1650 = vmatprep.subr.bf16.mxu0 %v1177
    %1651 = vmatpush1.bf16.msra.mxu0 %v1176
    %1652 = vmatprep.subr.bf16.mxu0 %v1181
    %1653 = vmatpush1.bf16.msra.mxu0 %v1180
    %1654 = vmatprep.subr.bf16.mxu0 0
    %1655 = vmatpush1.bf16.msra.mxu0 0
    %1656 = vmatprep.subr.bf16.mxu0 0
    %1657 = vmatpush1.bf16.msra.mxu0 0
    %1658 = vmatprep.subr.bf16.mxu0 0
    %1659 = vmatpush1.bf16.msra.mxu0 0
    %1660 = vmatprep.subr.bf16.mxu0 0
    %1661 = vmatpush1.bf16.msra.mxu0 0
    %1662 = vmatprep.subr.bf16.mxu0 0
    %1663 = vmatpush1.bf16.msra.mxu0 0
    %1664 = vmatprep.subr.bf16.mxu0 0
    %1665 = vmatpush1.bf16.msra.mxu0 0
    %1666 = vmatprep.subr.bf16.mxu0 0
    %1667 = vmatpush1.bf16.msra.mxu0 0
    %1668 = vmatprep.subr.bf16.mxu0 0
    %1669 = vmatpush1.bf16.msra.mxu0 0
    %1670 = vmatprep.mubr.bf16.mxu0 0
    %1671 = vmatmul.mubr.bf16.gmra.mrb[0].mxu0 %v1627
    %v1672 = vpop.f32.mrb[0].mxu0
    %v1673 = vadd.f32 0.0, %v1672
    %v1674 = vpop.f32.mrb[0].mxu0
    %v1675 = vadd.f32 0.0, %v1674
    %v1676 = vpop.f32.mrb[0].mxu0
    %v1677 = vadd.f32 0.0, %v1676
    %v1678 = vpop.f32.mrb[0].mxu0
    %v1679 = vadd.f32 0.0, %v1678
    %1680 = vdwg.mxu0
    %1681 = vmatprep.subr.bf16.mxu0 %v1155
    %1682 = vmatpush1.bf16.msra.mxu0 %v1154
    %1683 = vmatprep.subr.bf16.mxu0 %v1159
    %1684 = vmatpush1.bf16.msra.mxu0 %v1158
    %1685 = vmatprep.subr.bf16.mxu0 %v1163
    %1686 = vmatpush1.bf16.msra.mxu0 %v1162
    %1687 = vmatprep.subr.bf16.mxu0 %v1167
    %1688 = vmatpush1.bf16.msra.mxu0 %v1166
    %1689 = vmatprep.subr.bf16.mxu0 %v1171
    %1690 = vmatpush1.bf16.msra.mxu0 %v1170
    %1691 = vmatprep.subr.bf16.mxu0 %v1175
    %1692 = vmatpush1.bf16.msra.mxu0 %v1174
    %1693 = vmatprep.subr.bf16.mxu0 %v1179
    %1694 = vmatpush1.bf16.msra.mxu0 %v1178
    %1695 = vmatprep.subr.bf16.mxu0 %v1183
    %1696 = vmatpush1.bf16.msra.mxu0 %v1182
    %1697 = vmatprep.subr.bf16.mxu0 0
    %1698 = vmatpush1.bf16.msra.mxu0 0
    %1699 = vmatprep.subr.bf16.mxu0 0
    %1700 = vmatpush1.bf16.msra.mxu0 0
    %1701 = vmatprep.subr.bf16.mxu0 0
    %1702 = vmatpush1.bf16.msra.mxu0 0
    %1703 = vmatprep.subr.bf16.mxu0 0
    %1704 = vmatpush1.bf16.msra.mxu0 0
    %1705 = vmatprep.subr.bf16.mxu0 0
    %1706 = vmatpush1.bf16.msra.mxu0 0
    %1707 = vmatprep.subr.bf16.mxu0 0
    %1708 = vmatpush1.bf16.msra.mxu0 0
    %1709 = vmatprep.subr.bf16.mxu0 0
    %1710 = vmatpush1.bf16.msra.mxu0 0
    %1711 = vmatprep.subr.bf16.mxu0 0
    %1712 = vmatpush1.bf16.msra.mxu0 0
    %1713 = vmatprep.mubr.bf16.mxu0 0
    %1714 = vmatmul.mubr.bf16.gmra.mrb[0].mxu0 %v1627
    %v1715 = vpop.f32.mrb[0].mxu0
    %v1716 = vadd.f32 0.0, %v1715
    %v1717 = vpop.f32.mrb[0].mxu0
    %v1718 = vadd.f32 0.0, %v1717
    %v1719 = vpop.f32.mrb[0].mxu0
    %v1720 = vadd.f32 0.0, %v1719
    %v1721 = vpop.f32.mrb[0].mxu0
    %v1722 = vadd.f32 0.0, %v1721
    %1723 = vdwg.mxu0
    %v1724 = vadd.f32 %v1630, %v1673
    %v1725 = vadd.f32 %v1631, %v1675
    %v1726 = vadd.f32 %v1632, %v1716
    %v1727 = vadd.f32 %v1633, %v1718
    %v1728 = vadd.f32 %v1634, %v1677
    %v1729 = vadd.f32 %v1635, %v1679
    %v1730 = vadd.f32 %v1636, %v1720
    %v1731 = vadd.f32 %v1637, %v1722
    %v1732 = vmul.f32 %v1724, 0.5
    %v1733 = vmul.f32 %v1728, 0.5
    %v1734 = vtanh.pop %v1732
    %v1735 = vtanh.pop %v1733
    %v1736 = vmul.f32 %v1734, 0.5
    %v1737 = vmul.f32 %v1735, 0.5
    %v1738 = vadd.f32 %v1736, 0.5
    %v1739 = vadd.f32 %v1737, 0.5
    %v1740 = vmul.f32 %v1725, 0.5
    %v1741 = vmul.f32 %v1729, 0.5
    %v1742 = vtanh.pop %v1740
    %v1743 = vtanh.pop %v1741
    %v1744 = vmul.f32 %v1742, 0.5
    %v1745 = vmul.f32 %v1743, 0.5
    %v1746 = vadd.f32 %v1744, 0.5
    %v1747 = vadd.f32 %v1745, 0.5
    %v1748 = vtanh.pop %v1726
    %v1749 = vtanh.pop %v1730
    %v1750 = vmul.f32 %v1727, 0.5
    %v1751 = vmul.f32 %v1731, 0.5
    %v1752 = vtanh.pop %v1750
    %v1753 = vtanh.pop %v1751
    %v1754 = vmul.f32 %v1752, 0.5
    %v1755 = vmul.f32 %v1753, 0.5
    %v1756 = vadd.f32 %v1754, 0.5
    %v1757 = vadd.f32 %v1755, 0.5
    %v1758 = vmul.f32 %v1746, %v1621
    %v1759 = vmul.f32 %v1747, %v1622
    %v1760 = vmul.f32 %v1738, %v1748
    %v1761 = vmul.f32 %v1739, %v1749
    %v1762 = vadd.f32 %v1758, %v1760
    %v1763 = vadd.f32 %v1759, %v1761
    %v1764 = vtanh.pop %v1762
    %v1765 = vtanh.pop %v1763
    %v1766 = vmul.f32 %v1756, %v1764
    %v1767 = vmul.f32 %v1757, %v1765
    %v1768 = vpack.c.bf16 %v1767, %v1766
    %s1769 = scalar_lea.vmem [#allocation2], 24
    %1770 = vst [vmem:[%s1769] sm:$0xff] %v1768
    %v1771 = vld [vmem:[%s1039] sm:$0xff]
    %v1772 = vld [vmem:[%s1039 + $0x8] sm:$0xff]
    %v1773 = vld [vmem:[%s1039 + $0x10] sm:$0xff]
    %v1774 = vld [vmem:[%s1039 + $0x18] sm:$0xff]
    %v1775 = vld [vmem:[%s1039 + $0x20] sm:$0xff]
    %v1776 = vld [vmem:[%s1039 + $0x28] sm:$0xff]
    %v1777 = vld [vmem:[%s1039 + $0x30] sm:$0xff]
    %v1778 = vld [vmem:[%s1039 + $0x38] sm:$0xff]
    %1779 = vmatprep.subr.bf16.mxu0 %v1153
    %1780 = vmatpush1.bf16.msra.mxu0 %v1152
    %1781 = vmatprep.subr.bf16.mxu0 %v1157
    %1782 = vmatpush1.bf16.msra.mxu0 %v1156
    %1783 = vmatprep.subr.bf16.mxu0 %v1161
    %1784 = vmatpush1.bf16.msra.mxu0 %v1160
    %1785 = vmatprep.subr.bf16.mxu0 %v1165
    %1786 = vmatpush1.bf16.msra.mxu0 %v1164
    %1787 = vmatprep.subr.bf16.mxu0 %v1169
    %1788 = vmatpush1.bf16.msra.mxu0 %v1168
    %1789 = vmatprep.subr.bf16.mxu0 %v1173
    %1790 = vmatpush1.bf16.msra.mxu0 %v1172
    %1791 = vmatprep.subr.bf16.mxu0 %v1177
    %1792 = vmatpush1.bf16.msra.mxu0 %v1176
    %1793 = vmatprep.subr.bf16.mxu0 %v1181
    %1794 = vmatpush1.bf16.msra.mxu0 %v1180
    %1795 = vmatprep.subr.bf16.mxu0 0
    %1796 = vmatpush1.bf16.msra.mxu0 0
    %1797 = vmatprep.subr.bf16.mxu0 0
    %1798 = vmatpush1.bf16.msra.mxu0 0
    %1799 = vmatprep.subr.bf16.mxu0 0
    %1800 = vmatpush1.bf16.msra.mxu0 0
    %1801 = vmatprep.subr.bf16.mxu0 0
    %1802 = vmatpush1.bf16.msra.mxu0 0
    %1803 = vmatprep.subr.bf16.mxu0 0
    %1804 = vmatpush1.bf16.msra.mxu0 0
    %1805 = vmatprep.subr.bf16.mxu0 0
    %1806 = vmatpush1.bf16.msra.mxu0 0
    %1807 = vmatprep.subr.bf16.mxu0 0
    %1808 = vmatpush1.bf16.msra.mxu0 0
    %1809 = vmatprep.subr.bf16.mxu0 0
    %1810 = vmatpush1.bf16.msra.mxu0 0
    %1811 = vmatprep.mubr.bf16.mxu0 0
    %1812 = vmatmul.mubr.bf16.gmra.mrb[0].mxu0 %v1768
    %v1813 = vpop.f32.mrb[0].mxu0
    %v1814 = vadd.f32 0.0, %v1813
    %v1815 = vpop.f32.mrb[0].mxu0
    %v1816 = vadd.f32 0.0, %v1815
    %v1817 = vpop.f32.mrb[0].mxu0
    %v1818 = vadd.f32 0.0, %v1817
    %v1819 = vpop.f32.mrb[0].mxu0
    %v1820 = vadd.f32 0.0, %v1819
    %1821 = vdwg.mxu0
    %1822 = vmatprep.subr.bf16.mxu0 %v1155
    %1823 = vmatpush1.bf16.msra.mxu0 %v1154
    %1824 = vmatprep.subr.bf16.mxu0 %v1159
    %1825 = vmatpush1.bf16.msra.mxu0 %v1158
    %1826 = vmatprep.subr.bf16.mxu0 %v1163
    %1827 = vmatpush1.bf16.msra.mxu0 %v1162
    %1828 = vmatprep.subr.bf16.mxu0 %v1167
    %1829 = vmatpush1.bf16.msra.mxu0 %v1166
    %1830 = vmatprep.subr.bf16.mxu0 %v1171
    %1831 = vmatpush1.bf16.msra.mxu0 %v1170
    %1832 = vmatprep.subr.bf16.mxu0 %v1175
    %1833 = vmatpush1.bf16.msra.mxu0 %v1174
    %1834 = vmatprep.subr.bf16.mxu0 %v1179
    %1835 = vmatpush1.bf16.msra.mxu0 %v1178
    %1836 = vmatprep.subr.bf16.mxu0 %v1183
    %1837 = vmatpush1.bf16.msra.mxu0 %v1182
    %1838 = vmatprep.subr.bf16.mxu0 0
    %1839 = vmatpush1.bf16.msra.mxu0 0
    %1840 = vmatprep.subr.bf16.mxu0 0
    %1841 = vmatpush1.bf16.msra.mxu0 0
    %1842 = vmatprep.subr.bf16.mxu0 0
    %1843 = vmatpush1.bf16.msra.mxu0 0
    %1844 = vmatprep.subr.bf16.mxu0 0
    %1845 = vmatpush1.bf16.msra.mxu0 0
    %1846 = vmatprep.subr.bf16.mxu0 0
    %1847 = vmatpush1.bf16.msra.mxu0 0
    %1848 = vmatprep.subr.bf16.mxu0 0
    %1849 = vmatpush1.bf16.msra.mxu0 0
    %1850 = vmatprep.subr.bf16.mxu0 0
    %1851 = vmatpush1.bf16.msra.mxu0 0
    %1852 = vmatprep.subr.bf16.mxu0 0
    %1853 = vmatpush1.bf16.msra.mxu0 0
    %1854 = vmatprep.mubr.bf16.mxu0 0
    %1855 = vmatmul.mubr.bf16.gmra.mrb[0].mxu0 %v1768
    %v1856 = vpop.f32.mrb[0].mxu0
    %v1857 = vadd.f32 0.0, %v1856
    %v1858 = vpop.f32.mrb[0].mxu0
    %v1859 = vadd.f32 0.0, %v1858
    %v1860 = vpop.f32.mrb[0].mxu0
    %v1861 = vadd.f32 0.0, %v1860
    %v1862 = vpop.f32.mrb[0].mxu0
    %v1863 = vadd.f32 0.0, %v1862
    %1864 = vdwg.mxu0
    %v1865 = vadd.f32 %v1771, %v1814
    %v1866 = vadd.f32 %v1772, %v1816
    %v1867 = vadd.f32 %v1773, %v1857
    %v1868 = vadd.f32 %v1774, %v1859
    %v1869 = vadd.f32 %v1775, %v1818
    %v1870 = vadd.f32 %v1776, %v1820
    %v1871 = vadd.f32 %v1777, %v1861
    %v1872 = vadd.f32 %v1778, %v1863
    %v1873 = vmul.f32 %v1865, 0.5
    %v1874 = vmul.f32 %v1869, 0.5
    %v1875 = vtanh.pop %v1873
    %v1876 = vtanh.pop %v1874
    %v1877 = vmul.f32 %v1875, 0.5
    %v1878 = vmul.f32 %v1876, 0.5
    %v1879 = vadd.f32 %v1877, 0.5
    %v1880 = vadd.f32 %v1878, 0.5
    %v1881 = vmul.f32 %v1866, 0.5
    %v1882 = vmul.f32 %v1870, 0.5
    %v1883 = vtanh.pop %v1881
    %v1884 = vtanh.pop %v1882
    %v1885 = vmul.f32 %v1883, 0.5
    %v1886 = vmul.f32 %v1884, 0.5
    %v1887 = vadd.f32 %v1885, 0.5
    %v1888 = vadd.f32 %v1886, 0.5
    %v1889 = vtanh.pop %v1867
    %v1890 = vtanh.pop %v1871
    %v1891 = vmul.f32 %v1868, 0.5
    %v1892 = vmul.f32 %v1872, 0.5
    %v1893 = vtanh.pop %v1891
    %v1894 = vtanh.pop %v1892
    %v1895 = vmul.f32 %v1893, 0.5
    %v1896 = vmul.f32 %v1894, 0.5
    %v1897 = vadd.f32 %v1895, 0.5
    %v1898 = vadd.f32 %v1896, 0.5
    %v1899 = vmul.f32 %v1887, %v1762
    %v1900 = vmul.f32 %v1888, %v1763
    %v1901 = vmul.f32 %v1879, %v1889
    %v1902 = vmul.f32 %v1880, %v1890
    %v1903 = vadd.f32 %v1899, %v1901
    %v1904 = vadd.f32 %v1900, %v1902
    %v1905 = vtanh.pop %v1903
    %v1906 = vtanh.pop %v1904
    %v1907 = vmul.f32 %v1897, %v1905
    %v1908 = vmul.f32 %v1898, %v1906
    %v1909 = vpack.c.bf16 %v1908, %v1907
    %s1910 = scalar_lea.vmem [#allocation2], 32
    %1911 = vst [vmem:[%s1910] sm:$0xff] %v1909
    %v1912 = vld [vmem:[#allocation2] sm:$0xff]
    %v1913 = vld [vmem:[#allocation2 + $0x8] sm:$0xff]
    %v1914 = vld [vmem:[#allocation2 + $0x10] sm:$0xff]
    %v1915 = vld [vmem:[#allocation2 + $0x18] sm:$0xff]
    %v1916 = vld [vmem:[#allocation2 + $0x20] sm:$0xff]
    %s1917 = scalar_lea.vmem [#allocation4], 768
    %v1918 = vld [vmem:[%s1917] sm:$0xff]
    %v1919 = vld [vmem:[%s1917 + $0x8] sm:$0xff]
    %v1920 = vld [vmem:[%s1917 + $0x10] sm:$0xff]
    %v1921 = vld [vmem:[%s1917 + $0x18] sm:$0xff]
    %v1922 = vld [vmem:[%s1917 + $0x20] sm:$0xff]
    %v1923 = vld [vmem:[%s1917 + $0x28] sm:$0xff]
    %v1924 = vld [vmem:[%s1917 + $0x30] sm:$0xff]
    %v1925 = vld [vmem:[%s1917 + $0x38] sm:$0xff]
    %v1926 = vld [vmem:[%s1917 + $0x40] sm:$0xff]
    %v1927 = vld [vmem:[%s1917 + $0x48] sm:$0xff]
    %v1928 = vld [vmem:[%s1917 + $0x50] sm:$0xff]
    %v1929 = vld [vmem:[%s1917 + $0x58] sm:$0xff]
    %v1930 = vld [vmem:[%s1917 + $0x60] sm:$0xff]
    %v1931 = vld [vmem:[%s1917 + $0x68] sm:$0xff]
    %v1932 = vld [vmem:[%s1917 + $0x70] sm:$0xff]
    %v1933 = vld [vmem:[%s1917 + $0x78] sm:$0xff]
    %v1934 = vld [vmem:[%s1917 + $0x80] sm:$0xff]
    %v1935 = vld [vmem:[%s1917 + $0x88] sm:$0xff]
    %v1936 = vld [vmem:[%s1917 + $0x90] sm:$0xff]
    %v1937 = vld [vmem:[%s1917 + $0x98] sm:$0xff]
    %v1938 = vld [vmem:[%s1917 + $0xa0] sm:$0xff]
    %v1939 = vld [vmem:[%s1917 + $0xa8] sm:$0xff]
    %v1940 = vld [vmem:[%s1917 + $0xb0] sm:$0xff]
    %v1941 = vld [vmem:[%s1917 + $0xb8] sm:$0xff]
    %v1942 = vld [vmem:[%s1917 + $0xc0] sm:$0xff]
    %v1943 = vld [vmem:[%s1917 + $0xc8] sm:$0xff]
    %v1944 = vld [vmem:[%s1917 + $0xd0] sm:$0xff]
    %v1945 = vld [vmem:[%s1917 + $0xd8] sm:$0xff]
    %v1946 = vld [vmem:[%s1917 + $0xe0] sm:$0xff]
    %v1947 = vld [vmem:[%s1917 + $0xe8] sm:$0xff]
    %v1948 = vld [vmem:[%s1917 + $0xf0] sm:$0xff]
    %v1949 = vld [vmem:[%s1917 + $0xf8] sm:$0xff]
    %s1950 = scalar_lea.vmem [#allocation4], 1024
    %v1951 = vld [vmem:[%s1950] sm:$0xff]
    %v1952 = vld [vmem:[%s1950 + $0x8] sm:$0xff]
    %v1953 = vld [vmem:[%s1950 + $0x10] sm:$0xff]
    %v1954 = vld [vmem:[%s1950 + $0x18] sm:$0xff]
    %v1955 = vld [vmem:[%s1950 + $0x20] sm:$0xff]
    %v1956 = vld [vmem:[%s1950 + $0x28] sm:$0xff]
    %v1957 = vld [vmem:[%s1950 + $0x30] sm:$0xff]
    %v1958 = vld [vmem:[%s1950 + $0x38] sm:$0xff]
    %v1959 = vld [vmem:[%s1950 + $0x40] sm:$0xff]
    %v1960 = vld [vmem:[%s1950 + $0x48] sm:$0xff]
    %v1961 = vld [vmem:[%s1950 + $0x50] sm:$0xff]
    %v1962 = vld [vmem:[%s1950 + $0x58] sm:$0xff]
    %v1963 = vld [vmem:[%s1950 + $0x60] sm:$0xff]
    %v1964 = vld [vmem:[%s1950 + $0x68] sm:$0xff]
    %v1965 = vld [vmem:[%s1950 + $0x70] sm:$0xff]
    %v1966 = vld [vmem:[%s1950 + $0x78] sm:$0xff]
    %v1967 = vld [vmem:[%s1950 + $0x80] sm:$0xff]
    %v1968 = vld [vmem:[%s1950 + $0x88] sm:$0xff]
    %v1969 = vld [vmem:[%s1950 + $0x90] sm:$0xff]
    %v1970 = vld [vmem:[%s1950 + $0x98] sm:$0xff]
    %v1971 = vld [vmem:[%s1950 + $0xa0] sm:$0xff]
    %v1972 = vld [vmem:[%s1950 + $0xa8] sm:$0xff]
    %v1973 = vld [vmem:[%s1950 + $0xb0] sm:$0xff]
    %v1974 = vld [vmem:[%s1950 + $0xb8] sm:$0xff]
    %v1975 = vld [vmem:[%s1950 + $0xc0] sm:$0xff]
    %v1976 = vld [vmem:[%s1950 + $0xc8] sm:$0xff]
    %v1977 = vld [vmem:[%s1950 + $0xd0] sm:$0xff]
    %v1978 = vld [vmem:[%s1950 + $0xd8] sm:$0xff]
    %v1979 = vld [vmem:[%s1950 + $0xe0] sm:$0xff]
    %v1980 = vld [vmem:[%s1950 + $0xe8] sm:$0xff]
    %v1981 = vld [vmem:[%s1950 + $0xf0] sm:$0xff]
    %v1982 = vld [vmem:[%s1950 + $0xf8] sm:$0xff]
    %s1983 = scalar_lea.vmem [#allocation4], 1280
    %v1984 = vld [vmem:[%s1983] sm:$0xff]
    %v1985 = vld [vmem:[%s1983 + $0x8] sm:$0xff]
    %v1986 = vld [vmem:[%s1983 + $0x10] sm:$0xff]
    %v1987 = vld [vmem:[%s1983 + $0x18] sm:$0xff]
    %v1988 = vld [vmem:[%s1983 + $0x20] sm:$0xff]
    %v1989 = vld [vmem:[%s1983 + $0x28] sm:$0xff]
    %v1990 = vld [vmem:[%s1983 + $0x30] sm:$0xff]
    %v1991 = vld [vmem:[%s1983 + $0x38] sm:$0xff]
    %v1992 = vld [vmem:[%s1983 + $0x40] sm:$0xff]
    %v1993 = vld [vmem:[%s1983 + $0x48] sm:$0xff]
    %v1994 = vld [vmem:[%s1983 + $0x50] sm:$0xff]
    %v1995 = vld [vmem:[%s1983 + $0x58] sm:$0xff]
    %v1996 = vld [vmem:[%s1983 + $0x60] sm:$0xff]
    %v1997 = vld [vmem:[%s1983 + $0x68] sm:$0xff]
    %v1998 = vld [vmem:[%s1983 + $0x70] sm:$0xff]
    %v1999 = vld [vmem:[%s1983 + $0x78] sm:$0xff]
    %v2000 = vld [vmem:[%s1983 + $0x80] sm:$0xff]
    %v2001 = vld [vmem:[%s1983 + $0x88] sm:$0xff]
    %v2002 = vld [vmem:[%s1983 + $0x90] sm:$0xff]
    %v2003 = vld [vmem:[%s1983 + $0x98] sm:$0xff]
    %v2004 = vld [vmem:[%s1983 + $0xa0] sm:$0xff]
    %v2005 = vld [vmem:[%s1983 + $0xa8] sm:$0xff]
    %v2006 = vld [vmem:[%s1983 + $0xb0] sm:$0xff]
    %v2007 = vld [vmem:[%s1983 + $0xb8] sm:$0xff]
    %v2008 = vld [vmem:[%s1983 + $0xc0] sm:$0xff]
    %v2009 = vld [vmem:[%s1983 + $0xc8] sm:$0xff]
    %v2010 = vld [vmem:[%s1983 + $0xd0] sm:$0xff]
    %v2011 = vld [vmem:[%s1983 + $0xd8] sm:$0xff]
    %v2012 = vld [vmem:[%s1983 + $0xe0] sm:$0xff]
    %v2013 = vld [vmem:[%s1983 + $0xe8] sm:$0xff]
    %v2014 = vld [vmem:[%s1983 + $0xf0] sm:$0xff]
    %v2015 = vld [vmem:[%s1983 + $0xf8] sm:$0xff]
    %s2016 = scalar_lea.vmem [#allocation6], 4
    %v2017 = vld [vmem:[%s2016] sm:$0xf]
    %v2019 = vlaneseq
    %v2020 = vshrl.u32 %v2019, 7
    %v2021 = vsub.s32 0, %v2020
    %v2022 = vrot.slane %v2017, %v2021
    %v2023 = vlaneseq
    %v2024 = vshrl.u32 %v2023, 7
    %v2025 = vsub.s32 1, %v2024
    %v2026 = vrot.slane %v2017, %v2025
    %v2027 = vlaneseq
    %v2028 = vshrl.u32 %v2027, 7
    %v2029 = vsub.s32 2, %v2028
    %v2030 = vrot.slane %v2017, %v2029
    %v2031 = vlaneseq
    %v2032 = vshrl.u32 %v2031, 7
    %v2033 = vsub.s32 3, %v2032
    %v2034 = vrot.slane %v2017, %v2033
    %v2071 = vunpack.c.l.b16 %v1918
    %v2072 = vunpack.c.h.b16 %v1918
    %v2073 = vunpack.c.l.b16 %v1919
    %v2074 = vunpack.c.h.b16 %v1919
    %v2075 = vunpack.c.l.b16 %v1920
    %v2076 = vunpack.c.h.b16 %v1920
    %v2077 = vunpack.c.l.b16 %v1921
    %v2078 = vunpack.c.h.b16 %v1921
    %v2079 = vunpack.c.l.b16 %v1922
    %v2080 = vunpack.c.h.b16 %v1922
    %v2081 = vunpack.c.l.b16 %v1923
    %v2082 = vunpack.c.h.b16 %v1923
    %v2083 = vunpack.c.l.b16 %v1924
    %v2084 = vunpack.c.h.b16 %v1924
    %v2085 = vunpack.c.l.b16 %v1925
    %v2086 = vunpack.c.h.b16 %v1925
    %v2087 = vunpack.c.l.b16 %v1926
    %v2088 = vunpack.c.h.b16 %v1926
    %v2089 = vunpack.c.l.b16 %v1927
    %v2090 = vunpack.c.h.b16 %v1927
    %v2091 = vunpack.c.l.b16 %v1928
    %v2092 = vunpack.c.h.b16 %v1928
    %v2093 = vunpack.c.l.b16 %v1929
    %v2094 = vunpack.c.h.b16 %v1929
    %v2095 = vunpack.c.l.b16 %v1930
    %v2096 = vunpack.c.h.b16 %v1930
    %v2097 = vunpack.c.l.b16 %v1931
    %v2098 = vunpack.c.h.b16 %v1931
    %v2099 = vunpack.c.l.b16 %v1932
    %v2100 = vunpack.c.h.b16 %v1932
    %v2101 = vunpack.c.l.b16 %v1933
    %v2102 = vunpack.c.h.b16 %v1933
    %v2103 = vunpack.c.l.b16 %v1934
    %v2104 = vunpack.c.h.b16 %v1934
    %v2105 = vunpack.c.l.b16 %v1935
    %v2106 = vunpack.c.h.b16 %v1935
    %v2107 = vunpack.c.l.b16 %v1936
    %v2108 = vunpack.c.h.b16 %v1936
    %v2109 = vunpack.c.l.b16 %v1937
    %v2110 = vunpack.c.h.b16 %v1937
    %v2111 = vunpack.c.l.b16 %v1938
    %v2112 = vunpack.c.h.b16 %v1938
    %v2113 = vunpack.c.l.b16 %v1939
    %v2114 = vunpack.c.h.b16 %v1939
    %v2115 = vunpack.c.l.b16 %v1940
    %v2116 = vunpack.c.h.b16 %v1940
    %v2117 = vunpack.c.l.b16 %v1941
    %v2118 = vunpack.c.h.b16 %v1941
    %v2119 = vunpack.c.l.b16 %v1942
    %v2120 = vunpack.c.h.b16 %v1942
    %v2121 = vunpack.c.l.b16 %v1943
    %v2122 = vunpack.c.h.b16 %v1943
    %v2123 = vunpack.c.l.b16 %v1944
    %v2124 = vunpack.c.h.b16 %v1944
    %v2125 = vunpack.c.l.b16 %v1945
    %v2126 = vunpack.c.h.b16 %v1945
    %v2127 = vunpack.c.l.b16 %v1946
    %v2128 = vunpack.c.h.b16 %v1946
    %v2129 = vunpack.c.l.b16 %v1947
    %v2130 = vunpack.c.h.b16 %v1947
    %v2131 = vunpack.c.l.b16 %v1948
    %v2132 = vunpack.c.h.b16 %v1948
    %v2133 = vunpack.c.l.b16 %v1949
    %v2134 = vunpack.c.h.b16 %v1949
    %v2135 = vpack.c.b16 %v2075, %v2071
    %v2136 = vpack.c.b16 %v2076, %v2072
    %v2137 = vpack.c.b16 %v2077, %v2073
    %v2138 = vpack.c.b16 %v2078, %v2074
    %v2139 = vpack.c.b16 %v2083, %v2079
    %v2140 = vpack.c.b16 %v2084, %v2080
    %v2141 = vpack.c.b16 %v2085, %v2081
    %v2142 = vpack.c.b16 %v2086, %v2082
    %v2143 = vpack.c.b16 %v2091, %v2087
    %v2144 = vpack.c.b16 %v2092, %v2088
    %v2145 = vpack.c.b16 %v2093, %v2089
    %v2146 = vpack.c.b16 %v2094, %v2090
    %v2147 = vpack.c.b16 %v2099, %v2095
    %v2148 = vpack.c.b16 %v2100, %v2096
    %v2149 = vpack.c.b16 %v2101, %v2097
    %v2150 = vpack.c.b16 %v2102, %v2098
    %v2151 = vpack.c.b16 %v2107, %v2103
    %v2152 = vpack.c.b16 %v2108, %v2104
    %v2153 = vpack.c.b16 %v2109, %v2105
    %v2154 = vpack.c.b16 %v2110, %v2106
    %v2155 = vpack.c.b16 %v2115, %v2111
    %v2156 = vpack.c.b16 %v2116, %v2112
    %v2157 = vpack.c.b16 %v2117, %v2113
    %v2158 = vpack.c.b16 %v2118, %v2114
    %v2159 = vpack.c.b16 %v2123, %v2119
    %v2160 = vpack.c.b16 %v2124, %v2120
    %v2161 = vpack.c.b16 %v2125, %v2121
    %v2162 = vpack.c.b16 %v2126, %v2122
    %v2163 = vpack.c.b16 %v2131, %v2127
    %v2164 = vpack.c.b16 %v2132, %v2128
    %v2165 = vpack.c.b16 %v2133, %v2129
    %v2166 = vpack.c.b16 %v2134, %v2130
    %2199 = vmatprep.subr.bf16.mxu0 %v2136
    %2200 = vmatpush1.bf16.msra.mxu0 %v2135
    %2201 = vmatprep.subr.bf16.mxu0 %v2140
    %2202 = vmatpush1.bf16.msra.mxu0 %v2139
    %2203 = vmatprep.subr.bf16.mxu0 %v2144
    %2204 = vmatpush1.bf16.msra.mxu0 %v2143
    %2205 = vmatprep.subr.bf16.mxu0 %v2148
    %2206 = vmatpush1.bf16.msra.mxu0 %v2147
    %2207 = vmatprep.subr.bf16.mxu0 %v2152
    %2208 = vmatpush1.bf16.msra.mxu0 %v2151
    %2209 = vmatprep.subr.bf16.mxu0 %v2156
    %2210 = vmatpush1.bf16.msra.mxu0 %v2155
    %2211 = vmatprep.subr.bf16.mxu0 %v2160
    %2212 = vmatpush1.bf16.msra.mxu0 %v2159
    %2213 = vmatprep.subr.bf16.mxu0 %v2164
    %2214 = vmatpush1.bf16.msra.mxu0 %v2163
    %2215 = vmatprep.subr.bf16.mxu0 0
    %2216 = vmatpush1.bf16.msra.mxu0 0
    %2217 = vmatprep.subr.bf16.mxu0 0
    %2218 = vmatpush1.bf16.msra.mxu0 0
    %2219 = vmatprep.subr.bf16.mxu0 0
    %2220 = vmatpush1.bf16.msra.mxu0 0
    %2221 = vmatprep.subr.bf16.mxu0 0
    %2222 = vmatpush1.bf16.msra.mxu0 0
    %2223 = vmatprep.subr.bf16.mxu0 0
    %2224 = vmatpush1.bf16.msra.mxu0 0
    %2225 = vmatprep.subr.bf16.mxu0 0
    %2226 = vmatpush1.bf16.msra.mxu0 0
    %2227 = vmatprep.subr.bf16.mxu0 0
    %2228 = vmatpush1.bf16.msra.mxu0 0
    %2229 = vmatprep.subr.bf16.mxu0 0
    %2230 = vmatpush1.bf16.msra.mxu0 0
    %2231 = vmatprep.mubr.bf16.mxu0 0
    %2232 = vmatmul.mubr.bf16.gmra.mrb[0].mxu0 %v1912
    %v2233 = vpop.f32.mrb[0].mxu0
    %v2234 = vadd.f32 %v2022, %v2233
    %v2235 = vpop.f32.mrb[0].mxu0
    %v2236 = vadd.f32 %v2026, %v2235
    %v2237 = vpop.f32.mrb[0].mxu0
    %v2238 = vadd.f32 %v2022, %v2237
    %v2239 = vpop.f32.mrb[0].mxu0
    %v2240 = vadd.f32 %v2026, %v2239
    %2241 = vmatprep.mubr.bf16.mxu0 0
    %2242 = vmatmul.mubr.bf16.gmra.mrb[0].mxu0 %v1913
    %v2243 = vpop.f32.mrb[0].mxu0
    %v2244 = vadd.f32 %v2022, %v2243
    %v2245 = vpop.f32.mrb[0].mxu0
    %v2246 = vadd.f32 %v2026, %v2245
    %v2247 = vpop.f32.mrb[0].mxu0
    %v2248 = vadd.f32 %v2022, %v2247
    %v2249 = vpop.f32.mrb[0].mxu0
    %v2250 = vadd.f32 %v2026, %v2249
    %2251 = vmatprep.mubr.bf16.mxu0 0
    %2252 = vmatmul.mubr.bf16.gmra.mrb[0].mxu0 %v1914
    %v2253 = vpop.f32.mrb[0].mxu0
    %v2254 = vadd.f32 %v2022, %v2253
    %v2255 = vpop.f32.mrb[0].mxu0
    %v2256 = vadd.f32 %v2026, %v2255
    %v2257 = vpop.f32.mrb[0].mxu0
    %v2258 = vadd.f32 %v2022, %v2257
    %v2259 = vpop.f32.mrb[0].mxu0
    %v2260 = vadd.f32 %v2026, %v2259
    %2261 = vmatprep.mubr.bf16.mxu0 0
    %2262 = vmatmul.mubr.bf16.gmra.mrb[0].mxu0 %v1915
    %v2263 = vpop.f32.mrb[0].mxu0
    %v2264 = vadd.f32 %v2022, %v2263
    %v2265 = vpop.f32.mrb[0].mxu0
    %v2266 = vadd.f32 %v2026, %v2265
    %v2267 = vpop.f32.mrb[0].mxu0
    %v2268 = vadd.f32 %v2022, %v2267
    %v2269 = vpop.f32.mrb[0].mxu0
    %v2270 = vadd.f32 %v2026, %v2269
    %2271 = vmatprep.mubr.bf16.mxu0 0
    %2272 = vmatmul.mubr.bf16.gmra.mrb[0].mxu0 %v1916
    %v2273 = vpop.f32.mrb[0].mxu0
    %v2274 = vadd.f32 %v2022, %v2273
    %v2275 = vpop.f32.mrb[0].mxu0
    %v2276 = vadd.f32 %v2026, %v2275
    %v2277 = vpop.f32.mrb[0].mxu0
    %v2278 = vadd.f32 %v2022, %v2277
    %v2279 = vpop.f32.mrb[0].mxu0
    %v2280 = vadd.f32 %v2026, %v2279
    %2281 = vdwg.mxu0
    %2282 = vmatprep.subr.bf16.mxu0 %v2138
    %2283 = vmatpush1.bf16.msra.mxu0 %v2137
    %2284 = vmatprep.subr.bf16.mxu0 %v2142
    %2285 = vmatpush1.bf16.msra.mxu0 %v2141
    %2286 = vmatprep.subr.bf16.mxu0 %v2146
    %2287 = vmatpush1.bf16.msra.mxu0 %v2145
    %2288 = vmatprep.subr.bf16.mxu0 %v2150
    %2289 = vmatpush1.bf16.msra.mxu0 %v2149
    %2290 = vmatprep.subr.bf16.mxu0 %v2154
    %2291 = vmatpush1.bf16.msra.mxu0 %v2153
    %2292 = vmatprep.subr.bf16.mxu0 %v2158
    %2293 = vmatpush1.bf16.msra.mxu0 %v2157
    %2294 = vmatprep.subr.bf16.mxu0 %v2162
    %2295 = vmatpush1.bf16.msra.mxu0 %v2161
    %2296 = vmatprep.subr.bf16.mxu0 %v2166
    %2297 = vmatpush1.bf16.msra.mxu0 %v2165
    %2298 = vmatprep.subr.bf16.mxu0 0
    %2299 = vmatpush1.bf16.msra.mxu0 0
    %2300 = vmatprep.subr.bf16.mxu0 0
    %2301 = vmatpush1.bf16.msra.mxu0 0
    %2302 = vmatprep.subr.bf16.mxu0 0
    %2303 = vmatpush1.bf16.msra.mxu0 0
    %2304 = vmatprep.subr.bf16.mxu0 0
    %2305 = vmatpush1.bf16.msra.mxu0 0
    %2306 = vmatprep.subr.bf16.mxu0 0
    %2307 = vmatpush1.bf16.msra.mxu0 0
    %2308 = vmatprep.subr.bf16.mxu0 0
    %2309 = vmatpush1.bf16.msra.mxu0 0
    %2310 = vmatprep.subr.bf16.mxu0 0
    %2311 = vmatpush1.bf16.msra.mxu0 0
    %2312 = vmatprep.subr.bf16.mxu0 0
    %2313 = vmatpush1.bf16.msra.mxu0 0
    %2314 = vmatprep.mubr.bf16.mxu0 0
    %2315 = vmatmul.mubr.bf16.gmra.mrb[0].mxu0 %v1912
    %v2316 = vpop.f32.mrb[0].mxu0
    %v2317 = vadd.f32 %v2030, %v2316
    %v2318 = vpop.f32.mrb[0].mxu0
    %v2319 = vadd.f32 %v2034, %v2318
    %v2320 = vpop.f32.mrb[0].mxu0
    %v2321 = vadd.f32 %v2030, %v2320
    %v2322 = vpop.f32.mrb[0].mxu0
    %v2323 = vadd.f32 %v2034, %v2322
    %2324 = vmatprep.mubr.bf16.mxu0 0
    %2325 = vmatmul.mubr.bf16.gmra.mrb[0].mxu0 %v1913
    %v2326 = vpop.f32.mrb[0].mxu0
    %v2327 = vadd.f32 %v2030, %v2326
    %v2328 = vpop.f32.mrb[0].mxu0
    %v2329 = vadd.f32 %v2034, %v2328
    %v2330 = vpop.f32.mrb[0].mxu0
    %v2331 = vadd.f32 %v2030, %v2330
    %v2332 = vpop.f32.mrb[0].mxu0
    %v2333 = vadd.f32 %v2034, %v2332
    %2334 = vmatprep.mubr.bf16.mxu0 0
    %2335 = vmatmul.mubr.bf16.gmra.mrb[0].mxu0 %v1914
    %v2336 = vpop.f32.mrb[0].mxu0
    %v2337 = vadd.f32 %v2030, %v2336
    %v2338 = vpop.f32.mrb[0].mxu0
    %v2339 = vadd.f32 %v2034, %v2338
    %v2340 = vpop.f32.mrb[0].mxu0
    %v2341 = vadd.f32 %v2030, %v2340
    %v2342 = vpop.f32.mrb[0].mxu0
    %v2343 = vadd.f32 %v2034, %v2342
    %2344 = vmatprep.mubr.bf16.mxu0 0
    %2345 = vmatmul.mubr.bf16.gmra.mrb[0].mxu0 %v1915
    %v2346 = vpop.f32.mrb[0].mxu0
    %v2347 = vadd.f32 %v2030, %v2346
    %v2348 = vpop.f32.mrb[0].mxu0
    %v2349 = vadd.f32 %v2034, %v2348
    %v2350 = vpop.f32.mrb[0].mxu0
    %v2351 = vadd.f32 %v2030, %v2350
    %v2352 = vpop.f32.mrb[0].mxu0
    %v2353 = vadd.f32 %v2034, %v2352
    %2354 = vmatprep.mubr.bf16.mxu0 0
    %2355 = vmatmul.mubr.bf16.gmra.mrb[0].mxu0 %v1916
    %v2356 = vpop.f32.mrb[0].mxu0
    %v2357 = vadd.f32 %v2030, %v2356
    %v2358 = vpop.f32.mrb[0].mxu0
    %v2359 = vadd.f32 %v2034, %v2358
    %v2360 = vpop.f32.mrb[0].mxu0
    %v2361 = vadd.f32 %v2030, %v2360
    %v2362 = vpop.f32.mrb[0].mxu0
    %v2363 = vadd.f32 %v2034, %v2362
    %2364 = vdwg.mxu0
    %v2397 = vunpack.c.l.b16 %v1951
    %v2398 = vunpack.c.h.b16 %v1951
    %v2399 = vunpack.c.l.b16 %v1952
    %v2400 = vunpack.c.h.b16 %v1952
    %v2401 = vunpack.c.l.b16 %v1953
    %v2402 = vunpack.c.h.b16 %v1953
    %v2403 = vunpack.c.l.b16 %v1954
    %v2404 = vunpack.c.h.b16 %v1954
    %v2405 = vunpack.c.l.b16 %v1955
    %v2406 = vunpack.c.h.b16 %v1955
    %v2407 = vunpack.c.l.b16 %v1956
    %v2408 = vunpack.c.h.b16 %v1956
    %v2409 = vunpack.c.l.b16 %v1957
    %v2410 = vunpack.c.h.b16 %v1957
    %v2411 = vunpack.c.l.b16 %v1958
    %v2412 = vunpack.c.h.b16 %v1958
    %v2413 = vunpack.c.l.b16 %v1959
    %v2414 = vunpack.c.h.b16 %v1959
    %v2415 = vunpack.c.l.b16 %v1960
    %v2416 = vunpack.c.h.b16 %v1960
    %v2417 = vunpack.c.l.b16 %v1961
    %v2418 = vunpack.c.h.b16 %v1961
    %v2419 = vunpack.c.l.b16 %v1962
    %v2420 = vunpack.c.h.b16 %v1962
    %v2421 = vunpack.c.l.b16 %v1963
    %v2422 = vunpack.c.h.b16 %v1963
    %v2423 = vunpack.c.l.b16 %v1964
    %v2424 = vunpack.c.h.b16 %v1964
    %v2425 = vunpack.c.l.b16 %v1965
    %v2426 = vunpack.c.h.b16 %v1965
    %v2427 = vunpack.c.l.b16 %v1966
    %v2428 = vunpack.c.h.b16 %v1966
    %v2429 = vunpack.c.l.b16 %v1967
    %v2430 = vunpack.c.h.b16 %v1967
    %v2431 = vunpack.c.l.b16 %v1968
    %v2432 = vunpack.c.h.b16 %v1968
    %v2433 = vunpack.c.l.b16 %v1969
    %v2434 = vunpack.c.h.b16 %v1969
    %v2435 = vunpack.c.l.b16 %v1970
    %v2436 = vunpack.c.h.b16 %v1970
    %v2437 = vunpack.c.l.b16 %v1971
    %v2438 = vunpack.c.h.b16 %v1971
    %v2439 = vunpack.c.l.b16 %v1972
    %v2440 = vunpack.c.h.b16 %v1972
    %v2441 = vunpack.c.l.b16 %v1973
    %v2442 = vunpack.c.h.b16 %v1973
    %v2443 = vunpack.c.l.b16 %v1974
    %v2444 = vunpack.c.h.b16 %v1974
    %v2445 = vunpack.c.l.b16 %v1975
    %v2446 = vunpack.c.h.b16 %v1975
    %v2447 = vunpack.c.l.b16 %v1976
    %v2448 = vunpack.c.h.b16 %v1976
    %v2449 = vunpack.c.l.b16 %v1977
    %v2450 = vunpack.c.h.b16 %v1977
    %v2451 = vunpack.c.l.b16 %v1978
    %v2452 = vunpack.c.h.b16 %v1978
    %v2453 = vunpack.c.l.b16 %v1979
    %v2454 = vunpack.c.h.b16 %v1979
    %v2455 = vunpack.c.l.b16 %v1980
    %v2456 = vunpack.c.h.b16 %v1980
    %v2457 = vunpack.c.l.b16 %v1981
    %v2458 = vunpack.c.h.b16 %v1981
    %v2459 = vunpack.c.l.b16 %v1982
    %v2460 = vunpack.c.h.b16 %v1982
    %v2461 = vpack.c.b16 %v2401, %v2397
    %v2462 = vpack.c.b16 %v2402, %v2398
    %v2463 = vpack.c.b16 %v2403, %v2399
    %v2464 = vpack.c.b16 %v2404, %v2400
    %v2465 = vpack.c.b16 %v2409, %v2405
    %v2466 = vpack.c.b16 %v2410, %v2406
    %v2467 = vpack.c.b16 %v2411, %v2407
    %v2468 = vpack.c.b16 %v2412, %v2408
    %v2469 = vpack.c.b16 %v2417, %v2413
    %v2470 = vpack.c.b16 %v2418, %v2414
    %v2471 = vpack.c.b16 %v2419, %v2415
    %v2472 = vpack.c.b16 %v2420, %v2416
    %v2473 = vpack.c.b16 %v2425, %v2421
    %v2474 = vpack.c.b16 %v2426, %v2422
    %v2475 = vpack.c.b16 %v2427, %v2423
    %v2476 = vpack.c.b16 %v2428, %v2424
    %v2477 = vpack.c.b16 %v2433, %v2429
    %v2478 = vpack.c.b16 %v2434, %v2430
    %v2479 = vpack.c.b16 %v2435, %v2431
    %v2480 = vpack.c.b16 %v2436, %v2432
    %v2481 = vpack.c.b16 %v2441, %v2437
    %v2482 = vpack.c.b16 %v2442, %v2438
    %v2483 = vpack.c.b16 %v2443, %v2439
    %v2484 = vpack.c.b16 %v2444, %v2440
    %v2485 = vpack.c.b16 %v2449, %v2445
    %v2486 = vpack.c.b16 %v2450, %v2446
    %v2487 = vpack.c.b16 %v2451, %v2447
    %v2488 = vpack.c.b16 %v2452, %v2448
    %v2489 = vpack.c.b16 %v2457, %v2453
    %v2490 = vpack.c.b16 %v2458, %v2454
    %v2491 = vpack.c.b16 %v2459, %v2455
    %v2492 = vpack.c.b16 %v2460, %v2456
    %2525 = vmatprep.subr.bf16.mxu0 %v2462
    %2526 = vmatpush1.bf16.msra.mxu0 %v2461
    %2527 = vmatprep.subr.bf16.mxu0 %v2466
    %2528 = vmatpush1.bf16.msra.mxu0 %v2465
    %2529 = vmatprep.subr.bf16.mxu0 %v2470
    %2530 = vmatpush1.bf16.msra.mxu0 %v2469
    %2531 = vmatprep.subr.bf16.mxu0 %v2474
    %2532 = vmatpush1.bf16.msra.mxu0 %v2473
    %2533 = vmatprep.subr.bf16.mxu0 %v2478
    %2534 = vmatpush1.bf16.msra.mxu0 %v2477
    %2535 = vmatprep.subr.bf16.mxu0 %v2482
    %2536 = vmatpush1.bf16.msra.mxu0 %v2481
    %2537 = vmatprep.subr.bf16.mxu0 %v2486
    %2538 = vmatpush1.bf16.msra.mxu0 %v2485
    %2539 = vmatprep.subr.bf16.mxu0 %v2490
    %2540 = vmatpush1.bf16.msra.mxu0 %v2489
    %2541 = vmatprep.subr.bf16.mxu0 0
    %2542 = vmatpush1.bf16.msra.mxu0 0
    %2543 = vmatprep.subr.bf16.mxu0 0
    %2544 = vmatpush1.bf16.msra.mxu0 0
    %2545 = vmatprep.subr.bf16.mxu0 0
    %2546 = vmatpush1.bf16.msra.mxu0 0
    %2547 = vmatprep.subr.bf16.mxu0 0
    %2548 = vmatpush1.bf16.msra.mxu0 0
    %2549 = vmatprep.subr.bf16.mxu0 0
    %2550 = vmatpush1.bf16.msra.mxu0 0
    %2551 = vmatprep.subr.bf16.mxu0 0
    %2552 = vmatpush1.bf16.msra.mxu0 0
    %2553 = vmatprep.subr.bf16.mxu0 0
    %2554 = vmatpush1.bf16.msra.mxu0 0
    %2555 = vmatprep.subr.bf16.mxu0 0
    %2556 = vmatpush1.bf16.msra.mxu0 0
    %2557 = vmatprep.mubr.bf16.mxu0 0
    %2558 = vmatmul.mubr.bf16.gmra.mrb[0].mxu0 %v1912
    %v2559 = vpop.f32.mrb[0].mxu0
    %v2560 = vadd.f32 0.0, %v2559
    %v2561 = vpop.f32.mrb[0].mxu0
    %v2562 = vadd.f32 0.0, %v2561
    %v2563 = vpop.f32.mrb[0].mxu0
    %v2564 = vadd.f32 0.0, %v2563
    %v2565 = vpop.f32.mrb[0].mxu0
    %v2566 = vadd.f32 0.0, %v2565
    %2567 = vmatprep.mubr.bf16.mxu0 0
    %2568 = vmatmul.mubr.bf16.gmra.mrb[0].mxu0 %v1913
    %v2569 = vpop.f32.mrb[0].mxu0
    %v2570 = vadd.f32 0.0, %v2569
    %v2571 = vpop.f32.mrb[0].mxu0
    %v2572 = vadd.f32 0.0, %v2571
    %v2573 = vpop.f32.mrb[0].mxu0
    %v2574 = vadd.f32 0.0, %v2573
    %v2575 = vpop.f32.mrb[0].mxu0
    %v2576 = vadd.f32 0.0, %v2575
    %2577 = vmatprep.mubr.bf16.mxu0 0
    %2578 = vmatmul.mubr.bf16.gmra.mrb[0].mxu0 %v1914
    %v2579 = vpop.f32.mrb[0].mxu0
    %v2580 = vadd.f32 0.0, %v2579
    %v2581 = vpop.f32.mrb[0].mxu0
    %v2582 = vadd.f32 0.0, %v2581
    %v2583 = vpop.f32.mrb[0].mxu0
    %v2584 = vadd.f32 0.0, %v2583
    %v2585 = vpop.f32.mrb[0].mxu0
    %v2586 = vadd.f32 0.0, %v2585
    %2587 = vmatprep.mubr.bf16.mxu0 0
    %2588 = vmatmul.mubr.bf16.gmra.mrb[0].mxu0 %v1915
    %v2589 = vpop.f32.mrb[0].mxu0
    %v2590 = vadd.f32 0.0, %v2589
    %v2591 = vpop.f32.mrb[0].mxu0
    %v2592 = vadd.f32 0.0, %v2591
    %v2593 = vpop.f32.mrb[0].mxu0
    %v2594 = vadd.f32 0.0, %v2593
    %v2595 = vpop.f32.mrb[0].mxu0
    %v2596 = vadd.f32 0.0, %v2595
    %2597 = vmatprep.mubr.bf16.mxu0 0
    %2598 = vmatmul.mubr.bf16.gmra.mrb[0].mxu0 %v1916
    %v2599 = vpop.f32.mrb[0].mxu0
    %v2600 = vadd.f32 0.0, %v2599
    %v2601 = vpop.f32.mrb[0].mxu0
    %v2602 = vadd.f32 0.0, %v2601
    %v2603 = vpop.f32.mrb[0].mxu0
    %v2604 = vadd.f32 0.0, %v2603
    %v2605 = vpop.f32.mrb[0].mxu0
    %v2606 = vadd.f32 0.0, %v2605
    %2607 = vdwg.mxu0
    %2608 = vmatprep.subr.bf16.mxu0 %v2464
    %2609 = vmatpush1.bf16.msra.mxu0 %v2463
    %2610 = vmatprep.subr.bf16.mxu0 %v2468
    %2611 = vmatpush1.bf16.msra.mxu0 %v2467
    %2612 = vmatprep.subr.bf16.mxu0 %v2472
    %2613 = vmatpush1.bf16.msra.mxu0 %v2471
    %2614 = vmatprep.subr.bf16.mxu0 %v2476
    %2615 = vmatpush1.bf16.msra.mxu0 %v2475
    %2616 = vmatprep.subr.bf16.mxu0 %v2480
    %2617 = vmatpush1.bf16.msra.mxu0 %v2479
    %2618 = vmatprep.subr.bf16.mxu0 %v2484
    %2619 = vmatpush1.bf16.msra.mxu0 %v2483
    %2620 = vmatprep.subr.bf16.mxu0 %v2488
    %2621 = vmatpush1.bf16.msra.mxu0 %v2487
    %2622 = vmatprep.subr.bf16.mxu0 %v2492
    %2623 = vmatpush1.bf16.msra.mxu0 %v2491
    %2624 = vmatprep.subr.bf16.mxu0 0
    %2625 = vmatpush1.bf16.msra.mxu0 0
    %2626 = vmatprep.subr.bf16.mxu0 0
    %2627 = vmatpush1.bf16.msra.mxu0 0
    %2628 = vmatprep.subr.bf16.mxu0 0
    %2629 = vmatpush1.bf16.msra.mxu0 0
    %2630 = vmatprep.subr.bf16.mxu0 0
    %2631 = vmatpush1.bf16.msra.mxu0 0
    %2632 = vmatprep.subr.bf16.mxu0 0
    %2633 = vmatpush1.bf16.msra.mxu0 0
    %2634 = vmatprep.subr.bf16.mxu0 0
    %2635 = vmatpush1.bf16.msra.mxu0 0
    %2636 = vmatprep.subr.bf16.mxu0 0
    %2637 = vmatpush1.bf16.msra.mxu0 0
    %2638 = vmatprep.subr.bf16.mxu0 0
    %2639 = vmatpush1.bf16.msra.mxu0 0
    %2640 = vmatprep.mubr.bf16.mxu0 0
    %2641 = vmatmul.mubr.bf16.gmra.mrb[0].mxu0 %v1912
    %v2642 = vpop.f32.mrb[0].mxu0
    %v2643 = vadd.f32 0.0, %v2642
    %v2644 = vpop.f32.mrb[0].mxu0
    %v2645 = vadd.f32 0.0, %v2644
    %v2646 = vpop.f32.mrb[0].mxu0
    %v2647 = vadd.f32 0.0, %v2646
    %v2648 = vpop.f32.mrb[0].mxu0
    %v2649 = vadd.f32 0.0, %v2648
    %2650 = vmatprep.mubr.bf16.mxu0 0
    %2651 = vmatmul.mubr.bf16.gmra.mrb[0].mxu0 %v1913
    %v2652 = vpop.f32.mrb[0].mxu0
    %v2653 = vadd.f32 0.0, %v2652
    %v2654 = vpop.f32.mrb[0].mxu0
    %v2655 = vadd.f32 0.0, %v2654
    %v2656 = vpop.f32.mrb[0].mxu0
    %v2657 = vadd.f32 0.0, %v2656
    %v2658 = vpop.f32.mrb[0].mxu0
    %v2659 = vadd.f32 0.0, %v2658
    %2660 = vmatprep.mubr.bf16.mxu0 0
    %2661 = vmatmul.mubr.bf16.gmra.mrb[0].mxu0 %v1914
    %v2662 = vpop.f32.mrb[0].mxu0
    %v2663 = vadd.f32 0.0, %v2662
    %v2664 = vpop.f32.mrb[0].mxu0
    %v2665 = vadd.f32 0.0, %v2664
    %v2666 = vpop.f32.mrb[0].mxu0
    %v2667 = vadd.f32 0.0, %v2666
    %v2668 = vpop.f32.mrb[0].mxu0
    %v2669 = vadd.f32 0.0, %v2668
    %2670 = vmatprep.mubr.bf16.mxu0 0
    %2671 = vmatmul.mubr.bf16.gmra.mrb[0].mxu0 %v1915
    %v2672 = vpop.f32.mrb[0].mxu0
    %v2673 = vadd.f32 0.0, %v2672
    %v2674 = vpop.f32.mrb[0].mxu0
    %v2675 = vadd.f32 0.0, %v2674
    %v2676 = vpop.f32.mrb[0].mxu0
    %v2677 = vadd.f32 0.0, %v2676
    %v2678 = vpop.f32.mrb[0].mxu0
    %v2679 = vadd.f32 0.0, %v2678
    %2680 = vmatprep.mubr.bf16.mxu0 0
    %2681 = vmatmul.mubr.bf16.gmra.mrb[0].mxu0 %v1916
    %v2682 = vpop.f32.mrb[0].mxu0
    %v2683 = vadd.f32 0.0, %v2682
    %v2684 = vpop.f32.mrb[0].mxu0
    %v2685 = vadd.f32 0.0, %v2684
    %v2686 = vpop.f32.mrb[0].mxu0
    %v2687 = vadd.f32 0.0, %v2686
    %v2688 = vpop.f32.mrb[0].mxu0
    %v2689 = vadd.f32 0.0, %v2688
    %2690 = vdwg.mxu0
    %v2691 = vadd.f32 %v2234, %v2600
    %v2692 = vadd.f32 %v2236, %v2602
    %v2693 = vadd.f32 %v2317, %v2683
    %v2694 = vadd.f32 %v2319, %v2685
    %v2695 = vadd.f32 %v2238, %v2604
    %v2696 = vadd.f32 %v2240, %v2606
    %v2697 = vadd.f32 %v2321, %v2687
    %v2698 = vadd.f32 %v2323, %v2689
    %2699 = vst [vmem:[#allocation3] sm:$0xff] %v2691
    %2700 = vst [vmem:[#allocation3 + $0x8] sm:$0xff] %v2692
    %2701 = vst [vmem:[#allocation3 + $0x10] sm:$0xff] %v2693
    %2702 = vst [vmem:[#allocation3 + $0x18] sm:$0xff] %v2694
    %2703 = vst [vmem:[#allocation3 + $0x20] sm:$0xff] %v2695
    %2704 = vst [vmem:[#allocation3 + $0x28] sm:$0xff] %v2696
    %2705 = vst [vmem:[#allocation3 + $0x30] sm:$0xff] %v2697
    %2706 = vst [vmem:[#allocation3 + $0x38] sm:$0xff] %v2698
    %v2707 = vadd.f32 %v2244, %v2590
    %v2708 = vadd.f32 %v2246, %v2592
    %v2709 = vadd.f32 %v2327, %v2673
    %v2710 = vadd.f32 %v2329, %v2675
    %v2711 = vadd.f32 %v2248, %v2594
    %v2712 = vadd.f32 %v2250, %v2596
    %v2713 = vadd.f32 %v2331, %v2677
    %v2714 = vadd.f32 %v2333, %v2679
    %2715 = vst [vmem:[%s988] sm:$0xff] %v2707
    %2716 = vst [vmem:[%s988 + $0x8] sm:$0xff] %v2708
    %2717 = vst [vmem:[%s988 + $0x10] sm:$0xff] %v2709
    %2718 = vst [vmem:[%s988 + $0x18] sm:$0xff] %v2710
    %2719 = vst [vmem:[%s988 + $0x20] sm:$0xff] %v2711
    %2720 = vst [vmem:[%s988 + $0x28] sm:$0xff] %v2712
    %2721 = vst [vmem:[%s988 + $0x30] sm:$0xff] %v2713
    %2722 = vst [vmem:[%s988 + $0x38] sm:$0xff] %v2714
    %v2723 = vadd.f32 %v2254, %v2580
    %v2724 = vadd.f32 %v2256, %v2582
    %v2725 = vadd.f32 %v2337, %v2663
    %v2726 = vadd.f32 %v2339, %v2665
    %v2727 = vadd.f32 %v2258, %v2584
    %v2728 = vadd.f32 %v2260, %v2586
    %v2729 = vadd.f32 %v2341, %v2667
    %v2730 = vadd.f32 %v2343, %v2669
    %2731 = vst [vmem:[%s1005] sm:$0xff] %v2723
    %2732 = vst [vmem:[%s1005 + $0x8] sm:$0xff] %v2724
    %2733 = vst [vmem:[%s1005 + $0x10] sm:$0xff] %v2725
    %2734 = vst [vmem:[%s1005 + $0x18] sm:$0xff] %v2726
    %2735 = vst [vmem:[%s1005 + $0x20] sm:$0xff] %v2727
    %2736 = vst [vmem:[%s1005 + $0x28] sm:$0xff] %v2728
    %2737 = vst [vmem:[%s1005 + $0x30] sm:$0xff] %v2729
    %2738 = vst [vmem:[%s1005 + $0x38] sm:$0xff] %v2730
    %v2739 = vadd.f32 %v2264, %v2570
    %v2740 = vadd.f32 %v2266, %v2572
    %v2741 = vadd.f32 %v2347, %v2653
    %v2742 = vadd.f32 %v2349, %v2655
    %v2743 = vadd.f32 %v2268, %v2574
    %v2744 = vadd.f32 %v2270, %v2576
    %v2745 = vadd.f32 %v2351, %v2657
    %v2746 = vadd.f32 %v2353, %v2659
    %2747 = vst [vmem:[%s1022] sm:$0xff] %v2739
    %2748 = vst [vmem:[%s1022 + $0x8] sm:$0xff] %v2740
    %2749 = vst [vmem:[%s1022 + $0x10] sm:$0xff] %v2741
    %2750 = vst [vmem:[%s1022 + $0x18] sm:$0xff] %v2742
    %2751 = vst [vmem:[%s1022 + $0x20] sm:$0xff] %v2743
    %2752 = vst [vmem:[%s1022 + $0x28] sm:$0xff] %v2744
    %2753 = vst [vmem:[%s1022 + $0x30] sm:$0xff] %v2745
    %2754 = vst [vmem:[%s1022 + $0x38] sm:$0xff] %v2746
    %v2755 = vadd.f32 %v2274, %v2560
    %v2756 = vadd.f32 %v2276, %v2562
    %v2757 = vadd.f32 %v2357, %v2643
    %v2758 = vadd.f32 %v2359, %v2645
    %v2759 = vadd.f32 %v2278, %v2564
    %v2760 = vadd.f32 %v2280, %v2566
    %v2761 = vadd.f32 %v2361, %v2647
    %v2762 = vadd.f32 %v2363, %v2649
    %2763 = vst [vmem:[%s1039] sm:$0xff] %v2755
    %2764 = vst [vmem:[%s1039 + $0x8] sm:$0xff] %v2756
    %2765 = vst [vmem:[%s1039 + $0x10] sm:$0xff] %v2757
    %2766 = vst [vmem:[%s1039 + $0x18] sm:$0xff] %v2758
    %2767 = vst [vmem:[%s1039 + $0x20] sm:$0xff] %v2759
    %2768 = vst [vmem:[%s1039 + $0x28] sm:$0xff] %v2760
    %2769 = vst [vmem:[%s1039 + $0x30] sm:$0xff] %v2761
    %2770 = vst [vmem:[%s1039 + $0x38] sm:$0xff] %v2762
    %v2771 = vld [vmem:[#allocation3] sm:$0xff]
    %v2772 = vld [vmem:[#allocation3 + $0x8] sm:$0xff]
    %v2773 = vld [vmem:[#allocation3 + $0x10] sm:$0xff]
    %v2774 = vld [vmem:[#allocation3 + $0x18] sm:$0xff]
    %v2775 = vld [vmem:[#allocation3 + $0x20] sm:$0xff]
    %v2776 = vld [vmem:[#allocation3 + $0x28] sm:$0xff]
    %v2777 = vld [vmem:[#allocation3 + $0x30] sm:$0xff]
    %v2778 = vld [vmem:[#allocation3 + $0x38] sm:$0xff]
    %v2811 = vunpack.c.l.b16 %v1984
    %v2812 = vunpack.c.h.b16 %v1984
    %v2813 = vunpack.c.l.b16 %v1985
    %v2814 = vunpack.c.h.b16 %v1985
    %v2815 = vunpack.c.l.b16 %v1986
    %v2816 = vunpack.c.h.b16 %v1986
    %v2817 = vunpack.c.l.b16 %v1987
    %v2818 = vunpack.c.h.b16 %v1987
    %v2819 = vunpack.c.l.b16 %v1988
    %v2820 = vunpack.c.h.b16 %v1988
    %v2821 = vunpack.c.l.b16 %v1989
    %v2822 = vunpack.c.h.b16 %v1989
    %v2823 = vunpack.c.l.b16 %v1990
    %v2824 = vunpack.c.h.b16 %v1990
    %v2825 = vunpack.c.l.b16 %v1991
    %v2826 = vunpack.c.h.b16 %v1991
    %v2827 = vunpack.c.l.b16 %v1992
    %v2828 = vunpack.c.h.b16 %v1992
    %v2829 = vunpack.c.l.b16 %v1993
    %v2830 = vunpack.c.h.b16 %v1993
    %v2831 = vunpack.c.l.b16 %v1994
    %v2832 = vunpack.c.h.b16 %v1994
    %v2833 = vunpack.c.l.b16 %v1995
    %v2834 = vunpack.c.h.b16 %v1995
    %v2835 = vunpack.c.l.b16 %v1996
    %v2836 = vunpack.c.h.b16 %v1996
    %v2837 = vunpack.c.l.b16 %v1997
    %v2838 = vunpack.c.h.b16 %v1997
    %v2839 = vunpack.c.l.b16 %v1998
    %v2840 = vunpack.c.h.b16 %v1998
    %v2841 = vunpack.c.l.b16 %v1999
    %v2842 = vunpack.c.h.b16 %v1999
    %v2843 = vunpack.c.l.b16 %v2000
    %v2844 = vunpack.c.h.b16 %v2000
    %v2845 = vunpack.c.l.b16 %v2001
    %v2846 = vunpack.c.h.b16 %v2001
    %v2847 = vunpack.c.l.b16 %v2002
    %v2848 = vunpack.c.h.b16 %v2002
    %v2849 = vunpack.c.l.b16 %v2003
    %v2850 = vunpack.c.h.b16 %v2003
    %v2851 = vunpack.c.l.b16 %v2004
    %v2852 = vunpack.c.h.b16 %v2004
    %v2853 = vunpack.c.l.b16 %v2005
    %v2854 = vunpack.c.h.b16 %v2005
    %v2855 = vunpack.c.l.b16 %v2006
    %v2856 = vunpack.c.h.b16 %v2006
    %v2857 = vunpack.c.l.b16 %v2007
    %v2858 = vunpack.c.h.b16 %v2007
    %v2859 = vunpack.c.l.b16 %v2008
    %v2860 = vunpack.c.h.b16 %v2008
    %v2861 = vunpack.c.l.b16 %v2009
    %v2862 = vunpack.c.h.b16 %v2009
    %v2863 = vunpack.c.l.b16 %v2010
    %v2864 = vunpack.c.h.b16 %v2010
    %v2865 = vunpack.c.l.b16 %v2011
    %v2866 = vunpack.c.h.b16 %v2011
    %v2867 = vunpack.c.l.b16 %v2012
    %v2868 = vunpack.c.h.b16 %v2012
    %v2869 = vunpack.c.l.b16 %v2013
    %v2870 = vunpack.c.h.b16 %v2013
    %v2871 = vunpack.c.l.b16 %v2014
    %v2872 = vunpack.c.h.b16 %v2014
    %v2873 = vunpack.c.l.b16 %v2015
    %v2874 = vunpack.c.h.b16 %v2015
    %v2875 = vpack.c.b16 %v2815, %v2811
    %v2876 = vpack.c.b16 %v2816, %v2812
    %v2877 = vpack.c.b16 %v2817, %v2813
    %v2878 = vpack.c.b16 %v2818, %v2814
    %v2879 = vpack.c.b16 %v2823, %v2819
    %v2880 = vpack.c.b16 %v2824, %v2820
    %v2881 = vpack.c.b16 %v2825, %v2821
    %v2882 = vpack.c.b16 %v2826, %v2822
    %v2883 = vpack.c.b16 %v2831, %v2827
    %v2884 = vpack.c.b16 %v2832, %v2828
    %v2885 = vpack.c.b16 %v2833, %v2829
    %v2886 = vpack.c.b16 %v2834, %v2830
    %v2887 = vpack.c.b16 %v2839, %v2835
    %v2888 = vpack.c.b16 %v2840, %v2836
    %v2889 = vpack.c.b16 %v2841, %v2837
    %v2890 = vpack.c.b16 %v2842, %v2838
    %v2891 = vpack.c.b16 %v2847, %v2843
    %v2892 = vpack.c.b16 %v2848, %v2844
    %v2893 = vpack.c.b16 %v2849, %v2845
    %v2894 = vpack.c.b16 %v2850, %v2846
    %v2895 = vpack.c.b16 %v2855, %v2851
    %v2896 = vpack.c.b16 %v2856, %v2852
    %v2897 = vpack.c.b16 %v2857, %v2853
    %v2898 = vpack.c.b16 %v2858, %v2854
    %v2899 = vpack.c.b16 %v2863, %v2859
    %v2900 = vpack.c.b16 %v2864, %v2860
    %v2901 = vpack.c.b16 %v2865, %v2861
    %v2902 = vpack.c.b16 %v2866, %v2862
    %v2903 = vpack.c.b16 %v2871, %v2867
    %v2904 = vpack.c.b16 %v2872, %v2868
    %v2905 = vpack.c.b16 %v2873, %v2869
    %v2906 = vpack.c.b16 %v2874, %v2870
    %2939 = vmatprep.subr.bf16.mxu0 %v2876
    %2940 = vmatpush1.bf16.msra.mxu0 %v2875
    %2941 = vmatprep.subr.bf16.mxu0 %v2880
    %2942 = vmatpush1.bf16.msra.mxu0 %v2879
    %2943 = vmatprep.subr.bf16.mxu0 %v2884
    %2944 = vmatpush1.bf16.msra.mxu0 %v2883
    %2945 = vmatprep.subr.bf16.mxu0 %v2888
    %2946 = vmatpush1.bf16.msra.mxu0 %v2887
    %2947 = vmatprep.subr.bf16.mxu0 %v2892
    %2948 = vmatpush1.bf16.msra.mxu0 %v2891
    %2949 = vmatprep.subr.bf16.mxu0 %v2896
    %2950 = vmatpush1.bf16.msra.mxu0 %v2895
    %2951 = vmatprep.subr.bf16.mxu0 %v2900
    %2952 = vmatpush1.bf16.msra.mxu0 %v2899
    %2953 = vmatprep.subr.bf16.mxu0 %v2904
    %2954 = vmatpush1.bf16.msra.mxu0 %v2903
    %2955 = vmatprep.subr.bf16.mxu0 0
    %2956 = vmatpush1.bf16.msra.mxu0 0
    %2957 = vmatprep.subr.bf16.mxu0 0
    %2958 = vmatpush1.bf16.msra.mxu0 0
    %2959 = vmatprep.subr.bf16.mxu0 0
    %2960 = vmatpush1.bf16.msra.mxu0 0
    %2961 = vmatprep.subr.bf16.mxu0 0
    %2962 = vmatpush1.bf16.msra.mxu0 0
    %2963 = vmatprep.subr.bf16.mxu0 0
    %2964 = vmatpush1.bf16.msra.mxu0 0
    %2965 = vmatprep.subr.bf16.mxu0 0
    %2966 = vmatpush1.bf16.msra.mxu0 0
    %2967 = vmatprep.subr.bf16.mxu0 0
    %2968 = vmatpush1.bf16.msra.mxu0 0
    %2969 = vmatprep.subr.bf16.mxu0 0
    %2970 = vmatpush1.bf16.msra.mxu0 0
    %2971 = vmatprep.mubr.bf16.mxu0 0
    %2972 = vmatmul.mubr.bf16.gmra.mrb[0].mxu0 0
    %v2973 = vpop.f32.mrb[0].mxu0
    %v2974 = vadd.f32 0.0, %v2973
    %v2975 = vpop.f32.mrb[0].mxu0
    %v2976 = vadd.f32 0.0, %v2975
    %v2977 = vpop.f32.mrb[0].mxu0
    %v2978 = vadd.f32 0.0, %v2977
    %v2979 = vpop.f32.mrb[0].mxu0
    %v2980 = vadd.f32 0.0, %v2979
    %2981 = vdwg.mxu0
    %2982 = vmatprep.subr.bf16.mxu0 %v2878
    %2983 = vmatpush1.bf16.msra.mxu0 %v2877
    %2984 = vmatprep.subr.bf16.mxu0 %v2882
    %2985 = vmatpush1.bf16.msra.mxu0 %v2881
    %2986 = vmatprep.subr.bf16.mxu0 %v2886
    %2987 = vmatpush1.bf16.msra.mxu0 %v2885
    %2988 = vmatprep.subr.bf16.mxu0 %v2890
    %2989 = vmatpush1.bf16.msra.mxu0 %v2889
    %2990 = vmatprep.subr.bf16.mxu0 %v2894
    %2991 = vmatpush1.bf16.msra.mxu0 %v2893
    %2992 = vmatprep.subr.bf16.mxu0 %v2898
    %2993 = vmatpush1.bf16.msra.mxu0 %v2897
    %2994 = vmatprep.subr.bf16.mxu0 %v2902
    %2995 = vmatpush1.bf16.msra.mxu0 %v2901
    %2996 = vmatprep.subr.bf16.mxu0 %v2906
    %2997 = vmatpush1.bf16.msra.mxu0 %v2905
    %2998 = vmatprep.subr.bf16.mxu0 0
    %2999 = vmatpush1.bf16.msra.mxu0 0
    %3000 = vmatprep.subr.bf16.mxu0 0
    %3001 = vmatpush1.bf16.msra.mxu0 0
    %3002 = vmatprep.subr.bf16.mxu0 0
    %3003 = vmatpush1.bf16.msra.mxu0 0
    %3004 = vmatprep.subr.bf16.mxu0 0
    %3005 = vmatpush1.bf16.msra.mxu0 0
    %3006 = vmatprep.subr.bf16.mxu0 0
    %3007 = vmatpush1.bf16.msra.mxu0 0
    %3008 = vmatprep.subr.bf16.mxu0 0
    %3009 = vmatpush1.bf16.msra.mxu0 0
    %3010 = vmatprep.subr.bf16.mxu0 0
    %3011 = vmatpush1.bf16.msra.mxu0 0
    %3012 = vmatprep.subr.bf16.mxu0 0
    %3013 = vmatpush1.bf16.msra.mxu0 0
    %3014 = vmatprep.mubr.bf16.mxu0 0
    %3015 = vmatmul.mubr.bf16.gmra.mrb[0].mxu0 0
    %v3016 = vpop.f32.mrb[0].mxu0
    %v3017 = vadd.f32 0.0, %v3016
    %v3018 = vpop.f32.mrb[0].mxu0
    %v3019 = vadd.f32 0.0, %v3018
    %v3020 = vpop.f32.mrb[0].mxu0
    %v3021 = vadd.f32 0.0, %v3020
    %v3022 = vpop.f32.mrb[0].mxu0
    %v3023 = vadd.f32 0.0, %v3022
    %3024 = vdwg.mxu0
    %v3025 = vadd.f32 %v2771, %v2974
    %v3026 = vadd.f32 %v2772, %v2976
    %v3027 = vadd.f32 %v2773, %v3017
    %v3028 = vadd.f32 %v2774, %v3019
    %v3029 = vadd.f32 %v2775, %v2978
    %v3030 = vadd.f32 %v2776, %v2980
    %v3031 = vadd.f32 %v2777, %v3021
    %v3032 = vadd.f32 %v2778, %v3023
    %v3033 = vmul.f32 %v3025, 0.5
    %v3034 = vmul.f32 %v3029, 0.5
    %v3035 = vtanh.pop %v3033
    %v3036 = vtanh.pop %v3034
    %v3037 = vmul.f32 %v3035, 0.5
    %v3038 = vmul.f32 %v3036, 0.5
    %v3039 = vadd.f32 %v3037, 0.5
    %v3040 = vadd.f32 %v3038, 0.5
    %v3041 = vmul.f32 %v3026, 0.5
    %v3042 = vmul.f32 %v3030, 0.5
    %v3043 = vtanh.pop %v3041
    %v3044 = vtanh.pop %v3042
    %v3045 = vmul.f32 %v3043, 0.5
    %v3046 = vmul.f32 %v3044, 0.5
    %v3047 = vadd.f32 %v3045, 0.5
    %v3048 = vadd.f32 %v3046, 0.5
    %v3049 = vtanh.pop %v3027
    %v3050 = vtanh.pop %v3031
    %v3051 = vmul.f32 %v3028, 0.5
    %v3052 = vmul.f32 %v3032, 0.5
    %v3053 = vtanh.pop %v3051
    %v3054 = vtanh.pop %v3052
    %v3055 = vmul.f32 %v3053, 0.5
    %v3056 = vmul.f32 %v3054, 0.5
    %v3057 = vadd.f32 %v3055, 0.5
    %v3058 = vadd.f32 %v3056, 0.5
    %v3059 = vmul.f32 %v3047, 0.0
    %v3060 = vmul.f32 %v3048, 0.0
    %v3061 = vmul.f32 %v3039, %v3049
    %v3062 = vmul.f32 %v3040, %v3050
    %v3063 = vadd.f32 %v3059, %v3061
    %v3064 = vadd.f32 %v3060, %v3062
    %v3065 = vtanh.pop %v3063
    %v3066 = vtanh.pop %v3064
    %v3067 = vmul.f32 %v3057, %v3065
    %v3068 = vmul.f32 %v3058, %v3066
    %v3069 = vpack.c.bf16 %v3068, %v3067
    %3070 = vst [vmem:[#allocation2] sm:$0xff] %v3069
    %v3071 = vld [vmem:[%s988] sm:$0xff]
    %v3072 = vld [vmem:[%s988 + $0x8] sm:$0xff]
    %v3073 = vld [vmem:[%s988 + $0x10] sm:$0xff]
    %v3074 = vld [vmem:[%s988 + $0x18] sm:$0xff]
    %v3075 = vld [vmem:[%s988 + $0x20] sm:$0xff]
    %v3076 = vld [vmem:[%s988 + $0x28] sm:$0xff]
    %v3077 = vld [vmem:[%s988 + $0x30] sm:$0xff]
    %v3078 = vld [vmem:[%s988 + $0x38] sm:$0xff]
    %3079 = vmatprep.subr.bf16.mxu0 %v2876
    %3080 = vmatpush1.bf16.msra.mxu0 %v2875
    %3081 = vmatprep.subr.bf16.mxu0 %v2880
    %3082 = vmatpush1.bf16.msra.mxu0 %v2879
    %3083 = vmatprep.subr.bf16.mxu0 %v2884
    %3084 = vmatpush1.bf16.msra.mxu0 %v2883
    %3085 = vmatprep.subr.bf16.mxu0 %v2888
    %3086 = vmatpush1.bf16.msra.mxu0 %v2887
    %3087 = vmatprep.subr.bf16.mxu0 %v2892
    %3088 = vmatpush1.bf16.msra.mxu0 %v2891
    %3089 = vmatprep.subr.bf16.mxu0 %v2896
    %3090 = vmatpush1.bf16.msra.mxu0 %v2895
    %3091 = vmatprep.subr.bf16.mxu0 %v2900
    %3092 = vmatpush1.bf16.msra.mxu0 %v2899
    %3093 = vmatprep.subr.bf16.mxu0 %v2904
    %3094 = vmatpush1.bf16.msra.mxu0 %v2903
    %3095 = vmatprep.subr.bf16.mxu0 0
    %3096 = vmatpush1.bf16.msra.mxu0 0
    %3097 = vmatprep.subr.bf16.mxu0 0
    %3098 = vmatpush1.bf16.msra.mxu0 0
    %3099 = vmatprep.subr.bf16.mxu0 0
    %3100 = vmatpush1.bf16.msra.mxu0 0
    %3101 = vmatprep.subr.bf16.mxu0 0
    %3102 = vmatpush1.bf16.msra.mxu0 0
    %3103 = vmatprep.subr.bf16.mxu0 0
    %3104 = vmatpush1.bf16.msra.mxu0 0
    %3105 = vmatprep.subr.bf16.mxu0 0
    %3106 = vmatpush1.bf16.msra.mxu0 0
    %3107 = vmatprep.subr.bf16.mxu0 0
    %3108 = vmatpush1.bf16.msra.mxu0 0
    %3109 = vmatprep.subr.bf16.mxu0 0
    %3110 = vmatpush1.bf16.msra.mxu0 0
    %3111 = vmatprep.mubr.bf16.mxu0 0
    %3112 = vmatmul.mubr.bf16.gmra.mrb[0].mxu0 %v3069
    %v3113 = vpop.f32.mrb[0].mxu0
    %v3114 = vadd.f32 0.0, %v3113
    %v3115 = vpop.f32.mrb[0].mxu0
    %v3116 = vadd.f32 0.0, %v3115
    %v3117 = vpop.f32.mrb[0].mxu0
    %v3118 = vadd.f32 0.0, %v3117
    %v3119 = vpop.f32.mrb[0].mxu0
    %v3120 = vadd.f32 0.0, %v3119
    %3121 = vdwg.mxu0
    %3122 = vmatprep.subr.bf16.mxu0 %v2878
    %3123 = vmatpush1.bf16.msra.mxu0 %v2877
    %3124 = vmatprep.subr.bf16.mxu0 %v2882
    %3125 = vmatpush1.bf16.msra.mxu0 %v2881
    %3126 = vmatprep.subr.bf16.mxu0 %v2886
    %3127 = vmatpush1.bf16.msra.mxu0 %v2885
    %3128 = vmatprep.subr.bf16.mxu0 %v2890
    %3129 = vmatpush1.bf16.msra.mxu0 %v2889
    %3130 = vmatprep.subr.bf16.mxu0 %v2894
    %3131 = vmatpush1.bf16.msra.mxu0 %v2893
    %3132 = vmatprep.subr.bf16.mxu0 %v2898
    %3133 = vmatpush1.bf16.msra.mxu0 %v2897
    %3134 = vmatprep.subr.bf16.mxu0 %v2902
    %3135 = vmatpush1.bf16.msra.mxu0 %v2901
    %3136 = vmatprep.subr.bf16.mxu0 %v2906
    %3137 = vmatpush1.bf16.msra.mxu0 %v2905
    %3138 = vmatprep.subr.bf16.mxu0 0
    %3139 = vmatpush1.bf16.msra.mxu0 0
    %3140 = vmatprep.subr.bf16.mxu0 0
    %3141 = vmatpush1.bf16.msra.mxu0 0
    %3142 = vmatprep.subr.bf16.mxu0 0
    %3143 = vmatpush1.bf16.msra.mxu0 0
    %3144 = vmatprep.subr.bf16.mxu0 0
    %3145 = vmatpush1.bf16.msra.mxu0 0
    %3146 = vmatprep.subr.bf16.mxu0 0
    %3147 = vmatpush1.bf16.msra.mxu0 0
    %3148 = vmatprep.subr.bf16.mxu0 0
    %3149 = vmatpush1.bf16.msra.mxu0 0
    %3150 = vmatprep.subr.bf16.mxu0 0
    %3151 = vmatpush1.bf16.msra.mxu0 0
    %3152 = vmatprep.subr.bf16.mxu0 0
    %3153 = vmatpush1.bf16.msra.mxu0 0
    %3154 = vmatprep.mubr.bf16.mxu0 0
    %3155 = vmatmul.mubr.bf16.gmra.mrb[0].mxu0 %v3069
    %v3156 = vpop.f32.mrb[0].mxu0
    %v3157 = vadd.f32 0.0, %v3156
    %v3158 = vpop.f32.mrb[0].mxu0
    %v3159 = vadd.f32 0.0, %v3158
    %v3160 = vpop.f32.mrb[0].mxu0
    %v3161 = vadd.f32 0.0, %v3160
    %v3162 = vpop.f32.mrb[0].mxu0
    %v3163 = vadd.f32 0.0, %v3162
    %3164 = vdwg.mxu0
    %v3165 = vadd.f32 %v3071, %v3114
    %v3166 = vadd.f32 %v3072, %v3116
    %v3167 = vadd.f32 %v3073, %v3157
    %v3168 = vadd.f32 %v3074, %v3159
    %v3169 = vadd.f32 %v3075, %v3118
    %v3170 = vadd.f32 %v3076, %v3120
    %v3171 = vadd.f32 %v3077, %v3161
    %v3172 = vadd.f32 %v3078, %v3163
    %v3173 = vmul.f32 %v3165, 0.5
    %v3174 = vmul.f32 %v3169, 0.5
    %v3175 = vtanh.pop %v3173
    %v3176 = vtanh.pop %v3174
    %v3177 = vmul.f32 %v3175, 0.5
    %v3178 = vmul.f32 %v3176, 0.5
    %v3179 = vadd.f32 %v3177, 0.5
    %v3180 = vadd.f32 %v3178, 0.5
    %v3181 = vmul.f32 %v3166, 0.5
    %v3182 = vmul.f32 %v3170, 0.5
    %v3183 = vtanh.pop %v3181
    %v3184 = vtanh.pop %v3182
    %v3185 = vmul.f32 %v3183, 0.5
    %v3186 = vmul.f32 %v3184, 0.5
    %v3187 = vadd.f32 %v3185, 0.5
    %v3188 = vadd.f32 %v3186, 0.5
    %v3189 = vtanh.pop %v3167
    %v3190 = vtanh.pop %v3171
    %v3191 = vmul.f32 %v3168, 0.5
    %v3192 = vmul.f32 %v3172, 0.5
    %v3193 = vtanh.pop %v3191
    %v3194 = vtanh.pop %v3192
    %v3195 = vmul.f32 %v3193, 0.5
    %v3196 = vmul.f32 %v3194, 0.5
    %v3197 = vadd.f32 %v3195, 0.5
    %v3198 = vadd.f32 %v3196, 0.5
    %v3199 = vmul.f32 %v3187, %v3063
    %v3200 = vmul.f32 %v3188, %v3064
    %v3201 = vmul.f32 %v3179, %v3189
    %v3202 = vmul.f32 %v3180, %v3190
    %v3203 = vadd.f32 %v3199, %v3201
    %v3204 = vadd.f32 %v3200, %v3202
    %v3205 = vtanh.pop %v3203
    %v3206 = vtanh.pop %v3204
    %v3207 = vmul.f32 %v3197, %v3205
    %v3208 = vmul.f32 %v3198, %v3206
    %v3209 = vpack.c.bf16 %v3208, %v3207
    %3210 = vst [vmem:[%s1487] sm:$0xff] %v3209
    %v3211 = vld [vmem:[%s1005] sm:$0xff]
    %v3212 = vld [vmem:[%s1005 + $0x8] sm:$0xff]
    %v3213 = vld [vmem:[%s1005 + $0x10] sm:$0xff]
    %v3214 = vld [vmem:[%s1005 + $0x18] sm:$0xff]
    %v3215 = vld [vmem:[%s1005 + $0x20] sm:$0xff]
    %v3216 = vld [vmem:[%s1005 + $0x28] sm:$0xff]
    %v3217 = vld [vmem:[%s1005 + $0x30] sm:$0xff]
    %v3218 = vld [vmem:[%s1005 + $0x38] sm:$0xff]
    %3219 = vmatprep.subr.bf16.mxu0 %v2876
    %3220 = vmatpush1.bf16.msra.mxu0 %v2875
    %3221 = vmatprep.subr.bf16.mxu0 %v2880
    %3222 = vmatpush1.bf16.msra.mxu0 %v2879
    %3223 = vmatprep.subr.bf16.mxu0 %v2884
    %3224 = vmatpush1.bf16.msra.mxu0 %v2883
    %3225 = vmatprep.subr.bf16.mxu0 %v2888
    %3226 = vmatpush1.bf16.msra.mxu0 %v2887
    %3227 = vmatprep.subr.bf16.mxu0 %v2892
    %3228 = vmatpush1.bf16.msra.mxu0 %v2891
    %3229 = vmatprep.subr.bf16.mxu0 %v2896
    %3230 = vmatpush1.bf16.msra.mxu0 %v2895
    %3231 = vmatprep.subr.bf16.mxu0 %v2900
    %3232 = vmatpush1.bf16.msra.mxu0 %v2899
    %3233 = vmatprep.subr.bf16.mxu0 %v2904
    %3234 = vmatpush1.bf16.msra.mxu0 %v2903
    %3235 = vmatprep.subr.bf16.mxu0 0
    %3236 = vmatpush1.bf16.msra.mxu0 0
    %3237 = vmatprep.subr.bf16.mxu0 0
    %3238 = vmatpush1.bf16.msra.mxu0 0
    %3239 = vmatprep.subr.bf16.mxu0 0
    %3240 = vmatpush1.bf16.msra.mxu0 0
    %3241 = vmatprep.subr.bf16.mxu0 0
    %3242 = vmatpush1.bf16.msra.mxu0 0
    %3243 = vmatprep.subr.bf16.mxu0 0
    %3244 = vmatpush1.bf16.msra.mxu0 0
    %3245 = vmatprep.subr.bf16.mxu0 0
    %3246 = vmatpush1.bf16.msra.mxu0 0
    %3247 = vmatprep.subr.bf16.mxu0 0
    %3248 = vmatpush1.bf16.msra.mxu0 0
    %3249 = vmatprep.subr.bf16.mxu0 0
    %3250 = vmatpush1.bf16.msra.mxu0 0
    %3251 = vmatprep.mubr.bf16.mxu0 0
    %3252 = vmatmul.mubr.bf16.gmra.mrb[0].mxu0 %v3209
    %v3253 = vpop.f32.mrb[0].mxu0
    %v3254 = vadd.f32 0.0, %v3253
    %v3255 = vpop.f32.mrb[0].mxu0
    %v3256 = vadd.f32 0.0, %v3255
    %v3257 = vpop.f32.mrb[0].mxu0
    %v3258 = vadd.f32 0.0, %v3257
    %v3259 = vpop.f32.mrb[0].mxu0
    %v3260 = vadd.f32 0.0, %v3259
    %3261 = vdwg.mxu0
    %3262 = vmatprep.subr.bf16.mxu0 %v2878
    %3263 = vmatpush1.bf16.msra.mxu0 %v2877
    %3264 = vmatprep.subr.bf16.mxu0 %v2882
    %3265 = vmatpush1.bf16.msra.mxu0 %v2881
    %3266 = vmatprep.subr.bf16.mxu0 %v2886
    %3267 = vmatpush1.bf16.msra.mxu0 %v2885
    %3268 = vmatprep.subr.bf16.mxu0 %v2890
    %3269 = vmatpush1.bf16.msra.mxu0 %v2889
    %3270 = vmatprep.subr.bf16.mxu0 %v2894
    %3271 = vmatpush1.bf16.msra.mxu0 %v2893
    %3272 = vmatprep.subr.bf16.mxu0 %v2898
    %3273 = vmatpush1.bf16.msra.mxu0 %v2897
    %3274 = vmatprep.subr.bf16.mxu0 %v2902
    %3275 = vmatpush1.bf16.msra.mxu0 %v2901
    %3276 = vmatprep.subr.bf16.mxu0 %v2906
    %3277 = vmatpush1.bf16.msra.mxu0 %v2905
    %3278 = vmatprep.subr.bf16.mxu0 0
    %3279 = vmatpush1.bf16.msra.mxu0 0
    %3280 = vmatprep.subr.bf16.mxu0 0
    %3281 = vmatpush1.bf16.msra.mxu0 0
    %3282 = vmatprep.subr.bf16.mxu0 0
    %3283 = vmatpush1.bf16.msra.mxu0 0
    %3284 = vmatprep.subr.bf16.mxu0 0
    %3285 = vmatpush1.bf16.msra.mxu0 0
    %3286 = vmatprep.subr.bf16.mxu0 0
    %3287 = vmatpush1.bf16.msra.mxu0 0
    %3288 = vmatprep.subr.bf16.mxu0 0
    %3289 = vmatpush1.bf16.msra.mxu0 0
    %3290 = vmatprep.subr.bf16.mxu0 0
    %3291 = vmatpush1.bf16.msra.mxu0 0
    %3292 = vmatprep.subr.bf16.mxu0 0
    %3293 = vmatpush1.bf16.msra.mxu0 0
    %3294 = vmatprep.mubr.bf16.mxu0 0
    %3295 = vmatmul.mubr.bf16.gmra.mrb[0].mxu0 %v3209
    %v3296 = vpop.f32.mrb[0].mxu0
    %v3297 = vadd.f32 0.0, %v3296
    %v3298 = vpop.f32.mrb[0].mxu0
    %v3299 = vadd.f32 0.0, %v3298
    %v3300 = vpop.f32.mrb[0].mxu0
    %v3301 = vadd.f32 0.0, %v3300
    %v3302 = vpop.f32.mrb[0].mxu0
    %v3303 = vadd.f32 0.0, %v3302
    %3304 = vdwg.mxu0
    %v3305 = vadd.f32 %v3211, %v3254
    %v3306 = vadd.f32 %v3212, %v3256
    %v3307 = vadd.f32 %v3213, %v3297
    %v3308 = vadd.f32 %v3214, %v3299
    %v3309 = vadd.f32 %v3215, %v3258
    %v3310 = vadd.f32 %v3216, %v3260
    %v3311 = vadd.f32 %v3217, %v3301
    %v3312 = vadd.f32 %v3218, %v3303
    %v3313 = vmul.f32 %v3305, 0.5
    %v3314 = vmul.f32 %v3309, 0.5
    %v3315 = vtanh.pop %v3313
    %v3316 = vtanh.pop %v3314
    %v3317 = vmul.f32 %v3315, 0.5
    %v3318 = vmul.f32 %v3316, 0.5
    %v3319 = vadd.f32 %v3317, 0.5
    %v3320 = vadd.f32 %v3318, 0.5
    %v3321 = vmul.f32 %v3306, 0.5
    %v3322 = vmul.f32 %v3310, 0.5
    %v3323 = vtanh.pop %v3321
    %v3324 = vtanh.pop %v3322
    %v3325 = vmul.f32 %v3323, 0.5
    %v3326 = vmul.f32 %v3324, 0.5
    %v3327 = vadd.f32 %v3325, 0.5
    %v3328 = vadd.f32 %v3326, 0.5
    %v3329 = vtanh.pop %v3307
    %v3330 = vtanh.pop %v3311
    %v3331 = vmul.f32 %v3308, 0.5
    %v3332 = vmul.f32 %v3312, 0.5
    %v3333 = vtanh.pop %v3331
    %v3334 = vtanh.pop %v3332
    %v3335 = vmul.f32 %v3333, 0.5
    %v3336 = vmul.f32 %v3334, 0.5
    %v3337 = vadd.f32 %v3335, 0.5
    %v3338 = vadd.f32 %v3336, 0.5
    %v3339 = vmul.f32 %v3327, %v3203
    %v3340 = vmul.f32 %v3328, %v3204
    %v3341 = vmul.f32 %v3319, %v3329
    %v3342 = vmul.f32 %v3320, %v3330
    %v3343 = vadd.f32 %v3339, %v3341
    %v3344 = vadd.f32 %v3340, %v3342
    %v3345 = vtanh.pop %v3343
    %v3346 = vtanh.pop %v3344
    %v3347 = vmul.f32 %v3337, %v3345
    %v3348 = vmul.f32 %v3338, %v3346
    %v3349 = vpack.c.bf16 %v3348, %v3347
    %3350 = vst [vmem:[%s1628] sm:$0xff] %v3349
    %v3351 = vld [vmem:[%s1022] sm:$0xff]
    %v3352 = vld [vmem:[%s1022 + $0x8] sm:$0xff]
    %v3353 = vld [vmem:[%s1022 + $0x10] sm:$0xff]
    %v3354 = vld [vmem:[%s1022 + $0x18] sm:$0xff]
    %v3355 = vld [vmem:[%s1022 + $0x20] sm:$0xff]
    %v3356 = vld [vmem:[%s1022 + $0x28] sm:$0xff]
    %v3357 = vld [vmem:[%s1022 + $0x30] sm:$0xff]
    %v3358 = vld [vmem:[%s1022 + $0x38] sm:$0xff]
    %3359 = vmatprep.subr.bf16.mxu0 %v2876
    %3360 = vmatpush1.bf16.msra.mxu0 %v2875
    %3361 = vmatprep.subr.bf16.mxu0 %v2880
    %3362 = vmatpush1.bf16.msra.mxu0 %v2879
    %3363 = vmatprep.subr.bf16.mxu0 %v2884
    %3364 = vmatpush1.bf16.msra.mxu0 %v2883
    %3365 = vmatprep.subr.bf16.mxu0 %v2888
    %3366 = vmatpush1.bf16.msra.mxu0 %v2887
    %3367 = vmatprep.subr.bf16.mxu0 %v2892
    %3368 = vmatpush1.bf16.msra.mxu0 %v2891
    %3369 = vmatprep.subr.bf16.mxu0 %v2896
    %3370 = vmatpush1.bf16.msra.mxu0 %v2895
    %3371 = vmatprep.subr.bf16.mxu0 %v2900
    %3372 = vmatpush1.bf16.msra.mxu0 %v2899
    %3373 = vmatprep.subr.bf16.mxu0 %v2904
    %3374 = vmatpush1.bf16.msra.mxu0 %v2903
    %3375 = vmatprep.subr.bf16.mxu0 0
    %3376 = vmatpush1.bf16.msra.mxu0 0
    %3377 = vmatprep.subr.bf16.mxu0 0
    %3378 = vmatpush1.bf16.msra.mxu0 0
    %3379 = vmatprep.subr.bf16.mxu0 0
    %3380 = vmatpush1.bf16.msra.mxu0 0
    %3381 = vmatprep.subr.bf16.mxu0 0
    %3382 = vmatpush1.bf16.msra.mxu0 0
    %3383 = vmatprep.subr.bf16.mxu0 0
    %3384 = vmatpush1.bf16.msra.mxu0 0
    %3385 = vmatprep.subr.bf16.mxu0 0
    %3386 = vmatpush1.bf16.msra.mxu0 0
    %3387 = vmatprep.subr.bf16.mxu0 0
    %3388 = vmatpush1.bf16.msra.mxu0 0
    %3389 = vmatprep.subr.bf16.mxu0 0
    %3390 = vmatpush1.bf16.msra.mxu0 0
    %3391 = vmatprep.mubr.bf16.mxu0 0
    %3392 = vmatmul.mubr.bf16.gmra.mrb[0].mxu0 %v3349
    %v3393 = vpop.f32.mrb[0].mxu0
    %v3394 = vadd.f32 0.0, %v3393
    %v3395 = vpop.f32.mrb[0].mxu0
    %v3396 = vadd.f32 0.0, %v3395
    %v3397 = vpop.f32.mrb[0].mxu0
    %v3398 = vadd.f32 0.0, %v3397
    %v3399 = vpop.f32.mrb[0].mxu0
    %v3400 = vadd.f32 0.0, %v3399
    %3401 = vdwg.mxu0
    %3402 = vmatprep.subr.bf16.mxu0 %v2878
    %3403 = vmatpush1.bf16.msra.mxu0 %v2877
    %3404 = vmatprep.subr.bf16.mxu0 %v2882
    %3405 = vmatpush1.bf16.msra.mxu0 %v2881
    %3406 = vmatprep.subr.bf16.mxu0 %v2886
    %3407 = vmatpush1.bf16.msra.mxu0 %v2885
    %3408 = vmatprep.subr.bf16.mxu0 %v2890
    %3409 = vmatpush1.bf16.msra.mxu0 %v2889
    %3410 = vmatprep.subr.bf16.mxu0 %v2894
    %3411 = vmatpush1.bf16.msra.mxu0 %v2893
    %3412 = vmatprep.subr.bf16.mxu0 %v2898
    %3413 = vmatpush1.bf16.msra.mxu0 %v2897
    %3414 = vmatprep.subr.bf16.mxu0 %v2902
    %3415 = vmatpush1.bf16.msra.mxu0 %v2901
    %3416 = vmatprep.subr.bf16.mxu0 %v2906
    %3417 = vmatpush1.bf16.msra.mxu0 %v2905
    %3418 = vmatprep.subr.bf16.mxu0 0
    %3419 = vmatpush1.bf16.msra.mxu0 0
    %3420 = vmatprep.subr.bf16.mxu0 0
    %3421 = vmatpush1.bf16.msra.mxu0 0
    %3422 = vmatprep.subr.bf16.mxu0 0
    %3423 = vmatpush1.bf16.msra.mxu0 0
    %3424 = vmatprep.subr.bf16.mxu0 0
    %3425 = vmatpush1.bf16.msra.mxu0 0
    %3426 = vmatprep.subr.bf16.mxu0 0
    %3427 = vmatpush1.bf16.msra.mxu0 0
    %3428 = vmatprep.subr.bf16.mxu0 0
    %3429 = vmatpush1.bf16.msra.mxu0 0
    %3430 = vmatprep.subr.bf16.mxu0 0
    %3431 = vmatpush1.bf16.msra.mxu0 0
    %3432 = vmatprep.subr.bf16.mxu0 0
    %3433 = vmatpush1.bf16.msra.mxu0 0
    %3434 = vmatprep.mubr.bf16.mxu0 0
    %3435 = vmatmul.mubr.bf16.gmra.mrb[0].mxu0 %v3349
    %v3436 = vpop.f32.mrb[0].mxu0
    %v3437 = vadd.f32 0.0, %v3436
    %v3438 = vpop.f32.mrb[0].mxu0
    %v3439 = vadd.f32 0.0, %v3438
    %v3440 = vpop.f32.mrb[0].mxu0
    %v3441 = vadd.f32 0.0, %v3440
    %v3442 = vpop.f32.mrb[0].mxu0
    %v3443 = vadd.f32 0.0, %v3442
    %3444 = vdwg.mxu0
    %v3445 = vadd.f32 %v3351, %v3394
    %v3446 = vadd.f32 %v3352, %v3396
    %v3447 = vadd.f32 %v3353, %v3437
    %v3448 = vadd.f32 %v3354, %v3439
    %v3449 = vadd.f32 %v3355, %v3398
    %v3450 = vadd.f32 %v3356, %v3400
    %v3451 = vadd.f32 %v3357, %v3441
    %v3452 = vadd.f32 %v3358, %v3443
    %v3453 = vmul.f32 %v3445, 0.5
    %v3454 = vmul.f32 %v3449, 0.5
    %v3455 = vtanh.pop %v3453
    %v3456 = vtanh.pop %v3454
    %v3457 = vmul.f32 %v3455, 0.5
    %v3458 = vmul.f32 %v3456, 0.5
    %v3459 = vadd.f32 %v3457, 0.5
    %v3460 = vadd.f32 %v3458, 0.5
    %v3461 = vmul.f32 %v3446, 0.5
    %v3462 = vmul.f32 %v3450, 0.5
    %v3463 = vtanh.pop %v3461
    %v3464 = vtanh.pop %v3462
    %v3465 = vmul.f32 %v3463, 0.5
    %v3466 = vmul.f32 %v3464, 0.5
    %v3467 = vadd.f32 %v3465, 0.5
    %v3468 = vadd.f32 %v3466, 0.5
    %v3469 = vtanh.pop %v3447
    %v3470 = vtanh.pop %v3451
    %v3471 = vmul.f32 %v3448, 0.5
    %v3472 = vmul.f32 %v3452, 0.5
    %v3473 = vtanh.pop %v3471
    %v3474 = vtanh.pop %v3472
    %v3475 = vmul.f32 %v3473, 0.5
    %v3476 = vmul.f32 %v3474, 0.5
    %v3477 = vadd.f32 %v3475, 0.5
    %v3478 = vadd.f32 %v3476, 0.5
    %v3479 = vmul.f32 %v3467, %v3343
    %v3480 = vmul.f32 %v3468, %v3344
    %v3481 = vmul.f32 %v3459, %v3469
    %v3482 = vmul.f32 %v3460, %v3470
    %v3483 = vadd.f32 %v3479, %v3481
    %v3484 = vadd.f32 %v3480, %v3482
    %v3485 = vtanh.pop %v3483
    %v3486 = vtanh.pop %v3484
    %v3487 = vmul.f32 %v3477, %v3485
    %v3488 = vmul.f32 %v3478, %v3486
    %v3489 = vpack.c.bf16 %v3488, %v3487
    %3490 = vst [vmem:[%s1769] sm:$0xff] %v3489
    %v3491 = vld [vmem:[%s1039] sm:$0xff]
    %v3492 = vld [vmem:[%s1039 + $0x8] sm:$0xff]
    %v3493 = vld [vmem:[%s1039 + $0x10] sm:$0xff]
    %v3494 = vld [vmem:[%s1039 + $0x18] sm:$0xff]
    %v3495 = vld [vmem:[%s1039 + $0x20] sm:$0xff]
    %v3496 = vld [vmem:[%s1039 + $0x28] sm:$0xff]
    %v3497 = vld [vmem:[%s1039 + $0x30] sm:$0xff]
    %v3498 = vld [vmem:[%s1039 + $0x38] sm:$0xff]
    %3499 = vmatprep.subr.bf16.mxu0 %v2876
    %3500 = vmatpush1.bf16.msra.mxu0 %v2875
    %3501 = vmatprep.subr.bf16.mxu0 %v2880
    %3502 = vmatpush1.bf16.msra.mxu0 %v2879
    %3503 = vmatprep.subr.bf16.mxu0 %v2884
    %3504 = vmatpush1.bf16.msra.mxu0 %v2883
    %3505 = vmatprep.subr.bf16.mxu0 %v2888
    %3506 = vmatpush1.bf16.msra.mxu0 %v2887
    %3507 = vmatprep.subr.bf16.mxu0 %v2892
    %3508 = vmatpush1.bf16.msra.mxu0 %v2891
    %3509 = vmatprep.subr.bf16.mxu0 %v2896
    %3510 = vmatpush1.bf16.msra.mxu0 %v2895
    %3511 = vmatprep.subr.bf16.mxu0 %v2900
    %3512 = vmatpush1.bf16.msra.mxu0 %v2899
    %3513 = vmatprep.subr.bf16.mxu0 %v2904
    %3514 = vmatpush1.bf16.msra.mxu0 %v2903
    %3515 = vmatprep.subr.bf16.mxu0 0
    %3516 = vmatpush1.bf16.msra.mxu0 0
    %3517 = vmatprep.subr.bf16.mxu0 0
    %3518 = vmatpush1.bf16.msra.mxu0 0
    %3519 = vmatprep.subr.bf16.mxu0 0
    %3520 = vmatpush1.bf16.msra.mxu0 0
    %3521 = vmatprep.subr.bf16.mxu0 0
    %3522 = vmatpush1.bf16.msra.mxu0 0
    %3523 = vmatprep.subr.bf16.mxu0 0
    %3524 = vmatpush1.bf16.msra.mxu0 0
    %3525 = vmatprep.subr.bf16.mxu0 0
    %3526 = vmatpush1.bf16.msra.mxu0 0
    %3527 = vmatprep.subr.bf16.mxu0 0
    %3528 = vmatpush1.bf16.msra.mxu0 0
    %3529 = vmatprep.subr.bf16.mxu0 0
    %3530 = vmatpush1.bf16.msra.mxu0 0
    %3531 = vmatprep.mubr.bf16.mxu0 0
    %3532 = vmatmul.mubr.bf16.gmra.mrb[0].mxu0 %v3489
    %v3533 = vpop.f32.mrb[0].mxu0
    %v3534 = vadd.f32 0.0, %v3533
    %v3535 = vpop.f32.mrb[0].mxu0
    %v3536 = vadd.f32 0.0, %v3535
    %v3537 = vpop.f32.mrb[0].mxu0
    %v3538 = vadd.f32 0.0, %v3537
    %v3539 = vpop.f32.mrb[0].mxu0
    %v3540 = vadd.f32 0.0, %v3539
    %3541 = vdwg.mxu0
    %3542 = vmatprep.subr.bf16.mxu0 %v2878
    %3543 = vmatpush1.bf16.msra.mxu0 %v2877
    %3544 = vmatprep.subr.bf16.mxu0 %v2882
    %3545 = vmatpush1.bf16.msra.mxu0 %v2881
    %3546 = vmatprep.subr.bf16.mxu0 %v2886
    %3547 = vmatpush1.bf16.msra.mxu0 %v2885
    %3548 = vmatprep.subr.bf16.mxu0 %v2890
    %3549 = vmatpush1.bf16.msra.mxu0 %v2889
    %3550 = vmatprep.subr.bf16.mxu0 %v2894
    %3551 = vmatpush1.bf16.msra.mxu0 %v2893
    %3552 = vmatprep.subr.bf16.mxu0 %v2898
    %3553 = vmatpush1.bf16.msra.mxu0 %v2897
    %3554 = vmatprep.subr.bf16.mxu0 %v2902
    %3555 = vmatpush1.bf16.msra.mxu0 %v2901
    %3556 = vmatprep.subr.bf16.mxu0 %v2906
    %3557 = vmatpush1.bf16.msra.mxu0 %v2905
    %3558 = vmatprep.subr.bf16.mxu0 0
    %3559 = vmatpush1.bf16.msra.mxu0 0
    %3560 = vmatprep.subr.bf16.mxu0 0
    %3561 = vmatpush1.bf16.msra.mxu0 0
    %3562 = vmatprep.subr.bf16.mxu0 0
    %3563 = vmatpush1.bf16.msra.mxu0 0
    %3564 = vmatprep.subr.bf16.mxu0 0
    %3565 = vmatpush1.bf16.msra.mxu0 0
    %3566 = vmatprep.subr.bf16.mxu0 0
    %3567 = vmatpush1.bf16.msra.mxu0 0
    %3568 = vmatprep.subr.bf16.mxu0 0
    %3569 = vmatpush1.bf16.msra.mxu0 0
    %3570 = vmatprep.subr.bf16.mxu0 0
    %3571 = vmatpush1.bf16.msra.mxu0 0
    %3572 = vmatprep.subr.bf16.mxu0 0
    %3573 = vmatpush1.bf16.msra.mxu0 0
    %3574 = vmatprep.mubr.bf16.mxu0 0
    %3575 = vmatmul.mubr.bf16.gmra.mrb[0].mxu0 %v3489
    %v3576 = vpop.f32.mrb[0].mxu0
    %v3577 = vadd.f32 0.0, %v3576
    %v3578 = vpop.f32.mrb[0].mxu0
    %v3579 = vadd.f32 0.0, %v3578
    %v3580 = vpop.f32.mrb[0].mxu0
    %v3581 = vadd.f32 0.0, %v3580
    %v3582 = vpop.f32.mrb[0].mxu0
    %v3583 = vadd.f32 0.0, %v3582
    %3584 = vdwg.mxu0
    %v3585 = vadd.f32 %v3491, %v3534
    %v3586 = vadd.f32 %v3492, %v3536
    %v3587 = vadd.f32 %v3493, %v3577
    %v3588 = vadd.f32 %v3494, %v3579
    %v3589 = vadd.f32 %v3495, %v3538
    %v3590 = vadd.f32 %v3496, %v3540
    %v3591 = vadd.f32 %v3497, %v3581
    %v3592 = vadd.f32 %v3498, %v3583
    %v3593 = vmul.f32 %v3585, 0.5
    %v3594 = vmul.f32 %v3589, 0.5
    %v3595 = vtanh.pop %v3593
    %v3596 = vtanh.pop %v3594
    %v3597 = vmul.f32 %v3595, 0.5
    %v3598 = vmul.f32 %v3596, 0.5
    %v3599 = vadd.f32 %v3597, 0.5
    %v3600 = vadd.f32 %v3598, 0.5
    %v3601 = vmul.f32 %v3586, 0.5
    %v3602 = vmul.f32 %v3590, 0.5
    %v3603 = vtanh.pop %v3601
    %v3604 = vtanh.pop %v3602
    %v3605 = vmul.f32 %v3603, 0.5
    %v3606 = vmul.f32 %v3604, 0.5
    %v3607 = vadd.f32 %v3605, 0.5
    %v3608 = vadd.f32 %v3606, 0.5
    %v3609 = vtanh.pop %v3587
    %v3610 = vtanh.pop %v3591
    %v3611 = vmul.f32 %v3588, 0.5
    %v3612 = vmul.f32 %v3592, 0.5
    %v3613 = vtanh.pop %v3611
    %v3614 = vtanh.pop %v3612
    %v3615 = vmul.f32 %v3613, 0.5
    %v3616 = vmul.f32 %v3614, 0.5
    %v3617 = vadd.f32 %v3615, 0.5
    %v3618 = vadd.f32 %v3616, 0.5
    %v3619 = vmul.f32 %v3607, %v3483
    %v3620 = vmul.f32 %v3608, %v3484
    %v3621 = vmul.f32 %v3599, %v3609
    %v3622 = vmul.f32 %v3600, %v3610
    %v3623 = vadd.f32 %v3619, %v3621
    %v3624 = vadd.f32 %v3620, %v3622
    %v3625 = vtanh.pop %v3623
    %v3626 = vtanh.pop %v3624
    %v3627 = vmul.f32 %v3617, %v3625
    %v3628 = vmul.f32 %v3618, %v3626
    %v3629 = vpack.c.bf16 %v3628, %v3627
    %3630 = vst [vmem:[%s1910] sm:$0xff] %v3629
    %v3631 = vld [vmem:[#allocation2] sm:$0xff]
    %v3632 = vld [vmem:[#allocation2 + $0x8] sm:$0xff]
    %v3633 = vld [vmem:[#allocation2 + $0x10] sm:$0xff]
    %v3634 = vld [vmem:[#allocation2 + $0x18] sm:$0xff]
    %v3635 = vld [vmem:[#allocation2 + $0x20] sm:$0xff]
    %s3636 = scalar_lea.vmem [#allocation4], 1536
    %v3637 = vld [vmem:[%s3636] sm:$0xff]
    %v3638 = vld [vmem:[%s3636 + $0x8] sm:$0xff]
    %v3639 = vld [vmem:[%s3636 + $0x10] sm:$0xff]
    %v3640 = vld [vmem:[%s3636 + $0x18] sm:$0xff]
    %v3641 = vld [vmem:[%s3636 + $0x20] sm:$0xff]
    %v3642 = vld [vmem:[%s3636 + $0x28] sm:$0xff]
    %v3643 = vld [vmem:[%s3636 + $0x30] sm:$0xff]
    %v3644 = vld [vmem:[%s3636 + $0x38] sm:$0xff]
    %v3645 = vld [vmem:[%s3636 + $0x40] sm:$0xff]
    %v3646 = vld [vmem:[%s3636 + $0x48] sm:$0xff]
    %v3647 = vld [vmem:[%s3636 + $0x50] sm:$0xff]
    %v3648 = vld [vmem:[%s3636 + $0x58] sm:$0xff]
    %v3649 = vld [vmem:[%s3636 + $0x60] sm:$0xff]
    %v3650 = vld [vmem:[%s3636 + $0x68] sm:$0xff]
    %v3651 = vld [vmem:[%s3636 + $0x70] sm:$0xff]
    %v3652 = vld [vmem:[%s3636 + $0x78] sm:$0xff]
    %v3653 = vld [vmem:[%s3636 + $0x80] sm:$0xff]
    %v3654 = vld [vmem:[%s3636 + $0x88] sm:$0xff]
    %v3655 = vld [vmem:[%s3636 + $0x90] sm:$0xff]
    %v3656 = vld [vmem:[%s3636 + $0x98] sm:$0xff]
    %v3657 = vld [vmem:[%s3636 + $0xa0] sm:$0xff]
    %v3658 = vld [vmem:[%s3636 + $0xa8] sm:$0xff]
    %v3659 = vld [vmem:[%s3636 + $0xb0] sm:$0xff]
    %v3660 = vld [vmem:[%s3636 + $0xb8] sm:$0xff]
    %v3661 = vld [vmem:[%s3636 + $0xc0] sm:$0xff]
    %v3662 = vld [vmem:[%s3636 + $0xc8] sm:$0xff]
    %v3663 = vld [vmem:[%s3636 + $0xd0] sm:$0xff]
    %v3664 = vld [vmem:[%s3636 + $0xd8] sm:$0xff]
    %v3665 = vld [vmem:[%s3636 + $0xe0] sm:$0xff]
    %v3666 = vld [vmem:[%s3636 + $0xe8] sm:$0xff]
    %v3667 = vld [vmem:[%s3636 + $0xf0] sm:$0xff]
    %v3668 = vld [vmem:[%s3636 + $0xf8] sm:$0xff]
    %s3669 = scalar_lea.vmem [#allocation4], 1792
    %v3670 = vld [vmem:[%s3669] sm:$0xff]
    %v3671 = vld [vmem:[%s3669 + $0x8] sm:$0xff]
    %v3672 = vld [vmem:[%s3669 + $0x10] sm:$0xff]
    %v3673 = vld [vmem:[%s3669 + $0x18] sm:$0xff]
    %v3674 = vld [vmem:[%s3669 + $0x20] sm:$0xff]
    %v3675 = vld [vmem:[%s3669 + $0x28] sm:$0xff]
    %v3676 = vld [vmem:[%s3669 + $0x30] sm:$0xff]
    %v3677 = vld [vmem:[%s3669 + $0x38] sm:$0xff]
    %v3678 = vld [vmem:[%s3669 + $0x40] sm:$0xff]
    %v3679 = vld [vmem:[%s3669 + $0x48] sm:$0xff]
    %v3680 = vld [vmem:[%s3669 + $0x50] sm:$0xff]
    %v3681 = vld [vmem:[%s3669 + $0x58] sm:$0xff]
    %v3682 = vld [vmem:[%s3669 + $0x60] sm:$0xff]
    %v3683 = vld [vmem:[%s3669 + $0x68] sm:$0xff]
    %v3684 = vld [vmem:[%s3669 + $0x70] sm:$0xff]
    %v3685 = vld [vmem:[%s3669 + $0x78] sm:$0xff]
    %v3686 = vld [vmem:[%s3669 + $0x80] sm:$0xff]
    %v3687 = vld [vmem:[%s3669 + $0x88] sm:$0xff]
    %v3688 = vld [vmem:[%s3669 + $0x90] sm:$0xff]
    %v3689 = vld [vmem:[%s3669 + $0x98] sm:$0xff]
    %v3690 = vld [vmem:[%s3669 + $0xa0] sm:$0xff]
    %v3691 = vld [vmem:[%s3669 + $0xa8] sm:$0xff]
    %v3692 = vld [vmem:[%s3669 + $0xb0] sm:$0xff]
    %v3693 = vld [vmem:[%s3669 + $0xb8] sm:$0xff]
    %v3694 = vld [vmem:[%s3669 + $0xc0] sm:$0xff]
    %v3695 = vld [vmem:[%s3669 + $0xc8] sm:$0xff]
    %v3696 = vld [vmem:[%s3669 + $0xd0] sm:$0xff]
    %v3697 = vld [vmem:[%s3669 + $0xd8] sm:$0xff]
    %v3698 = vld [vmem:[%s3669 + $0xe0] sm:$0xff]
    %v3699 = vld [vmem:[%s3669 + $0xe8] sm:$0xff]
    %v3700 = vld [vmem:[%s3669 + $0xf0] sm:$0xff]
    %v3701 = vld [vmem:[%s3669 + $0xf8] sm:$0xff]
    %s3702 = scalar_lea.vmem [#allocation4], 2048
    %v3703 = vld [vmem:[%s3702] sm:$0xff]
    %v3704 = vld [vmem:[%s3702 + $0x8] sm:$0xff]
    %v3705 = vld [vmem:[%s3702 + $0x10] sm:$0xff]
    %v3706 = vld [vmem:[%s3702 + $0x18] sm:$0xff]
    %v3707 = vld [vmem:[%s3702 + $0x20] sm:$0xff]
    %v3708 = vld [vmem:[%s3702 + $0x28] sm:$0xff]
    %v3709 = vld [vmem:[%s3702 + $0x30] sm:$0xff]
    %v3710 = vld [vmem:[%s3702 + $0x38] sm:$0xff]
    %v3711 = vld [vmem:[%s3702 + $0x40] sm:$0xff]
    %v3712 = vld [vmem:[%s3702 + $0x48] sm:$0xff]
    %v3713 = vld [vmem:[%s3702 + $0x50] sm:$0xff]
    %v3714 = vld [vmem:[%s3702 + $0x58] sm:$0xff]
    %v3715 = vld [vmem:[%s3702 + $0x60] sm:$0xff]
    %v3716 = vld [vmem:[%s3702 + $0x68] sm:$0xff]
    %v3717 = vld [vmem:[%s3702 + $0x70] sm:$0xff]
    %v3718 = vld [vmem:[%s3702 + $0x78] sm:$0xff]
    %v3719 = vld [vmem:[%s3702 + $0x80] sm:$0xff]
    %v3720 = vld [vmem:[%s3702 + $0x88] sm:$0xff]
    %v3721 = vld [vmem:[%s3702 + $0x90] sm:$0xff]
    %v3722 = vld [vmem:[%s3702 + $0x98] sm:$0xff]
    %v3723 = vld [vmem:[%s3702 + $0xa0] sm:$0xff]
    %v3724 = vld [vmem:[%s3702 + $0xa8] sm:$0xff]
    %v3725 = vld [vmem:[%s3702 + $0xb0] sm:$0xff]
    %v3726 = vld [vmem:[%s3702 + $0xb8] sm:$0xff]
    %v3727 = vld [vmem:[%s3702 + $0xc0] sm:$0xff]
    %v3728 = vld [vmem:[%s3702 + $0xc8] sm:$0xff]
    %v3729 = vld [vmem:[%s3702 + $0xd0] sm:$0xff]
    %v3730 = vld [vmem:[%s3702 + $0xd8] sm:$0xff]
    %v3731 = vld [vmem:[%s3702 + $0xe0] sm:$0xff]
    %v3732 = vld [vmem:[%s3702 + $0xe8] sm:$0xff]
    %v3733 = vld [vmem:[%s3702 + $0xf0] sm:$0xff]
    %v3734 = vld [vmem:[%s3702 + $0xf8] sm:$0xff]
    %s3735 = scalar_lea.vmem [#allocation6], 8
    %v3736 = vld [vmem:[%s3735] sm:$0xf]
    %v3738 = vlaneseq
    %v3739 = vshrl.u32 %v3738, 7
    %v3740 = vsub.s32 0, %v3739
    %v3741 = vrot.slane %v3736, %v3740
    %v3742 = vlaneseq
    %v3743 = vshrl.u32 %v3742, 7
    %v3744 = vsub.s32 1, %v3743
    %v3745 = vrot.slane %v3736, %v3744
    %v3746 = vlaneseq
    %v3747 = vshrl.u32 %v3746, 7
    %v3748 = vsub.s32 2, %v3747
    %v3749 = vrot.slane %v3736, %v3748
    %v3750 = vlaneseq
    %v3751 = vshrl.u32 %v3750, 7
    %v3752 = vsub.s32 3, %v3751
    %v3753 = vrot.slane %v3736, %v3752
    %v3790 = vunpack.c.l.b16 %v3637
    %v3791 = vunpack.c.h.b16 %v3637
    %v3792 = vunpack.c.l.b16 %v3638
    %v3793 = vunpack.c.h.b16 %v3638
    %v3794 = vunpack.c.l.b16 %v3639
    %v3795 = vunpack.c.h.b16 %v3639
    %v3796 = vunpack.c.l.b16 %v3640
    %v3797 = vunpack.c.h.b16 %v3640
    %v3798 = vunpack.c.l.b16 %v3641
    %v3799 = vunpack.c.h.b16 %v3641
    %v3800 = vunpack.c.l.b16 %v3642
    %v3801 = vunpack.c.h.b16 %v3642
    %v3802 = vunpack.c.l.b16 %v3643
    %v3803 = vunpack.c.h.b16 %v3643
    %v3804 = vunpack.c.l.b16 %v3644
    %v3805 = vunpack.c.h.b16 %v3644
    %v3806 = vunpack.c.l.b16 %v3645
    %v3807 = vunpack.c.h.b16 %v3645
    %v3808 = vunpack.c.l.b16 %v3646
    %v3809 = vunpack.c.h.b16 %v3646
    %v3810 = vunpack.c.l.b16 %v3647
    %v3811 = vunpack.c.h.b16 %v3647
    %v3812 = vunpack.c.l.b16 %v3648
    %v3813 = vunpack.c.h.b16 %v3648
    %v3814 = vunpack.c.l.b16 %v3649
    %v3815 = vunpack.c.h.b16 %v3649
    %v3816 = vunpack.c.l.b16 %v3650
    %v3817 = vunpack.c.h.b16 %v3650
    %v3818 = vunpack.c.l.b16 %v3651
    %v3819 = vunpack.c.h.b16 %v3651
    %v3820 = vunpack.c.l.b16 %v3652
    %v3821 = vunpack.c.h.b16 %v3652
    %v3822 = vunpack.c.l.b16 %v3653
    %v3823 = vunpack.c.h.b16 %v3653
    %v3824 = vunpack.c.l.b16 %v3654
    %v3825 = vunpack.c.h.b16 %v3654
    %v3826 = vunpack.c.l.b16 %v3655
    %v3827 = vunpack.c.h.b16 %v3655
    %v3828 = vunpack.c.l.b16 %v3656
    %v3829 = vunpack.c.h.b16 %v3656
    %v3830 = vunpack.c.l.b16 %v3657
    %v3831 = vunpack.c.h.b16 %v3657
    %v3832 = vunpack.c.l.b16 %v3658
    %v3833 = vunpack.c.h.b16 %v3658
    %v3834 = vunpack.c.l.b16 %v3659
    %v3835 = vunpack.c.h.b16 %v3659
    %v3836 = vunpack.c.l.b16 %v3660
    %v3837 = vunpack.c.h.b16 %v3660
    %v3838 = vunpack.c.l.b16 %v3661
    %v3839 = vunpack.c.h.b16 %v3661
    %v3840 = vunpack.c.l.b16 %v3662
    %v3841 = vunpack.c.h.b16 %v3662
    %v3842 = vunpack.c.l.b16 %v3663
    %v3843 = vunpack.c.h.b16 %v3663
    %v3844 = vunpack.c.l.b16 %v3664
    %v3845 = vunpack.c.h.b16 %v3664
    %v3846 = vunpack.c.l.b16 %v3665
    %v3847 = vunpack.c.h.b16 %v3665
    %v3848 = vunpack.c.l.b16 %v3666
    %v3849 = vunpack.c.h.b16 %v3666
    %v3850 = vunpack.c.l.b16 %v3667
    %v3851 = vunpack.c.h.b16 %v3667
    %v3852 = vunpack.c.l.b16 %v3668
    %v3853 = vunpack.c.h.b16 %v3668
    %v3854 = vpack.c.b16 %v3794, %v3790
    %v3855 = vpack.c.b16 %v3795, %v3791
    %v3856 = vpack.c.b16 %v3796, %v3792
    %v3857 = vpack.c.b16 %v3797, %v3793
    %v3858 = vpack.c.b16 %v3802, %v3798
    %v3859 = vpack.c.b16 %v3803, %v3799
    %v3860 = vpack.c.b16 %v3804, %v3800
    %v3861 = vpack.c.b16 %v3805, %v3801
    %v3862 = vpack.c.b16 %v3810, %v3806
    %v3863 = vpack.c.b16 %v3811, %v3807
    %v3864 = vpack.c.b16 %v3812, %v3808
    %v3865 = vpack.c.b16 %v3813, %v3809
    %v3866 = vpack.c.b16 %v3818, %v3814
    %v3867 = vpack.c.b16 %v3819, %v3815
    %v3868 = vpack.c.b16 %v3820, %v3816
    %v3869 = vpack.c.b16 %v3821, %v3817
    %v3870 = vpack.c.b16 %v3826, %v3822
    %v3871 = vpack.c.b16 %v3827, %v3823
    %v3872 = vpack.c.b16 %v3828, %v3824
    %v3873 = vpack.c.b16 %v3829, %v3825
    %v3874 = vpack.c.b16 %v3834, %v3830
    %v3875 = vpack.c.b16 %v3835, %v3831
    %v3876 = vpack.c.b16 %v3836, %v3832
    %v3877 = vpack.c.b16 %v3837, %v3833
    %v3878 = vpack.c.b16 %v3842, %v3838
    %v3879 = vpack.c.b16 %v3843, %v3839
    %v3880 = vpack.c.b16 %v3844, %v3840
    %v3881 = vpack.c.b16 %v3845, %v3841
    %v3882 = vpack.c.b16 %v3850, %v3846
    %v3883 = vpack.c.b16 %v3851, %v3847
    %v3884 = vpack.c.b16 %v3852, %v3848
    %v3885 = vpack.c.b16 %v3853, %v3849
    %3918 = vmatprep.subr.bf16.mxu0 %v3855
    %3919 = vmatpush1.bf16.msra.mxu0 %v3854
    %3920 = vmatprep.subr.bf16.mxu0 %v3859
    %3921 = vmatpush1.bf16.msra.mxu0 %v3858
    %3922 = vmatprep.subr.bf16.mxu0 %v3863
    %3923 = vmatpush1.bf16.msra.mxu0 %v3862
    %3924 = vmatprep.subr.bf16.mxu0 %v3867
    %3925 = vmatpush1.bf16.msra.mxu0 %v3866
    %3926 = vmatprep.subr.bf16.mxu0 %v3871
    %3927 = vmatpush1.bf16.msra.mxu0 %v3870
    %3928 = vmatprep.subr.bf16.mxu0 %v3875
    %3929 = vmatpush1.bf16.msra.mxu0 %v3874
    %3930 = vmatprep.subr.bf16.mxu0 %v3879
    %3931 = vmatpush1.bf16.msra.mxu0 %v3878
    %3932 = vmatprep.subr.bf16.mxu0 %v3883
    %3933 = vmatpush1.bf16.msra.mxu0 %v3882
    %3934 = vmatprep.subr.bf16.mxu0 0
    %3935 = vmatpush1.bf16.msra.mxu0 0
    %3936 = vmatprep.subr.bf16.mxu0 0
    %3937 = vmatpush1.bf16.msra.mxu0 0
    %3938 = vmatprep.subr.bf16.mxu0 0
    %3939 = vmatpush1.bf16.msra.mxu0 0
    %3940 = vmatprep.subr.bf16.mxu0 0
    %3941 = vmatpush1.bf16.msra.mxu0 0
    %3942 = vmatprep.subr.bf16.mxu0 0
    %3943 = vmatpush1.bf16.msra.mxu0 0
    %3944 = vmatprep.subr.bf16.mxu0 0
    %3945 = vmatpush1.bf16.msra.mxu0 0
    %3946 = vmatprep.subr.bf16.mxu0 0
    %3947 = vmatpush1.bf16.msra.mxu0 0
    %3948 = vmatprep.subr.bf16.mxu0 0
    %3949 = vmatpush1.bf16.msra.mxu0 0
    %3950 = vmatprep.mubr.bf16.mxu0 0
    %3951 = vmatmul.mubr.bf16.gmra.mrb[0].mxu0 %v3631
    %v3952 = vpop.f32.mrb[0].mxu0
    %v3953 = vadd.f32 %v3741, %v3952
    %v3954 = vpop.f32.mrb[0].mxu0
    %v3955 = vadd.f32 %v3745, %v3954
    %v3956 = vpop.f32.mrb[0].mxu0
    %v3957 = vadd.f32 %v3741, %v3956
    %v3958 = vpop.f32.mrb[0].mxu0
    %v3959 = vadd.f32 %v3745, %v3958
    %3960 = vmatprep.mubr.bf16.mxu0 0
    %3961 = vmatmul.mubr.bf16.gmra.mrb[0].mxu0 %v3632
    %v3962 = vpop.f32.mrb[0].mxu0
    %v3963 = vadd.f32 %v3741, %v3962
    %v3964 = vpop.f32.mrb[0].mxu0
    %v3965 = vadd.f32 %v3745, %v3964
    %v3966 = vpop.f32.mrb[0].mxu0
    %v3967 = vadd.f32 %v3741, %v3966
    %v3968 = vpop.f32.mrb[0].mxu0
    %v3969 = vadd.f32 %v3745, %v3968
    %3970 = vmatprep.mubr.bf16.mxu0 0
    %3971 = vmatmul.mubr.bf16.gmra.mrb[0].mxu0 %v3633
    %v3972 = vpop.f32.mrb[0].mxu0
    %v3973 = vadd.f32 %v3741, %v3972
    %v3974 = vpop.f32.mrb[0].mxu0
    %v3975 = vadd.f32 %v3745, %v3974
    %v3976 = vpop.f32.mrb[0].mxu0
    %v3977 = vadd.f32 %v3741, %v3976
    %v3978 = vpop.f32.mrb[0].mxu0
    %v3979 = vadd.f32 %v3745, %v3978
    %3980 = vmatprep.mubr.bf16.mxu0 0
    %3981 = vmatmul.mubr.bf16.gmra.mrb[0].mxu0 %v3634
    %v3982 = vpop.f32.mrb[0].mxu0
    %v3983 = vadd.f32 %v3741, %v3982
    %v3984 = vpop.f32.mrb[0].mxu0
    %v3985 = vadd.f32 %v3745, %v3984
    %v3986 = vpop.f32.mrb[0].mxu0
    %v3987 = vadd.f32 %v3741, %v3986
    %v3988 = vpop.f32.mrb[0].mxu0
    %v3989 = vadd.f32 %v3745, %v3988
    %3990 = vmatprep.mubr.bf16.mxu0 0
    %3991 = vmatmul.mubr.bf16.gmra.mrb[0].mxu0 %v3635
    %v3992 = vpop.f32.mrb[0].mxu0
    %v3993 = vadd.f32 %v3741, %v3992
    %v3994 = vpop.f32.mrb[0].mxu0
    %v3995 = vadd.f32 %v3745, %v3994
    %v3996 = vpop.f32.mrb[0].mxu0
    %v3997 = vadd.f32 %v3741, %v3996
    %v3998 = vpop.f32.mrb[0].mxu0
    %v3999 = vadd.f32 %v3745, %v3998
    %4000 = vdwg.mxu0
    %4001 = vmatprep.subr.bf16.mxu0 %v3857
    %4002 = vmatpush1.bf16.msra.mxu0 %v3856
    %4003 = vmatprep.subr.bf16.mxu0 %v3861
    %4004 = vmatpush1.bf16.msra.mxu0 %v3860
    %4005 = vmatprep.subr.bf16.mxu0 %v3865
    %4006 = vmatpush1.bf16.msra.mxu0 %v3864
    %4007 = vmatprep.subr.bf16.mxu0 %v3869
    %4008 = vmatpush1.bf16.msra.mxu0 %v3868
    %4009 = vmatprep.subr.bf16.mxu0 %v3873
    %4010 = vmatpush1.bf16.msra.mxu0 %v3872
    %4011 = vmatprep.subr.bf16.mxu0 %v3877
    %4012 = vmatpush1.bf16.msra.mxu0 %v3876
    %4013 = vmatprep.subr.bf16.mxu0 %v3881
    %4014 = vmatpush1.bf16.msra.mxu0 %v3880
    %4015 = vmatprep.subr.bf16.mxu0 %v3885
    %4016 = vmatpush1.bf16.msra.mxu0 %v3884
    %4017 = vmatprep.subr.bf16.mxu0 0
    %4018 = vmatpush1.bf16.msra.mxu0 0
    %4019 = vmatprep.subr.bf16.mxu0 0
    %4020 = vmatpush1.bf16.msra.mxu0 0
    %4021 = vmatprep.subr.bf16.mxu0 0
    %4022 = vmatpush1.bf16.msra.mxu0 0
    %4023 = vmatprep.subr.bf16.mxu0 0
    %4024 = vmatpush1.bf16.msra.mxu0 0
    %4025 = vmatprep.subr.bf16.mxu0 0
    %4026 = vmatpush1.bf16.msra.mxu0 0
    %4027 = vmatprep.subr.bf16.mxu0 0
    %4028 = vmatpush1.bf16.msra.mxu0 0
    %4029 = vmatprep.subr.bf16.mxu0 0
    %4030 = vmatpush1.bf16.msra.mxu0 0
    %4031 = vmatprep.subr.bf16.mxu0 0
    %4032 = vmatpush1.bf16.msra.mxu0 0
    %4033 = vmatprep.mubr.bf16.mxu0 0
    %4034 = vmatmul.mubr.bf16.gmra.mrb[0].mxu0 %v3631
    %v4035 = vpop.f32.mrb[0].mxu0
    %v4036 = vadd.f32 %v3749, %v4035
    %v4037 = vpop.f32.mrb[0].mxu0
    %v4038 = vadd.f32 %v3753, %v4037
    %v4039 = vpop.f32.mrb[0].mxu0
    %v4040 = vadd.f32 %v3749, %v4039
    %v4041 = vpop.f32.mrb[0].mxu0
    %v4042 = vadd.f32 %v3753, %v4041
    %4043 = vmatprep.mubr.bf16.mxu0 0
    %4044 = vmatmul.mubr.bf16.gmra.mrb[0].mxu0 %v3632
    %v4045 = vpop.f32.mrb[0].mxu0
    %v4046 = vadd.f32 %v3749, %v4045
    %v4047 = vpop.f32.mrb[0].mxu0
    %v4048 = vadd.f32 %v3753, %v4047
    %v4049 = vpop.f32.mrb[0].mxu0
    %v4050 = vadd.f32 %v3749, %v4049
    %v4051 = vpop.f32.mrb[0].mxu0
    %v4052 = vadd.f32 %v3753, %v4051
    %4053 = vmatprep.mubr.bf16.mxu0 0
    %4054 = vmatmul.mubr.bf16.gmra.mrb[0].mxu0 %v3633
    %v4055 = vpop.f32.mrb[0].mxu0
    %v4056 = vadd.f32 %v3749, %v4055
    %v4057 = vpop.f32.mrb[0].mxu0
    %v4058 = vadd.f32 %v3753, %v4057
    %v4059 = vpop.f32.mrb[0].mxu0
    %v4060 = vadd.f32 %v3749, %v4059
    %v4061 = vpop.f32.mrb[0].mxu0
    %v4062 = vadd.f32 %v3753, %v4061
    %4063 = vmatprep.mubr.bf16.mxu0 0
    %4064 = vmatmul.mubr.bf16.gmra.mrb[0].mxu0 %v3634
    %v4065 = vpop.f32.mrb[0].mxu0
    %v4066 = vadd.f32 %v3749, %v4065
    %v4067 = vpop.f32.mrb[0].mxu0
    %v4068 = vadd.f32 %v3753, %v4067
    %v4069 = vpop.f32.mrb[0].mxu0
    %v4070 = vadd.f32 %v3749, %v4069
    %v4071 = vpop.f32.mrb[0].mxu0
    %v4072 = vadd.f32 %v3753, %v4071
    %4073 = vmatprep.mubr.bf16.mxu0 0
    %4074 = vmatmul.mubr.bf16.gmra.mrb[0].mxu0 %v3635
    %v4075 = vpop.f32.mrb[0].mxu0
    %v4076 = vadd.f32 %v3749, %v4075
    %v4077 = vpop.f32.mrb[0].mxu0
    %v4078 = vadd.f32 %v3753, %v4077
    %v4079 = vpop.f32.mrb[0].mxu0
    %v4080 = vadd.f32 %v3749, %v4079
    %v4081 = vpop.f32.mrb[0].mxu0
    %v4082 = vadd.f32 %v3753, %v4081
    %4083 = vdwg.mxu0
    %v4116 = vunpack.c.l.b16 %v3670
    %v4117 = vunpack.c.h.b16 %v3670
    %v4118 = vunpack.c.l.b16 %v3671
    %v4119 = vunpack.c.h.b16 %v3671
    %v4120 = vunpack.c.l.b16 %v3672
    %v4121 = vunpack.c.h.b16 %v3672
    %v4122 = vunpack.c.l.b16 %v3673
    %v4123 = vunpack.c.h.b16 %v3673
    %v4124 = vunpack.c.l.b16 %v3674
    %v4125 = vunpack.c.h.b16 %v3674
    %v4126 = vunpack.c.l.b16 %v3675
    %v4127 = vunpack.c.h.b16 %v3675
    %v4128 = vunpack.c.l.b16 %v3676
    %v4129 = vunpack.c.h.b16 %v3676
    %v4130 = vunpack.c.l.b16 %v3677
    %v4131 = vunpack.c.h.b16 %v3677
    %v4132 = vunpack.c.l.b16 %v3678
    %v4133 = vunpack.c.h.b16 %v3678
    %v4134 = vunpack.c.l.b16 %v3679
    %v4135 = vunpack.c.h.b16 %v3679
    %v4136 = vunpack.c.l.b16 %v3680
    %v4137 = vunpack.c.h.b16 %v3680
    %v4138 = vunpack.c.l.b16 %v3681
    %v4139 = vunpack.c.h.b16 %v3681
    %v4140 = vunpack.c.l.b16 %v3682
    %v4141 = vunpack.c.h.b16 %v3682
    %v4142 = vunpack.c.l.b16 %v3683
    %v4143 = vunpack.c.h.b16 %v3683
    %v4144 = vunpack.c.l.b16 %v3684
    %v4145 = vunpack.c.h.b16 %v3684
    %v4146 = vunpack.c.l.b16 %v3685
    %v4147 = vunpack.c.h.b16 %v3685
    %v4148 = vunpack.c.l.b16 %v3686
    %v4149 = vunpack.c.h.b16 %v3686
    %v4150 = vunpack.c.l.b16 %v3687
    %v4151 = vunpack.c.h.b16 %v3687
    %v4152 = vunpack.c.l.b16 %v3688
    %v4153 = vunpack.c.h.b16 %v3688
    %v4154 = vunpack.c.l.b16 %v3689
    %v4155 = vunpack.c.h.b16 %v3689
    %v4156 = vunpack.c.l.b16 %v3690
    %v4157 = vunpack.c.h.b16 %v3690
    %v4158 = vunpack.c.l.b16 %v3691
    %v4159 = vunpack.c.h.b16 %v3691
    %v4160 = vunpack.c.l.b16 %v3692
    %v4161 = vunpack.c.h.b16 %v3692
    %v4162 = vunpack.c.l.b16 %v3693
    %v4163 = vunpack.c.h.b16 %v3693
    %v4164 = vunpack.c.l.b16 %v3694
    %v4165 = vunpack.c.h.b16 %v3694
    %v4166 = vunpack.c.l.b16 %v3695
    %v4167 = vunpack.c.h.b16 %v3695
    %v4168 = vunpack.c.l.b16 %v3696
    %v4169 = vunpack.c.h.b16 %v3696
    %v4170 = vunpack.c.l.b16 %v3697
    %v4171 = vunpack.c.h.b16 %v3697
    %v4172 = vunpack.c.l.b16 %v3698
    %v4173 = vunpack.c.h.b16 %v3698
    %v4174 = vunpack.c.l.b16 %v3699
    %v4175 = vunpack.c.h.b16 %v3699
    %v4176 = vunpack.c.l.b16 %v3700
    %v4177 = vunpack.c.h.b16 %v3700
    %v4178 = vunpack.c.l.b16 %v3701
    %v4179 = vunpack.c.h.b16 %v3701
    %v4180 = vpack.c.b16 %v4120, %v4116
    %v4181 = vpack.c.b16 %v4121, %v4117
    %v4182 = vpack.c.b16 %v4122, %v4118
    %v4183 = vpack.c.b16 %v4123, %v4119
    %v4184 = vpack.c.b16 %v4128, %v4124
    %v4185 = vpack.c.b16 %v4129, %v4125
    %v4186 = vpack.c.b16 %v4130, %v4126
    %v4187 = vpack.c.b16 %v4131, %v4127
    %v4188 = vpack.c.b16 %v4136, %v4132
    %v4189 = vpack.c.b16 %v4137, %v4133
    %v4190 = vpack.c.b16 %v4138, %v4134
    %v4191 = vpack.c.b16 %v4139, %v4135
    %v4192 = vpack.c.b16 %v4144, %v4140
    %v4193 = vpack.c.b16 %v4145, %v4141
    %v4194 = vpack.c.b16 %v4146, %v4142
    %v4195 = vpack.c.b16 %v4147, %v4143
    %v4196 = vpack.c.b16 %v4152, %v4148
    %v4197 = vpack.c.b16 %v4153, %v4149
    %v4198 = vpack.c.b16 %v4154, %v4150
    %v4199 = vpack.c.b16 %v4155, %v4151
    %v4200 = vpack.c.b16 %v4160, %v4156
    %v4201 = vpack.c.b16 %v4161, %v4157
    %v4202 = vpack.c.b16 %v4162, %v4158
    %v4203 = vpack.c.b16 %v4163, %v4159
    %v4204 = vpack.c.b16 %v4168, %v4164
    %v4205 = vpack.c.b16 %v4169, %v4165
    %v4206 = vpack.c.b16 %v4170, %v4166
    %v4207 = vpack.c.b16 %v4171, %v4167
    %v4208 = vpack.c.b16 %v4176, %v4172
    %v4209 = vpack.c.b16 %v4177, %v4173
    %v4210 = vpack.c.b16 %v4178, %v4174
    %v4211 = vpack.c.b16 %v4179, %v4175
    %4244 = vmatprep.subr.bf16.mxu0 %v4181
    %4245 = vmatpush1.bf16.msra.mxu0 %v4180
    %4246 = vmatprep.subr.bf16.mxu0 %v4185
    %4247 = vmatpush1.bf16.msra.mxu0 %v4184
    %4248 = vmatprep.subr.bf16.mxu0 %v4189
    %4249 = vmatpush1.bf16.msra.mxu0 %v4188
    %4250 = vmatprep.subr.bf16.mxu0 %v4193
    %4251 = vmatpush1.bf16.msra.mxu0 %v4192
    %4252 = vmatprep.subr.bf16.mxu0 %v4197
    %4253 = vmatpush1.bf16.msra.mxu0 %v4196
    %4254 = vmatprep.subr.bf16.mxu0 %v4201
    %4255 = vmatpush1.bf16.msra.mxu0 %v4200
    %4256 = vmatprep.subr.bf16.mxu0 %v4205
    %4257 = vmatpush1.bf16.msra.mxu0 %v4204
    %4258 = vmatprep.subr.bf16.mxu0 %v4209
    %4259 = vmatpush1.bf16.msra.mxu0 %v4208
    %4260 = vmatprep.subr.bf16.mxu0 0
    %4261 = vmatpush1.bf16.msra.mxu0 0
    %4262 = vmatprep.subr.bf16.mxu0 0
    %4263 = vmatpush1.bf16.msra.mxu0 0
    %4264 = vmatprep.subr.bf16.mxu0 0
    %4265 = vmatpush1.bf16.msra.mxu0 0
    %4266 = vmatprep.subr.bf16.mxu0 0
    %4267 = vmatpush1.bf16.msra.mxu0 0
    %4268 = vmatprep.subr.bf16.mxu0 0
    %4269 = vmatpush1.bf16.msra.mxu0 0
    %4270 = vmatprep.subr.bf16.mxu0 0
    %4271 = vmatpush1.bf16.msra.mxu0 0
    %4272 = vmatprep.subr.bf16.mxu0 0
    %4273 = vmatpush1.bf16.msra.mxu0 0
    %4274 = vmatprep.subr.bf16.mxu0 0
    %4275 = vmatpush1.bf16.msra.mxu0 0
    %4276 = vmatprep.mubr.bf16.mxu0 0
    %4277 = vmatmul.mubr.bf16.gmra.mrb[0].mxu0 %v3631
    %v4278 = vpop.f32.mrb[0].mxu0
    %v4279 = vadd.f32 0.0, %v4278
    %v4280 = vpop.f32.mrb[0].mxu0
    %v4281 = vadd.f32 0.0, %v4280
    %v4282 = vpop.f32.mrb[0].mxu0
    %v4283 = vadd.f32 0.0, %v4282
    %v4284 = vpop.f32.mrb[0].mxu0
    %v4285 = vadd.f32 0.0, %v4284
    %4286 = vmatprep.mubr.bf16.mxu0 0
    %4287 = vmatmul.mubr.bf16.gmra.mrb[0].mxu0 %v3632
    %v4288 = vpop.f32.mrb[0].mxu0
    %v4289 = vadd.f32 0.0, %v4288
    %v4290 = vpop.f32.mrb[0].mxu0
    %v4291 = vadd.f32 0.0, %v4290
    %v4292 = vpop.f32.mrb[0].mxu0
    %v4293 = vadd.f32 0.0, %v4292
    %v4294 = vpop.f32.mrb[0].mxu0
    %v4295 = vadd.f32 0.0, %v4294
    %4296 = vmatprep.mubr.bf16.mxu0 0
    %4297 = vmatmul.mubr.bf16.gmra.mrb[0].mxu0 %v3633
    %v4298 = vpop.f32.mrb[0].mxu0
    %v4299 = vadd.f32 0.0, %v4298
    %v4300 = vpop.f32.mrb[0].mxu0
    %v4301 = vadd.f32 0.0, %v4300
    %v4302 = vpop.f32.mrb[0].mxu0
    %v4303 = vadd.f32 0.0, %v4302
    %v4304 = vpop.f32.mrb[0].mxu0
    %v4305 = vadd.f32 0.0, %v4304
    %4306 = vmatprep.mubr.bf16.mxu0 0
    %4307 = vmatmul.mubr.bf16.gmra.mrb[0].mxu0 %v3634
    %v4308 = vpop.f32.mrb[0].mxu0
    %v4309 = vadd.f32 0.0, %v4308
    %v4310 = vpop.f32.mrb[0].mxu0
    %v4311 = vadd.f32 0.0, %v4310
    %v4312 = vpop.f32.mrb[0].mxu0
    %v4313 = vadd.f32 0.0, %v4312
    %v4314 = vpop.f32.mrb[0].mxu0
    %v4315 = vadd.f32 0.0, %v4314
    %4316 = vmatprep.mubr.bf16.mxu0 0
    %4317 = vmatmul.mubr.bf16.gmra.mrb[0].mxu0 %v3635
    %v4318 = vpop.f32.mrb[0].mxu0
    %v4319 = vadd.f32 0.0, %v4318
    %v4320 = vpop.f32.mrb[0].mxu0
    %v4321 = vadd.f32 0.0, %v4320
    %v4322 = vpop.f32.mrb[0].mxu0
    %v4323 = vadd.f32 0.0, %v4322
    %v4324 = vpop.f32.mrb[0].mxu0
    %v4325 = vadd.f32 0.0, %v4324
    %4326 = vdwg.mxu0
    %4327 = vmatprep.subr.bf16.mxu0 %v4183
    %4328 = vmatpush1.bf16.msra.mxu0 %v4182
    %4329 = vmatprep.subr.bf16.mxu0 %v4187
    %4330 = vmatpush1.bf16.msra.mxu0 %v4186
    %4331 = vmatprep.subr.bf16.mxu0 %v4191
    %4332 = vmatpush1.bf16.msra.mxu0 %v4190
    %4333 = vmatprep.subr.bf16.mxu0 %v4195
    %4334 = vmatpush1.bf16.msra.mxu0 %v4194
    %4335 = vmatprep.subr.bf16.mxu0 %v4199
    %4336 = vmatpush1.bf16.msra.mxu0 %v4198
    %4337 = vmatprep.subr.bf16.mxu0 %v4203
    %4338 = vmatpush1.bf16.msra.mxu0 %v4202
    %4339 = vmatprep.subr.bf16.mxu0 %v4207
    %4340 = vmatpush1.bf16.msra.mxu0 %v4206
    %4341 = vmatprep.subr.bf16.mxu0 %v4211
    %4342 = vmatpush1.bf16.msra.mxu0 %v4210
    %4343 = vmatprep.subr.bf16.mxu0 0
    %4344 = vmatpush1.bf16.msra.mxu0 0
    %4345 = vmatprep.subr.bf16.mxu0 0
    %4346 = vmatpush1.bf16.msra.mxu0 0
    %4347 = vmatprep.subr.bf16.mxu0 0
    %4348 = vmatpush1.bf16.msra.mxu0 0
    %4349 = vmatprep.subr.bf16.mxu0 0
    %4350 = vmatpush1.bf16.msra.mxu0 0
    %4351 = vmatprep.subr.bf16.mxu0 0
    %4352 = vmatpush1.bf16.msra.mxu0 0
    %4353 = vmatprep.subr.bf16.mxu0 0
    %4354 = vmatpush1.bf16.msra.mxu0 0
    %4355 = vmatprep.subr.bf16.mxu0 0
    %4356 = vmatpush1.bf16.msra.mxu0 0
    %4357 = vmatprep.subr.bf16.mxu0 0
    %4358 = vmatpush1.bf16.msra.mxu0 0
    %4359 = vmatprep.mubr.bf16.mxu0 0
    %4360 = vmatmul.mubr.bf16.gmra.mrb[0].mxu0 %v3631
    %v4361 = vpop.f32.mrb[0].mxu0
    %v4362 = vadd.f32 0.0, %v4361
    %v4363 = vpop.f32.mrb[0].mxu0
    %v4364 = vadd.f32 0.0, %v4363
    %v4365 = vpop.f32.mrb[0].mxu0
    %v4366 = vadd.f32 0.0, %v4365
    %v4367 = vpop.f32.mrb[0].mxu0
    %v4368 = vadd.f32 0.0, %v4367
    %4369 = vmatprep.mubr.bf16.mxu0 0
    %4370 = vmatmul.mubr.bf16.gmra.mrb[0].mxu0 %v3632
    %v4371 = vpop.f32.mrb[0].mxu0
    %v4372 = vadd.f32 0.0, %v4371
    %v4373 = vpop.f32.mrb[0].mxu0
    %v4374 = vadd.f32 0.0, %v4373
    %v4375 = vpop.f32.mrb[0].mxu0
    %v4376 = vadd.f32 0.0, %v4375
    %v4377 = vpop.f32.mrb[0].mxu0
    %v4378 = vadd.f32 0.0, %v4377
    %4379 = vmatprep.mubr.bf16.mxu0 0
    %4380 = vmatmul.mubr.bf16.gmra.mrb[0].mxu0 %v3633
    %v4381 = vpop.f32.mrb[0].mxu0
    %v4382 = vadd.f32 0.0, %v4381
    %v4383 = vpop.f32.mrb[0].mxu0
    %v4384 = vadd.f32 0.0, %v4383
    %v4385 = vpop.f32.mrb[0].mxu0
    %v4386 = vadd.f32 0.0, %v4385
    %v4387 = vpop.f32.mrb[0].mxu0
    %v4388 = vadd.f32 0.0, %v4387
    %4389 = vmatprep.mubr.bf16.mxu0 0
    %4390 = vmatmul.mubr.bf16.gmra.mrb[0].mxu0 %v3634
    %v4391 = vpop.f32.mrb[0].mxu0
    %v4392 = vadd.f32 0.0, %v4391
    %v4393 = vpop.f32.mrb[0].mxu0
    %v4394 = vadd.f32 0.0, %v4393
    %v4395 = vpop.f32.mrb[0].mxu0
    %v4396 = vadd.f32 0.0, %v4395
    %v4397 = vpop.f32.mrb[0].mxu0
    %v4398 = vadd.f32 0.0, %v4397
    %4399 = vmatprep.mubr.bf16.mxu0 0
    %4400 = vmatmul.mubr.bf16.gmra.mrb[0].mxu0 %v3635
    %v4401 = vpop.f32.mrb[0].mxu0
    %v4402 = vadd.f32 0.0, %v4401
    %v4403 = vpop.f32.mrb[0].mxu0
    %v4404 = vadd.f32 0.0, %v4403
    %v4405 = vpop.f32.mrb[0].mxu0
    %v4406 = vadd.f32 0.0, %v4405
    %v4407 = vpop.f32.mrb[0].mxu0
    %v4408 = vadd.f32 0.0, %v4407
    %4409 = vdwg.mxu0
    %v4410 = vadd.f32 %v3953, %v4319
    %v4411 = vadd.f32 %v3955, %v4321
    %v4412 = vadd.f32 %v4036, %v4402
    %v4413 = vadd.f32 %v4038, %v4404
    %v4414 = vadd.f32 %v3957, %v4323
    %v4415 = vadd.f32 %v3959, %v4325
    %v4416 = vadd.f32 %v4040, %v4406
    %v4417 = vadd.f32 %v4042, %v4408
    %4418 = vst [vmem:[#allocation3] sm:$0xff] %v4410
    %4419 = vst [vmem:[#allocation3 + $0x8] sm:$0xff] %v4411
    %4420 = vst [vmem:[#allocation3 + $0x10] sm:$0xff] %v4412
    %4421 = vst [vmem:[#allocation3 + $0x18] sm:$0xff] %v4413
    %4422 = vst [vmem:[#allocation3 + $0x20] sm:$0xff] %v4414
    %4423 = vst [vmem:[#allocation3 + $0x28] sm:$0xff] %v4415
    %4424 = vst [vmem:[#allocation3 + $0x30] sm:$0xff] %v4416
    %4425 = vst [vmem:[#allocation3 + $0x38] sm:$0xff] %v4417
    %v4426 = vadd.f32 %v3963, %v4309
    %v4427 = vadd.f32 %v3965, %v4311
    %v4428 = vadd.f32 %v4046, %v4392
    %v4429 = vadd.f32 %v4048, %v4394
    %v4430 = vadd.f32 %v3967, %v4313
    %v4431 = vadd.f32 %v3969, %v4315
    %v4432 = vadd.f32 %v4050, %v4396
    %v4433 = vadd.f32 %v4052, %v4398
    %4434 = vst [vmem:[%s988] sm:$0xff] %v4426
    %4435 = vst [vmem:[%s988 + $0x8] sm:$0xff] %v4427
    %4436 = vst [vmem:[%s988 + $0x10] sm:$0xff] %v4428
    %4437 = vst [vmem:[%s988 + $0x18] sm:$0xff] %v4429
    %4438 = vst [vmem:[%s988 + $0x20] sm:$0xff] %v4430
    %4439 = vst [vmem:[%s988 + $0x28] sm:$0xff] %v4431
    %4440 = vst [vmem:[%s988 + $0x30] sm:$0xff] %v4432
    %4441 = vst [vmem:[%s988 + $0x38] sm:$0xff] %v4433
    %v4442 = vadd.f32 %v3973, %v4299
    %v4443 = vadd.f32 %v3975, %v4301
    %v4444 = vadd.f32 %v4056, %v4382
    %v4445 = vadd.f32 %v4058, %v4384
    %v4446 = vadd.f32 %v3977, %v4303
    %v4447 = vadd.f32 %v3979, %v4305
    %v4448 = vadd.f32 %v4060, %v4386
    %v4449 = vadd.f32 %v4062, %v4388
    %4450 = vst [vmem:[%s1005] sm:$0xff] %v4442
    %4451 = vst [vmem:[%s1005 + $0x8] sm:$0xff] %v4443
    %4452 = vst [vmem:[%s1005 + $0x10] sm:$0xff] %v4444
    %4453 = vst [vmem:[%s1005 + $0x18] sm:$0xff] %v4445
    %4454 = vst [vmem:[%s1005 + $0x20] sm:$0xff] %v4446
    %4455 = vst [vmem:[%s1005 + $0x28] sm:$0xff] %v4447
    %4456 = vst [vmem:[%s1005 + $0x30] sm:$0xff] %v4448
    %4457 = vst [vmem:[%s1005 + $0x38] sm:$0xff] %v4449
    %v4458 = vadd.f32 %v3983, %v4289
    %v4459 = vadd.f32 %v3985, %v4291
    %v4460 = vadd.f32 %v4066, %v4372
    %v4461 = vadd.f32 %v4068, %v4374
    %v4462 = vadd.f32 %v3987, %v4293
    %v4463 = vadd.f32 %v3989, %v4295
    %v4464 = vadd.f32 %v4070, %v4376
    %v4465 = vadd.f32 %v4072, %v4378
    %4466 = vst [vmem:[%s1022] sm:$0xff] %v4458
    %4467 = vst [vmem:[%s1022 + $0x8] sm:$0xff] %v4459
    %4468 = vst [vmem:[%s1022 + $0x10] sm:$0xff] %v4460
    %4469 = vst [vmem:[%s1022 + $0x18] sm:$0xff] %v4461
    %4470 = vst [vmem:[%s1022 + $0x20] sm:$0xff] %v4462
    %4471 = vst [vmem:[%s1022 + $0x28] sm:$0xff] %v4463
    %4472 = vst [vmem:[%s1022 + $0x30] sm:$0xff] %v4464
    %4473 = vst [vmem:[%s1022 + $0x38] sm:$0xff] %v4465
    %v4474 = vadd.f32 %v3993, %v4279
    %v4475 = vadd.f32 %v3995, %v4281
    %v4476 = vadd.f32 %v4076, %v4362
    %v4477 = vadd.f32 %v4078, %v4364
    %v4478 = vadd.f32 %v3997, %v4283
    %v4479 = vadd.f32 %v3999, %v4285
    %v4480 = vadd.f32 %v4080, %v4366
    %v4481 = vadd.f32 %v4082, %v4368
    %4482 = vst [vmem:[%s1039] sm:$0xff] %v4474
    %4483 = vst [vmem:[%s1039 + $0x8] sm:$0xff] %v4475
    %4484 = vst [vmem:[%s1039 + $0x10] sm:$0xff] %v4476
    %4485 = vst [vmem:[%s1039 + $0x18] sm:$0xff] %v4477
    %4486 = vst [vmem:[%s1039 + $0x20] sm:$0xff] %v4478
    %4487 = vst [vmem:[%s1039 + $0x28] sm:$0xff] %v4479
    %4488 = vst [vmem:[%s1039 + $0x30] sm:$0xff] %v4480
    %4489 = vst [vmem:[%s1039 + $0x38] sm:$0xff] %v4481
    %v4490 = vld [vmem:[#allocation3] sm:$0xff]
    %v4491 = vld [vmem:[#allocation3 + $0x8] sm:$0xff]
    %v4492 = vld [vmem:[#allocation3 + $0x10] sm:$0xff]
    %v4493 = vld [vmem:[#allocation3 + $0x18] sm:$0xff]
    %v4494 = vld [vmem:[#allocation3 + $0x20] sm:$0xff]
    %v4495 = vld [vmem:[#allocation3 + $0x28] sm:$0xff]
    %v4496 = vld [vmem:[#allocation3 + $0x30] sm:$0xff]
    %v4497 = vld [vmem:[#allocation3 + $0x38] sm:$0xff]
    %v4530 = vunpack.c.l.b16 %v3703
    %v4531 = vunpack.c.h.b16 %v3703
    %v4532 = vunpack.c.l.b16 %v3704
    %v4533 = vunpack.c.h.b16 %v3704
    %v4534 = vunpack.c.l.b16 %v3705
    %v4535 = vunpack.c.h.b16 %v3705
    %v4536 = vunpack.c.l.b16 %v3706
    %v4537 = vunpack.c.h.b16 %v3706
    %v4538 = vunpack.c.l.b16 %v3707
    %v4539 = vunpack.c.h.b16 %v3707
    %v4540 = vunpack.c.l.b16 %v3708
    %v4541 = vunpack.c.h.b16 %v3708
    %v4542 = vunpack.c.l.b16 %v3709
    %v4543 = vunpack.c.h.b16 %v3709
    %v4544 = vunpack.c.l.b16 %v3710
    %v4545 = vunpack.c.h.b16 %v3710
    %v4546 = vunpack.c.l.b16 %v3711
    %v4547 = vunpack.c.h.b16 %v3711
    %v4548 = vunpack.c.l.b16 %v3712
    %v4549 = vunpack.c.h.b16 %v3712
    %v4550 = vunpack.c.l.b16 %v3713
    %v4551 = vunpack.c.h.b16 %v3713
    %v4552 = vunpack.c.l.b16 %v3714
    %v4553 = vunpack.c.h.b16 %v3714
    %v4554 = vunpack.c.l.b16 %v3715
    %v4555 = vunpack.c.h.b16 %v3715
    %v4556 = vunpack.c.l.b16 %v3716
    %v4557 = vunpack.c.h.b16 %v3716
    %v4558 = vunpack.c.l.b16 %v3717
    %v4559 = vunpack.c.h.b16 %v3717
    %v4560 = vunpack.c.l.b16 %v3718
    %v4561 = vunpack.c.h.b16 %v3718
    %v4562 = vunpack.c.l.b16 %v3719
    %v4563 = vunpack.c.h.b16 %v3719
    %v4564 = vunpack.c.l.b16 %v3720
    %v4565 = vunpack.c.h.b16 %v3720
    %v4566 = vunpack.c.l.b16 %v3721
    %v4567 = vunpack.c.h.b16 %v3721
    %v4568 = vunpack.c.l.b16 %v3722
    %v4569 = vunpack.c.h.b16 %v3722
    %v4570 = vunpack.c.l.b16 %v3723
    %v4571 = vunpack.c.h.b16 %v3723
    %v4572 = vunpack.c.l.b16 %v3724
    %v4573 = vunpack.c.h.b16 %v3724
    %v4574 = vunpack.c.l.b16 %v3725
    %v4575 = vunpack.c.h.b16 %v3725
    %v4576 = vunpack.c.l.b16 %v3726
    %v4577 = vunpack.c.h.b16 %v3726
    %v4578 = vunpack.c.l.b16 %v3727
    %v4579 = vunpack.c.h.b16 %v3727
    %v4580 = vunpack.c.l.b16 %v3728
    %v4581 = vunpack.c.h.b16 %v3728
    %v4582 = vunpack.c.l.b16 %v3729
    %v4583 = vunpack.c.h.b16 %v3729
    %v4584 = vunpack.c.l.b16 %v3730
    %v4585 = vunpack.c.h.b16 %v3730
    %v4586 = vunpack.c.l.b16 %v3731
    %v4587 = vunpack.c.h.b16 %v3731
    %v4588 = vunpack.c.l.b16 %v3732
    %v4589 = vunpack.c.h.b16 %v3732
    %v4590 = vunpack.c.l.b16 %v3733
    %v4591 = vunpack.c.h.b16 %v3733
    %v4592 = vunpack.c.l.b16 %v3734
    %v4593 = vunpack.c.h.b16 %v3734
    %v4594 = vpack.c.b16 %v4534, %v4530
    %v4595 = vpack.c.b16 %v4535, %v4531
    %v4596 = vpack.c.b16 %v4536, %v4532
    %v4597 = vpack.c.b16 %v4537, %v4533
    %v4598 = vpack.c.b16 %v4542, %v4538
    %v4599 = vpack.c.b16 %v4543, %v4539
    %v4600 = vpack.c.b16 %v4544, %v4540
    %v4601 = vpack.c.b16 %v4545, %v4541
    %v4602 = vpack.c.b16 %v4550, %v4546
    %v4603 = vpack.c.b16 %v4551, %v4547
    %v4604 = vpack.c.b16 %v4552, %v4548
    %v4605 = vpack.c.b16 %v4553, %v4549
    %v4606 = vpack.c.b16 %v4558, %v4554
    %v4607 = vpack.c.b16 %v4559, %v4555
    %v4608 = vpack.c.b16 %v4560, %v4556
    %v4609 = vpack.c.b16 %v4561, %v4557
    %v4610 = vpack.c.b16 %v4566, %v4562
    %v4611 = vpack.c.b16 %v4567, %v4563
    %v4612 = vpack.c.b16 %v4568, %v4564
    %v4613 = vpack.c.b16 %v4569, %v4565
    %v4614 = vpack.c.b16 %v4574, %v4570
    %v4615 = vpack.c.b16 %v4575, %v4571
    %v4616 = vpack.c.b16 %v4576, %v4572
    %v4617 = vpack.c.b16 %v4577, %v4573
    %v4618 = vpack.c.b16 %v4582, %v4578
    %v4619 = vpack.c.b16 %v4583, %v4579
    %v4620 = vpack.c.b16 %v4584, %v4580
    %v4621 = vpack.c.b16 %v4585, %v4581
    %v4622 = vpack.c.b16 %v4590, %v4586
    %v4623 = vpack.c.b16 %v4591, %v4587
    %v4624 = vpack.c.b16 %v4592, %v4588
    %v4625 = vpack.c.b16 %v4593, %v4589
    %4658 = vmatprep.subr.bf16.mxu0 %v4595
    %4659 = vmatpush1.bf16.msra.mxu0 %v4594
    %4660 = vmatprep.subr.bf16.mxu0 %v4599
    %4661 = vmatpush1.bf16.msra.mxu0 %v4598
    %4662 = vmatprep.subr.bf16.mxu0 %v4603
    %4663 = vmatpush1.bf16.msra.mxu0 %v4602
    %4664 = vmatprep.subr.bf16.mxu0 %v4607
    %4665 = vmatpush1.bf16.msra.mxu0 %v4606
    %4666 = vmatprep.subr.bf16.mxu0 %v4611
    %4667 = vmatpush1.bf16.msra.mxu0 %v4610
    %4668 = vmatprep.subr.bf16.mxu0 %v4615
    %4669 = vmatpush1.bf16.msra.mxu0 %v4614
    %4670 = vmatprep.subr.bf16.mxu0 %v4619
    %4671 = vmatpush1.bf16.msra.mxu0 %v4618
    %4672 = vmatprep.subr.bf16.mxu0 %v4623
    %4673 = vmatpush1.bf16.msra.mxu0 %v4622
    %4674 = vmatprep.subr.bf16.mxu0 0
    %4675 = vmatpush1.bf16.msra.mxu0 0
    %4676 = vmatprep.subr.bf16.mxu0 0
    %4677 = vmatpush1.bf16.msra.mxu0 0
    %4678 = vmatprep.subr.bf16.mxu0 0
    %4679 = vmatpush1.bf16.msra.mxu0 0
    %4680 = vmatprep.subr.bf16.mxu0 0
    %4681 = vmatpush1.bf16.msra.mxu0 0
    %4682 = vmatprep.subr.bf16.mxu0 0
    %4683 = vmatpush1.bf16.msra.mxu0 0
    %4684 = vmatprep.subr.bf16.mxu0 0
    %4685 = vmatpush1.bf16.msra.mxu0 0
    %4686 = vmatprep.subr.bf16.mxu0 0
    %4687 = vmatpush1.bf16.msra.mxu0 0
    %4688 = vmatprep.subr.bf16.mxu0 0
    %4689 = vmatpush1.bf16.msra.mxu0 0
    %4690 = vmatprep.mubr.bf16.mxu0 0
    %4691 = vmatmul.mubr.bf16.gmra.mrb[0].mxu0 0
    %v4692 = vpop.f32.mrb[0].mxu0
    %v4693 = vadd.f32 0.0, %v4692
    %v4694 = vpop.f32.mrb[0].mxu0
    %v4695 = vadd.f32 0.0, %v4694
    %v4696 = vpop.f32.mrb[0].mxu0
    %v4697 = vadd.f32 0.0, %v4696
    %v4698 = vpop.f32.mrb[0].mxu0
    %v4699 = vadd.f32 0.0, %v4698
    %4700 = vdwg.mxu0
    %4701 = vmatprep.subr.bf16.mxu0 %v4597
    %4702 = vmatpush1.bf16.msra.mxu0 %v4596
    %4703 = vmatprep.subr.bf16.mxu0 %v4601
    %4704 = vmatpush1.bf16.msra.mxu0 %v4600
    %4705 = vmatprep.subr.bf16.mxu0 %v4605
    %4706 = vmatpush1.bf16.msra.mxu0 %v4604
    %4707 = vmatprep.subr.bf16.mxu0 %v4609
    %4708 = vmatpush1.bf16.msra.mxu0 %v4608
    %4709 = vmatprep.subr.bf16.mxu0 %v4613
    %4710 = vmatpush1.bf16.msra.mxu0 %v4612
    %4711 = vmatprep.subr.bf16.mxu0 %v4617
    %4712 = vmatpush1.bf16.msra.mxu0 %v4616
    %4713 = vmatprep.subr.bf16.mxu0 %v4621
    %4714 = vmatpush1.bf16.msra.mxu0 %v4620
    %4715 = vmatprep.subr.bf16.mxu0 %v4625
    %4716 = vmatpush1.bf16.msra.mxu0 %v4624
    %4717 = vmatprep.subr.bf16.mxu0 0
    %4718 = vmatpush1.bf16.msra.mxu0 0
    %4719 = vmatprep.subr.bf16.mxu0 0
    %4720 = vmatpush1.bf16.msra.mxu0 0
    %4721 = vmatprep.subr.bf16.mxu0 0
    %4722 = vmatpush1.bf16.msra.mxu0 0
    %4723 = vmatprep.subr.bf16.mxu0 0
    %4724 = vmatpush1.bf16.msra.mxu0 0
    %4725 = vmatprep.subr.bf16.mxu0 0
    %4726 = vmatpush1.bf16.msra.mxu0 0
    %4727 = vmatprep.subr.bf16.mxu0 0
    %4728 = vmatpush1.bf16.msra.mxu0 0
    %4729 = vmatprep.subr.bf16.mxu0 0
    %4730 = vmatpush1.bf16.msra.mxu0 0
    %4731 = vmatprep.subr.bf16.mxu0 0
    %4732 = vmatpush1.bf16.msra.mxu0 0
    %4733 = vmatprep.mubr.bf16.mxu0 0
    %4734 = vmatmul.mubr.bf16.gmra.mrb[0].mxu0 0
    %v4735 = vpop.f32.mrb[0].mxu0
    %v4736 = vadd.f32 0.0, %v4735
    %v4737 = vpop.f32.mrb[0].mxu0
    %v4738 = vadd.f32 0.0, %v4737
    %v4739 = vpop.f32.mrb[0].mxu0
    %v4740 = vadd.f32 0.0, %v4739
    %v4741 = vpop.f32.mrb[0].mxu0
    %v4742 = vadd.f32 0.0, %v4741
    %4743 = vdwg.mxu0
    %v4744 = vadd.f32 %v4490, %v4693
    %v4745 = vadd.f32 %v4491, %v4695
    %v4746 = vadd.f32 %v4492, %v4736
    %v4747 = vadd.f32 %v4493, %v4738
    %v4748 = vadd.f32 %v4494, %v4697
    %v4749 = vadd.f32 %v4495, %v4699
    %v4750 = vadd.f32 %v4496, %v4740
    %v4751 = vadd.f32 %v4497, %v4742
    %v4752 = vmul.f32 %v4744, 0.5
    %v4753 = vmul.f32 %v4748, 0.5
    %v4754 = vtanh.pop %v4752
    %v4755 = vtanh.pop %v4753
    %v4756 = vmul.f32 %v4754, 0.5
    %v4757 = vmul.f32 %v4755, 0.5
    %v4758 = vadd.f32 %v4756, 0.5
    %v4759 = vadd.f32 %v4757, 0.5
    %v4760 = vmul.f32 %v4745, 0.5
    %v4761 = vmul.f32 %v4749, 0.5
    %v4762 = vtanh.pop %v4760
    %v4763 = vtanh.pop %v4761
    %v4764 = vmul.f32 %v4762, 0.5
    %v4765 = vmul.f32 %v4763, 0.5
    %v4766 = vadd.f32 %v4764, 0.5
    %v4767 = vadd.f32 %v4765, 0.5
    %v4768 = vtanh.pop %v4746
    %v4769 = vtanh.pop %v4750
    %v4770 = vmul.f32 %v4747, 0.5
    %v4771 = vmul.f32 %v4751, 0.5
    %v4772 = vtanh.pop %v4770
    %v4773 = vtanh.pop %v4771
    %v4774 = vmul.f32 %v4772, 0.5
    %v4775 = vmul.f32 %v4773, 0.5
    %v4776 = vadd.f32 %v4774, 0.5
    %v4777 = vadd.f32 %v4775, 0.5
    %v4778 = vmul.f32 %v4766, 0.0
    %v4779 = vmul.f32 %v4767, 0.0
    %v4780 = vmul.f32 %v4758, %v4768
    %v4781 = vmul.f32 %v4759, %v4769
    %v4782 = vadd.f32 %v4778, %v4780
    %v4783 = vadd.f32 %v4779, %v4781
    %v4784 = vtanh.pop %v4782
    %v4785 = vtanh.pop %v4783
    %v4786 = vmul.f32 %v4776, %v4784
    %v4787 = vmul.f32 %v4777, %v4785
    %v4788 = vpack.c.bf16 %v4787, %v4786
    %4789 = vst [vmem:[#allocation2] sm:$0xff] %v4788
    %v4790 = vld [vmem:[%s988] sm:$0xff]
    %v4791 = vld [vmem:[%s988 + $0x8] sm:$0xff]
    %v4792 = vld [vmem:[%s988 + $0x10] sm:$0xff]
    %v4793 = vld [vmem:[%s988 + $0x18] sm:$0xff]
    %v4794 = vld [vmem:[%s988 + $0x20] sm:$0xff]
    %v4795 = vld [vmem:[%s988 + $0x28] sm:$0xff]
    %v4796 = vld [vmem:[%s988 + $0x30] sm:$0xff]
    %v4797 = vld [vmem:[%s988 + $0x38] sm:$0xff]
    %4798 = vmatprep.subr.bf16.mxu0 %v4595
    %4799 = vmatpush1.bf16.msra.mxu0 %v4594
    %4800 = vmatprep.subr.bf16.mxu0 %v4599
    %4801 = vmatpush1.bf16.msra.mxu0 %v4598
    %4802 = vmatprep.subr.bf16.mxu0 %v4603
    %4803 = vmatpush1.bf16.msra.mxu0 %v4602
    %4804 = vmatprep.subr.bf16.mxu0 %v4607
    %4805 = vmatpush1.bf16.msra.mxu0 %v4606
    %4806 = vmatprep.subr.bf16.mxu0 %v4611
    %4807 = vmatpush1.bf16.msra.mxu0 %v4610
    %4808 = vmatprep.subr.bf16.mxu0 %v4615
    %4809 = vmatpush1.bf16.msra.mxu0 %v4614
    %4810 = vmatprep.subr.bf16.mxu0 %v4619
    %4811 = vmatpush1.bf16.msra.mxu0 %v4618
    %4812 = vmatprep.subr.bf16.mxu0 %v4623
    %4813 = vmatpush1.bf16.msra.mxu0 %v4622
    %4814 = vmatprep.subr.bf16.mxu0 0
    %4815 = vmatpush1.bf16.msra.mxu0 0
    %4816 = vmatprep.subr.bf16.mxu0 0
    %4817 = vmatpush1.bf16.msra.mxu0 0
    %4818 = vmatprep.subr.bf16.mxu0 0
    %4819 = vmatpush1.bf16.msra.mxu0 0
    %4820 = vmatprep.subr.bf16.mxu0 0
    %4821 = vmatpush1.bf16.msra.mxu0 0
    %4822 = vmatprep.subr.bf16.mxu0 0
    %4823 = vmatpush1.bf16.msra.mxu0 0
    %4824 = vmatprep.subr.bf16.mxu0 0
    %4825 = vmatpush1.bf16.msra.mxu0 0
    %4826 = vmatprep.subr.bf16.mxu0 0
    %4827 = vmatpush1.bf16.msra.mxu0 0
    %4828 = vmatprep.subr.bf16.mxu0 0
    %4829 = vmatpush1.bf16.msra.mxu0 0
    %4830 = vmatprep.mubr.bf16.mxu0 0
    %4831 = vmatmul.mubr.bf16.gmra.mrb[0].mxu0 %v4788
    %v4832 = vpop.f32.mrb[0].mxu0
    %v4833 = vadd.f32 0.0, %v4832
    %v4834 = vpop.f32.mrb[0].mxu0
    %v4835 = vadd.f32 0.0, %v4834
    %v4836 = vpop.f32.mrb[0].mxu0
    %v4837 = vadd.f32 0.0, %v4836
    %v4838 = vpop.f32.mrb[0].mxu0
    %v4839 = vadd.f32 0.0, %v4838
    %4840 = vdwg.mxu0
    %4841 = vmatprep.subr.bf16.mxu0 %v4597
    %4842 = vmatpush1.bf16.msra.mxu0 %v4596
    %4843 = vmatprep.subr.bf16.mxu0 %v4601
    %4844 = vmatpush1.bf16.msra.mxu0 %v4600
    %4845 = vmatprep.subr.bf16.mxu0 %v4605
    %4846 = vmatpush1.bf16.msra.mxu0 %v4604
    %4847 = vmatprep.subr.bf16.mxu0 %v4609
    %4848 = vmatpush1.bf16.msra.mxu0 %v4608
    %4849 = vmatprep.subr.bf16.mxu0 %v4613
    %4850 = vmatpush1.bf16.msra.mxu0 %v4612
    %4851 = vmatprep.subr.bf16.mxu0 %v4617
    %4852 = vmatpush1.bf16.msra.mxu0 %v4616
    %4853 = vmatprep.subr.bf16.mxu0 %v4621
    %4854 = vmatpush1.bf16.msra.mxu0 %v4620
    %4855 = vmatprep.subr.bf16.mxu0 %v4625
    %4856 = vmatpush1.bf16.msra.mxu0 %v4624
    %4857 = vmatprep.subr.bf16.mxu0 0
    %4858 = vmatpush1.bf16.msra.mxu0 0
    %4859 = vmatprep.subr.bf16.mxu0 0
    %4860 = vmatpush1.bf16.msra.mxu0 0
    %4861 = vmatprep.subr.bf16.mxu0 0
    %4862 = vmatpush1.bf16.msra.mxu0 0
    %4863 = vmatprep.subr.bf16.mxu0 0
    %4864 = vmatpush1.bf16.msra.mxu0 0
    %4865 = vmatprep.subr.bf16.mxu0 0
    %4866 = vmatpush1.bf16.msra.mxu0 0
    %4867 = vmatprep.subr.bf16.mxu0 0
    %4868 = vmatpush1.bf16.msra.mxu0 0
    %4869 = vmatprep.subr.bf16.mxu0 0
    %4870 = vmatpush1.bf16.msra.mxu0 0
    %4871 = vmatprep.subr.bf16.mxu0 0
    %4872 = vmatpush1.bf16.msra.mxu0 0
    %4873 = vmatprep.mubr.bf16.mxu0 0
    %4874 = vmatmul.mubr.bf16.gmra.mrb[0].mxu0 %v4788
    %v4875 = vpop.f32.mrb[0].mxu0
    %v4876 = vadd.f32 0.0, %v4875
    %v4877 = vpop.f32.mrb[0].mxu0
    %v4878 = vadd.f32 0.0, %v4877
    %v4879 = vpop.f32.mrb[0].mxu0
    %v4880 = vadd.f32 0.0, %v4879
    %v4881 = vpop.f32.mrb[0].mxu0
    %v4882 = vadd.f32 0.0, %v4881
    %4883 = vdwg.mxu0
    %v4884 = vadd.f32 %v4790, %v4833
    %v4885 = vadd.f32 %v4791, %v4835
    %v4886 = vadd.f32 %v4792, %v4876
    %v4887 = vadd.f32 %v4793, %v4878
    %v4888 = vadd.f32 %v4794, %v4837
    %v4889 = vadd.f32 %v4795, %v4839
    %v4890 = vadd.f32 %v4796, %v4880
    %v4891 = vadd.f32 %v4797, %v4882
    %v4892 = vmul.f32 %v4884, 0.5
    %v4893 = vmul.f32 %v4888, 0.5
    %v4894 = vtanh.pop %v4892
    %v4895 = vtanh.pop %v4893
    %v4896 = vmul.f32 %v4894, 0.5
    %v4897 = vmul.f32 %v4895, 0.5
    %v4898 = vadd.f32 %v4896, 0.5
    %v4899 = vadd.f32 %v4897, 0.5
    %v4900 = vmul.f32 %v4885, 0.5
    %v4901 = vmul.f32 %v4889, 0.5
    %v4902 = vtanh.pop %v4900
    %v4903 = vtanh.pop %v4901
    %v4904 = vmul.f32 %v4902, 0.5
    %v4905 = vmul.f32 %v4903, 0.5
    %v4906 = vadd.f32 %v4904, 0.5
    %v4907 = vadd.f32 %v4905, 0.5
    %v4908 = vtanh.pop %v4886
    %v4909 = vtanh.pop %v4890
    %v4910 = vmul.f32 %v4887, 0.5
    %v4911 = vmul.f32 %v4891, 0.5
    %v4912 = vtanh.pop %v4910
    %v4913 = vtanh.pop %v4911
    %v4914 = vmul.f32 %v4912, 0.5
    %v4915 = vmul.f32 %v4913, 0.5
    %v4916 = vadd.f32 %v4914, 0.5
    %v4917 = vadd.f32 %v4915, 0.5
    %v4918 = vmul.f32 %v4906, %v4782
    %v4919 = vmul.f32 %v4907, %v4783
    %v4920 = vmul.f32 %v4898, %v4908
    %v4921 = vmul.f32 %v4899, %v4909
    %v4922 = vadd.f32 %v4918, %v4920
    %v4923 = vadd.f32 %v4919, %v4921
    %v4924 = vtanh.pop %v4922
    %v4925 = vtanh.pop %v4923
    %v4926 = vmul.f32 %v4916, %v4924
    %v4927 = vmul.f32 %v4917, %v4925
    %v4928 = vpack.c.bf16 %v4927, %v4926
    %4929 = vst [vmem:[%s1487] sm:$0xff] %v4928
    %v4930 = vld [vmem:[%s1005] sm:$0xff]
    %v4931 = vld [vmem:[%s1005 + $0x8] sm:$0xff]
    %v4932 = vld [vmem:[%s1005 + $0x10] sm:$0xff]
    %v4933 = vld [vmem:[%s1005 + $0x18] sm:$0xff]
    %v4934 = vld [vmem:[%s1005 + $0x20] sm:$0xff]
    %v4935 = vld [vmem:[%s1005 + $0x28] sm:$0xff]
    %v4936 = vld [vmem:[%s1005 + $0x30] sm:$0xff]
    %v4937 = vld [vmem:[%s1005 + $0x38] sm:$0xff]
    %4938 = vmatprep.subr.bf16.mxu0 %v4595
    %4939 = vmatpush1.bf16.msra.mxu0 %v4594
    %4940 = vmatprep.subr.bf16.mxu0 %v4599
    %4941 = vmatpush1.bf16.msra.mxu0 %v4598
    %4942 = vmatprep.subr.bf16.mxu0 %v4603
    %4943 = vmatpush1.bf16.msra.mxu0 %v4602
    %4944 = vmatprep.subr.bf16.mxu0 %v4607
    %4945 = vmatpush1.bf16.msra.mxu0 %v4606
    %4946 = vmatprep.subr.bf16.mxu0 %v4611
    %4947 = vmatpush1.bf16.msra.mxu0 %v4610
    %4948 = vmatprep.subr.bf16.mxu0 %v4615
    %4949 = vmatpush1.bf16.msra.mxu0 %v4614
    %4950 = vmatprep.subr.bf16.mxu0 %v4619
    %4951 = vmatpush1.bf16.msra.mxu0 %v4618
    %4952 = vmatprep.subr.bf16.mxu0 %v4623
    %4953 = vmatpush1.bf16.msra.mxu0 %v4622
    %4954 = vmatprep.subr.bf16.mxu0 0
    %4955 = vmatpush1.bf16.msra.mxu0 0
    %4956 = vmatprep.subr.bf16.mxu0 0
    %4957 = vmatpush1.bf16.msra.mxu0 0
    %4958 = vmatprep.subr.bf16.mxu0 0
    %4959 = vmatpush1.bf16.msra.mxu0 0
    %4960 = vmatprep.subr.bf16.mxu0 0
    %4961 = vmatpush1.bf16.msra.mxu0 0
    %4962 = vmatprep.subr.bf16.mxu0 0
    %4963 = vmatpush1.bf16.msra.mxu0 0
    %4964 = vmatprep.subr.bf16.mxu0 0
    %4965 = vmatpush1.bf16.msra.mxu0 0
    %4966 = vmatprep.subr.bf16.mxu0 0
    %4967 = vmatpush1.bf16.msra.mxu0 0
    %4968 = vmatprep.subr.bf16.mxu0 0
    %4969 = vmatpush1.bf16.msra.mxu0 0
    %4970 = vmatprep.mubr.bf16.mxu0 0
    %4971 = vmatmul.mubr.bf16.gmra.mrb[0].mxu0 %v4928
    %v4972 = vpop.f32.mrb[0].mxu0
    %v4973 = vadd.f32 0.0, %v4972
    %v4974 = vpop.f32.mrb[0].mxu0
    %v4975 = vadd.f32 0.0, %v4974
    %v4976 = vpop.f32.mrb[0].mxu0
    %v4977 = vadd.f32 0.0, %v4976
    %v4978 = vpop.f32.mrb[0].mxu0
    %v4979 = vadd.f32 0.0, %v4978
    %4980 = vdwg.mxu0
    %4981 = vmatprep.subr.bf16.mxu0 %v4597
    %4982 = vmatpush1.bf16.msra.mxu0 %v4596
    %4983 = vmatprep.subr.bf16.mxu0 %v4601
    %4984 = vmatpush1.bf16.msra.mxu0 %v4600
    %4985 = vmatprep.subr.bf16.mxu0 %v4605
    %4986 = vmatpush1.bf16.msra.mxu0 %v4604
    %4987 = vmatprep.subr.bf16.mxu0 %v4609
    %4988 = vmatpush1.bf16.msra.mxu0 %v4608
    %4989 = vmatprep.subr.bf16.mxu0 %v4613
    %4990 = vmatpush1.bf16.msra.mxu0 %v4612
    %4991 = vmatprep.subr.bf16.mxu0 %v4617
    %4992 = vmatpush1.bf16.msra.mxu0 %v4616
    %4993 = vmatprep.subr.bf16.mxu0 %v4621
    %4994 = vmatpush1.bf16.msra.mxu0 %v4620
    %4995 = vmatprep.subr.bf16.mxu0 %v4625
    %4996 = vmatpush1.bf16.msra.mxu0 %v4624
    %4997 = vmatprep.subr.bf16.mxu0 0
    %4998 = vmatpush1.bf16.msra.mxu0 0
    %4999 = vmatprep.subr.bf16.mxu0 0
    %5000 = vmatpush1.bf16.msra.mxu0 0
    %5001 = vmatprep.subr.bf16.mxu0 0
    %5002 = vmatpush1.bf16.msra.mxu0 0
    %5003 = vmatprep.subr.bf16.mxu0 0
    %5004 = vmatpush1.bf16.msra.mxu0 0
    %5005 = vmatprep.subr.bf16.mxu0 0
    %5006 = vmatpush1.bf16.msra.mxu0 0
    %5007 = vmatprep.subr.bf16.mxu0 0
    %5008 = vmatpush1.bf16.msra.mxu0 0
    %5009 = vmatprep.subr.bf16.mxu0 0
    %5010 = vmatpush1.bf16.msra.mxu0 0
    %5011 = vmatprep.subr.bf16.mxu0 0
    %5012 = vmatpush1.bf16.msra.mxu0 0
    %5013 = vmatprep.mubr.bf16.mxu0 0
    %5014 = vmatmul.mubr.bf16.gmra.mrb[0].mxu0 %v4928
    %v5015 = vpop.f32.mrb[0].mxu0
    %v5016 = vadd.f32 0.0, %v5015
    %v5017 = vpop.f32.mrb[0].mxu0
    %v5018 = vadd.f32 0.0, %v5017
    %v5019 = vpop.f32.mrb[0].mxu0
    %v5020 = vadd.f32 0.0, %v5019
    %v5021 = vpop.f32.mrb[0].mxu0
    %v5022 = vadd.f32 0.0, %v5021
    %5023 = vdwg.mxu0
    %v5024 = vadd.f32 %v4930, %v4973
    %v5025 = vadd.f32 %v4931, %v4975
    %v5026 = vadd.f32 %v4932, %v5016
    %v5027 = vadd.f32 %v4933, %v5018
    %v5028 = vadd.f32 %v4934, %v4977
    %v5029 = vadd.f32 %v4935, %v4979
    %v5030 = vadd.f32 %v4936, %v5020
    %v5031 = vadd.f32 %v4937, %v5022
    %v5032 = vmul.f32 %v5024, 0.5
    %v5033 = vmul.f32 %v5028, 0.5
    %v5034 = vtanh.pop %v5032
    %v5035 = vtanh.pop %v5033
    %v5036 = vmul.f32 %v5034, 0.5
    %v5037 = vmul.f32 %v5035, 0.5
    %v5038 = vadd.f32 %v5036, 0.5
    %v5039 = vadd.f32 %v5037, 0.5
    %v5040 = vmul.f32 %v5025, 0.5
    %v5041 = vmul.f32 %v5029, 0.5
    %v5042 = vtanh.pop %v5040
    %v5043 = vtanh.pop %v5041
    %v5044 = vmul.f32 %v5042, 0.5
    %v5045 = vmul.f32 %v5043, 0.5
    %v5046 = vadd.f32 %v5044, 0.5
    %v5047 = vadd.f32 %v5045, 0.5
    %v5048 = vtanh.pop %v5026
    %v5049 = vtanh.pop %v5030
    %v5050 = vmul.f32 %v5027, 0.5
    %v5051 = vmul.f32 %v5031, 0.5
    %v5052 = vtanh.pop %v5050
    %v5053 = vtanh.pop %v5051
    %v5054 = vmul.f32 %v5052, 0.5
    %v5055 = vmul.f32 %v5053, 0.5
    %v5056 = vadd.f32 %v5054, 0.5
    %v5057 = vadd.f32 %v5055, 0.5
    %v5058 = vmul.f32 %v5046, %v4922
    %v5059 = vmul.f32 %v5047, %v4923
    %v5060 = vmul.f32 %v5038, %v5048
    %v5061 = vmul.f32 %v5039, %v5049
    %v5062 = vadd.f32 %v5058, %v5060
    %v5063 = vadd.f32 %v5059, %v5061
    %v5064 = vtanh.pop %v5062
    %v5065 = vtanh.pop %v5063
    %v5066 = vmul.f32 %v5056, %v5064
    %v5067 = vmul.f32 %v5057, %v5065
    %v5068 = vpack.c.bf16 %v5067, %v5066
    %5069 = vst [vmem:[%s1628] sm:$0xff] %v5068
    %v5070 = vld [vmem:[%s1022] sm:$0xff]
    %v5071 = vld [vmem:[%s1022 + $0x8] sm:$0xff]
    %v5072 = vld [vmem:[%s1022 + $0x10] sm:$0xff]
    %v5073 = vld [vmem:[%s1022 + $0x18] sm:$0xff]
    %v5074 = vld [vmem:[%s1022 + $0x20] sm:$0xff]
    %v5075 = vld [vmem:[%s1022 + $0x28] sm:$0xff]
    %v5076 = vld [vmem:[%s1022 + $0x30] sm:$0xff]
    %v5077 = vld [vmem:[%s1022 + $0x38] sm:$0xff]
    %5078 = vmatprep.subr.bf16.mxu0 %v4595
    %5079 = vmatpush1.bf16.msra.mxu0 %v4594
    %5080 = vmatprep.subr.bf16.mxu0 %v4599
    %5081 = vmatpush1.bf16.msra.mxu0 %v4598
    %5082 = vmatprep.subr.bf16.mxu0 %v4603
    %5083 = vmatpush1.bf16.msra.mxu0 %v4602
    %5084 = vmatprep.subr.bf16.mxu0 %v4607
    %5085 = vmatpush1.bf16.msra.mxu0 %v4606
    %5086 = vmatprep.subr.bf16.mxu0 %v4611
    %5087 = vmatpush1.bf16.msra.mxu0 %v4610
    %5088 = vmatprep.subr.bf16.mxu0 %v4615
    %5089 = vmatpush1.bf16.msra.mxu0 %v4614
    %5090 = vmatprep.subr.bf16.mxu0 %v4619
    %5091 = vmatpush1.bf16.msra.mxu0 %v4618
    %5092 = vmatprep.subr.bf16.mxu0 %v4623
    %5093 = vmatpush1.bf16.msra.mxu0 %v4622
    %5094 = vmatprep.subr.bf16.mxu0 0
    %5095 = vmatpush1.bf16.msra.mxu0 0
    %5096 = vmatprep.subr.bf16.mxu0 0
    %5097 = vmatpush1.bf16.msra.mxu0 0
    %5098 = vmatprep.subr.bf16.mxu0 0
    %5099 = vmatpush1.bf16.msra.mxu0 0
    %5100 = vmatprep.subr.bf16.mxu0 0
    %5101 = vmatpush1.bf16.msra.mxu0 0
    %5102 = vmatprep.subr.bf16.mxu0 0
    %5103 = vmatpush1.bf16.msra.mxu0 0
    %5104 = vmatprep.subr.bf16.mxu0 0
    %5105 = vmatpush1.bf16.msra.mxu0 0
    %5106 = vmatprep.subr.bf16.mxu0 0
    %5107 = vmatpush1.bf16.msra.mxu0 0
    %5108 = vmatprep.subr.bf16.mxu0 0
    %5109 = vmatpush1.bf16.msra.mxu0 0
    %5110 = vmatprep.mubr.bf16.mxu0 0
    %5111 = vmatmul.mubr.bf16.gmra.mrb[0].mxu0 %v5068
    %v5112 = vpop.f32.mrb[0].mxu0
    %v5113 = vadd.f32 0.0, %v5112
    %v5114 = vpop.f32.mrb[0].mxu0
    %v5115 = vadd.f32 0.0, %v5114
    %v5116 = vpop.f32.mrb[0].mxu0
    %v5117 = vadd.f32 0.0, %v5116
    %v5118 = vpop.f32.mrb[0].mxu0
    %v5119 = vadd.f32 0.0, %v5118
    %5120 = vdwg.mxu0
    %5121 = vmatprep.subr.bf16.mxu0 %v4597
    %5122 = vmatpush1.bf16.msra.mxu0 %v4596
    %5123 = vmatprep.subr.bf16.mxu0 %v4601
    %5124 = vmatpush1.bf16.msra.mxu0 %v4600
    %5125 = vmatprep.subr.bf16.mxu0 %v4605
    %5126 = vmatpush1.bf16.msra.mxu0 %v4604
    %5127 = vmatprep.subr.bf16.mxu0 %v4609
    %5128 = vmatpush1.bf16.msra.mxu0 %v4608
    %5129 = vmatprep.subr.bf16.mxu0 %v4613
    %5130 = vmatpush1.bf16.msra.mxu0 %v4612
    %5131 = vmatprep.subr.bf16.mxu0 %v4617
    %5132 = vmatpush1.bf16.msra.mxu0 %v4616
    %5133 = vmatprep.subr.bf16.mxu0 %v4621
    %5134 = vmatpush1.bf16.msra.mxu0 %v4620
    %5135 = vmatprep.subr.bf16.mxu0 %v4625
    %5136 = vmatpush1.bf16.msra.mxu0 %v4624
    %5137 = vmatprep.subr.bf16.mxu0 0
    %5138 = vmatpush1.bf16.msra.mxu0 0
    %5139 = vmatprep.subr.bf16.mxu0 0
    %5140 = vmatpush1.bf16.msra.mxu0 0
    %5141 = vmatprep.subr.bf16.mxu0 0
    %5142 = vmatpush1.bf16.msra.mxu0 0
    %5143 = vmatprep.subr.bf16.mxu0 0
    %5144 = vmatpush1.bf16.msra.mxu0 0
    %5145 = vmatprep.subr.bf16.mxu0 0
    %5146 = vmatpush1.bf16.msra.mxu0 0
    %5147 = vmatprep.subr.bf16.mxu0 0
    %5148 = vmatpush1.bf16.msra.mxu0 0
    %5149 = vmatprep.subr.bf16.mxu0 0
    %5150 = vmatpush1.bf16.msra.mxu0 0
    %5151 = vmatprep.subr.bf16.mxu0 0
    %5152 = vmatpush1.bf16.msra.mxu0 0
    %5153 = vmatprep.mubr.bf16.mxu0 0
    %5154 = vmatmul.mubr.bf16.gmra.mrb[0].mxu0 %v5068
    %v5155 = vpop.f32.mrb[0].mxu0
    %v5156 = vadd.f32 0.0, %v5155
    %v5157 = vpop.f32.mrb[0].mxu0
    %v5158 = vadd.f32 0.0, %v5157
    %v5159 = vpop.f32.mrb[0].mxu0
    %v5160 = vadd.f32 0.0, %v5159
    %v5161 = vpop.f32.mrb[0].mxu0
    %v5162 = vadd.f32 0.0, %v5161
    %5163 = vdwg.mxu0
    %v5164 = vadd.f32 %v5070, %v5113
    %v5165 = vadd.f32 %v5071, %v5115
    %v5166 = vadd.f32 %v5072, %v5156
    %v5167 = vadd.f32 %v5073, %v5158
    %v5168 = vadd.f32 %v5074, %v5117
    %v5169 = vadd.f32 %v5075, %v5119
    %v5170 = vadd.f32 %v5076, %v5160
    %v5171 = vadd.f32 %v5077, %v5162
    %v5172 = vmul.f32 %v5164, 0.5
    %v5173 = vmul.f32 %v5168, 0.5
    %v5174 = vtanh.pop %v5172
    %v5175 = vtanh.pop %v5173
    %v5176 = vmul.f32 %v5174, 0.5
    %v5177 = vmul.f32 %v5175, 0.5
    %v5178 = vadd.f32 %v5176, 0.5
    %v5179 = vadd.f32 %v5177, 0.5
    %v5180 = vmul.f32 %v5165, 0.5
    %v5181 = vmul.f32 %v5169, 0.5
    %v5182 = vtanh.pop %v5180
    %v5183 = vtanh.pop %v5181
    %v5184 = vmul.f32 %v5182, 0.5
    %v5185 = vmul.f32 %v5183, 0.5
    %v5186 = vadd.f32 %v5184, 0.5
    %v5187 = vadd.f32 %v5185, 0.5
    %v5188 = vtanh.pop %v5166
    %v5189 = vtanh.pop %v5170
    %v5190 = vmul.f32 %v5167, 0.5
    %v5191 = vmul.f32 %v5171, 0.5
    %v5192 = vtanh.pop %v5190
    %v5193 = vtanh.pop %v5191
    %v5194 = vmul.f32 %v5192, 0.5
    %v5195 = vmul.f32 %v5193, 0.5
    %v5196 = vadd.f32 %v5194, 0.5
    %v5197 = vadd.f32 %v5195, 0.5
    %v5198 = vmul.f32 %v5186, %v5062
    %v5199 = vmul.f32 %v5187, %v5063
    %v5200 = vmul.f32 %v5178, %v5188
    %v5201 = vmul.f32 %v5179, %v5189
    %v5202 = vadd.f32 %v5198, %v5200
    %v5203 = vadd.f32 %v5199, %v5201
    %v5204 = vtanh.pop %v5202
    %v5205 = vtanh.pop %v5203
    %v5206 = vmul.f32 %v5196, %v5204
    %v5207 = vmul.f32 %v5197, %v5205
    %v5208 = vpack.c.bf16 %v5207, %v5206
    %5209 = vst [vmem:[%s1769] sm:$0xff] %v5208
    %v5210 = vld [vmem:[%s1039] sm:$0xff]
    %v5211 = vld [vmem:[%s1039 + $0x8] sm:$0xff]
    %v5212 = vld [vmem:[%s1039 + $0x10] sm:$0xff]
    %v5213 = vld [vmem:[%s1039 + $0x18] sm:$0xff]
    %v5214 = vld [vmem:[%s1039 + $0x20] sm:$0xff]
    %v5215 = vld [vmem:[%s1039 + $0x28] sm:$0xff]
    %v5216 = vld [vmem:[%s1039 + $0x30] sm:$0xff]
    %v5217 = vld [vmem:[%s1039 + $0x38] sm:$0xff]
    %5218 = vmatprep.subr.bf16.mxu0 %v4595
    %5219 = vmatpush1.bf16.msra.mxu0 %v4594
    %5220 = vmatprep.subr.bf16.mxu0 %v4599
    %5221 = vmatpush1.bf16.msra.mxu0 %v4598
    %5222 = vmatprep.subr.bf16.mxu0 %v4603
    %5223 = vmatpush1.bf16.msra.mxu0 %v4602
    %5224 = vmatprep.subr.bf16.mxu0 %v4607
    %5225 = vmatpush1.bf16.msra.mxu0 %v4606
    %5226 = vmatprep.subr.bf16.mxu0 %v4611
    %5227 = vmatpush1.bf16.msra.mxu0 %v4610
    %5228 = vmatprep.subr.bf16.mxu0 %v4615
    %5229 = vmatpush1.bf16.msra.mxu0 %v4614
    %5230 = vmatprep.subr.bf16.mxu0 %v4619
    %5231 = vmatpush1.bf16.msra.mxu0 %v4618
    %5232 = vmatprep.subr.bf16.mxu0 %v4623
    %5233 = vmatpush1.bf16.msra.mxu0 %v4622
    %5234 = vmatprep.subr.bf16.mxu0 0
    %5235 = vmatpush1.bf16.msra.mxu0 0
    %5236 = vmatprep.subr.bf16.mxu0 0
    %5237 = vmatpush1.bf16.msra.mxu0 0
    %5238 = vmatprep.subr.bf16.mxu0 0
    %5239 = vmatpush1.bf16.msra.mxu0 0
    %5240 = vmatprep.subr.bf16.mxu0 0
    %5241 = vmatpush1.bf16.msra.mxu0 0
    %5242 = vmatprep.subr.bf16.mxu0 0
    %5243 = vmatpush1.bf16.msra.mxu0 0
    %5244 = vmatprep.subr.bf16.mxu0 0
    %5245 = vmatpush1.bf16.msra.mxu0 0
    %5246 = vmatprep.subr.bf16.mxu0 0
    %5247 = vmatpush1.bf16.msra.mxu0 0
    %5248 = vmatprep.subr.bf16.mxu0 0
    %5249 = vmatpush1.bf16.msra.mxu0 0
    %5250 = vmatprep.mubr.bf16.mxu0 0
    %5251 = vmatmul.mubr.bf16.gmra.mrb[0].mxu0 %v5208
    %v5252 = vpop.f32.mrb[0].mxu0
    %v5253 = vadd.f32 0.0, %v5252
    %v5254 = vpop.f32.mrb[0].mxu0
    %v5255 = vadd.f32 0.0, %v5254
    %v5256 = vpop.f32.mrb[0].mxu0
    %v5257 = vadd.f32 0.0, %v5256
    %v5258 = vpop.f32.mrb[0].mxu0
    %v5259 = vadd.f32 0.0, %v5258
    %5260 = vdwg.mxu0
    %5261 = vmatprep.subr.bf16.mxu0 %v4597
    %5262 = vmatpush1.bf16.msra.mxu0 %v4596
    %5263 = vmatprep.subr.bf16.mxu0 %v4601
    %5264 = vmatpush1.bf16.msra.mxu0 %v4600
    %5265 = vmatprep.subr.bf16.mxu0 %v4605
    %5266 = vmatpush1.bf16.msra.mxu0 %v4604
    %5267 = vmatprep.subr.bf16.mxu0 %v4609
    %5268 = vmatpush1.bf16.msra.mxu0 %v4608
    %5269 = vmatprep.subr.bf16.mxu0 %v4613
    %5270 = vmatpush1.bf16.msra.mxu0 %v4612
    %5271 = vmatprep.subr.bf16.mxu0 %v4617
    %5272 = vmatpush1.bf16.msra.mxu0 %v4616
    %5273 = vmatprep.subr.bf16.mxu0 %v4621
    %5274 = vmatpush1.bf16.msra.mxu0 %v4620
    %5275 = vmatprep.subr.bf16.mxu0 %v4625
    %5276 = vmatpush1.bf16.msra.mxu0 %v4624
    %5277 = vmatprep.subr.bf16.mxu0 0
    %5278 = vmatpush1.bf16.msra.mxu0 0
    %5279 = vmatprep.subr.bf16.mxu0 0
    %5280 = vmatpush1.bf16.msra.mxu0 0
    %5281 = vmatprep.subr.bf16.mxu0 0
    %5282 = vmatpush1.bf16.msra.mxu0 0
    %5283 = vmatprep.subr.bf16.mxu0 0
    %5284 = vmatpush1.bf16.msra.mxu0 0
    %5285 = vmatprep.subr.bf16.mxu0 0
    %5286 = vmatpush1.bf16.msra.mxu0 0
    %5287 = vmatprep.subr.bf16.mxu0 0
    %5288 = vmatpush1.bf16.msra.mxu0 0
    %5289 = vmatprep.subr.bf16.mxu0 0
    %5290 = vmatpush1.bf16.msra.mxu0 0
    %5291 = vmatprep.subr.bf16.mxu0 0
    %5292 = vmatpush1.bf16.msra.mxu0 0
    %5293 = vmatprep.mubr.bf16.mxu0 0
    %5294 = vmatmul.mubr.bf16.gmra.mrb[0].mxu0 %v5208
    %v5295 = vpop.f32.mrb[0].mxu0
    %v5296 = vadd.f32 0.0, %v5295
    %v5297 = vpop.f32.mrb[0].mxu0
    %v5298 = vadd.f32 0.0, %v5297
    %v5299 = vpop.f32.mrb[0].mxu0
    %v5300 = vadd.f32 0.0, %v5299
    %v5301 = vpop.f32.mrb[0].mxu0
    %v5302 = vadd.f32 0.0, %v5301
    %5303 = vdwg.mxu0
    %v5304 = vadd.f32 %v5210, %v5253
    %v5305 = vadd.f32 %v5211, %v5255
    %v5306 = vadd.f32 %v5212, %v5296
    %v5307 = vadd.f32 %v5213, %v5298
    %v5308 = vadd.f32 %v5214, %v5257
    %v5309 = vadd.f32 %v5215, %v5259
    %v5310 = vadd.f32 %v5216, %v5300
    %v5311 = vadd.f32 %v5217, %v5302
    %v5312 = vmul.f32 %v5304, 0.5
    %v5313 = vmul.f32 %v5308, 0.5
    %v5314 = vtanh.pop %v5312
    %v5315 = vtanh.pop %v5313
    %v5316 = vmul.f32 %v5314, 0.5
    %v5317 = vmul.f32 %v5315, 0.5
    %v5318 = vadd.f32 %v5316, 0.5
    %v5319 = vadd.f32 %v5317, 0.5
    %v5320 = vmul.f32 %v5305, 0.5
    %v5321 = vmul.f32 %v5309, 0.5
    %v5322 = vtanh.pop %v5320
    %v5323 = vtanh.pop %v5321
    %v5324 = vmul.f32 %v5322, 0.5
    %v5325 = vmul.f32 %v5323, 0.5
    %v5326 = vadd.f32 %v5324, 0.5
    %v5327 = vadd.f32 %v5325, 0.5
    %v5328 = vtanh.pop %v5306
    %v5329 = vtanh.pop %v5310
    %v5330 = vmul.f32 %v5307, 0.5
    %v5331 = vmul.f32 %v5311, 0.5
    %v5332 = vtanh.pop %v5330
    %v5333 = vtanh.pop %v5331
    %v5334 = vmul.f32 %v5332, 0.5
    %v5335 = vmul.f32 %v5333, 0.5
    %v5336 = vadd.f32 %v5334, 0.5
    %v5337 = vadd.f32 %v5335, 0.5
    %v5338 = vmul.f32 %v5326, %v5202
    %v5339 = vmul.f32 %v5327, %v5203
    %v5340 = vmul.f32 %v5318, %v5328
    %v5341 = vmul.f32 %v5319, %v5329
    %v5342 = vadd.f32 %v5338, %v5340
    %v5343 = vadd.f32 %v5339, %v5341
    %v5344 = vtanh.pop %v5342
    %v5345 = vtanh.pop %v5343
    %v5346 = vmul.f32 %v5336, %v5344
    %v5347 = vmul.f32 %v5337, %v5345
    %v5348 = vpack.c.bf16 %v5347, %v5346
    %5349 = vst [vmem:[%s1910] sm:$0xff] %v5348
    %v5350 = vld [vmem:[%s1910] sm:$0xff]
    %v5351 = vld [vmem:[#allocation2] sm:$0xff]
    %v5352 = vld [vmem:[#allocation8] sm:$0xff]
    %v5353 = vld [vmem:[#allocation8 + $0x8] sm:$0xff]
    %v5354 = vld [vmem:[#allocation8 + $0x10] sm:$0xff]
    %v5355 = vld [vmem:[#allocation8 + $0x18] sm:$0xff]
    %v5356 = vld [vmem:[#allocation8 + $0x20] sm:$0xff]
    %v5357 = vld [vmem:[#allocation8 + $0x28] sm:$0xff]
    %v5358 = vld [vmem:[#allocation8 + $0x30] sm:$0xff]
    %v5359 = vld [vmem:[#allocation8 + $0x38] sm:$0xff]
    %v5360 = vld [vmem:[#allocation8 + $0x40] sm:$0xff]
    %v5361 = vld [vmem:[#allocation8 + $0x48] sm:$0xff]
    %v5362 = vld [vmem:[#allocation8 + $0x50] sm:$0xff]
    %v5363 = vld [vmem:[#allocation8 + $0x58] sm:$0xff]
    %v5364 = vld [vmem:[#allocation8 + $0x60] sm:$0xff]
    %v5365 = vld [vmem:[#allocation8 + $0x68] sm:$0xff]
    %v5366 = vld [vmem:[#allocation8 + $0x70] sm:$0xff]
    %v5367 = vld [vmem:[#allocation8 + $0x78] sm:$0xff]
    %s5368 = scalar_lea.vmem [#allocation8], 128
    %v5369 = vld [vmem:[%s5368] sm:$0xff]
    %v5370 = vld [vmem:[%s5368 + $0x8] sm:$0xff]
    %v5371 = vld [vmem:[%s5368 + $0x10] sm:$0xff]
    %v5372 = vld [vmem:[%s5368 + $0x18] sm:$0xff]
    %v5373 = vld [vmem:[%s5368 + $0x20] sm:$0xff]
    %v5374 = vld [vmem:[%s5368 + $0x28] sm:$0xff]
    %v5375 = vld [vmem:[%s5368 + $0x30] sm:$0xff]
    %v5376 = vld [vmem:[%s5368 + $0x38] sm:$0xff]
    %v5377 = vld [vmem:[%s5368 + $0x40] sm:$0xff]
    %v5378 = vld [vmem:[%s5368 + $0x48] sm:$0xff]
    %v5379 = vld [vmem:[%s5368 + $0x50] sm:$0xff]
    %v5380 = vld [vmem:[%s5368 + $0x58] sm:$0xff]
    %v5381 = vld [vmem:[%s5368 + $0x60] sm:$0xff]
    %v5382 = vld [vmem:[%s5368 + $0x68] sm:$0xff]
    %v5383 = vld [vmem:[%s5368 + $0x70] sm:$0xff]
    %v5384 = vld [vmem:[%s5368 + $0x78] sm:$0xff]
    %v5401 = vunpack.c.l.b16 %v5369
    %v5402 = vunpack.c.h.b16 %v5369
    %v5403 = vunpack.c.l.b16 %v5370
    %v5404 = vunpack.c.h.b16 %v5370
    %v5405 = vunpack.c.l.b16 %v5371
    %v5406 = vunpack.c.h.b16 %v5371
    %v5407 = vunpack.c.l.b16 %v5372
    %v5408 = vunpack.c.h.b16 %v5372
    %v5409 = vunpack.c.l.b16 %v5373
    %v5410 = vunpack.c.h.b16 %v5373
    %v5411 = vunpack.c.l.b16 %v5374
    %v5412 = vunpack.c.h.b16 %v5374
    %v5413 = vunpack.c.l.b16 %v5375
    %v5414 = vunpack.c.h.b16 %v5375
    %v5415 = vunpack.c.l.b16 %v5376
    %v5416 = vunpack.c.h.b16 %v5376
    %v5417 = vunpack.c.l.b16 %v5377
    %v5418 = vunpack.c.h.b16 %v5377
    %v5419 = vunpack.c.l.b16 %v5378
    %v5420 = vunpack.c.h.b16 %v5378
    %v5421 = vunpack.c.l.b16 %v5379
    %v5422 = vunpack.c.h.b16 %v5379
    %v5423 = vunpack.c.l.b16 %v5380
    %v5424 = vunpack.c.h.b16 %v5380
    %v5425 = vunpack.c.l.b16 %v5381
    %v5426 = vunpack.c.h.b16 %v5381
    %v5427 = vunpack.c.l.b16 %v5382
    %v5428 = vunpack.c.h.b16 %v5382
    %v5429 = vunpack.c.l.b16 %v5383
    %v5430 = vunpack.c.h.b16 %v5383
    %v5431 = vunpack.c.l.b16 %v5384
    %v5432 = vunpack.c.h.b16 %v5384
    %v5433 = vpack.c.b16 %v5403, %v5401
    %v5434 = vpack.c.b16 %v5404, %v5402
    %v5435 = vpack.c.b16 %v5407, %v5405
    %v5436 = vpack.c.b16 %v5408, %v5406
    %v5437 = vpack.c.b16 %v5411, %v5409
    %v5438 = vpack.c.b16 %v5412, %v5410
    %v5439 = vpack.c.b16 %v5415, %v5413
    %v5440 = vpack.c.b16 %v5416, %v5414
    %v5441 = vpack.c.b16 %v5419, %v5417
    %v5442 = vpack.c.b16 %v5420, %v5418
    %v5443 = vpack.c.b16 %v5423, %v5421
    %v5444 = vpack.c.b16 %v5424, %v5422
    %v5445 = vpack.c.b16 %v5427, %v5425
    %v5446 = vpack.c.b16 %v5428, %v5426
    %v5447 = vpack.c.b16 %v5431, %v5429
    %v5448 = vpack.c.b16 %v5432, %v5430
    %5465 = vmatprep.subr.bf16.mxu0 %v5434
    %5466 = vmatpush1.bf16.msra.mxu0 %v5433
    %5467 = vmatprep.subr.bf16.mxu0 %v5436
    %5468 = vmatpush1.bf16.msra.mxu0 %v5435
    %5469 = vmatprep.subr.bf16.mxu0 %v5438
    %5470 = vmatpush1.bf16.msra.mxu0 %v5437
    %5471 = vmatprep.subr.bf16.mxu0 %v5440
    %5472 = vmatpush1.bf16.msra.mxu0 %v5439
    %5473 = vmatprep.subr.bf16.mxu0 %v5442
    %5474 = vmatpush1.bf16.msra.mxu0 %v5441
    %5475 = vmatprep.subr.bf16.mxu0 %v5444
    %5476 = vmatpush1.bf16.msra.mxu0 %v5443
    %5477 = vmatprep.subr.bf16.mxu0 %v5446
    %5478 = vmatpush1.bf16.msra.mxu0 %v5445
    %5479 = vmatprep.subr.bf16.mxu0 %v5448
    %5480 = vmatpush1.bf16.msra.mxu0 %v5447
    %5481 = vmatprep.subr.bf16.mxu0 0
    %5482 = vmatpush1.bf16.msra.mxu0 0
    %5483 = vmatprep.subr.bf16.mxu0 0
    %5484 = vmatpush1.bf16.msra.mxu0 0
    %5485 = vmatprep.subr.bf16.mxu0 0
    %5486 = vmatpush1.bf16.msra.mxu0 0
    %5487 = vmatprep.subr.bf16.mxu0 0
    %5488 = vmatpush1.bf16.msra.mxu0 0
    %5489 = vmatprep.subr.bf16.mxu0 0
    %5490 = vmatpush1.bf16.msra.mxu0 0
    %5491 = vmatprep.subr.bf16.mxu0 0
    %5492 = vmatpush1.bf16.msra.mxu0 0
    %5493 = vmatprep.subr.bf16.mxu0 0
    %5494 = vmatpush1.bf16.msra.mxu0 0
    %5495 = vmatprep.subr.bf16.mxu0 0
    %5496 = vmatpush1.bf16.msra.mxu0 0
    %5497 = vmatprep.mubr.bf16.mxu0 0
    %5498 = vmatmul.mubr.bf16.gmra.mrb[0].mxu0 %v5351
    %v5499 = vpop.f32.mrb[0].mxu0
    %v5500 = vadd.f32 0.0, %v5499
    %v5501 = vpop.f32.mrb[0].mxu0
    %v5502 = vadd.f32 0.0, %v5501
    %v5503 = vpop.f32.mrb[0].mxu0
    %v5504 = vadd.f32 0.0, %v5503
    %v5505 = vpop.f32.mrb[0].mxu0
    %v5506 = vadd.f32 0.0, %v5505
    %5507 = vdwg.mxu0
    %v5524 = vunpack.c.l.b16 %v5352
    %v5525 = vunpack.c.h.b16 %v5352
    %v5526 = vunpack.c.l.b16 %v5353
    %v5527 = vunpack.c.h.b16 %v5353
    %v5528 = vunpack.c.l.b16 %v5354
    %v5529 = vunpack.c.h.b16 %v5354
    %v5530 = vunpack.c.l.b16 %v5355
    %v5531 = vunpack.c.h.b16 %v5355
    %v5532 = vunpack.c.l.b16 %v5356
    %v5533 = vunpack.c.h.b16 %v5356
    %v5534 = vunpack.c.l.b16 %v5357
    %v5535 = vunpack.c.h.b16 %v5357
    %v5536 = vunpack.c.l.b16 %v5358
    %v5537 = vunpack.c.h.b16 %v5358
    %v5538 = vunpack.c.l.b16 %v5359
    %v5539 = vunpack.c.h.b16 %v5359
    %v5540 = vunpack.c.l.b16 %v5360
    %v5541 = vunpack.c.h.b16 %v5360
    %v5542 = vunpack.c.l.b16 %v5361
    %v5543 = vunpack.c.h.b16 %v5361
    %v5544 = vunpack.c.l.b16 %v5362
    %v5545 = vunpack.c.h.b16 %v5362
    %v5546 = vunpack.c.l.b16 %v5363
    %v5547 = vunpack.c.h.b16 %v5363
    %v5548 = vunpack.c.l.b16 %v5364
    %v5549 = vunpack.c.h.b16 %v5364
    %v5550 = vunpack.c.l.b16 %v5365
    %v5551 = vunpack.c.h.b16 %v5365
    %v5552 = vunpack.c.l.b16 %v5366
    %v5553 = vunpack.c.h.b16 %v5366
    %v5554 = vunpack.c.l.b16 %v5367
    %v5555 = vunpack.c.h.b16 %v5367
    %v5556 = vpack.c.b16 %v5526, %v5524
    %v5557 = vpack.c.b16 %v5527, %v5525
    %v5558 = vpack.c.b16 %v5530, %v5528
    %v5559 = vpack.c.b16 %v5531, %v5529
    %v5560 = vpack.c.b16 %v5534, %v5532
    %v5561 = vpack.c.b16 %v5535, %v5533
    %v5562 = vpack.c.b16 %v5538, %v5536
    %v5563 = vpack.c.b16 %v5539, %v5537
    %v5564 = vpack.c.b16 %v5542, %v5540
    %v5565 = vpack.c.b16 %v5543, %v5541
    %v5566 = vpack.c.b16 %v5546, %v5544
    %v5567 = vpack.c.b16 %v5547, %v5545
    %v5568 = vpack.c.b16 %v5550, %v5548
    %v5569 = vpack.c.b16 %v5551, %v5549
    %v5570 = vpack.c.b16 %v5554, %v5552
    %v5571 = vpack.c.b16 %v5555, %v5553
    %5588 = vmatprep.subr.bf16.mxu0 %v5557
    %5589 = vmatpush1.bf16.msra.mxu0 %v5556
    %5590 = vmatprep.subr.bf16.mxu0 %v5559
    %5591 = vmatpush1.bf16.msra.mxu0 %v5558
    %5592 = vmatprep.subr.bf16.mxu0 %v5561
    %5593 = vmatpush1.bf16.msra.mxu0 %v5560
    %5594 = vmatprep.subr.bf16.mxu0 %v5563
    %5595 = vmatpush1.bf16.msra.mxu0 %v5562
    %5596 = vmatprep.subr.bf16.mxu0 %v5565
    %5597 = vmatpush1.bf16.msra.mxu0 %v5564
    %5598 = vmatprep.subr.bf16.mxu0 %v5567
    %5599 = vmatpush1.bf16.msra.mxu0 %v5566
    %5600 = vmatprep.subr.bf16.mxu0 %v5569
    %5601 = vmatpush1.bf16.msra.mxu0 %v5568
    %5602 = vmatprep.subr.bf16.mxu0 %v5571
    %5603 = vmatpush1.bf16.msra.mxu0 %v5570
    %5604 = vmatprep.subr.bf16.mxu0 0
    %5605 = vmatpush1.bf16.msra.mxu0 0
    %5606 = vmatprep.subr.bf16.mxu0 0
    %5607 = vmatpush1.bf16.msra.mxu0 0
    %5608 = vmatprep.subr.bf16.mxu0 0
    %5609 = vmatpush1.bf16.msra.mxu0 0
    %5610 = vmatprep.subr.bf16.mxu0 0
    %5611 = vmatpush1.bf16.msra.mxu0 0
    %5612 = vmatprep.subr.bf16.mxu0 0
    %5613 = vmatpush1.bf16.msra.mxu0 0
    %5614 = vmatprep.subr.bf16.mxu0 0
    %5615 = vmatpush1.bf16.msra.mxu0 0
    %5616 = vmatprep.subr.bf16.mxu0 0
    %5617 = vmatpush1.bf16.msra.mxu0 0
    %5618 = vmatprep.subr.bf16.mxu0 0
    %5619 = vmatpush1.bf16.msra.mxu0 0
    %5620 = vmatprep.mubr.bf16.mxu0 0
    %5621 = vmatmul.mubr.bf16.gmra.mrb[0].mxu0 %v5350
    %v5622 = vpop.f32.mrb[0].mxu0
    %v5623 = vadd.f32 %v5500, %v5622
    %v5624 = vpop.f32.mrb[0].mxu0
    %v5625 = vadd.f32 %v5502, %v5624
    %v5626 = vpop.f32.mrb[0].mxu0
    %v5627 = vadd.f32 %v5504, %v5626
    %v5628 = vpop.f32.mrb[0].mxu0
    %v5629 = vadd.f32 %v5506, %v5628
    %5630 = vdwg.mxu0
    %v5631 = vld [vmem:[#allocation9] sm:$0x3]
    %v5633 = vlaneseq
    %v5634 = vshrl.u32 %v5633, 7
    %v5635 = vsub.s32 0, %v5634
    %v5636 = vrot.slane %v5631, %v5635
    %v5637 = vlaneseq
    %v5638 = vshrl.u32 %v5637, 7
    %v5639 = vsub.s32 1, %v5638
    %v5640 = vrot.slane %v5631, %v5639
    %v5643 = vadd.f32 %v5623, %v5636
    %v5644 = vadd.f32 %v5625, %v5640
    %v5645 = vadd.f32 %v5627, %v5636
    %v5646 = vadd.f32 %v5629, %v5640
    %v5647 = vmul.f32 %v5643, 0.5
    %v5648 = vmul.f32 %v5644, 0.5
    %v5649 = vmul.f32 %v5645, 0.5
    %v5650 = vmul.f32 %v5646, 0.5
    %v5651 = vmul.f32 %v5643, 0.70710677
    %v5652 = vmul.f32 %v5644, 0.70710677
    %v5653 = vmul.f32 %v5645, 0.70710677
    %v5654 = vmul.f32 %v5646, 0.70710677
    %v5655 = verf.f32.pop %v5651
    %v5656 = verf.f32.pop %v5652
    %v5657 = verf.f32.pop %v5653
    %v5658 = verf.f32.pop %v5654
    %v5659 = vadd.f32 %v5655, 1.0
    %v5660 = vadd.f32 %v5656, 1.0
    %v5661 = vadd.f32 %v5657, 1.0
    %v5662 = vadd.f32 %v5658, 1.0
    %v5663 = vmul.f32 %v5647, %v5659
    %v5664 = vmul.f32 %v5648, %v5660
    %v5665 = vmul.f32 %v5649, %v5661
    %v5666 = vmul.f32 %v5650, %v5662
    %v5667 = vpack.c.bf16 %v5665, %v5663
    %v5668 = vpack.c.bf16 %v5666, %v5664
    %v5669 = vld [vmem:[#allocation11] sm:$0xf]
    %v5670 = vld [vmem:[#allocation11 + $0x4] sm:$0xf]
    %v5671 = vld [vmem:[#allocation11 + $0x8] sm:$0xf]
    %v5672 = vld [vmem:[#allocation11 + $0xc] sm:$0xf]
    %v5673 = vld [vmem:[#allocation11 + $0x10] sm:$0xf]
    %v5674 = vld [vmem:[#allocation11 + $0x14] sm:$0xf]
    %v5675 = vld [vmem:[#allocation11 + $0x18] sm:$0xf]
    %v5676 = vld [vmem:[#allocation11 + $0x1c] sm:$0xf]
    %v5677 = vld [vmem:[#allocation11 + $0x20] sm:$0xf]
    %v5678 = vld [vmem:[#allocation11 + $0x24] sm:$0xf]
    %v5679 = vld [vmem:[#allocation11 + $0x28] sm:$0xf]
    %v5680 = vld [vmem:[#allocation11 + $0x2c] sm:$0xf]
    %v5681 = vld [vmem:[#allocation11 + $0x30] sm:$0xf]
    %v5682 = vld [vmem:[#allocation11 + $0x34] sm:$0xf]
    %v5683 = vld [vmem:[#allocation11 + $0x38] sm:$0xf]
    %v5684 = vld [vmem:[#allocation11 + $0x3c] sm:$0xf]
    %v5685 = vld [vmem:[#allocation11 + $0x40] sm:$0xf]
    %v5686 = vld [vmem:[#allocation11 + $0x44] sm:$0xf]
    %v5687 = vld [vmem:[#allocation11 + $0x48] sm:$0xf]
    %v5688 = vld [vmem:[#allocation11 + $0x4c] sm:$0xf]
    %v5689 = vld [vmem:[#allocation11 + $0x50] sm:$0xf]
    %v5690 = vld [vmem:[#allocation11 + $0x54] sm:$0xf]
    %v5691 = vld [vmem:[#allocation11 + $0x58] sm:$0xf]
    %v5692 = vld [vmem:[#allocation11 + $0x5c] sm:$0xf]
    %v5693 = vld [vmem:[#allocation11 + $0x60] sm:$0xf]
    %v5694 = vld [vmem:[#allocation11 + $0x64] sm:$0xf]
    %v5695 = vld [vmem:[#allocation11 + $0x68] sm:$0xf]
    %v5696 = vld [vmem:[#allocation11 + $0x6c] sm:$0xf]
    %v5697 = vld [vmem:[#allocation11 + $0x70] sm:$0xf]
    %v5698 = vld [vmem:[#allocation11 + $0x74] sm:$0xf]
    %v5699 = vld [vmem:[#allocation11 + $0x78] sm:$0xf]
    %v5700 = vld [vmem:[#allocation11 + $0x7c] sm:$0xf]
    %v5701 = vld [vmem:[#allocation12] sm:$0x1]
    %v5703 = vlaneseq
    %v5704 = vshrl.u32 %v5703, 7
    %v5705 = vsub.s32 0, %v5704
    %v5706 = vrot.slane %v5701, %v5705
    %v5740 = vunpack.c.l.b16 %v5669
    %v5741 = vunpack.c.l.b16 %v5670
    %v5742 = vunpack.c.l.b16 %v5671
    %v5743 = vunpack.c.l.b16 %v5672
    %v5744 = vunpack.c.l.b16 %v5673
    %v5745 = vunpack.c.l.b16 %v5674
    %v5746 = vunpack.c.l.b16 %v5675
    %v5747 = vunpack.c.l.b16 %v5676
    %v5748 = vunpack.c.l.b16 %v5677
    %v5749 = vunpack.c.l.b16 %v5678
    %v5750 = vunpack.c.l.b16 %v5679
    %v5751 = vunpack.c.l.b16 %v5680
    %v5752 = vunpack.c.l.b16 %v5681
    %v5753 = vunpack.c.l.b16 %v5682
    %v5754 = vunpack.c.l.b16 %v5683
    %v5755 = vunpack.c.l.b16 %v5684
    %v5756 = vunpack.c.l.b16 %v5685
    %v5757 = vunpack.c.l.b16 %v5686
    %v5758 = vunpack.c.l.b16 %v5687
    %v5759 = vunpack.c.l.b16 %v5688
    %v5760 = vunpack.c.l.b16 %v5689
    %v5761 = vunpack.c.l.b16 %v5690
    %v5762 = vunpack.c.l.b16 %v5691
    %v5763 = vunpack.c.l.b16 %v5692
    %v5764 = vunpack.c.l.b16 %v5693
    %v5765 = vunpack.c.l.b16 %v5694
    %v5766 = vunpack.c.l.b16 %v5695
    %v5767 = vunpack.c.l.b16 %v5696
    %v5768 = vunpack.c.l.b16 %v5697
    %v5769 = vunpack.c.l.b16 %v5698
    %v5770 = vunpack.c.l.b16 %v5699
    %v5771 = vunpack.c.l.b16 %v5700
    %v5772 = vpack.c.b16 %v5741, %v5740
    %v5773 = vpack.c.b16 %v5743, %v5742
    %v5774 = vpack.c.b16 %v5745, %v5744
    %v5775 = vpack.c.b16 %v5747, %v5746
    %v5776 = vpack.c.b16 %v5749, %v5748
    %v5777 = vpack.c.b16 %v5751, %v5750
    %v5778 = vpack.c.b16 %v5753, %v5752
    %v5779 = vpack.c.b16 %v5755, %v5754
    %v5780 = vpack.c.b16 %v5757, %v5756
    %v5781 = vpack.c.b16 %v5759, %v5758
    %v5782 = vpack.c.b16 %v5761, %v5760
    %v5783 = vpack.c.b16 %v5763, %v5762
    %v5784 = vpack.c.b16 %v5765, %v5764
    %v5785 = vpack.c.b16 %v5767, %v5766
    %v5786 = vpack.c.b16 %v5769, %v5768
    %v5787 = vpack.c.b16 %v5771, %v5770
    %5804 = vmatprep.subr.bf16.mxu0 0
    %5805 = vmatpush1.bf16.msra.mxu0 %v5772
    %5806 = vmatprep.subr.bf16.mxu0 0
    %5807 = vmatpush1.bf16.msra.mxu0 %v5773
    %5808 = vmatprep.subr.bf16.mxu0 0
    %5809 = vmatpush1.bf16.msra.mxu0 %v5774
    %5810 = vmatprep.subr.bf16.mxu0 0
    %5811 = vmatpush1.bf16.msra.mxu0 %v5775
    %5812 = vmatprep.subr.bf16.mxu0 0
    %5813 = vmatpush1.bf16.msra.mxu0 %v5776
    %5814 = vmatprep.subr.bf16.mxu0 0
    %5815 = vmatpush1.bf16.msra.mxu0 %v5777
    %5816 = vmatprep.subr.bf16.mxu0 0
    %5817 = vmatpush1.bf16.msra.mxu0 %v5778
    %5818 = vmatprep.subr.bf16.mxu0 0
    %5819 = vmatpush1.bf16.msra.mxu0 %v5779
    %5820 = vmatprep.subr.bf16.mxu0 0
    %5821 = vmatpush1.bf16.msra.mxu0 %v5780
    %5822 = vmatprep.subr.bf16.mxu0 0
    %5823 = vmatpush1.bf16.msra.mxu0 %v5781
    %5824 = vmatprep.subr.bf16.mxu0 0
    %5825 = vmatpush1.bf16.msra.mxu0 %v5782
    %5826 = vmatprep.subr.bf16.mxu0 0
    %5827 = vmatpush1.bf16.msra.mxu0 %v5783
    %5828 = vmatprep.subr.bf16.mxu0 0
    %5829 = vmatpush1.bf16.msra.mxu0 %v5784
    %5830 = vmatprep.subr.bf16.mxu0 0
    %5831 = vmatpush1.bf16.msra.mxu0 %v5785
    %5832 = vmatprep.subr.bf16.mxu0 0
    %5833 = vmatpush1.bf16.msra.mxu0 %v5786
    %5834 = vmatprep.subr.bf16.mxu0 0
    %5835 = vmatpush1.bf16.msra.mxu0 %v5787
    %5836 = vmatprep.mubr.bf16.mxu0 %v5668
    %5837 = vmatmul.mubr.bf16.gmra.mrb[0].mxu0 %v5667
    %v5838 = vpop.f32.mrb[0].mxu0
    %v5839 = vadd.f32 %v5706, %v5838
    %v5840 = vpop.f32.mrb[0].mxu0
    %v5841 = vpop.f32.mrb[0].mxu0
    %v5842 = vadd.f32 %v5706, %v5841
    %v5843 = vpop.f32.mrb[0].mxu0
    %5844 = vdwg.mxu0
    %v5845 = vmul.f32 %v5839, 0.5
    %v5846 = vmul.f32 %v5842, 0.5
    %v5847 = vmul.f32 %v5839, 0.70710677
    %v5848 = vmul.f32 %v5842, 0.70710677
    %v5849 = verf.f32.pop %v5847
    %v5850 = verf.f32.pop %v5848
    %v5851 = vadd.f32 %v5849, 1.0
    %v5852 = vadd.f32 %v5850, 1.0
    %v5853 = vmul.f32 %v5845, %v5851
    %v5854 = vmul.f32 %v5846, %v5852
    %v5855 = vpack.c.bf16 %v5854, %v5853
    %v5856 = vld [vmem:[#allocation14] sm:$0xf]
    %v5857 = vld [vmem:[#allocation14 + $0x4] sm:$0xf]
    %v5858 = vld [vmem:[#allocation14 + $0x8] sm:$0xf]
    %v5859 = vld [vmem:[#allocation14 + $0xc] sm:$0xf]
    %v5860 = vld [vmem:[#allocation14 + $0x10] sm:$0xf]
    %v5861 = vld [vmem:[#allocation14 + $0x14] sm:$0xf]
    %v5862 = vld [vmem:[#allocation14 + $0x18] sm:$0xf]
    %v5863 = vld [vmem:[#allocation14 + $0x1c] sm:$0xf]
    %v5864 = vld [vmem:[#allocation14 + $0x20] sm:$0xf]
    %v5865 = vld [vmem:[#allocation14 + $0x24] sm:$0xf]
    %v5866 = vld [vmem:[#allocation14 + $0x28] sm:$0xf]
    %v5867 = vld [vmem:[#allocation14 + $0x2c] sm:$0xf]
    %v5868 = vld [vmem:[#allocation14 + $0x30] sm:$0xf]
    %v5869 = vld [vmem:[#allocation14 + $0x34] sm:$0xf]
    %v5870 = vld [vmem:[#allocation14 + $0x38] sm:$0xf]
    %v5871 = vld [vmem:[#allocation14 + $0x3c] sm:$0xf]
    %v5872 = vld [vmem:[#allocation15] sm:$0x1]
    %v5874 = vlaneseq
    %v5875 = vshrl.u32 %v5874, 7
    %v5876 = vsub.s32 0, %v5875
    %v5877 = vrot.slane %v5872, %v5876
    %v5895 = vunpack.c.l.b16 %v5856
    %v5896 = vunpack.c.l.b16 %v5857
    %v5897 = vunpack.c.l.b16 %v5858
    %v5898 = vunpack.c.l.b16 %v5859
    %v5899 = vunpack.c.l.b16 %v5860
    %v5900 = vunpack.c.l.b16 %v5861
    %v5901 = vunpack.c.l.b16 %v5862
    %v5902 = vunpack.c.l.b16 %v5863
    %v5903 = vunpack.c.l.b16 %v5864
    %v5904 = vunpack.c.l.b16 %v5865
    %v5905 = vunpack.c.l.b16 %v5866
    %v5906 = vunpack.c.l.b16 %v5867
    %v5907 = vunpack.c.l.b16 %v5868
    %v5908 = vunpack.c.l.b16 %v5869
    %v5909 = vunpack.c.l.b16 %v5870
    %v5910 = vunpack.c.l.b16 %v5871
    %v5911 = vpack.c.b16 %v5896, %v5895
    %v5912 = vpack.c.b16 %v5898, %v5897
    %v5913 = vpack.c.b16 %v5900, %v5899
    %v5914 = vpack.c.b16 %v5902, %v5901
    %v5915 = vpack.c.b16 %v5904, %v5903
    %v5916 = vpack.c.b16 %v5906, %v5905
    %v5917 = vpack.c.b16 %v5908, %v5907
    %v5918 = vpack.c.b16 %v5910, %v5909
    %5927 = vmatprep.subr.bf16.mxu0 0
    %5928 = vmatpush1.bf16.msra.mxu0 %v5911
    %5929 = vmatprep.subr.bf16.mxu0 0
    %5930 = vmatpush1.bf16.msra.mxu0 %v5912
    %5931 = vmatprep.subr.bf16.mxu0 0
    %5932 = vmatpush1.bf16.msra.mxu0 %v5913
    %5933 = vmatprep.subr.bf16.mxu0 0
    %5934 = vmatpush1.bf16.msra.mxu0 %v5914
    %5935 = vmatprep.subr.bf16.mxu0 0
    %5936 = vmatpush1.bf16.msra.mxu0 %v5915
    %5937 = vmatprep.subr.bf16.mxu0 0
    %5938 = vmatpush1.bf16.msra.mxu0 %v5916
    %5939 = vmatprep.subr.bf16.mxu0 0
    %5940 = vmatpush1.bf16.msra.mxu0 %v5917
    %5941 = vmatprep.subr.bf16.mxu0 0
    %5942 = vmatpush1.bf16.msra.mxu0 %v5918
    %5943 = vmatprep.subr.bf16.mxu0 0
    %5944 = vmatpush1.bf16.msra.mxu0 0
    %5945 = vmatprep.subr.bf16.mxu0 0
    %5946 = vmatpush1.bf16.msra.mxu0 0
    %5947 = vmatprep.subr.bf16.mxu0 0
    %5948 = vmatpush1.bf16.msra.mxu0 0
    %5949 = vmatprep.subr.bf16.mxu0 0
    %5950 = vmatpush1.bf16.msra.mxu0 0
    %5951 = vmatprep.subr.bf16.mxu0 0
    %5952 = vmatpush1.bf16.msra.mxu0 0
    %5953 = vmatprep.subr.bf16.mxu0 0
    %5954 = vmatpush1.bf16.msra.mxu0 0
    %5955 = vmatprep.subr.bf16.mxu0 0
    %5956 = vmatpush1.bf16.msra.mxu0 0
    %5957 = vmatprep.subr.bf16.mxu0 0
    %5958 = vmatpush1.bf16.msra.mxu0 0
    %5959 = vmatprep.mubr.bf16.mxu0 0
    %5960 = vmatmul.mubr.bf16.gmra.mrb[0].mxu0 %v5855
    %v5961 = vpop.f32.mrb[0].mxu0
    %v5962 = vadd.f32 %v5877, %v5961
    %v5963 = vpop.f32.mrb[0].mxu0
    %v5964 = vpop.f32.mrb[0].mxu0
    %v5965 = vadd.f32 %v5877, %v5964
    %v5966 = vpop.f32.mrb[0].mxu0
    %5967 = vdwg.mxu0
    %5968 = vst [vmem:[%s9] sm:$0xff] %v5962
    %5969 = vst [vmem:[%s9 + $0x8] sm:$0xff] %v5965
    // Predicated region
    $region70: #{weather_forward_packed.1} parent=1 // pred_check
      _
    $region71: #{weather_forward_packed.1} parent=1 // pred_check_branch
      %5971 = sbr.rel (0) target = $region73
    $region72: #{weather_forward_packed.1} parent=1 // pred_region
      _
    $region73: #{weather_forward_packed.1} parent=1 // pred_fallthru
      _
    // Predicated region
    $region74: #{weather_forward_packed.1} parent=1 // pred_check
      _
    $region75: #{weather_forward_packed.1} parent=1 // pred_check_branch
      %5973 = sbr.rel (0) target = $region77
    $region76: #{weather_forward_packed.1} parent=1 // pred_region
      _
    $region77: #{weather_forward_packed.1} parent=1 // pred_fallthru
      _
    %5974 = vsyncpa [#allocation5], 1
    %5975 = vsyncpa [#allocation7], 1
    %5976 = vsyncpa [#allocation10], 1
    %5977 = vsyncpa [#allocation13], 1
    %5978 = vsyncpa [#allocation16], 1

</llo_original>
